<compile_context>
chip_gen: v6e
topology: v6e:2x2x1
jax: 0.10.0
libtpu: 0.0.40
codegen_flags: <defaults>
</compile_context>

<pallas_src>
import numpy as np
import jax
import jax.numpy as jnp
from jax.experimental import pallas as pl
from jax.experimental.pallas import tpu as pltpu

EPS = 1e-5
PATCH_N = 4                                # config.patch_n
DAE_DIMS = [8, 16, 32, 64, 32, 16, 8, 4]   # config.dae_dims (8 layers -> U-Net)
NUM_LAYERS = len(DAE_DIMS)
SHORTCUT_SRC = (0, 1, 2)                   # store the output of these layers
SHORTCUT_USE = (5, 6, 7)                   # these layers consume [x, popped shortcut]


# ------------------------------ static layer plan ---------------------------------

def layer_plan(B, L0):
    """Static shapes per layer: lengths, rows (B*L), channel splits, conv/deconv."""
    encoder = [PATCH_N] + DAE_DIMS
    shortcut_chans = []
    plan, L = [], L0
    for i, (ic, oc) in enumerate(zip(encoder[:-1], encoder[1:])):
        if i in SHORTCUT_SRC:
            shortcut_chans.append(oc)
        extra = shortcut_chans.pop() if i in SHORTCUT_USE else 0
        is_deconv = ic > oc
        L_out = 2 * L if is_deconv else L // 2
        plan.append(dict(is_deconv=is_deconv,
                         c_new=ic, c_in=ic + extra, c_out=oc,
                         L_in=L, L_out=L_out,
                         bl_in=B * L, bl_out=B * L_out))
        L = L_out
    return plan


# ------------------------------ fused Pallas kernel ------------------------------

def make_dae_kernel(plan):
    c_last = plan[-1]["c_out"]

    def kernel(x_ref, a_ref, w_ref, gb_ref, wf_ref, bf_ref, out_ref):
        # a_ref : (NL, 3, max_BLout, max_BLin)  0/1 tap gather/scatter matrices (padded)
        # w_ref : (NL, 3, max_Cin,  max_Cout)   per-tap weights                  (padded)
        # gb_ref: (NL, 2, max_Cout)             gamma ; beta                     (padded)
        # wf_ref: (C_last, 1), bf_ref: (1, 1)   final 1x1 conv
        x = x_ref[...]                          # (B*L0, C0) channels-last input
        shortcuts = []
        for l, p in enumerate(plan):
            bli, blo = p["bl_in"], p["bl_out"]
            c_new, cin, cout = p["c_new"], p["c_in"], p["c_out"]
            x_short = shortcuts.pop() if l in SHORTCUT_USE else None

            y = None
            for k in range(3):                  # 3 kernel taps -> accumulated matmuls
                z = jnp.dot(x, w_ref[l, k, :c_new, :cout],
                            preferred_element_type=jnp.float32)
                if x_short is not None:
                    # concat([x, shortcut], channel) realized as split-weight matmuls
                    z = z + jnp.dot(x_short, w_ref[l, k, c_new:cin, :cout],
                                    preferred_element_type=jnp.float32)
                t = jnp.dot(a_ref[l, k, :blo, :bli], z,
                            preferred_element_type=jnp.float32)
                y = t if y is None else y + t

            # Train-mode BatchNorm1d (single-pass batch stats over B*L rows) + ReLU.
            # Conv bias is omitted: it is exactly cancelled by the mean subtraction.
            inv_m = 1.0 / blo
            s1 = jnp.sum(y, axis=0, keepdims=True)
            s2 = jnp.sum(y * y, axis=0, keepdims=True)
            mean = s1 * inv_m
            var = jnp.maximum(s2 * inv_m - mean * mean, 0.0)
            x = jnp.maximum(
                gb_ref[l, 0:1, :cout] * (y - mean) * jax.lax.rsqrt(var + EPS)
                + gb_ref[l, 1:2, :cout],
                0.0)

            if l in SHORTCUT_SRC:
                shortcuts.append(x)

        # Final nn.Conv1d(oc, 1, kernel_size=1) fused as the epilogue.
        out_ref[...] = (jnp.dot(x, wf_ref[...], preferred_element_type=jnp.float32)
                        + bf_ref[...])

    return kernel


# ------------------------------ host-side preparation -----------------------------

def make_tap_matrices(L_in, is_deconv, B):
    """(3, B*L_out, B*L_in) 0/1 gather (conv) / scatter (deconv) matrices,
    block-diagonal over batch so one matmul handles all batch rows at once."""
    L_out = 2 * L_in if is_deconv else L_in // 2
    o = np.arange(L_out)[:, None]
    i = np.arange(L_in)[None, :]
    taps = []
    for k in range(3):
        if is_deconv:   # ConvTranspose1d(ks=3, s=2, p=1, output_padding=1): o = 2i + k - 1
            m = (o == 2 * i + k - 1)
        else:           # Conv1d(ks=3, s=2, p=1):                            i = 2o + k - 1
            m = (i == 2 * o + k - 1)
        taps.append(np.kron(np.eye(B, dtype=np.float32), m.astype(np.float32)))
    return np.stack(taps)                       # (3, B*L_out, B*L_in)


def init_params(key, plan):
    layers = []
    for p in plan:
        ic_tot, oc = p["c_in"], p["c_out"]
        key, kw, kb, kg, kbe = jax.random.split(key, 5)
        if p["is_deconv"]:
            w = 0.1 * jax.random.normal(kw, (ic_tot, oc, 3), jnp.float32)   # (IC, OC, K)
            w_taps = jnp.transpose(w, (2, 0, 1))                            # (K, IC, OC)
        else:
            w = 0.1 * jax.random.normal(kw, (oc, ic_tot, 3), jnp.float32)   # (OC, IC, K)
            w_taps = jnp.transpose(w, (2, 1, 0))                            # (K, IC, OC)
        layers.append(dict(
            w=w, w_taps=w_taps,
            b=0.1 * jax.random.normal(kb, (oc,), jnp.float32),              # reference only
            gamma=1.0 + 0.1 * jax.random.normal(kg, (oc,), jnp.float32),
            beta=0.1 * jax.random.normal(kbe, (oc,), jnp.float32)))
    key, kw, kb = jax.random.split(key, 3)
    c_last = plan[-1]["c_out"]
    wf = 0.1 * jax.random.normal(kw, (1, c_last, 1), jnp.float32)
    final = dict(w=wf, b=0.1 * jax.random.normal(kb, (1,), jnp.float32))
    return layers, final


def pack_inputs(plan, layers, final, B):
    """Pack every per-layer operand into zero-padded slabs -> 6 kernel inputs total."""
    max_bli = max(p["bl_in"] for p in plan)
    max_blo = max(p["bl_out"] for p in plan)
    max_cin = max(p["c_in"] for p in plan)
    max_cout = max(p["c_out"] for p in plan)

    A_all = np.zeros((NUM_LAYERS, 3, max_blo, max_bli), np.float32)
    W_all = np.zeros((NUM_LAYERS, 3, max_cin, max_cout), np.float32)
    GB_all = np.zeros((NUM_LAYERS, 2, max_cout), np.float32)
    for l, (p, lay) in enumerate(zip(plan, layers)):
        A = make_tap_matrices(p["L_in"], p["is_deconv"], B)
        A_all[l, :, :p["bl_out"], :p["bl_in"]] = A
        W_all[l, :, :p["c_in"], :p["c_out"]] = np.asarray(lay["w_taps"])
        GB_all[l, 0, :p["c_out"]] = np.asarray(lay["gamma"])
        GB_all[l, 1, :p["c_out"]] = np.asarray(lay["beta"])

    c_last = plan[-1]["c_out"]
    WF = np.asarray(final["w"][0, :, 0]).reshape(c_last, 1)
    BF = np.asarray(final["b"]).reshape(1, 1)
    return (jnp.asarray(A_all), jnp.asarray(W_all), jnp.asarray(GB_all),
            jnp.asarray(WF), jnp.asarray(BF))


def dae_forward_fused(x_ncl, packed, plan):
    B, C0, L0 = x_ncl.shape
    x2d = jnp.transpose(x_ncl, (0, 2, 1)).reshape(B * L0, C0)   # (B*L, C) channels-last
    A_all, W_all, GB_all, WF, BF = packed

    vmem = pl.BlockSpec(memory_space=pltpu.MemorySpace.VMEM)
    out = pl.pallas_call(
        make_dae_kernel(plan),
        out_shape=jax.ShapeDtypeStruct((B * L0, 1), jnp.float32),
        in_specs=[vmem] * 6,
        out_specs=vmem,
    )(x2d, A_all, W_all, GB_all, WF, BF)
    return jnp.transpose(out.reshape(B, L0, 1), (0, 2, 1))       # (B, 1, L) like PyTorch


# --------------------------- pure-JAX reference (NCL layout) ----------------------

def ref_dae(x_ncl, plan, layers, final):
    x = x_ncl
    shortcuts = []
    for i, (p, lay) in enumerate(zip(plan, layers)):
        if p["is_deconv"]:
            w_eff = jnp.transpose(lay["w"][:, :, ::-1], (1, 0, 2))  # (OC, IC, K)
            y = jax.lax.conv_general_dilated(
                x, w_eff, window_strides=(1,), padding=[(1, 2)], lhs_dilation=(2,),
                dimension_numbers=("NCH", "OIH", "NCH"),
                precision=jax.lax.Precision.HIGHEST)
        else:
            y = jax.lax.conv_general_dilated(
                x, lay["w"], window_strides=(2,), padding=[(1, 1)],
                dimension_numbers=("NCH", "OIH", "NCH"),
                precision=jax.lax.Precision.HIGHEST)
        y = y + lay["b"][None, :, None]
        mean = jnp.mean(y, axis=(0, 2), keepdims=True)
        var = jnp.mean((y - mean) ** 2, axis=(0, 2), keepdims=True)
        y = (lay["gamma"][None, :, None] * (y - mean) / jnp.sqrt(var + EPS)
             + lay["beta"][None, :, None])
        x = jnp.maximum(y, 0.0)
        if i in SHORTCUT_SRC:
            shortcuts.append(x)
        elif (i + 1) in SHORTCUT_USE:
            x = jnp.concatenate([x, shortcuts.pop()], axis=1)
    return jnp.einsum("oc,bcl->bol", final["w"][:, :, 0], x) + final["b"][None, :, None]


# -------------------------------------- main --------------------------------------

if __name__ == "__main__":
    key = jax.random.PRNGKey(0)
    kx, kp = jax.random.split(key)
    B, L = 2, 64
    x_ncl = jax.random.normal(kx, (B, PATCH_N, L), jnp.float32)   # PyTorch layout (N, C, L)

    plan = layer_plan(B, L)
    layers, final = init_params(kp, plan)
    packed = pack_inputs(plan, layers, final, B)

    fwd = jax.jit(lambda x: dae_forward_fused(x, packed, plan))
    out_ncl = fwd(x_ncl)
    jax.block_until_ready(out_ncl)

    assert out_ncl.shape == (B, 1, L)
    ref = ref_dae(x_ncl, plan, layers, final)
    max_err = float(jnp.max(jnp.abs(out_ncl - ref)))
    assert max_err < 1e-2, f"mismatch vs reference: {max_err}"
    print("KERNEL_OK")
</pallas_src>

<mosaic_0001>
module attributes {stable_mosaic.version = 11 : i64} {
  func.func @kernel(%arg0: memref<128x4xf32, #tpu.memory_space<vmem>>, %arg1: memref<8x3x128x128xf32, #tpu.memory_space<vmem>>, %arg2: memref<8x3x64x64xf32, #tpu.memory_space<vmem>>, %arg3: memref<8x2x64xf32, #tpu.memory_space<vmem>>, %arg4: memref<4x1xf32, #tpu.memory_space<vmem>>, %arg5: memref<1x1xf32, #tpu.memory_space<vmem>>, %arg6: memref<128x1xf32, #tpu.memory_space<vmem>>) attributes {dimension_semantics = [], scalar_prefetch = 0 : i64, scratch_operands = 0 : i64, tpu.core_type = #tpu.core_type<tc>} {
    %c0 = arith.constant 0 : index
    %c0_0 = arith.constant 0 : index
    %0 = vector.load %arg0[%c0, %c0_0] : memref<128x4xf32, #tpu.memory_space<vmem>>, vector<128x4xf32>
    %c0_1 = arith.constant 0 : index
    %c0_2 = arith.constant 0 : index
    %c0_3 = arith.constant 0 : index
    %c0_4 = arith.constant 0 : index
    %1 = vector.load %arg2[%c0_1, %c0_2, %c0_3, %c0_4] : memref<8x3x64x64xf32, #tpu.memory_space<vmem>>, vector<1x1x4x8xf32>
    %2 = vector.shape_cast %1 : vector<1x1x4x8xf32> to vector<4x8xf32>
    %cst = arith.constant dense<0.000000e+00> : vector<128x8xf32>
    %3 = tpu.matmul %0, %2, %cst {dimension_numbers = #tpu.dot_dimension_numbers<[1], [0], [0], [1], [0, 0, 1, 1], [], []>} : vector<128x4xf32>, vector<4x8xf32>, vector<128x8xf32> -> vector<128x8xf32>
    %c0_5 = arith.constant 0 : index
    %c0_6 = arith.constant 0 : index
    %c0_7 = arith.constant 0 : index
    %c0_8 = arith.constant 0 : index
    %4 = vector.load %arg1[%c0_5, %c0_6, %c0_7, %c0_8] : memref<8x3x128x128xf32, #tpu.memory_space<vmem>>, vector<1x1x64x128xf32>
    %5 = vector.shape_cast %4 : vector<1x1x64x128xf32> to vector<64x128xf32>
    %cst_9 = arith.constant dense<0.000000e+00> : vector<64x8xf32>
    %6 = tpu.matmul %5, %3, %cst_9 {dimension_numbers = #tpu.dot_dimension_numbers<[1], [0], [0], [1], [0, 0, 1, 1], [], []>} : vector<64x128xf32>, vector<128x8xf32>, vector<64x8xf32> -> vector<64x8xf32>
    %c0_10 = arith.constant 0 : index
    %c1 = arith.constant 1 : index
    %c0_11 = arith.constant 0 : index
    %c0_12 = arith.constant 0 : index
    %7 = vector.load %arg2[%c0_10, %c1, %c0_11, %c0_12] : memref<8x3x64x64xf32, #tpu.memory_space<vmem>>, vector<1x1x4x8xf32>
    %8 = vector.shape_cast %7 : vector<1x1x4x8xf32> to vector<4x8xf32>
    %cst_13 = arith.constant dense<0.000000e+00> : vector<128x8xf32>
    %9 = tpu.matmul %0, %8, %cst_13 {dimension_numbers = #tpu.dot_dimension_numbers<[1], [0], [0], [1], [0, 0, 1, 1], [], []>} : vector<128x4xf32>, vector<4x8xf32>, vector<128x8xf32> -> vector<128x8xf32>
    %c0_14 = arith.constant 0 : index
    %c1_15 = arith.constant 1 : index
    %c0_16 = arith.constant 0 : index
    %c0_17 = arith.constant 0 : index
    %10 = vector.load %arg1[%c0_14, %c1_15, %c0_16, %c0_17] : memref<8x3x128x128xf32, #tpu.memory_space<vmem>>, vector<1x1x64x128xf32>
    %11 = vector.shape_cast %10 : vector<1x1x64x128xf32> to vector<64x128xf32>
    %cst_18 = arith.constant dense<0.000000e+00> : vector<64x8xf32>
    %12 = tpu.matmul %11, %9, %cst_18 {dimension_numbers = #tpu.dot_dimension_numbers<[1], [0], [0], [1], [0, 0, 1, 1], [], []>} : vector<64x128xf32>, vector<128x8xf32>, vector<64x8xf32> -> vector<64x8xf32>
    %13 = arith.addf %6, %12 : vector<64x8xf32>
    %c0_19 = arith.constant 0 : index
    %c2 = arith.constant 2 : index
    %c0_20 = arith.constant 0 : index
    %c0_21 = arith.constant 0 : index
    %14 = vector.load %arg2[%c0_19, %c2, %c0_20, %c0_21] : memref<8x3x64x64xf32, #tpu.memory_space<vmem>>, vector<1x1x4x8xf32>
    %15 = vector.shape_cast %14 : vector<1x1x4x8xf32> to vector<4x8xf32>
    %cst_22 = arith.constant dense<0.000000e+00> : vector<128x8xf32>
    %16 = tpu.matmul %0, %15, %cst_22 {dimension_numbers = #tpu.dot_dimension_numbers<[1], [0], [0], [1], [0, 0, 1, 1], [], []>} : vector<128x4xf32>, vector<4x8xf32>, vector<128x8xf32> -> vector<128x8xf32>
    %c0_23 = arith.constant 0 : index
    %c2_24 = arith.constant 2 : index
    %c0_25 = arith.constant 0 : index
    %c0_26 = arith.constant 0 : index
    %17 = vector.load %arg1[%c0_23, %c2_24, %c0_25, %c0_26] : memref<8x3x128x128xf32, #tpu.memory_space<vmem>>, vector<1x1x64x128xf32>
    %18 = vector.shape_cast %17 : vector<1x1x64x128xf32> to vector<64x128xf32>
    %cst_27 = arith.constant dense<0.000000e+00> : vector<64x8xf32>
    %19 = tpu.matmul %18, %16, %cst_27 {dimension_numbers = #tpu.dot_dimension_numbers<[1], [0], [0], [1], [0, 0, 1, 1], [], []>} : vector<64x128xf32>, vector<128x8xf32>, vector<64x8xf32> -> vector<64x8xf32>
    %20 = arith.addf %13, %19 : vector<64x8xf32>
    %cst_28 = arith.constant dense<0.000000e+00> : vector<8xf32>
    %21 = vector.multi_reduction <add>, %20, %cst_28 [0] : vector<64x8xf32> to vector<8xf32>
    %22 = vector.shape_cast %21 : vector<8xf32> to vector<1x8xf32>
    %23 = arith.mulf %20, %20 : vector<64x8xf32>
    %cst_29 = arith.constant dense<0.000000e+00> : vector<8xf32>
    %24 = vector.multi_reduction <add>, %23, %cst_29 [0] : vector<64x8xf32> to vector<8xf32>
    %25 = vector.shape_cast %24 : vector<8xf32> to vector<1x8xf32>
    %cst_30 = arith.constant 1.562500e-02 : f32
    %26 = vector.broadcast %cst_30 : f32 to vector<1x8xf32>
    %27 = arith.mulf %22, %26 : vector<1x8xf32>
    %cst_31 = arith.constant 1.562500e-02 : f32
    %28 = vector.broadcast %cst_31 : f32 to vector<1x8xf32>
    %29 = arith.mulf %25, %28 : vector<1x8xf32>
    %30 = arith.mulf %27, %27 : vector<1x8xf32>
    %31 = arith.subf %29, %30 : vector<1x8xf32>
    %cst_32 = arith.constant 0.000000e+00 : f32
    %32 = vector.broadcast %cst_32 : f32 to vector<1x8xf32>
    %33 = arith.maximumf %31, %32 : vector<1x8xf32>
    %c0_33 = arith.constant 0 : index
    %c0_34 = arith.constant 0 : index
    %c0_35 = arith.constant 0 : index
    %34 = vector.load %arg3[%c0_33, %c0_34, %c0_35] : memref<8x2x64xf32, #tpu.memory_space<vmem>>, vector<1x1x8xf32>
    %35 = vector.shape_cast %34 : vector<1x1x8xf32> to vector<1x8xf32>
    %36 = vector.broadcast %27 : vector<1x8xf32> to vector<64x8xf32>
    %37 = arith.subf %20, %36 : vector<64x8xf32>
    %38 = vector.broadcast %35 : vector<1x8xf32> to vector<64x8xf32>
    %39 = arith.mulf %38, %37 : vector<64x8xf32>
    %cst_36 = arith.constant 9.99999974E-6 : f32
    %40 = vector.broadcast %cst_36 : f32 to vector<1x8xf32>
    %41 = arith.addf %33, %40 : vector<1x8xf32>
    %42 = math.rsqrt %41 : vector<1x8xf32>
    %43 = vector.broadcast %42 : vector<1x8xf32> to vector<64x8xf32>
    %44 = arith.mulf %39, %43 : vector<64x8xf32>
    %c0_37 = arith.constant 0 : index
    %c1_38 = arith.constant 1 : index
    %c0_39 = arith.constant 0 : index
    %45 = vector.load %arg3[%c0_37, %c1_38, %c0_39] : memref<8x2x64xf32, #tpu.memory_space<vmem>>, vector<1x1x8xf32>
    %46 = vector.shape_cast %45 : vector<1x1x8xf32> to vector<1x8xf32>
    %47 = vector.broadcast %46 : vector<1x8xf32> to vector<64x8xf32>
    %48 = arith.addf %44, %47 : vector<64x8xf32>
    %cst_40 = arith.constant 0.000000e+00 : f32
    %49 = vector.broadcast %cst_40 : f32 to vector<64x8xf32>
    %50 = arith.maximumf %48, %49 : vector<64x8xf32>
    %c1_41 = arith.constant 1 : index
    %c0_42 = arith.constant 0 : index
    %c0_43 = arith.constant 0 : index
    %c0_44 = arith.constant 0 : index
    %51 = vector.load %arg2[%c1_41, %c0_42, %c0_43, %c0_44] : memref<8x3x64x64xf32, #tpu.memory_space<vmem>>, vector<1x1x8x16xf32>
    %52 = vector.shape_cast %51 : vector<1x1x8x16xf32> to vector<8x16xf32>
    %cst_45 = arith.constant dense<0.000000e+00> : vector<64x16xf32>
    %53 = tpu.matmul %50, %52, %cst_45 {dimension_numbers = #tpu.dot_dimension_numbers<[1], [0], [0], [1], [0, 0, 1, 1], [], []>} : vector<64x8xf32>, vector<8x16xf32>, vector<64x16xf32> -> vector<64x16xf32>
    %c1_46 = arith.constant 1 : index
    %c0_47 = arith.constant 0 : index
    %c0_48 = arith.constant 0 : index
    %c0_49 = arith.constant 0 : index
    %54 = vector.load %arg1[%c1_46, %c0_47, %c0_48, %c0_49] : memref<8x3x128x128xf32, #tpu.memory_space<vmem>>, vector<1x1x32x64xf32>
    %55 = vector.shape_cast %54 : vector<1x1x32x64xf32> to vector<32x64xf32>
    %cst_50 = arith.constant dense<0.000000e+00> : vector<32x16xf32>
    %56 = tpu.matmul %55, %53, %cst_50 {dimension_numbers = #tpu.dot_dimension_numbers<[1], [0], [0], [1], [0, 0, 1, 1], [], []>} : vector<32x64xf32>, vector<64x16xf32>, vector<32x16xf32> -> vector<32x16xf32>
    %c1_51 = arith.constant 1 : index
    %c1_52 = arith.constant 1 : index
    %c0_53 = arith.constant 0 : index
    %c0_54 = arith.constant 0 : index
    %57 = vector.load %arg2[%c1_51, %c1_52, %c0_53, %c0_54] : memref<8x3x64x64xf32, #tpu.memory_space<vmem>>, vector<1x1x8x16xf32>
    %58 = vector.shape_cast %57 : vector<1x1x8x16xf32> to vector<8x16xf32>
    %cst_55 = arith.constant dense<0.000000e+00> : vector<64x16xf32>
    %59 = tpu.matmul %50, %58, %cst_55 {dimension_numbers = #tpu.dot_dimension_numbers<[1], [0], [0], [1], [0, 0, 1, 1], [], []>} : vector<64x8xf32>, vector<8x16xf32>, vector<64x16xf32> -> vector<64x16xf32>
    %c1_56 = arith.constant 1 : index
    %c1_57 = arith.constant 1 : index
    %c0_58 = arith.constant 0 : index
    %c0_59 = arith.constant 0 : index
    %60 = vector.load %arg1[%c1_56, %c1_57, %c0_58, %c0_59] : memref<8x3x128x128xf32, #tpu.memory_space<vmem>>, vector<1x1x32x64xf32>
    %61 = vector.shape_cast %60 : vector<1x1x32x64xf32> to vector<32x64xf32>
    %cst_60 = arith.constant dense<0.000000e+00> : vector<32x16xf32>
    %62 = tpu.matmul %61, %59, %cst_60 {dimension_numbers = #tpu.dot_dimension_numbers<[1], [0], [0], [1], [0, 0, 1, 1], [], []>} : vector<32x64xf32>, vector<64x16xf32>, vector<32x16xf32> -> vector<32x16xf32>
    %63 = arith.addf %56, %62 : vector<32x16xf32>
    %c1_61 = arith.constant 1 : index
    %c2_62 = arith.constant 2 : index
    %c0_63 = arith.constant 0 : index
    %c0_64 = arith.constant 0 : index
    %64 = vector.load %arg2[%c1_61, %c2_62, %c0_63, %c0_64] : memref<8x3x64x64xf32, #tpu.memory_space<vmem>>, vector<1x1x8x16xf32>
    %65 = vector.shape_cast %64 : vector<1x1x8x16xf32> to vector<8x16xf32>
    %cst_65 = arith.constant dense<0.000000e+00> : vector<64x16xf32>
    %66 = tpu.matmul %50, %65, %cst_65 {dimension_numbers = #tpu.dot_dimension_numbers<[1], [0], [0], [1], [0, 0, 1, 1], [], []>} : vector<64x8xf32>, vector<8x16xf32>, vector<64x16xf32> -> vector<64x16xf32>
    %c1_66 = arith.constant 1 : index
    %c2_67 = arith.constant 2 : index
    %c0_68 = arith.constant 0 : index
    %c0_69 = arith.constant 0 : index
    %67 = vector.load %arg1[%c1_66, %c2_67, %c0_68, %c0_69] : memref<8x3x128x128xf32, #tpu.memory_space<vmem>>, vector<1x1x32x64xf32>
    %68 = vector.shape_cast %67 : vector<1x1x32x64xf32> to vector<32x64xf32>
    %cst_70 = arith.constant dense<0.000000e+00> : vector<32x16xf32>
    %69 = tpu.matmul %68, %66, %cst_70 {dimension_numbers = #tpu.dot_dimension_numbers<[1], [0], [0], [1], [0, 0, 1, 1], [], []>} : vector<32x64xf32>, vector<64x16xf32>, vector<32x16xf32> -> vector<32x16xf32>
    %70 = arith.addf %63, %69 : vector<32x16xf32>
    %cst_71 = arith.constant dense<0.000000e+00> : vector<16xf32>
    %71 = vector.multi_reduction <add>, %70, %cst_71 [0] : vector<32x16xf32> to vector<16xf32>
    %72 = vector.shape_cast %71 : vector<16xf32> to vector<1x16xf32>
    %73 = arith.mulf %70, %70 : vector<32x16xf32>
    %cst_72 = arith.constant dense<0.000000e+00> : vector<16xf32>
    %74 = vector.multi_reduction <add>, %73, %cst_72 [0] : vector<32x16xf32> to vector<16xf32>
    %75 = vector.shape_cast %74 : vector<16xf32> to vector<1x16xf32>
    %cst_73 = arith.constant 3.125000e-02 : f32
    %76 = vector.broadcast %cst_73 : f32 to vector<1x16xf32>
    %77 = arith.mulf %72, %76 : vector<1x16xf32>
    %cst_74 = arith.constant 3.125000e-02 : f32
    %78 = vector.broadcast %cst_74 : f32 to vector<1x16xf32>
    %79 = arith.mulf %75, %78 : vector<1x16xf32>
    %80 = arith.mulf %77, %77 : vector<1x16xf32>
    %81 = arith.subf %79, %80 : vector<1x16xf32>
    %cst_75 = arith.constant 0.000000e+00 : f32
    %82 = vector.broadcast %cst_75 : f32 to vector<1x16xf32>
    %83 = arith.maximumf %81, %82 : vector<1x16xf32>
    %c1_76 = arith.constant 1 : index
    %c0_77 = arith.constant 0 : index
    %c0_78 = arith.constant 0 : index
    %84 = vector.load %arg3[%c1_76, %c0_77, %c0_78] : memref<8x2x64xf32, #tpu.memory_space<vmem>>, vector<1x1x16xf32>
    %85 = vector.shape_cast %84 : vector<1x1x16xf32> to vector<1x16xf32>
    %86 = vector.broadcast %77 : vector<1x16xf32> to vector<32x16xf32>
    %87 = arith.subf %70, %86 : vector<32x16xf32>
    %88 = vector.broadcast %85 : vector<1x16xf32> to vector<32x16xf32>
    %89 = arith.mulf %88, %87 : vector<32x16xf32>
    %cst_79 = arith.constant 9.99999974E-6 : f32
    %90 = vector.broadcast %cst_79 : f32 to vector<1x16xf32>
    %91 = arith.addf %83, %90 : vector<1x16xf32>
    %92 = math.rsqrt %91 : vector<1x16xf32>
    %93 = vector.broadcast %92 : vector<1x16xf32> to vector<32x16xf32>
    %94 = arith.mulf %89, %93 : vector<32x16xf32>
    %c1_80 = arith.constant 1 : index
    %c1_81 = arith.constant 1 : index
    %c0_82 = arith.constant 0 : index
    %95 = vector.load %arg3[%c1_80, %c1_81, %c0_82] : memref<8x2x64xf32, #tpu.memory_space<vmem>>, vector<1x1x16xf32>
    %96 = vector.shape_cast %95 : vector<1x1x16xf32> to vector<1x16xf32>
    %97 = vector.broadcast %96 : vector<1x16xf32> to vector<32x16xf32>
    %98 = arith.addf %94, %97 : vector<32x16xf32>
    %cst_83 = arith.constant 0.000000e+00 : f32
    %99 = vector.broadcast %cst_83 : f32 to vector<32x16xf32>
    %100 = arith.maximumf %98, %99 : vector<32x16xf32>
    %c2_84 = arith.constant 2 : index
    %c0_85 = arith.constant 0 : index
    %c0_86 = arith.constant 0 : index
    %c0_87 = arith.constant 0 : index
    %101 = vector.load %arg2[%c2_84, %c0_85, %c0_86, %c0_87] : memref<8x3x64x64xf32, #tpu.memory_space<vmem>>, vector<1x1x16x32xf32>
    %102 = vector.shape_cast %101 : vector<1x1x16x32xf32> to vector<16x32xf32>
    %cst_88 = arith.constant dense<0.000000e+00> : vector<32x32xf32>
    %103 = tpu.matmul %100, %102, %cst_88 {dimension_numbers = #tpu.dot_dimension_numbers<[1], [0], [0], [1], [0, 0, 1, 1], [], []>} : vector<32x16xf32>, vector<16x32xf32>, vector<32x32xf32> -> vector<32x32xf32>
    %c2_89 = arith.constant 2 : index
    %c0_90 = arith.constant 0 : index
    %c0_91 = arith.constant 0 : index
    %c0_92 = arith.constant 0 : index
    %104 = vector.load %arg1[%c2_89, %c0_90, %c0_91, %c0_92] : memref<8x3x128x128xf32, #tpu.memory_space<vmem>>, vector<1x1x16x32xf32>
    %105 = vector.shape_cast %104 : vector<1x1x16x32xf32> to vector<16x32xf32>
    %cst_93 = arith.constant dense<0.000000e+00> : vector<16x32xf32>
    %106 = tpu.matmul %105, %103, %cst_93 {dimension_numbers = #tpu.dot_dimension_numbers<[1], [0], [0], [1], [0, 0, 1, 1], [], []>} : vector<16x32xf32>, vector<32x32xf32>, vector<16x32xf32> -> vector<16x32xf32>
    %c2_94 = arith.constant 2 : index
    %c1_95 = arith.constant 1 : index
    %c0_96 = arith.constant 0 : index
    %c0_97 = arith.constant 0 : index
    %107 = vector.load %arg2[%c2_94, %c1_95, %c0_96, %c0_97] : memref<8x3x64x64xf32, #tpu.memory_space<vmem>>, vector<1x1x16x32xf32>
    %108 = vector.shape_cast %107 : vector<1x1x16x32xf32> to vector<16x32xf32>
    %cst_98 = arith.constant dense<0.000000e+00> : vector<32x32xf32>
    %109 = tpu.matmul %100, %108, %cst_98 {dimension_numbers = #tpu.dot_dimension_numbers<[1], [0], [0], [1], [0, 0, 1, 1], [], []>} : vector<32x16xf32>, vector<16x32xf32>, vector<32x32xf32> -> vector<32x32xf32>
    %c2_99 = arith.constant 2 : index
    %c1_100 = arith.constant 1 : index
    %c0_101 = arith.constant 0 : index
    %c0_102 = arith.constant 0 : index
    %110 = vector.load %arg1[%c2_99, %c1_100, %c0_101, %c0_102] : memref<8x3x128x128xf32, #tpu.memory_space<vmem>>, vector<1x1x16x32xf32>
    %111 = vector.shape_cast %110 : vector<1x1x16x32xf32> to vector<16x32xf32>
    %cst_103 = arith.constant dense<0.000000e+00> : vector<16x32xf32>
    %112 = tpu.matmul %111, %109, %cst_103 {dimension_numbers = #tpu.dot_dimension_numbers<[1], [0], [0], [1], [0, 0, 1, 1], [], []>} : vector<16x32xf32>, vector<32x32xf32>, vector<16x32xf32> -> vector<16x32xf32>
    %113 = arith.addf %106, %112 : vector<16x32xf32>
    %c2_104 = arith.constant 2 : index
    %c2_105 = arith.constant 2 : index
    %c0_106 = arith.constant 0 : index
    %c0_107 = arith.constant 0 : index
    %114 = vector.load %arg2[%c2_104, %c2_105, %c0_106, %c0_107] : memref<8x3x64x64xf32, #tpu.memory_space<vmem>>, vector<1x1x16x32xf32>
    %115 = vector.shape_cast %114 : vector<1x1x16x32xf32> to vector<16x32xf32>
    %cst_108 = arith.constant dense<0.000000e+00> : vector<32x32xf32>
    %116 = tpu.matmul %100, %115, %cst_108 {dimension_numbers = #tpu.dot_dimension_numbers<[1], [0], [0], [1], [0, 0, 1, 1], [], []>} : vector<32x16xf32>, vector<16x32xf32>, vector<32x32xf32> -> vector<32x32xf32>
    %c2_109 = arith.constant 2 : index
    %c2_110 = arith.constant 2 : index
    %c0_111 = arith.constant 0 : index
    %c0_112 = arith.constant 0 : index
    %117 = vector.load %arg1[%c2_109, %c2_110, %c0_111, %c0_112] : memref<8x3x128x128xf32, #tpu.memory_space<vmem>>, vector<1x1x16x32xf32>
    %118 = vector.shape_cast %117 : vector<1x1x16x32xf32> to vector<16x32xf32>
    %cst_113 = arith.constant dense<0.000000e+00> : vector<16x32xf32>
    %119 = tpu.matmul %118, %116, %cst_113 {dimension_numbers = #tpu.dot_dimension_numbers<[1], [0], [0], [1], [0, 0, 1, 1], [], []>} : vector<16x32xf32>, vector<32x32xf32>, vector<16x32xf32> -> vector<16x32xf32>
    %120 = arith.addf %113, %119 : vector<16x32xf32>
    %cst_114 = arith.constant dense<0.000000e+00> : vector<32xf32>
    %121 = vector.multi_reduction <add>, %120, %cst_114 [0] : vector<16x32xf32> to vector<32xf32>
    %122 = vector.shape_cast %121 : vector<32xf32> to vector<1x32xf32>
    %123 = arith.mulf %120, %120 : vector<16x32xf32>
    %cst_115 = arith.constant dense<0.000000e+00> : vector<32xf32>
    %124 = vector.multi_reduction <add>, %123, %cst_115 [0] : vector<16x32xf32> to vector<32xf32>
    %125 = vector.shape_cast %124 : vector<32xf32> to vector<1x32xf32>
    %cst_116 = arith.constant 6.250000e-02 : f32
    %126 = vector.broadcast %cst_116 : f32 to vector<1x32xf32>
    %127 = arith.mulf %122, %126 : vector<1x32xf32>
    %cst_117 = arith.constant 6.250000e-02 : f32
    %128 = vector.broadcast %cst_117 : f32 to vector<1x32xf32>
    %129 = arith.mulf %125, %128 : vector<1x32xf32>
    %130 = arith.mulf %127, %127 : vector<1x32xf32>
    %131 = arith.subf %129, %130 : vector<1x32xf32>
    %cst_118 = arith.constant 0.000000e+00 : f32
    %132 = vector.broadcast %cst_118 : f32 to vector<1x32xf32>
    %133 = arith.maximumf %131, %132 : vector<1x32xf32>
    %c2_119 = arith.constant 2 : index
    %c0_120 = arith.constant 0 : index
    %c0_121 = arith.constant 0 : index
    %134 = vector.load %arg3[%c2_119, %c0_120, %c0_121] : memref<8x2x64xf32, #tpu.memory_space<vmem>>, vector<1x1x32xf32>
    %135 = vector.shape_cast %134 : vector<1x1x32xf32> to vector<1x32xf32>
    %136 = vector.broadcast %127 : vector<1x32xf32> to vector<16x32xf32>
    %137 = arith.subf %120, %136 : vector<16x32xf32>
    %138 = vector.broadcast %135 : vector<1x32xf32> to vector<16x32xf32>
    %139 = arith.mulf %138, %137 : vector<16x32xf32>
    %cst_122 = arith.constant 9.99999974E-6 : f32
    %140 = vector.broadcast %cst_122 : f32 to vector<1x32xf32>
    %141 = arith.addf %133, %140 : vector<1x32xf32>
    %142 = math.rsqrt %141 : vector<1x32xf32>
    %143 = vector.broadcast %142 : vector<1x32xf32> to vector<16x32xf32>
    %144 = arith.mulf %139, %143 : vector<16x32xf32>
    %c2_123 = arith.constant 2 : index
    %c1_124 = arith.constant 1 : index
    %c0_125 = arith.constant 0 : index
    %145 = vector.load %arg3[%c2_123, %c1_124, %c0_125] : memref<8x2x64xf32, #tpu.memory_space<vmem>>, vector<1x1x32xf32>
    %146 = vector.shape_cast %145 : vector<1x1x32xf32> to vector<1x32xf32>
    %147 = vector.broadcast %146 : vector<1x32xf32> to vector<16x32xf32>
    %148 = arith.addf %144, %147 : vector<16x32xf32>
    %cst_126 = arith.constant 0.000000e+00 : f32
    %149 = vector.broadcast %cst_126 : f32 to vector<16x32xf32>
    %150 = arith.maximumf %148, %149 : vector<16x32xf32>
    %c3 = arith.constant 3 : index
    %c0_127 = arith.constant 0 : index
    %c0_128 = arith.constant 0 : index
    %c0_129 = arith.constant 0 : index
    %151 = vector.load %arg2[%c3, %c0_127, %c0_128, %c0_129] : memref<8x3x64x64xf32, #tpu.memory_space<vmem>>, vector<1x1x32x64xf32>
    %152 = vector.shape_cast %151 : vector<1x1x32x64xf32> to vector<32x64xf32>
    %cst_130 = arith.constant dense<0.000000e+00> : vector<16x64xf32>
    %153 = tpu.matmul %150, %152, %cst_130 {dimension_numbers = #tpu.dot_dimension_numbers<[1], [0], [0], [1], [0, 0, 1, 1], [], []>} : vector<16x32xf32>, vector<32x64xf32>, vector<16x64xf32> -> vector<16x64xf32>
    %c3_131 = arith.constant 3 : index
    %c0_132 = arith.constant 0 : index
    %c0_133 = arith.constant 0 : index
    %c0_134 = arith.constant 0 : index
    %154 = vector.load %arg1[%c3_131, %c0_132, %c0_133, %c0_134] : memref<8x3x128x128xf32, #tpu.memory_space<vmem>>, vector<1x1x8x16xf32>
    %155 = vector.shape_cast %154 : vector<1x1x8x16xf32> to vector<8x16xf32>
    %cst_135 = arith.constant dense<0.000000e+00> : vector<8x64xf32>
    %156 = tpu.matmul %155, %153, %cst_135 {dimension_numbers = #tpu.dot_dimension_numbers<[1], [0], [0], [1], [0, 0, 1, 1], [], []>} : vector<8x16xf32>, vector<16x64xf32>, vector<8x64xf32> -> vector<8x64xf32>
    %c3_136 = arith.constant 3 : index
    %c1_137 = arith.constant 1 : index
    %c0_138 = arith.constant 0 : index
    %c0_139 = arith.constant 0 : index
    %157 = vector.load %arg2[%c3_136, %c1_137, %c0_138, %c0_139] : memref<8x3x64x64xf32, #tpu.memory_space<vmem>>, vector<1x1x32x64xf32>
    %158 = vector.shape_cast %157 : vector<1x1x32x64xf32> to vector<32x64xf32>
    %cst_140 = arith.constant dense<0.000000e+00> : vector<16x64xf32>
    %159 = tpu.matmul %150, %158, %cst_140 {dimension_numbers = #tpu.dot_dimension_numbers<[1], [0], [0], [1], [0, 0, 1, 1], [], []>} : vector<16x32xf32>, vector<32x64xf32>, vector<16x64xf32> -> vector<16x64xf32>
    %c3_141 = arith.constant 3 : index
    %c1_142 = arith.constant 1 : index
    %c0_143 = arith.constant 0 : index
    %c0_144 = arith.constant 0 : index
    %160 = vector.load %arg1[%c3_141, %c1_142, %c0_143, %c0_144] : memref<8x3x128x128xf32, #tpu.memory_space<vmem>>, vector<1x1x8x16xf32>
    %161 = vector.shape_cast %160 : vector<1x1x8x16xf32> to vector<8x16xf32>
    %cst_145 = arith.constant dense<0.000000e+00> : vector<8x64xf32>
    %162 = tpu.matmul %161, %159, %cst_145 {dimension_numbers = #tpu.dot_dimension_numbers<[1], [0], [0], [1], [0, 0, 1, 1], [], []>} : vector<8x16xf32>, vector<16x64xf32>, vector<8x64xf32> -> vector<8x64xf32>
    %163 = arith.addf %156, %162 : vector<8x64xf32>
    %c3_146 = arith.constant 3 : index
    %c2_147 = arith.constant 2 : index
    %c0_148 = arith.constant 0 : index
    %c0_149 = arith.constant 0 : index
    %164 = vector.load %arg2[%c3_146, %c2_147, %c0_148, %c0_149] : memref<8x3x64x64xf32, #tpu.memory_space<vmem>>, vector<1x1x32x64xf32>
    %165 = vector.shape_cast %164 : vector<1x1x32x64xf32> to vector<32x64xf32>
    %cst_150 = arith.constant dense<0.000000e+00> : vector<16x64xf32>
    %166 = tpu.matmul %150, %165, %cst_150 {dimension_numbers = #tpu.dot_dimension_numbers<[1], [0], [0], [1], [0, 0, 1, 1], [], []>} : vector<16x32xf32>, vector<32x64xf32>, vector<16x64xf32> -> vector<16x64xf32>
    %c3_151 = arith.constant 3 : index
    %c2_152 = arith.constant 2 : index
    %c0_153 = arith.constant 0 : index
    %c0_154 = arith.constant 0 : index
    %167 = vector.load %arg1[%c3_151, %c2_152, %c0_153, %c0_154] : memref<8x3x128x128xf32, #tpu.memory_space<vmem>>, vector<1x1x8x16xf32>
    %168 = vector.shape_cast %167 : vector<1x1x8x16xf32> to vector<8x16xf32>
    %cst_155 = arith.constant dense<0.000000e+00> : vector<8x64xf32>
    %169 = tpu.matmul %168, %166, %cst_155 {dimension_numbers = #tpu.dot_dimension_numbers<[1], [0], [0], [1], [0, 0, 1, 1], [], []>} : vector<8x16xf32>, vector<16x64xf32>, vector<8x64xf32> -> vector<8x64xf32>
    %170 = arith.addf %163, %169 : vector<8x64xf32>
    %cst_156 = arith.constant dense<0.000000e+00> : vector<64xf32>
    %171 = vector.multi_reduction <add>, %170, %cst_156 [0] : vector<8x64xf32> to vector<64xf32>
    %172 = vector.shape_cast %171 : vector<64xf32> to vector<1x64xf32>
    %173 = arith.mulf %170, %170 : vector<8x64xf32>
    %cst_157 = arith.constant dense<0.000000e+00> : vector<64xf32>
    %174 = vector.multi_reduction <add>, %173, %cst_157 [0] : vector<8x64xf32> to vector<64xf32>
    %175 = vector.shape_cast %174 : vector<64xf32> to vector<1x64xf32>
    %cst_158 = arith.constant 1.250000e-01 : f32
    %176 = vector.broadcast %cst_158 : f32 to vector<1x64xf32>
    %177 = arith.mulf %172, %176 : vector<1x64xf32>
    %cst_159 = arith.constant 1.250000e-01 : f32
    %178 = vector.broadcast %cst_159 : f32 to vector<1x64xf32>
    %179 = arith.mulf %175, %178 : vector<1x64xf32>
    %180 = arith.mulf %177, %177 : vector<1x64xf32>
    %181 = arith.subf %179, %180 : vector<1x64xf32>
    %cst_160 = arith.constant 0.000000e+00 : f32
    %182 = vector.broadcast %cst_160 : f32 to vector<1x64xf32>
    %183 = arith.maximumf %181, %182 : vector<1x64xf32>
    %c3_161 = arith.constant 3 : index
    %c0_162 = arith.constant 0 : index
    %c0_163 = arith.constant 0 : index
    %184 = vector.load %arg3[%c3_161, %c0_162, %c0_163] : memref<8x2x64xf32, #tpu.memory_space<vmem>>, vector<1x1x64xf32>
    %185 = vector.shape_cast %184 : vector<1x1x64xf32> to vector<1x64xf32>
    %186 = vector.broadcast %177 : vector<1x64xf32> to vector<8x64xf32>
    %187 = arith.subf %170, %186 : vector<8x64xf32>
    %188 = vector.broadcast %185 : vector<1x64xf32> to vector<8x64xf32>
    %189 = arith.mulf %188, %187 : vector<8x64xf32>
    %cst_164 = arith.constant 9.99999974E-6 : f32
    %190 = vector.broadcast %cst_164 : f32 to vector<1x64xf32>
    %191 = arith.addf %183, %190 : vector<1x64xf32>
    %192 = math.rsqrt %191 : vector<1x64xf32>
    %193 = vector.broadcast %192 : vector<1x64xf32> to vector<8x64xf32>
    %194 = arith.mulf %189, %193 : vector<8x64xf32>
    %c3_165 = arith.constant 3 : index
    %c1_166 = arith.constant 1 : index
    %c0_167 = arith.constant 0 : index
    %195 = vector.load %arg3[%c3_165, %c1_166, %c0_167] : memref<8x2x64xf32, #tpu.memory_space<vmem>>, vector<1x1x64xf32>
    %196 = vector.shape_cast %195 : vector<1x1x64xf32> to vector<1x64xf32>
    %197 = vector.broadcast %196 : vector<1x64xf32> to vector<8x64xf32>
    %198 = arith.addf %194, %197 : vector<8x64xf32>
    %cst_168 = arith.constant 0.000000e+00 : f32
    %199 = vector.broadcast %cst_168 : f32 to vector<8x64xf32>
    %200 = arith.maximumf %198, %199 : vector<8x64xf32>
    %c4 = arith.constant 4 : index
    %c0_169 = arith.constant 0 : index
    %c0_170 = arith.constant 0 : index
    %c0_171 = arith.constant 0 : index
    %201 = vector.load %arg2[%c4, %c0_169, %c0_170, %c0_171] : memref<8x3x64x64xf32, #tpu.memory_space<vmem>>, vector<1x1x64x32xf32>
    %202 = vector.shape_cast %201 : vector<1x1x64x32xf32> to vector<64x32xf32>
    %cst_172 = arith.constant dense<0.000000e+00> : vector<8x32xf32>
    %203 = tpu.matmul %200, %202, %cst_172 {dimension_numbers = #tpu.dot_dimension_numbers<[1], [0], [0], [1], [0, 0, 1, 1], [], []>} : vector<8x64xf32>, vector<64x32xf32>, vector<8x32xf32> -> vector<8x32xf32>
    %c4_173 = arith.constant 4 : index
    %c0_174 = arith.constant 0 : index
    %c0_175 = arith.constant 0 : index
    %c0_176 = arith.constant 0 : index
    %204 = vector.load %arg1[%c4_173, %c0_174, %c0_175, %c0_176] : memref<8x3x128x128xf32, #tpu.memory_space<vmem>>, vector<1x1x16x8xf32>
    %205 = vector.shape_cast %204 : vector<1x1x16x8xf32> to vector<16x8xf32>
    %cst_177 = arith.constant dense<0.000000e+00> : vector<16x32xf32>
    %206 = tpu.matmul %205, %203, %cst_177 {dimension_numbers = #tpu.dot_dimension_numbers<[1], [0], [0], [1], [0, 0, 1, 1], [], []>} : vector<16x8xf32>, vector<8x32xf32>, vector<16x32xf32> -> vector<16x32xf32>
    %c4_178 = arith.constant 4 : index
    %c1_179 = arith.constant 1 : index
    %c0_180 = arith.constant 0 : index
    %c0_181 = arith.constant 0 : index
    %207 = vector.load %arg2[%c4_178, %c1_179, %c0_180, %c0_181] : memref<8x3x64x64xf32, #tpu.memory_space<vmem>>, vector<1x1x64x32xf32>
    %208 = vector.shape_cast %207 : vector<1x1x64x32xf32> to vector<64x32xf32>
    %cst_182 = arith.constant dense<0.000000e+00> : vector<8x32xf32>
    %209 = tpu.matmul %200, %208, %cst_182 {dimension_numbers = #tpu.dot_dimension_numbers<[1], [0], [0], [1], [0, 0, 1, 1], [], []>} : vector<8x64xf32>, vector<64x32xf32>, vector<8x32xf32> -> vector<8x32xf32>
    %c4_183 = arith.constant 4 : index
    %c1_184 = arith.constant 1 : index
    %c0_185 = arith.constant 0 : index
    %c0_186 = arith.constant 0 : index
    %210 = vector.load %arg1[%c4_183, %c1_184, %c0_185, %c0_186] : memref<8x3x128x128xf32, #tpu.memory_space<vmem>>, vector<1x1x16x8xf32>
    %211 = vector.shape_cast %210 : vector<1x1x16x8xf32> to vector<16x8xf32>
    %cst_187 = arith.constant dense<0.000000e+00> : vector<16x32xf32>
    %212 = tpu.matmul %211, %209, %cst_187 {dimension_numbers = #tpu.dot_dimension_numbers<[1], [0], [0], [1], [0, 0, 1, 1], [], []>} : vector<16x8xf32>, vector<8x32xf32>, vector<16x32xf32> -> vector<16x32xf32>
    %213 = arith.addf %206, %212 : vector<16x32xf32>
    %c4_188 = arith.constant 4 : index
    %c2_189 = arith.constant 2 : index
    %c0_190 = arith.constant 0 : index
    %c0_191 = arith.constant 0 : index
    %214 = vector.load %arg2[%c4_188, %c2_189, %c0_190, %c0_191] : memref<8x3x64x64xf32, #tpu.memory_space<vmem>>, vector<1x1x64x32xf32>
    %215 = vector.shape_cast %214 : vector<1x1x64x32xf32> to vector<64x32xf32>
    %cst_192 = arith.constant dense<0.000000e+00> : vector<8x32xf32>
    %216 = tpu.matmul %200, %215, %cst_192 {dimension_numbers = #tpu.dot_dimension_numbers<[1], [0], [0], [1], [0, 0, 1, 1], [], []>} : vector<8x64xf32>, vector<64x32xf32>, vector<8x32xf32> -> vector<8x32xf32>
    %c4_193 = arith.constant 4 : index
    %c2_194 = arith.constant 2 : index
    %c0_195 = arith.constant 0 : index
    %c0_196 = arith.constant 0 : index
    %217 = vector.load %arg1[%c4_193, %c2_194, %c0_195, %c0_196] : memref<8x3x128x128xf32, #tpu.memory_space<vmem>>, vector<1x1x16x8xf32>
    %218 = vector.shape_cast %217 : vector<1x1x16x8xf32> to vector<16x8xf32>
    %cst_197 = arith.constant dense<0.000000e+00> : vector<16x32xf32>
    %219 = tpu.matmul %218, %216, %cst_197 {dimension_numbers = #tpu.dot_dimension_numbers<[1], [0], [0], [1], [0, 0, 1, 1], [], []>} : vector<16x8xf32>, vector<8x32xf32>, vector<16x32xf32> -> vector<16x32xf32>
    %220 = arith.addf %213, %219 : vector<16x32xf32>
    %cst_198 = arith.constant dense<0.000000e+00> : vector<32xf32>
    %221 = vector.multi_reduction <add>, %220, %cst_198 [0] : vector<16x32xf32> to vector<32xf32>
    %222 = vector.shape_cast %221 : vector<32xf32> to vector<1x32xf32>
    %223 = arith.mulf %220, %220 : vector<16x32xf32>
    %cst_199 = arith.constant dense<0.000000e+00> : vector<32xf32>
    %224 = vector.multi_reduction <add>, %223, %cst_199 [0] : vector<16x32xf32> to vector<32xf32>
    %225 = vector.shape_cast %224 : vector<32xf32> to vector<1x32xf32>
    %cst_200 = arith.constant 6.250000e-02 : f32
    %226 = vector.broadcast %cst_200 : f32 to vector<1x32xf32>
    %227 = arith.mulf %222, %226 : vector<1x32xf32>
    %cst_201 = arith.constant 6.250000e-02 : f32
    %228 = vector.broadcast %cst_201 : f32 to vector<1x32xf32>
    %229 = arith.mulf %225, %228 : vector<1x32xf32>
    %230 = arith.mulf %227, %227 : vector<1x32xf32>
    %231 = arith.subf %229, %230 : vector<1x32xf32>
    %cst_202 = arith.constant 0.000000e+00 : f32
    %232 = vector.broadcast %cst_202 : f32 to vector<1x32xf32>
    %233 = arith.maximumf %231, %232 : vector<1x32xf32>
    %c4_203 = arith.constant 4 : index
    %c0_204 = arith.constant 0 : index
    %c0_205 = arith.constant 0 : index
    %234 = vector.load %arg3[%c4_203, %c0_204, %c0_205] : memref<8x2x64xf32, #tpu.memory_space<vmem>>, vector<1x1x32xf32>
    %235 = vector.shape_cast %234 : vector<1x1x32xf32> to vector<1x32xf32>
    %236 = vector.broadcast %227 : vector<1x32xf32> to vector<16x32xf32>
    %237 = arith.subf %220, %236 : vector<16x32xf32>
    %238 = vector.broadcast %235 : vector<1x32xf32> to vector<16x32xf32>
    %239 = arith.mulf %238, %237 : vector<16x32xf32>
    %cst_206 = arith.constant 9.99999974E-6 : f32
    %240 = vector.broadcast %cst_206 : f32 to vector<1x32xf32>
    %241 = arith.addf %233, %240 : vector<1x32xf32>
    %242 = math.rsqrt %241 : vector<1x32xf32>
    %243 = vector.broadcast %242 : vector<1x32xf32> to vector<16x32xf32>
    %244 = arith.mulf %239, %243 : vector<16x32xf32>
    %c4_207 = arith.constant 4 : index
    %c1_208 = arith.constant 1 : index
    %c0_209 = arith.constant 0 : index
    %245 = vector.load %arg3[%c4_207, %c1_208, %c0_209] : memref<8x2x64xf32, #tpu.memory_space<vmem>>, vector<1x1x32xf32>
    %246 = vector.shape_cast %245 : vector<1x1x32xf32> to vector<1x32xf32>
    %247 = vector.broadcast %246 : vector<1x32xf32> to vector<16x32xf32>
    %248 = arith.addf %244, %247 : vector<16x32xf32>
    %cst_210 = arith.constant 0.000000e+00 : f32
    %249 = vector.broadcast %cst_210 : f32 to vector<16x32xf32>
    %250 = arith.maximumf %248, %249 : vector<16x32xf32>
    %c5 = arith.constant 5 : index
    %c0_211 = arith.constant 0 : index
    %c0_212 = arith.constant 0 : index
    %c0_213 = arith.constant 0 : index
    %251 = vector.load %arg2[%c5, %c0_211, %c0_212, %c0_213] : memref<8x3x64x64xf32, #tpu.memory_space<vmem>>, vector<1x1x32x16xf32>
    %252 = vector.shape_cast %251 : vector<1x1x32x16xf32> to vector<32x16xf32>
    %cst_214 = arith.constant dense<0.000000e+00> : vector<16x16xf32>
    %253 = tpu.matmul %250, %252, %cst_214 {dimension_numbers = #tpu.dot_dimension_numbers<[1], [0], [0], [1], [0, 0, 1, 1], [], []>} : vector<16x32xf32>, vector<32x16xf32>, vector<16x16xf32> -> vector<16x16xf32>
    %c5_215 = arith.constant 5 : index
    %c0_216 = arith.constant 0 : index
    %c32 = arith.constant 32 : index
    %c0_217 = arith.constant 0 : index
    %254 = vector.load %arg2[%c5_215, %c0_216, %c32, %c0_217] : memref<8x3x64x64xf32, #tpu.memory_space<vmem>>, vector<1x1x32x16xf32>
    %255 = vector.shape_cast %254 : vector<1x1x32x16xf32> to vector<32x16xf32>
    %cst_218 = arith.constant dense<0.000000e+00> : vector<16x16xf32>
    %256 = tpu.matmul %150, %255, %cst_218 {dimension_numbers = #tpu.dot_dimension_numbers<[1], [0], [0], [1], [0, 0, 1, 1], [], []>} : vector<16x32xf32>, vector<32x16xf32>, vector<16x16xf32> -> vector<16x16xf32>
    %257 = arith.addf %253, %256 : vector<16x16xf32>
    %c5_219 = arith.constant 5 : index
    %c0_220 = arith.constant 0 : index
    %c0_221 = arith.constant 0 : index
    %c0_222 = arith.constant 0 : index
    %258 = vector.load %arg1[%c5_219, %c0_220, %c0_221, %c0_222] : memref<8x3x128x128xf32, #tpu.memory_space<vmem>>, vector<1x1x32x16xf32>
    %259 = vector.shape_cast %258 : vector<1x1x32x16xf32> to vector<32x16xf32>
    %cst_223 = arith.constant dense<0.000000e+00> : vector<32x16xf32>
    %260 = tpu.matmul %259, %257, %cst_223 {dimension_numbers = #tpu.dot_dimension_numbers<[1], [0], [0], [1], [0, 0, 1, 1], [], []>} : vector<32x16xf32>, vector<16x16xf32>, vector<32x16xf32> -> vector<32x16xf32>
    %c5_224 = arith.constant 5 : index
    %c1_225 = arith.constant 1 : index
    %c0_226 = arith.constant 0 : index
    %c0_227 = arith.constant 0 : index
    %261 = vector.load %arg2[%c5_224, %c1_225, %c0_226, %c0_227] : memref<8x3x64x64xf32, #tpu.memory_space<vmem>>, vector<1x1x32x16xf32>
    %262 = vector.shape_cast %261 : vector<1x1x32x16xf32> to vector<32x16xf32>
    %cst_228 = arith.constant dense<0.000000e+00> : vector<16x16xf32>
    %263 = tpu.matmul %250, %262, %cst_228 {dimension_numbers = #tpu.dot_dimension_numbers<[1], [0], [0], [1], [0, 0, 1, 1], [], []>} : vector<16x32xf32>, vector<32x16xf32>, vector<16x16xf32> -> vector<16x16xf32>
    %c5_229 = arith.constant 5 : index
    %c1_230 = arith.constant 1 : index
    %c32_231 = arith.constant 32 : index
    %c0_232 = arith.constant 0 : index
    %264 = vector.load %arg2[%c5_229, %c1_230, %c32_231, %c0_232] : memref<8x3x64x64xf32, #tpu.memory_space<vmem>>, vector<1x1x32x16xf32>
    %265 = vector.shape_cast %264 : vector<1x1x32x16xf32> to vector<32x16xf32>
    %cst_233 = arith.constant dense<0.000000e+00> : vector<16x16xf32>
    %266 = tpu.matmul %150, %265, %cst_233 {dimension_numbers = #tpu.dot_dimension_numbers<[1], [0], [0], [1], [0, 0, 1, 1], [], []>} : vector<16x32xf32>, vector<32x16xf32>, vector<16x16xf32> -> vector<16x16xf32>
    %267 = arith.addf %263, %266 : vector<16x16xf32>
    %c5_234 = arith.constant 5 : index
    %c1_235 = arith.constant 1 : index
    %c0_236 = arith.constant 0 : index
    %c0_237 = arith.constant 0 : index
    %268 = vector.load %arg1[%c5_234, %c1_235, %c0_236, %c0_237] : memref<8x3x128x128xf32, #tpu.memory_space<vmem>>, vector<1x1x32x16xf32>
    %269 = vector.shape_cast %268 : vector<1x1x32x16xf32> to vector<32x16xf32>
    %cst_238 = arith.constant dense<0.000000e+00> : vector<32x16xf32>
    %270 = tpu.matmul %269, %267, %cst_238 {dimension_numbers = #tpu.dot_dimension_numbers<[1], [0], [0], [1], [0, 0, 1, 1], [], []>} : vector<32x16xf32>, vector<16x16xf32>, vector<32x16xf32> -> vector<32x16xf32>
    %271 = arith.addf %260, %270 : vector<32x16xf32>
    %c5_239 = arith.constant 5 : index
    %c2_240 = arith.constant 2 : index
    %c0_241 = arith.constant 0 : index
    %c0_242 = arith.constant 0 : index
    %272 = vector.load %arg2[%c5_239, %c2_240, %c0_241, %c0_242] : memref<8x3x64x64xf32, #tpu.memory_space<vmem>>, vector<1x1x32x16xf32>
    %273 = vector.shape_cast %272 : vector<1x1x32x16xf32> to vector<32x16xf32>
    %cst_243 = arith.constant dense<0.000000e+00> : vector<16x16xf32>
    %274 = tpu.matmul %250, %273, %cst_243 {dimension_numbers = #tpu.dot_dimension_numbers<[1], [0], [0], [1], [0, 0, 1, 1], [], []>} : vector<16x32xf32>, vector<32x16xf32>, vector<16x16xf32> -> vector<16x16xf32>
    %c5_244 = arith.constant 5 : index
    %c2_245 = arith.constant 2 : index
    %c32_246 = arith.constant 32 : index
    %c0_247 = arith.constant 0 : index
    %275 = vector.load %arg2[%c5_244, %c2_245, %c32_246, %c0_247] : memref<8x3x64x64xf32, #tpu.memory_space<vmem>>, vector<1x1x32x16xf32>
    %276 = vector.shape_cast %275 : vector<1x1x32x16xf32> to vector<32x16xf32>
    %cst_248 = arith.constant dense<0.000000e+00> : vector<16x16xf32>
    %277 = tpu.matmul %150, %276, %cst_248 {dimension_numbers = #tpu.dot_dimension_numbers<[1], [0], [0], [1], [0, 0, 1, 1], [], []>} : vector<16x32xf32>, vector<32x16xf32>, vector<16x16xf32> -> vector<16x16xf32>
    %278 = arith.addf %274, %277 : vector<16x16xf32>
    %c5_249 = arith.constant 5 : index
    %c2_250 = arith.constant 2 : index
    %c0_251 = arith.constant 0 : index
    %c0_252 = arith.constant 0 : index
    %279 = vector.load %arg1[%c5_249, %c2_250, %c0_251, %c0_252] : memref<8x3x128x128xf32, #tpu.memory_space<vmem>>, vector<1x1x32x16xf32>
    %280 = vector.shape_cast %279 : vector<1x1x32x16xf32> to vector<32x16xf32>
    %cst_253 = arith.constant dense<0.000000e+00> : vector<32x16xf32>
    %281 = tpu.matmul %280, %278, %cst_253 {dimension_numbers = #tpu.dot_dimension_numbers<[1], [0], [0], [1], [0, 0, 1, 1], [], []>} : vector<32x16xf32>, vector<16x16xf32>, vector<32x16xf32> -> vector<32x16xf32>
    %282 = arith.addf %271, %281 : vector<32x16xf32>
    %cst_254 = arith.constant dense<0.000000e+00> : vector<16xf32>
    %283 = vector.multi_reduction <add>, %282, %cst_254 [0] : vector<32x16xf32> to vector<16xf32>
    %284 = vector.shape_cast %283 : vector<16xf32> to vector<1x16xf32>
    %285 = arith.mulf %282, %282 : vector<32x16xf32>
    %cst_255 = arith.constant dense<0.000000e+00> : vector<16xf32>
    %286 = vector.multi_reduction <add>, %285, %cst_255 [0] : vector<32x16xf32> to vector<16xf32>
    %287 = vector.shape_cast %286 : vector<16xf32> to vector<1x16xf32>
    %cst_256 = arith.constant 3.125000e-02 : f32
    %288 = vector.broadcast %cst_256 : f32 to vector<1x16xf32>
    %289 = arith.mulf %284, %288 : vector<1x16xf32>
    %cst_257 = arith.constant 3.125000e-02 : f32
    %290 = vector.broadcast %cst_257 : f32 to vector<1x16xf32>
    %291 = arith.mulf %287, %290 : vector<1x16xf32>
    %292 = arith.mulf %289, %289 : vector<1x16xf32>
    %293 = arith.subf %291, %292 : vector<1x16xf32>
    %cst_258 = arith.constant 0.000000e+00 : f32
    %294 = vector.broadcast %cst_258 : f32 to vector<1x16xf32>
    %295 = arith.maximumf %293, %294 : vector<1x16xf32>
    %c5_259 = arith.constant 5 : index
    %c0_260 = arith.constant 0 : index
    %c0_261 = arith.constant 0 : index
    %296 = vector.load %arg3[%c5_259, %c0_260, %c0_261] : memref<8x2x64xf32, #tpu.memory_space<vmem>>, vector<1x1x16xf32>
    %297 = vector.shape_cast %296 : vector<1x1x16xf32> to vector<1x16xf32>
    %298 = vector.broadcast %289 : vector<1x16xf32> to vector<32x16xf32>
    %299 = arith.subf %282, %298 : vector<32x16xf32>
    %300 = vector.broadcast %297 : vector<1x16xf32> to vector<32x16xf32>
    %301 = arith.mulf %300, %299 : vector<32x16xf32>
    %cst_262 = arith.constant 9.99999974E-6 : f32
    %302 = vector.broadcast %cst_262 : f32 to vector<1x16xf32>
    %303 = arith.addf %295, %302 : vector<1x16xf32>
    %304 = math.rsqrt %303 : vector<1x16xf32>
    %305 = vector.broadcast %304 : vector<1x16xf32> to vector<32x16xf32>
    %306 = arith.mulf %301, %305 : vector<32x16xf32>
    %c5_263 = arith.constant 5 : index
    %c1_264 = arith.constant 1 : index
    %c0_265 = arith.constant 0 : index
    %307 = vector.load %arg3[%c5_263, %c1_264, %c0_265] : memref<8x2x64xf32, #tpu.memory_space<vmem>>, vector<1x1x16xf32>
    %308 = vector.shape_cast %307 : vector<1x1x16xf32> to vector<1x16xf32>
    %309 = vector.broadcast %308 : vector<1x16xf32> to vector<32x16xf32>
    %310 = arith.addf %306, %309 : vector<32x16xf32>
    %cst_266 = arith.constant 0.000000e+00 : f32
    %311 = vector.broadcast %cst_266 : f32 to vector<32x16xf32>
    %312 = arith.maximumf %310, %311 : vector<32x16xf32>
    %c6 = arith.constant 6 : index
    %c0_267 = arith.constant 0 : index
    %c0_268 = arith.constant 0 : index
    %c0_269 = arith.constant 0 : index
    %313 = vector.load %arg2[%c6, %c0_267, %c0_268, %c0_269] : memref<8x3x64x64xf32, #tpu.memory_space<vmem>>, vector<1x1x16x8xf32>
    %314 = vector.shape_cast %313 : vector<1x1x16x8xf32> to vector<16x8xf32>
    %cst_270 = arith.constant dense<0.000000e+00> : vector<32x8xf32>
    %315 = tpu.matmul %312, %314, %cst_270 {dimension_numbers = #tpu.dot_dimension_numbers<[1], [0], [0], [1], [0, 0, 1, 1], [], []>} : vector<32x16xf32>, vector<16x8xf32>, vector<32x8xf32> -> vector<32x8xf32>
    %c6_271 = arith.constant 6 : index
    %c0_272 = arith.constant 0 : index
    %c16 = arith.constant 16 : index
    %c0_273 = arith.constant 0 : index
    %316 = vector.load %arg2[%c6_271, %c0_272, %c16, %c0_273] : memref<8x3x64x64xf32, #tpu.memory_space<vmem>>, vector<1x1x16x8xf32>
    %317 = vector.shape_cast %316 : vector<1x1x16x8xf32> to vector<16x8xf32>
    %cst_274 = arith.constant dense<0.000000e+00> : vector<32x8xf32>
    %318 = tpu.matmul %100, %317, %cst_274 {dimension_numbers = #tpu.dot_dimension_numbers<[1], [0], [0], [1], [0, 0, 1, 1], [], []>} : vector<32x16xf32>, vector<16x8xf32>, vector<32x8xf32> -> vector<32x8xf32>
    %319 = arith.addf %315, %318 : vector<32x8xf32>
    %c6_275 = arith.constant 6 : index
    %c0_276 = arith.constant 0 : index
    %c0_277 = arith.constant 0 : index
    %c0_278 = arith.constant 0 : index
    %320 = vector.load %arg1[%c6_275, %c0_276, %c0_277, %c0_278] : memref<8x3x128x128xf32, #tpu.memory_space<vmem>>, vector<1x1x64x32xf32>
    %321 = vector.shape_cast %320 : vector<1x1x64x32xf32> to vector<64x32xf32>
    %cst_279 = arith.constant dense<0.000000e+00> : vector<64x8xf32>
    %322 = tpu.matmul %321, %319, %cst_279 {dimension_numbers = #tpu.dot_dimension_numbers<[1], [0], [0], [1], [0, 0, 1, 1], [], []>} : vector<64x32xf32>, vector<32x8xf32>, vector<64x8xf32> -> vector<64x8xf32>
    %c6_280 = arith.constant 6 : index
    %c1_281 = arith.constant 1 : index
    %c0_282 = arith.constant 0 : index
    %c0_283 = arith.constant 0 : index
    %323 = vector.load %arg2[%c6_280, %c1_281, %c0_282, %c0_283] : memref<8x3x64x64xf32, #tpu.memory_space<vmem>>, vector<1x1x16x8xf32>
    %324 = vector.shape_cast %323 : vector<1x1x16x8xf32> to vector<16x8xf32>
    %cst_284 = arith.constant dense<0.000000e+00> : vector<32x8xf32>
    %325 = tpu.matmul %312, %324, %cst_284 {dimension_numbers = #tpu.dot_dimension_numbers<[1], [0], [0], [1], [0, 0, 1, 1], [], []>} : vector<32x16xf32>, vector<16x8xf32>, vector<32x8xf32> -> vector<32x8xf32>
    %c6_285 = arith.constant 6 : index
    %c1_286 = arith.constant 1 : index
    %c16_287 = arith.constant 16 : index
    %c0_288 = arith.constant 0 : index
    %326 = vector.load %arg2[%c6_285, %c1_286, %c16_287, %c0_288] : memref<8x3x64x64xf32, #tpu.memory_space<vmem>>, vector<1x1x16x8xf32>
    %327 = vector.shape_cast %326 : vector<1x1x16x8xf32> to vector<16x8xf32>
    %cst_289 = arith.constant dense<0.000000e+00> : vector<32x8xf32>
    %328 = tpu.matmul %100, %327, %cst_289 {dimension_numbers = #tpu.dot_dimension_numbers<[1], [0], [0], [1], [0, 0, 1, 1], [], []>} : vector<32x16xf32>, vector<16x8xf32>, vector<32x8xf32> -> vector<32x8xf32>
    %329 = arith.addf %325, %328 : vector<32x8xf32>
    %c6_290 = arith.constant 6 : index
    %c1_291 = arith.constant 1 : index
    %c0_292 = arith.constant 0 : index
    %c0_293 = arith.constant 0 : index
    %330 = vector.load %arg1[%c6_290, %c1_291, %c0_292, %c0_293] : memref<8x3x128x128xf32, #tpu.memory_space<vmem>>, vector<1x1x64x32xf32>
    %331 = vector.shape_cast %330 : vector<1x1x64x32xf32> to vector<64x32xf32>
    %cst_294 = arith.constant dense<0.000000e+00> : vector<64x8xf32>
    %332 = tpu.matmul %331, %329, %cst_294 {dimension_numbers = #tpu.dot_dimension_numbers<[1], [0], [0], [1], [0, 0, 1, 1], [], []>} : vector<64x32xf32>, vector<32x8xf32>, vector<64x8xf32> -> vector<64x8xf32>
    %333 = arith.addf %322, %332 : vector<64x8xf32>
    %c6_295 = arith.constant 6 : index
    %c2_296 = arith.constant 2 : index
    %c0_297 = arith.constant 0 : index
    %c0_298 = arith.constant 0 : index
    %334 = vector.load %arg2[%c6_295, %c2_296, %c0_297, %c0_298] : memref<8x3x64x64xf32, #tpu.memory_space<vmem>>, vector<1x1x16x8xf32>
    %335 = vector.shape_cast %334 : vector<1x1x16x8xf32> to vector<16x8xf32>
    %cst_299 = arith.constant dense<0.000000e+00> : vector<32x8xf32>
    %336 = tpu.matmul %312, %335, %cst_299 {dimension_numbers = #tpu.dot_dimension_numbers<[1], [0], [0], [1], [0, 0, 1, 1], [], []>} : vector<32x16xf32>, vector<16x8xf32>, vector<32x8xf32> -> vector<32x8xf32>
    %c6_300 = arith.constant 6 : index
    %c2_301 = arith.constant 2 : index
    %c16_302 = arith.constant 16 : index
    %c0_303 = arith.constant 0 : index
    %337 = vector.load %arg2[%c6_300, %c2_301, %c16_302, %c0_303] : memref<8x3x64x64xf32, #tpu.memory_space<vmem>>, vector<1x1x16x8xf32>
    %338 = vector.shape_cast %337 : vector<1x1x16x8xf32> to vector<16x8xf32>
    %cst_304 = arith.constant dense<0.000000e+00> : vector<32x8xf32>
    %339 = tpu.matmul %100, %338, %cst_304 {dimension_numbers = #tpu.dot_dimension_numbers<[1], [0], [0], [1], [0, 0, 1, 1], [], []>} : vector<32x16xf32>, vector<16x8xf32>, vector<32x8xf32> -> vector<32x8xf32>
    %340 = arith.addf %336, %339 : vector<32x8xf32>
    %c6_305 = arith.constant 6 : index
    %c2_306 = arith.constant 2 : index
    %c0_307 = arith.constant 0 : index
    %c0_308 = arith.constant 0 : index
    %341 = vector.load %arg1[%c6_305, %c2_306, %c0_307, %c0_308] : memref<8x3x128x128xf32, #tpu.memory_space<vmem>>, vector<1x1x64x32xf32>
    %342 = vector.shape_cast %341 : vector<1x1x64x32xf32> to vector<64x32xf32>
    %cst_309 = arith.constant dense<0.000000e+00> : vector<64x8xf32>
    %343 = tpu.matmul %342, %340, %cst_309 {dimension_numbers = #tpu.dot_dimension_numbers<[1], [0], [0], [1], [0, 0, 1, 1], [], []>} : vector<64x32xf32>, vector<32x8xf32>, vector<64x8xf32> -> vector<64x8xf32>
    %344 = arith.addf %333, %343 : vector<64x8xf32>
    %cst_310 = arith.constant dense<0.000000e+00> : vector<8xf32>
    %345 = vector.multi_reduction <add>, %344, %cst_310 [0] : vector<64x8xf32> to vector<8xf32>
    %346 = vector.shape_cast %345 : vector<8xf32> to vector<1x8xf32>
    %347 = arith.mulf %344, %344 : vector<64x8xf32>
    %cst_311 = arith.constant dense<0.000000e+00> : vector<8xf32>
    %348 = vector.multi_reduction <add>, %347, %cst_311 [0] : vector<64x8xf32> to vector<8xf32>
    %349 = vector.shape_cast %348 : vector<8xf32> to vector<1x8xf32>
    %cst_312 = arith.constant 1.562500e-02 : f32
    %350 = vector.broadcast %cst_312 : f32 to vector<1x8xf32>
    %351 = arith.mulf %346, %350 : vector<1x8xf32>
    %cst_313 = arith.constant 1.562500e-02 : f32
    %352 = vector.broadcast %cst_313 : f32 to vector<1x8xf32>
    %353 = arith.mulf %349, %352 : vector<1x8xf32>
    %354 = arith.mulf %351, %351 : vector<1x8xf32>
    %355 = arith.subf %353, %354 : vector<1x8xf32>
    %cst_314 = arith.constant 0.000000e+00 : f32
    %356 = vector.broadcast %cst_314 : f32 to vector<1x8xf32>
    %357 = arith.maximumf %355, %356 : vector<1x8xf32>
    %c6_315 = arith.constant 6 : index
    %c0_316 = arith.constant 0 : index
    %c0_317 = arith.constant 0 : index
    %358 = vector.load %arg3[%c6_315, %c0_316, %c0_317] : memref<8x2x64xf32, #tpu.memory_space<vmem>>, vector<1x1x8xf32>
    %359 = vector.shape_cast %358 : vector<1x1x8xf32> to vector<1x8xf32>
    %360 = vector.broadcast %351 : vector<1x8xf32> to vector<64x8xf32>
    %361 = arith.subf %344, %360 : vector<64x8xf32>
    %362 = vector.broadcast %359 : vector<1x8xf32> to vector<64x8xf32>
    %363 = arith.mulf %362, %361 : vector<64x8xf32>
    %cst_318 = arith.constant 9.99999974E-6 : f32
    %364 = vector.broadcast %cst_318 : f32 to vector<1x8xf32>
    %365 = arith.addf %357, %364 : vector<1x8xf32>
    %366 = math.rsqrt %365 : vector<1x8xf32>
    %367 = vector.broadcast %366 : vector<1x8xf32> to vector<64x8xf32>
    %368 = arith.mulf %363, %367 : vector<64x8xf32>
    %c6_319 = arith.constant 6 : index
    %c1_320 = arith.constant 1 : index
    %c0_321 = arith.constant 0 : index
    %369 = vector.load %arg3[%c6_319, %c1_320, %c0_321] : memref<8x2x64xf32, #tpu.memory_space<vmem>>, vector<1x1x8xf32>
    %370 = vector.shape_cast %369 : vector<1x1x8xf32> to vector<1x8xf32>
    %371 = vector.broadcast %370 : vector<1x8xf32> to vector<64x8xf32>
    %372 = arith.addf %368, %371 : vector<64x8xf32>
    %cst_322 = arith.constant 0.000000e+00 : f32
    %373 = vector.broadcast %cst_322 : f32 to vector<64x8xf32>
    %374 = arith.maximumf %372, %373 : vector<64x8xf32>
    %c7 = arith.constant 7 : index
    %c0_323 = arith.constant 0 : index
    %c0_324 = arith.constant 0 : index
    %c0_325 = arith.constant 0 : index
    %375 = vector.load %arg2[%c7, %c0_323, %c0_324, %c0_325] : memref<8x3x64x64xf32, #tpu.memory_space<vmem>>, vector<1x1x8x4xf32>
    %376 = vector.shape_cast %375 : vector<1x1x8x4xf32> to vector<8x4xf32>
    %cst_326 = arith.constant dense<0.000000e+00> : vector<64x4xf32>
    %377 = tpu.matmul %374, %376, %cst_326 {dimension_numbers = #tpu.dot_dimension_numbers<[1], [0], [0], [1], [0, 0, 1, 1], [], []>} : vector<64x8xf32>, vector<8x4xf32>, vector<64x4xf32> -> vector<64x4xf32>
    %c7_327 = arith.constant 7 : index
    %c0_328 = arith.constant 0 : index
    %c8 = arith.constant 8 : index
    %c0_329 = arith.constant 0 : index
    %378 = vector.load %arg2[%c7_327, %c0_328, %c8, %c0_329] : memref<8x3x64x64xf32, #tpu.memory_space<vmem>>, vector<1x1x8x4xf32>
    %379 = vector.shape_cast %378 : vector<1x1x8x4xf32> to vector<8x4xf32>
    %cst_330 = arith.constant dense<0.000000e+00> : vector<64x4xf32>
    %380 = tpu.matmul %50, %379, %cst_330 {dimension_numbers = #tpu.dot_dimension_numbers<[1], [0], [0], [1], [0, 0, 1, 1], [], []>} : vector<64x8xf32>, vector<8x4xf32>, vector<64x4xf32> -> vector<64x4xf32>
    %381 = arith.addf %377, %380 : vector<64x4xf32>
    %c7_331 = arith.constant 7 : index
    %c0_332 = arith.constant 0 : index
    %c0_333 = arith.constant 0 : index
    %c0_334 = arith.constant 0 : index
    %382 = vector.load %arg1[%c7_331, %c0_332, %c0_333, %c0_334] : memref<8x3x128x128xf32, #tpu.memory_space<vmem>>, vector<1x1x128x64xf32>
    %383 = vector.shape_cast %382 : vector<1x1x128x64xf32> to vector<128x64xf32>
    %cst_335 = arith.constant dense<0.000000e+00> : vector<128x4xf32>
    %384 = tpu.matmul %383, %381, %cst_335 {dimension_numbers = #tpu.dot_dimension_numbers<[1], [0], [0], [1], [0, 0, 1, 1], [], []>} : vector<128x64xf32>, vector<64x4xf32>, vector<128x4xf32> -> vector<128x4xf32>
    %c7_336 = arith.constant 7 : index
    %c1_337 = arith.constant 1 : index
    %c0_338 = arith.constant 0 : index
    %c0_339 = arith.constant 0 : index
    %385 = vector.load %arg2[%c7_336, %c1_337, %c0_338, %c0_339] : memref<8x3x64x64xf32, #tpu.memory_space<vmem>>, vector<1x1x8x4xf32>
    %386 = vector.shape_cast %385 : vector<1x1x8x4xf32> to vector<8x4xf32>
    %cst_340 = arith.constant dense<0.000000e+00> : vector<64x4xf32>
    %387 = tpu.matmul %374, %386, %cst_340 {dimension_numbers = #tpu.dot_dimension_numbers<[1], [0], [0], [1], [0, 0, 1, 1], [], []>} : vector<64x8xf32>, vector<8x4xf32>, vector<64x4xf32> -> vector<64x4xf32>
    %c7_341 = arith.constant 7 : index
    %c1_342 = arith.constant 1 : index
    %c8_343 = arith.constant 8 : index
    %c0_344 = arith.constant 0 : index
    %388 = vector.load %arg2[%c7_341, %c1_342, %c8_343, %c0_344] : memref<8x3x64x64xf32, #tpu.memory_space<vmem>>, vector<1x1x8x4xf32>
    %389 = vector.shape_cast %388 : vector<1x1x8x4xf32> to vector<8x4xf32>
    %cst_345 = arith.constant dense<0.000000e+00> : vector<64x4xf32>
    %390 = tpu.matmul %50, %389, %cst_345 {dimension_numbers = #tpu.dot_dimension_numbers<[1], [0], [0], [1], [0, 0, 1, 1], [], []>} : vector<64x8xf32>, vector<8x4xf32>, vector<64x4xf32> -> vector<64x4xf32>
    %391 = arith.addf %387, %390 : vector<64x4xf32>
    %c7_346 = arith.constant 7 : index
    %c1_347 = arith.constant 1 : index
    %c0_348 = arith.constant 0 : index
    %c0_349 = arith.constant 0 : index
    %392 = vector.load %arg1[%c7_346, %c1_347, %c0_348, %c0_349] : memref<8x3x128x128xf32, #tpu.memory_space<vmem>>, vector<1x1x128x64xf32>
    %393 = vector.shape_cast %392 : vector<1x1x128x64xf32> to vector<128x64xf32>
    %cst_350 = arith.constant dense<0.000000e+00> : vector<128x4xf32>
    %394 = tpu.matmul %393, %391, %cst_350 {dimension_numbers = #tpu.dot_dimension_numbers<[1], [0], [0], [1], [0, 0, 1, 1], [], []>} : vector<128x64xf32>, vector<64x4xf32>, vector<128x4xf32> -> vector<128x4xf32>
    %395 = arith.addf %384, %394 : vector<128x4xf32>
    %c7_351 = arith.constant 7 : index
    %c2_352 = arith.constant 2 : index
    %c0_353 = arith.constant 0 : index
    %c0_354 = arith.constant 0 : index
    %396 = vector.load %arg2[%c7_351, %c2_352, %c0_353, %c0_354] : memref<8x3x64x64xf32, #tpu.memory_space<vmem>>, vector<1x1x8x4xf32>
    %397 = vector.shape_cast %396 : vector<1x1x8x4xf32> to vector<8x4xf32>
    %cst_355 = arith.constant dense<0.000000e+00> : vector<64x4xf32>
    %398 = tpu.matmul %374, %397, %cst_355 {dimension_numbers = #tpu.dot_dimension_numbers<[1], [0], [0], [1], [0, 0, 1, 1], [], []>} : vector<64x8xf32>, vector<8x4xf32>, vector<64x4xf32> -> vector<64x4xf32>
    %c7_356 = arith.constant 7 : index
    %c2_357 = arith.constant 2 : index
    %c8_358 = arith.constant 8 : index
    %c0_359 = arith.constant 0 : index
    %399 = vector.load %arg2[%c7_356, %c2_357, %c8_358, %c0_359] : memref<8x3x64x64xf32, #tpu.memory_space<vmem>>, vector<1x1x8x4xf32>
    %400 = vector.shape_cast %399 : vector<1x1x8x4xf32> to vector<8x4xf32>
    %cst_360 = arith.constant dense<0.000000e+00> : vector<64x4xf32>
    %401 = tpu.matmul %50, %400, %cst_360 {dimension_numbers = #tpu.dot_dimension_numbers<[1], [0], [0], [1], [0, 0, 1, 1], [], []>} : vector<64x8xf32>, vector<8x4xf32>, vector<64x4xf32> -> vector<64x4xf32>
    %402 = arith.addf %398, %401 : vector<64x4xf32>
    %c7_361 = arith.constant 7 : index
    %c2_362 = arith.constant 2 : index
    %c0_363 = arith.constant 0 : index
    %c0_364 = arith.constant 0 : index
    %403 = vector.load %arg1[%c7_361, %c2_362, %c0_363, %c0_364] : memref<8x3x128x128xf32, #tpu.memory_space<vmem>>, vector<1x1x128x64xf32>
    %404 = vector.shape_cast %403 : vector<1x1x128x64xf32> to vector<128x64xf32>
    %cst_365 = arith.constant dense<0.000000e+00> : vector<128x4xf32>
    %405 = tpu.matmul %404, %402, %cst_365 {dimension_numbers = #tpu.dot_dimension_numbers<[1], [0], [0], [1], [0, 0, 1, 1], [], []>} : vector<128x64xf32>, vector<64x4xf32>, vector<128x4xf32> -> vector<128x4xf32>
    %406 = arith.addf %395, %405 : vector<128x4xf32>
    %cst_366 = arith.constant dense<0.000000e+00> : vector<4xf32>
    %407 = vector.multi_reduction <add>, %406, %cst_366 [0] : vector<128x4xf32> to vector<4xf32>
    %408 = vector.shape_cast %407 : vector<4xf32> to vector<1x4xf32>
    %409 = arith.mulf %406, %406 : vector<128x4xf32>
    %cst_367 = arith.constant dense<0.000000e+00> : vector<4xf32>
    %410 = vector.multi_reduction <add>, %409, %cst_367 [0] : vector<128x4xf32> to vector<4xf32>
    %411 = vector.shape_cast %410 : vector<4xf32> to vector<1x4xf32>
    %cst_368 = arith.constant 7.812500e-03 : f32
    %412 = vector.broadcast %cst_368 : f32 to vector<1x4xf32>
    %413 = arith.mulf %408, %412 : vector<1x4xf32>
    %cst_369 = arith.constant 7.812500e-03 : f32
    %414 = vector.broadcast %cst_369 : f32 to vector<1x4xf32>
    %415 = arith.mulf %411, %414 : vector<1x4xf32>
    %416 = arith.mulf %413, %413 : vector<1x4xf32>
    %417 = arith.subf %415, %416 : vector<1x4xf32>
    %cst_370 = arith.constant 0.000000e+00 : f32
    %418 = vector.broadcast %cst_370 : f32 to vector<1x4xf32>
    %419 = arith.maximumf %417, %418 : vector<1x4xf32>
    %c7_371 = arith.constant 7 : index
    %c0_372 = arith.constant 0 : index
    %c0_373 = arith.constant 0 : index
    %420 = vector.load %arg3[%c7_371, %c0_372, %c0_373] : memref<8x2x64xf32, #tpu.memory_space<vmem>>, vector<1x1x4xf32>
    %421 = vector.shape_cast %420 : vector<1x1x4xf32> to vector<1x4xf32>
    %422 = vector.broadcast %413 : vector<1x4xf32> to vector<128x4xf32>
    %423 = arith.subf %406, %422 : vector<128x4xf32>
    %424 = vector.broadcast %421 : vector<1x4xf32> to vector<128x4xf32>
    %425 = arith.mulf %424, %423 : vector<128x4xf32>
    %cst_374 = arith.constant 9.99999974E-6 : f32
    %426 = vector.broadcast %cst_374 : f32 to vector<1x4xf32>
    %427 = arith.addf %419, %426 : vector<1x4xf32>
    %428 = math.rsqrt %427 : vector<1x4xf32>
    %429 = vector.broadcast %428 : vector<1x4xf32> to vector<128x4xf32>
    %430 = arith.mulf %425, %429 : vector<128x4xf32>
    %c7_375 = arith.constant 7 : index
    %c1_376 = arith.constant 1 : index
    %c0_377 = arith.constant 0 : index
    %431 = vector.load %arg3[%c7_375, %c1_376, %c0_377] : memref<8x2x64xf32, #tpu.memory_space<vmem>>, vector<1x1x4xf32>
    %432 = vector.shape_cast %431 : vector<1x1x4xf32> to vector<1x4xf32>
    %433 = vector.broadcast %432 : vector<1x4xf32> to vector<128x4xf32>
    %434 = arith.addf %430, %433 : vector<128x4xf32>
    %cst_378 = arith.constant 0.000000e+00 : f32
    %435 = vector.broadcast %cst_378 : f32 to vector<128x4xf32>
    %436 = arith.maximumf %434, %435 : vector<128x4xf32>
    %c0_379 = arith.constant 0 : index
    %c0_380 = arith.constant 0 : index
    %437 = vector.load %arg4[%c0_379, %c0_380] : memref<4x1xf32, #tpu.memory_space<vmem>>, vector<4x1xf32>
    %cst_381 = arith.constant dense<0.000000e+00> : vector<128x1xf32>
    %438 = tpu.matmul %436, %437, %cst_381 {dimension_numbers = #tpu.dot_dimension_numbers<[1], [0], [0], [1], [0, 0, 1, 1], [], []>} : vector<128x4xf32>, vector<4x1xf32>, vector<128x1xf32> -> vector<128x1xf32>
    %c0_382 = arith.constant 0 : index
    %c0_383 = arith.constant 0 : index
    %439 = vector.load %arg5[%c0_382, %c0_383] : memref<1x1xf32, #tpu.memory_space<vmem>>, vector<1x1xf32>
    %440 = vector.broadcast %439 : vector<1x1xf32> to vector<128x1xf32>
    %441 = arith.addf %438, %440 : vector<128x1xf32>
    %c0_384 = arith.constant 0 : index
    %c0_385 = arith.constant 0 : index
    %442 = vector.load %arg6[%c0_384, %c0_385] : memref<128x1xf32, #tpu.memory_space<vmem>>, vector<128x1xf32>
    tpu.vector_store %arg6[%c0_384, %c0_385], %441 {strides = array<i32>} : memref<128x1xf32, #tpu.memory_space<vmem>>, vector<128x1xf32>,
    return
  }
}

</mosaic_0001>

<llo_original>
// kernel: _lambda_.1
$region0: #{_lambda_.1}
  #allocation0 [shape = 'u32[]', space=smem, size = 0x4, offset = 0x4, fixed_abs, tag = 'smem constant byte address 0x4 - core index']
  #allocation1 [shape = 'u32[144,128]{1,0:T(1,128)}', space=vmem, size = 0x12000, scoped, tag = 'internal scratch']
  #allocation2 [shape = 'f32[1,1]{1,0:T(1,128)S(1)}', space=vmem, size = 0x200, scoped, tag = 'scoped memory for _lambda_.1']
  %s0 = inlined_call_operand.vmem [shape: f32[128,4], index: 0, kind: input, shape index: {}]
  %s1 = inlined_call_operand.hbm [shape: f32[8,3,128,128], index: 1, kind: input, shape index: {}]
  %s2 = inlined_call_operand.hbm [shape: f32[8,3,64,64], index: 2, kind: input, shape index: {}]
  %s3 = inlined_call_operand.hbm [shape: f32[8,2,64], index: 3, kind: input, shape index: {}]
  %s4 = inlined_call_operand.hbm [shape: f32[4,1], index: 4, kind: input, shape index: {}]
  %s5 = inlined_call_operand.<no memory space> [shape: f32[1,1], index: 5, kind: input, shape index: {}]
  %s6 = inlined_call_operand.vmem [shape: f32[128,1], index: 6, kind: output, shape index: {}]
  %s7 = sld [smem:[#allocation0]]
  $region50: #{_lambda_.1} parent=0
    _
  %s9 = ssub.s32 1, %s7
  %s10 = scalar_select 0, %s9, %s7
  %v11 = vstv %s5
  %12 = vst [vmem:[#allocation2] sm:$0x1] %v11
  $region1: #{_lambda_.1} parent=0
    #allocation3 [shape = 'u8[1572864]{0}', space=vmem, size = 0x180000, scoped, tag = 'input window, operand 1, single buffered']
    #allocation4 [shape = 's32[1]{0}', space=sflag, size = 0x4, scoped, tag = 'scoped memory for _lambda_.1']
    #allocation5 [shape = 'u8[786432]{0}', space=vmem, size = 0xc0000, scoped, tag = 'input window, operand 2, single buffered']
    #allocation6 [shape = 's32[1]{0}', space=sflag, size = 0x4, scoped, tag = 'scoped memory for _lambda_.1']
    #allocation7 [shape = 'u8[8192]{0}', space=vmem, size = 0x2000, scoped, tag = 'input window, operand 3, single buffered']
    #allocation8 [shape = 'u8[2048]{0}', space=vmem, size = 0x800, scoped, tag = 'input window, operand 4, single buffered']
    #allocation9 [shape = 's32[1]{0}', space=sflag, size = 0x4, scoped, tag = 'scoped memory for _lambda_.1']
    %13 = vsyncpa [#allocation4], 0
    %14 = vsyncpa [#allocation6], 0
    %15 = vsyncpa [#allocation9], 0
    // Predicated region
    $region2: #{_lambda_.1} parent=1 // pred_check
      _
    $region3: #{_lambda_.1} parent=1 // pred_check_branch
      %17 = sbr.rel (0) target = $region5
    $region4: #{_lambda_.1} parent=1 // pred_region
      _
    $region5: #{_lambda_.1} parent=1 // pred_fallthru
      _
    // Predicated region
    $region6: #{_lambda_.1} parent=1 // pred_check
      _
    $region7: #{_lambda_.1} parent=1 // pred_check_branch
      %19 = sbr.rel (0) target = $region9
    $region8: #{_lambda_.1} parent=1 // pred_region
      %s21 = ssub.s32 49152, 49152
      %22 = vsyncadd [#allocation4], %s21
      %s23 = sshll.u32 [#allocation3], 4
      %s24 = int_to_ptr.vmem [resolvable:$true] %s23
      %29 = dma.hbm_to_vmem [thread:$0]  %s1, 49152, %s24, [#allocation4], 128, 128, 8
    $region9: #{_lambda_.1} parent=1 // pred_fallthru
      _
    // Predicated region
    $region10: #{_lambda_.1} parent=1 // pred_check
      _
    $region11: #{_lambda_.1} parent=1 // pred_check_branch
      %31 = sbr.rel (0) target = $region13
    $region12: #{_lambda_.1} parent=1 // pred_region
      %s33 = ssub.s32 24576, 24576
      %34 = vsyncadd [#allocation6], %s33
      %s35 = sshll.u32 [#allocation5], 4
      %s36 = int_to_ptr.vmem [resolvable:$true] %s35
      %41 = dma.hbm_to_vmem [thread:$0]  %s2, 24576, %s36, [#allocation6], 128, 128, 8
    $region13: #{_lambda_.1} parent=1 // pred_fallthru
      _
    // Predicated region
    $region14: #{_lambda_.1} parent=1 // pred_check
      _
    $region15: #{_lambda_.1} parent=1 // pred_check_branch
      %43 = sbr.rel (0) target = $region17
    $region16: #{_lambda_.1} parent=1 // pred_region
      %s45 = ssub.s32 256, 256
      %46 = vsyncadd [#allocation6], %s45
      %s47 = sshll.u32 [#allocation7], 4
      %s48 = int_to_ptr.vmem [resolvable:$true] %s47
      %53 = dma.hbm_to_vmem [thread:$0]  %s3, 256, %s48, [#allocation6], 32, 32, 2
    $region17: #{_lambda_.1} parent=1 // pred_fallthru
      _
    // Predicated region
    $region18: #{_lambda_.1} parent=1 // pred_check
      _
    $region19: #{_lambda_.1} parent=1 // pred_check_branch
      %55 = sbr.rel (0) target = $region21
    $region20: #{_lambda_.1} parent=1 // pred_region
      %s57 = ssub.s32 64, 64
      %58 = vsyncadd [#allocation9], %s57
      %s60 = sshll.u32 [#allocation8], 4
      %s61 = int_to_ptr.vmem [resolvable:$true] %s60
      %63 = dma.hbm_to_vmem [thread:$0]  %s4, 64, %s61, [#allocation9]
    $region21: #{_lambda_.1} parent=1 // pred_fallthru
      _
    // Predicated region
    $region22: #{_lambda_.1} parent=1 // pred_check
      _
    $region23: #{_lambda_.1} parent=1 // pred_check_branch
      %65 = sbr.rel (0) target = $region25
    $region24: #{_lambda_.1} parent=1 // pred_region
      _
    $region25: #{_lambda_.1} parent=1 // pred_fallthru
      _
    // Predicated region
    $region26: #{_lambda_.1} parent=1 // pred_check
      _
    $region27: #{_lambda_.1} parent=1 // pred_check_branch
      %67 = sbr.rel (0) target = $region29
    $region28: #{_lambda_.1} parent=1 // pred_region
      %68 = dma.done [#allocation4], 49152
    $region29: #{_lambda_.1} parent=1 // pred_fallthru
      _
    // Predicated region
    $region30: #{_lambda_.1} parent=1 // pred_check
      _
    $region31: #{_lambda_.1} parent=1 // pred_check_branch
      %70 = sbr.rel (0) target = $region33
    $region32: #{_lambda_.1} parent=1 // pred_region
      %71 = dma.done [#allocation6], 24576
    $region33: #{_lambda_.1} parent=1 // pred_fallthru
      _
    // Predicated region
    $region34: #{_lambda_.1} parent=1 // pred_check
      _
    $region35: #{_lambda_.1} parent=1 // pred_check_branch
      %73 = sbr.rel (0) target = $region37
    $region36: #{_lambda_.1} parent=1 // pred_region
      %74 = dma.done [#allocation6], 256
    $region37: #{_lambda_.1} parent=1 // pred_fallthru
      _
    // Predicated region
    $region38: #{_lambda_.1} parent=1 // pred_check
      _
    $region39: #{_lambda_.1} parent=1 // pred_check_branch
      %76 = sbr.rel (0) target = $region41
    $region40: #{_lambda_.1} parent=1 // pred_region
      %77 = dma.done [#allocation9], 64
    $region41: #{_lambda_.1} parent=1 // pred_fallthru
      _
    %v78 = vld [vmem:[%s0] sm:$0xff]
    %v79 = vld [vmem:[%s0 + $0x8] sm:$0xff]
    %v80 = vld [vmem:[%s0 + $0x10] sm:$0xff]
    %v81 = vld [vmem:[%s0 + $0x18] sm:$0xff]
    %v82 = vld [vmem:[%s0 + $0x20] sm:$0xff]
    %v83 = vld [vmem:[%s0 + $0x28] sm:$0xff]
    %v84 = vld [vmem:[%s0 + $0x30] sm:$0xff]
    %v85 = vld [vmem:[%s0 + $0x38] sm:$0xff]
    %v86 = vld [vmem:[%s0 + $0x40] sm:$0xff]
    %v87 = vld [vmem:[%s0 + $0x48] sm:$0xff]
    %v88 = vld [vmem:[%s0 + $0x50] sm:$0xff]
    %v89 = vld [vmem:[%s0 + $0x58] sm:$0xff]
    %v90 = vld [vmem:[%s0 + $0x60] sm:$0xff]
    %v91 = vld [vmem:[%s0 + $0x68] sm:$0xff]
    %v92 = vld [vmem:[%s0 + $0x70] sm:$0xff]
    %v93 = vld [vmem:[%s0 + $0x78] sm:$0xff]
    %v94 = vld [vmem:[#allocation5] sm:$0xf]
    %vm95 = vcmask 31744
    %v97 = vsel %vm95, %v78, 0
    %v100 = vsel %vm95, %v79, 0
    %v103 = vsel %vm95, %v80, 0
    %v106 = vsel %vm95, %v81, 0
    %v109 = vsel %vm95, %v82, 0
    %v112 = vsel %vm95, %v83, 0
    %v115 = vsel %vm95, %v84, 0
    %v118 = vsel %vm95, %v85, 0
    %v121 = vsel %vm95, %v86, 0
    %v124 = vsel %vm95, %v87, 0
    %v127 = vsel %vm95, %v88, 0
    %v130 = vsel %vm95, %v89, 0
    %v133 = vsel %vm95, %v90, 0
    %v136 = vsel %vm95, %v91, 0
    %v139 = vsel %vm95, %v92, 0
    %v142 = vsel %vm95, %v93, 0
    %vm144 = vcmask 1043456
    %v146 = vsel %vm144, %v94, 0
    %148 = vmatprep.subr.mxu0 0.0
    %149 = vmatpush1.msra.mxu0 0.0
    %150 = vmatprep.subr.mxu0 0.0
    %151 = vmatpush1.msra.mxu0 0.0
    %152 = vmatprep.subr.mxu0 0.0
    %153 = vmatpush1.msra.mxu0 0.0
    %154 = vmatprep.subr.mxu0 0.0
    %155 = vmatpush1.msra.mxu0 0.0
    %156 = vmatprep.subr.mxu0 0.0
    %157 = vmatpush1.msra.mxu0 0.0
    %158 = vmatprep.subr.mxu0 0.0
    %159 = vmatpush1.msra.mxu0 0.0
    %160 = vmatprep.subr.mxu0 0.0
    %161 = vmatpush1.msra.mxu0 0.0
    %162 = vmatprep.subr.mxu0 0.0
    %163 = vmatpush1.msra.mxu0 0.0
    %164 = vmatprep.subr.mxu0 0.0
    %165 = vmatpush1.msra.mxu0 0.0
    %166 = vmatprep.subr.mxu0 0.0
    %167 = vmatpush1.msra.mxu0 0.0
    %168 = vmatprep.subr.mxu0 0.0
    %169 = vmatpush1.msra.mxu0 0.0
    %170 = vmatprep.subr.mxu0 0.0
    %171 = vmatpush1.msra.mxu0 0.0
    %172 = vmatprep.subr.mxu0 0.0
    %173 = vmatpush1.msra.mxu0 0.0
    %174 = vmatprep.subr.mxu0 0.0
    %175 = vmatpush1.msra.mxu0 0.0
    %176 = vmatprep.subr.mxu0 0.0
    %177 = vmatpush1.msra.mxu0 0.0
    %178 = vmatprep.subr.mxu0 0.0
    %179 = vmatpush1.msra.mxu0 %v146
    %180 = vmatprep.subr.mxu0 0.0
    %181 = vmatpush2.msra.mxu0 0.0
    %182 = vmatprep.subr.mxu0 0.0
    %183 = vmatpush2.msra.mxu0 0.0
    %184 = vmatprep.subr.mxu0 0.0
    %185 = vmatpush2.msra.mxu0 0.0
    %186 = vmatprep.subr.mxu0 0.0
    %187 = vmatpush2.msra.mxu0 0.0
    %188 = vmatprep.subr.mxu0 0.0
    %189 = vmatpush2.msra.mxu0 0.0
    %190 = vmatprep.subr.mxu0 0.0
    %191 = vmatpush2.msra.mxu0 0.0
    %192 = vmatprep.subr.mxu0 0.0
    %193 = vmatpush2.msra.mxu0 0.0
    %194 = vmatprep.subr.mxu0 0.0
    %195 = vmatpush2.msra.mxu0 0.0
    %196 = vmatprep.subr.mxu0 0.0
    %197 = vmatpush2.msra.mxu0 0.0
    %198 = vmatprep.subr.mxu0 0.0
    %199 = vmatpush2.msra.mxu0 0.0
    %200 = vmatprep.subr.mxu0 0.0
    %201 = vmatpush2.msra.mxu0 0.0
    %202 = vmatprep.subr.mxu0 0.0
    %203 = vmatpush2.msra.mxu0 0.0
    %204 = vmatprep.subr.mxu0 0.0
    %205 = vmatpush2.msra.mxu0 0.0
    %206 = vmatprep.subr.mxu0 0.0
    %207 = vmatpush2.msra.mxu0 0.0
    %208 = vmatprep.subr.mxu0 0.0
    %209 = vmatpush2.msra.mxu0 0.0
    %210 = vmatprep.subr.mxu0 0.0
    %211 = vmatpush2.msra.mxu0 0.0
    %212 = vmatprep.mubr.f32.mxu0 0.0
    %213 = vmatmul.mubr.f32.gmra.mxu0 %v97
    %v214 = vpop.f32.mrf.mxu0
    %v215 = vadd.f32 0.0, %v214
    %v216 = vpop.f32.mrf.mxu0
    %217 = vmatprep.mubr.f32.mxu0 0.0
    %218 = vmatmul.mubr.f32.gmra.mxu0 %v100
    %v219 = vpop.f32.mrf.mxu0
    %v220 = vadd.f32 0.0, %v219
    %v221 = vpop.f32.mrf.mxu0
    %222 = vmatprep.mubr.f32.mxu0 0.0
    %223 = vmatmul.mubr.f32.gmra.mxu0 %v103
    %v224 = vpop.f32.mrf.mxu0
    %v225 = vadd.f32 0.0, %v224
    %v226 = vpop.f32.mrf.mxu0
    %227 = vmatprep.mubr.f32.mxu0 0.0
    %228 = vmatmul.mubr.f32.gmra.mxu0 %v106
    %v229 = vpop.f32.mrf.mxu0
    %v230 = vadd.f32 0.0, %v229
    %v231 = vpop.f32.mrf.mxu0
    %232 = vmatprep.mubr.f32.mxu0 0.0
    %233 = vmatmul.mubr.f32.gmra.mxu0 %v109
    %v234 = vpop.f32.mrf.mxu0
    %v235 = vadd.f32 0.0, %v234
    %v236 = vpop.f32.mrf.mxu0
    %237 = vmatprep.mubr.f32.mxu0 0.0
    %238 = vmatmul.mubr.f32.gmra.mxu0 %v112
    %v239 = vpop.f32.mrf.mxu0
    %v240 = vadd.f32 0.0, %v239
    %v241 = vpop.f32.mrf.mxu0
    %242 = vmatprep.mubr.f32.mxu0 0.0
    %243 = vmatmul.mubr.f32.gmra.mxu0 %v115
    %v244 = vpop.f32.mrf.mxu0
    %v245 = vadd.f32 0.0, %v244
    %v246 = vpop.f32.mrf.mxu0
    %247 = vmatprep.mubr.f32.mxu0 0.0
    %248 = vmatmul.mubr.f32.gmra.mxu0 %v118
    %v249 = vpop.f32.mrf.mxu0
    %v250 = vadd.f32 0.0, %v249
    %v251 = vpop.f32.mrf.mxu0
    %252 = vmatprep.mubr.f32.mxu0 0.0
    %253 = vmatmul.mubr.f32.gmra.mxu0 %v121
    %v254 = vpop.f32.mrf.mxu0
    %v255 = vadd.f32 0.0, %v254
    %v256 = vpop.f32.mrf.mxu0
    %257 = vmatprep.mubr.f32.mxu0 0.0
    %258 = vmatmul.mubr.f32.gmra.mxu0 %v124
    %v259 = vpop.f32.mrf.mxu0
    %v260 = vadd.f32 0.0, %v259
    %v261 = vpop.f32.mrf.mxu0
    %262 = vmatprep.mubr.f32.mxu0 0.0
    %263 = vmatmul.mubr.f32.gmra.mxu0 %v127
    %v264 = vpop.f32.mrf.mxu0
    %v265 = vadd.f32 0.0, %v264
    %v266 = vpop.f32.mrf.mxu0
    %267 = vmatprep.mubr.f32.mxu0 0.0
    %268 = vmatmul.mubr.f32.gmra.mxu0 %v130
    %v269 = vpop.f32.mrf.mxu0
    %v270 = vadd.f32 0.0, %v269
    %v271 = vpop.f32.mrf.mxu0
    %272 = vmatprep.mubr.f32.mxu0 0.0
    %273 = vmatmul.mubr.f32.gmra.mxu0 %v133
    %v274 = vpop.f32.mrf.mxu0
    %v275 = vadd.f32 0.0, %v274
    %v276 = vpop.f32.mrf.mxu0
    %277 = vmatprep.mubr.f32.mxu0 0.0
    %278 = vmatmul.mubr.f32.gmra.mxu0 %v136
    %v279 = vpop.f32.mrf.mxu0
    %v280 = vadd.f32 0.0, %v279
    %v281 = vpop.f32.mrf.mxu0
    %282 = vmatprep.mubr.f32.mxu0 0.0
    %283 = vmatmul.mubr.f32.gmra.mxu0 %v139
    %v284 = vpop.f32.mrf.mxu0
    %v285 = vadd.f32 0.0, %v284
    %v286 = vpop.f32.mrf.mxu0
    %287 = vmatprep.mubr.f32.mxu0 0.0
    %288 = vmatmul.mubr.f32.gmra.mxu0 %v142
    %v289 = vpop.f32.mrf.mxu0
    %v290 = vadd.f32 0.0, %v289
    %v291 = vpop.f32.mrf.mxu0
    %292 = vdwg.mxu0
    %v293 = vld [vmem:[#allocation3] sm:$0xff]
    %v294 = vld [vmem:[#allocation3 + $0x8] sm:$0xff]
    %v295 = vld [vmem:[#allocation3 + $0x10] sm:$0xff]
    %v296 = vld [vmem:[#allocation3 + $0x18] sm:$0xff]
    %v297 = vld [vmem:[#allocation3 + $0x20] sm:$0xff]
    %v298 = vld [vmem:[#allocation3 + $0x28] sm:$0xff]
    %v299 = vld [vmem:[#allocation3 + $0x30] sm:$0xff]
    %v300 = vld [vmem:[#allocation3 + $0x38] sm:$0xff]
    %s301 = scalar_lea.vmem [#allocation5], 64
    %v302 = vld [vmem:[%s301] sm:$0xf]
    %v304 = vsel %vm144, %v302, 0
    %306 = vmatprep.subr.mxu0 0.0
    %307 = vmatpush1.msra.mxu0 0.0
    %308 = vmatprep.subr.mxu0 0.0
    %309 = vmatpush1.msra.mxu0 0.0
    %310 = vmatprep.subr.mxu0 0.0
    %311 = vmatpush1.msra.mxu0 0.0
    %312 = vmatprep.subr.mxu0 0.0
    %313 = vmatpush1.msra.mxu0 0.0
    %314 = vmatprep.subr.mxu0 0.0
    %315 = vmatpush1.msra.mxu0 0.0
    %316 = vmatprep.subr.mxu0 0.0
    %317 = vmatpush1.msra.mxu0 0.0
    %318 = vmatprep.subr.mxu0 0.0
    %319 = vmatpush1.msra.mxu0 0.0
    %320 = vmatprep.subr.mxu0 0.0
    %321 = vmatpush1.msra.mxu0 0.0
    %322 = vmatprep.subr.mxu0 0.0
    %323 = vmatpush1.msra.mxu0 0.0
    %324 = vmatprep.subr.mxu0 0.0
    %325 = vmatpush1.msra.mxu0 0.0
    %326 = vmatprep.subr.mxu0 0.0
    %327 = vmatpush1.msra.mxu0 0.0
    %328 = vmatprep.subr.mxu0 0.0
    %329 = vmatpush1.msra.mxu0 0.0
    %330 = vmatprep.subr.mxu0 0.0
    %331 = vmatpush1.msra.mxu0 0.0
    %332 = vmatprep.subr.mxu0 0.0
    %333 = vmatpush1.msra.mxu0 0.0
    %334 = vmatprep.subr.mxu0 0.0
    %335 = vmatpush1.msra.mxu0 0.0
    %336 = vmatprep.subr.mxu0 0.0
    %337 = vmatpush1.msra.mxu0 %v304
    %338 = vmatprep.subr.mxu0 0.0
    %339 = vmatpush2.msra.mxu0 0.0
    %340 = vmatprep.subr.mxu0 0.0
    %341 = vmatpush2.msra.mxu0 0.0
    %342 = vmatprep.subr.mxu0 0.0
    %343 = vmatpush2.msra.mxu0 0.0
    %344 = vmatprep.subr.mxu0 0.0
    %345 = vmatpush2.msra.mxu0 0.0
    %346 = vmatprep.subr.mxu0 0.0
    %347 = vmatpush2.msra.mxu0 0.0
    %348 = vmatprep.subr.mxu0 0.0
    %349 = vmatpush2.msra.mxu0 0.0
    %350 = vmatprep.subr.mxu0 0.0
    %351 = vmatpush2.msra.mxu0 0.0
    %352 = vmatprep.subr.mxu0 0.0
    %353 = vmatpush2.msra.mxu0 0.0
    %354 = vmatprep.subr.mxu0 0.0
    %355 = vmatpush2.msra.mxu0 0.0
    %356 = vmatprep.subr.mxu0 0.0
    %357 = vmatpush2.msra.mxu0 0.0
    %358 = vmatprep.subr.mxu0 0.0
    %359 = vmatpush2.msra.mxu0 0.0
    %360 = vmatprep.subr.mxu0 0.0
    %361 = vmatpush2.msra.mxu0 0.0
    %362 = vmatprep.subr.mxu0 0.0
    %363 = vmatpush2.msra.mxu0 0.0
    %364 = vmatprep.subr.mxu0 0.0
    %365 = vmatpush2.msra.mxu0 0.0
    %366 = vmatprep.subr.mxu0 0.0
    %367 = vmatpush2.msra.mxu0 0.0
    %368 = vmatprep.subr.mxu0 0.0
    %369 = vmatpush2.msra.mxu0 0.0
    %370 = vmatprep.mubr.f32.mxu0 0.0
    %371 = vmatmul.mubr.f32.gmra.mxu0 %v97
    %v372 = vpop.f32.mrf.mxu0
    %v373 = vadd.f32 0.0, %v372
    %v374 = vpop.f32.mrf.mxu0
    %375 = vmatprep.mubr.f32.mxu0 0.0
    %376 = vmatmul.mubr.f32.gmra.mxu0 %v100
    %v377 = vpop.f32.mrf.mxu0
    %v378 = vadd.f32 0.0, %v377
    %v379 = vpop.f32.mrf.mxu0
    %380 = vmatprep.mubr.f32.mxu0 0.0
    %381 = vmatmul.mubr.f32.gmra.mxu0 %v103
    %v382 = vpop.f32.mrf.mxu0
    %v383 = vadd.f32 0.0, %v382
    %v384 = vpop.f32.mrf.mxu0
    %385 = vmatprep.mubr.f32.mxu0 0.0
    %386 = vmatmul.mubr.f32.gmra.mxu0 %v106
    %v387 = vpop.f32.mrf.mxu0
    %v388 = vadd.f32 0.0, %v387
    %v389 = vpop.f32.mrf.mxu0
    %390 = vmatprep.mubr.f32.mxu0 0.0
    %391 = vmatmul.mubr.f32.gmra.mxu0 %v109
    %v392 = vpop.f32.mrf.mxu0
    %v393 = vadd.f32 0.0, %v392
    %v394 = vpop.f32.mrf.mxu0
    %395 = vmatprep.mubr.f32.mxu0 0.0
    %396 = vmatmul.mubr.f32.gmra.mxu0 %v112
    %v397 = vpop.f32.mrf.mxu0
    %v398 = vadd.f32 0.0, %v397
    %v399 = vpop.f32.mrf.mxu0
    %400 = vmatprep.mubr.f32.mxu0 0.0
    %401 = vmatmul.mubr.f32.gmra.mxu0 %v115
    %v402 = vpop.f32.mrf.mxu0
    %v403 = vadd.f32 0.0, %v402
    %v404 = vpop.f32.mrf.mxu0
    %405 = vmatprep.mubr.f32.mxu0 0.0
    %406 = vmatmul.mubr.f32.gmra.mxu0 %v118
    %v407 = vpop.f32.mrf.mxu0
    %v408 = vadd.f32 0.0, %v407
    %v409 = vpop.f32.mrf.mxu0
    %410 = vmatprep.mubr.f32.mxu0 0.0
    %411 = vmatmul.mubr.f32.gmra.mxu0 %v121
    %v412 = vpop.f32.mrf.mxu0
    %v413 = vadd.f32 0.0, %v412
    %v414 = vpop.f32.mrf.mxu0
    %415 = vmatprep.mubr.f32.mxu0 0.0
    %416 = vmatmul.mubr.f32.gmra.mxu0 %v124
    %v417 = vpop.f32.mrf.mxu0
    %v418 = vadd.f32 0.0, %v417
    %v419 = vpop.f32.mrf.mxu0
    %420 = vmatprep.mubr.f32.mxu0 0.0
    %421 = vmatmul.mubr.f32.gmra.mxu0 %v127
    %v422 = vpop.f32.mrf.mxu0
    %v423 = vadd.f32 0.0, %v422
    %v424 = vpop.f32.mrf.mxu0
    %425 = vmatprep.mubr.f32.mxu0 0.0
    %426 = vmatmul.mubr.f32.gmra.mxu0 %v130
    %v427 = vpop.f32.mrf.mxu0
    %v428 = vadd.f32 0.0, %v427
    %v429 = vpop.f32.mrf.mxu0
    %430 = vmatprep.mubr.f32.mxu0 0.0
    %431 = vmatmul.mubr.f32.gmra.mxu0 %v133
    %v432 = vpop.f32.mrf.mxu0
    %v433 = vadd.f32 0.0, %v432
    %v434 = vpop.f32.mrf.mxu0
    %435 = vmatprep.mubr.f32.mxu0 0.0
    %436 = vmatmul.mubr.f32.gmra.mxu0 %v136
    %v437 = vpop.f32.mrf.mxu0
    %v438 = vadd.f32 0.0, %v437
    %v439 = vpop.f32.mrf.mxu0
    %440 = vmatprep.mubr.f32.mxu0 0.0
    %441 = vmatmul.mubr.f32.gmra.mxu0 %v139
    %v442 = vpop.f32.mrf.mxu0
    %v443 = vadd.f32 0.0, %v442
    %v444 = vpop.f32.mrf.mxu0
    %445 = vmatprep.mubr.f32.mxu0 0.0
    %446 = vmatmul.mubr.f32.gmra.mxu0 %v142
    %v447 = vpop.f32.mrf.mxu0
    %v448 = vadd.f32 0.0, %v447
    %v449 = vpop.f32.mrf.mxu0
    %450 = vdwg.mxu0
    %s451 = scalar_lea.vmem [#allocation3], 128
    %v452 = vld [vmem:[%s451] sm:$0xff]
    %v453 = vld [vmem:[%s451 + $0x8] sm:$0xff]
    %v454 = vld [vmem:[%s451 + $0x10] sm:$0xff]
    %v455 = vld [vmem:[%s451 + $0x18] sm:$0xff]
    %v456 = vld [vmem:[%s451 + $0x20] sm:$0xff]
    %v457 = vld [vmem:[%s451 + $0x28] sm:$0xff]
    %v458 = vld [vmem:[%s451 + $0x30] sm:$0xff]
    %v459 = vld [vmem:[%s451 + $0x38] sm:$0xff]
    %460 = vmatprep.subr.mxu0 0.0
    %461 = vmatpush1.msra.mxu0 %v448
    %462 = vmatprep.subr.mxu0 0.0
    %463 = vmatpush1.msra.mxu0 %v443
    %464 = vmatprep.subr.mxu0 0.0
    %465 = vmatpush1.msra.mxu0 %v438
    %466 = vmatprep.subr.mxu0 0.0
    %467 = vmatpush1.msra.mxu0 %v433
    %468 = vmatprep.subr.mxu0 0.0
    %469 = vmatpush1.msra.mxu0 %v428
    %470 = vmatprep.subr.mxu0 0.0
    %471 = vmatpush1.msra.mxu0 %v423
    %472 = vmatprep.subr.mxu0 0.0
    %473 = vmatpush1.msra.mxu0 %v418
    %474 = vmatprep.subr.mxu0 0.0
    %475 = vmatpush1.msra.mxu0 %v413
    %476 = vmatprep.subr.mxu0 0.0
    %477 = vmatpush1.msra.mxu0 %v408
    %478 = vmatprep.subr.mxu0 0.0
    %479 = vmatpush1.msra.mxu0 %v403
    %480 = vmatprep.subr.mxu0 0.0
    %481 = vmatpush1.msra.mxu0 %v398
    %482 = vmatprep.subr.mxu0 0.0
    %483 = vmatpush1.msra.mxu0 %v393
    %484 = vmatprep.subr.mxu0 0.0
    %485 = vmatpush1.msra.mxu0 %v388
    %486 = vmatprep.subr.mxu0 0.0
    %487 = vmatpush1.msra.mxu0 %v383
    %488 = vmatprep.subr.mxu0 0.0
    %489 = vmatpush1.msra.mxu0 %v378
    %490 = vmatprep.subr.mxu0 0.0
    %491 = vmatpush1.msra.mxu0 %v373
    %492 = vmatprep.subr.mxu0 0.0
    %493 = vmatpush2.msra.mxu0 0.0
    %494 = vmatprep.subr.mxu0 0.0
    %495 = vmatpush2.msra.mxu0 0.0
    %496 = vmatprep.subr.mxu0 0.0
    %497 = vmatpush2.msra.mxu0 0.0
    %498 = vmatprep.subr.mxu0 0.0
    %499 = vmatpush2.msra.mxu0 0.0
    %500 = vmatprep.subr.mxu0 0.0
    %501 = vmatpush2.msra.mxu0 0.0
    %502 = vmatprep.subr.mxu0 0.0
    %503 = vmatpush2.msra.mxu0 0.0
    %504 = vmatprep.subr.mxu0 0.0
    %505 = vmatpush2.msra.mxu0 0.0
    %506 = vmatprep.subr.mxu0 0.0
    %507 = vmatpush2.msra.mxu0 0.0
    %508 = vmatprep.subr.mxu0 0.0
    %509 = vmatpush2.msra.mxu0 0.0
    %510 = vmatprep.subr.mxu0 0.0
    %511 = vmatpush2.msra.mxu0 0.0
    %512 = vmatprep.subr.mxu0 0.0
    %513 = vmatpush2.msra.mxu0 0.0
    %514 = vmatprep.subr.mxu0 0.0
    %515 = vmatpush2.msra.mxu0 0.0
    %516 = vmatprep.subr.mxu0 0.0
    %517 = vmatpush2.msra.mxu0 0.0
    %518 = vmatprep.subr.mxu0 0.0
    %519 = vmatpush2.msra.mxu0 0.0
    %520 = vmatprep.subr.mxu0 0.0
    %521 = vmatpush2.msra.mxu0 0.0
    %522 = vmatprep.subr.mxu0 0.0
    %523 = vmatpush2.msra.mxu0 0.0
    %524 = vmatprep.mubr.f32.mxu0 0.0
    %525 = vmatmul.mubr.f32.gmra.mxu0 %v452
    %v526 = vpop.f32.mrf.mxu0
    %v527 = vadd.f32 0.0, %v526
    %v528 = vpop.f32.mrf.mxu0
    %529 = vmatprep.mubr.f32.mxu0 0.0
    %530 = vmatmul.mubr.f32.gmra.mxu0 %v453
    %v531 = vpop.f32.mrf.mxu0
    %v532 = vadd.f32 0.0, %v531
    %v533 = vpop.f32.mrf.mxu0
    %534 = vmatprep.mubr.f32.mxu0 0.0
    %535 = vmatmul.mubr.f32.gmra.mxu0 %v454
    %v536 = vpop.f32.mrf.mxu0
    %v537 = vadd.f32 0.0, %v536
    %v538 = vpop.f32.mrf.mxu0
    %539 = vmatprep.mubr.f32.mxu0 0.0
    %540 = vmatmul.mubr.f32.gmra.mxu0 %v455
    %v541 = vpop.f32.mrf.mxu0
    %v542 = vadd.f32 0.0, %v541
    %v543 = vpop.f32.mrf.mxu0
    %544 = vmatprep.mubr.f32.mxu0 0.0
    %545 = vmatmul.mubr.f32.gmra.mxu0 %v456
    %v546 = vpop.f32.mrf.mxu0
    %v547 = vadd.f32 0.0, %v546
    %v548 = vpop.f32.mrf.mxu0
    %549 = vmatprep.mubr.f32.mxu0 0.0
    %550 = vmatmul.mubr.f32.gmra.mxu0 %v457
    %v551 = vpop.f32.mrf.mxu0
    %v552 = vadd.f32 0.0, %v551
    %v553 = vpop.f32.mrf.mxu0
    %554 = vmatprep.mubr.f32.mxu0 0.0
    %555 = vmatmul.mubr.f32.gmra.mxu0 %v458
    %v556 = vpop.f32.mrf.mxu0
    %v557 = vadd.f32 0.0, %v556
    %v558 = vpop.f32.mrf.mxu0
    %559 = vmatprep.mubr.f32.mxu0 0.0
    %560 = vmatmul.mubr.f32.gmra.mxu0 %v459
    %v561 = vpop.f32.mrf.mxu0
    %v562 = vadd.f32 0.0, %v561
    %v563 = vpop.f32.mrf.mxu0
    %564 = vdwg.mxu0
    %565 = vmatprep.subr.mxu0 0.0
    %566 = vmatpush1.msra.mxu0 %v290
    %567 = vmatprep.subr.mxu0 0.0
    %568 = vmatpush1.msra.mxu0 %v285
    %569 = vmatprep.subr.mxu0 0.0
    %570 = vmatpush1.msra.mxu0 %v280
    %571 = vmatprep.subr.mxu0 0.0
    %572 = vmatpush1.msra.mxu0 %v275
    %573 = vmatprep.subr.mxu0 0.0
    %574 = vmatpush1.msra.mxu0 %v270
    %575 = vmatprep.subr.mxu0 0.0
    %576 = vmatpush1.msra.mxu0 %v265
    %577 = vmatprep.subr.mxu0 0.0
    %578 = vmatpush1.msra.mxu0 %v260
    %579 = vmatprep.subr.mxu0 0.0
    %580 = vmatpush1.msra.mxu0 %v255
    %581 = vmatprep.subr.mxu0 0.0
    %582 = vmatpush1.msra.mxu0 %v250
    %583 = vmatprep.subr.mxu0 0.0
    %584 = vmatpush1.msra.mxu0 %v245
    %585 = vmatprep.subr.mxu0 0.0
    %586 = vmatpush1.msra.mxu0 %v240
    %587 = vmatprep.subr.mxu0 0.0
    %588 = vmatpush1.msra.mxu0 %v235
    %589 = vmatprep.subr.mxu0 0.0
    %590 = vmatpush1.msra.mxu0 %v230
    %591 = vmatprep.subr.mxu0 0.0
    %592 = vmatpush1.msra.mxu0 %v225
    %593 = vmatprep.subr.mxu0 0.0
    %594 = vmatpush1.msra.mxu0 %v220
    %595 = vmatprep.subr.mxu0 0.0
    %596 = vmatpush1.msra.mxu0 %v215
    %597 = vmatprep.subr.mxu0 0.0
    %598 = vmatpush2.msra.mxu0 0.0
    %599 = vmatprep.subr.mxu0 0.0
    %600 = vmatpush2.msra.mxu0 0.0
    %601 = vmatprep.subr.mxu0 0.0
    %602 = vmatpush2.msra.mxu0 0.0
    %603 = vmatprep.subr.mxu0 0.0
    %604 = vmatpush2.msra.mxu0 0.0
    %605 = vmatprep.subr.mxu0 0.0
    %606 = vmatpush2.msra.mxu0 0.0
    %607 = vmatprep.subr.mxu0 0.0
    %608 = vmatpush2.msra.mxu0 0.0
    %609 = vmatprep.subr.mxu0 0.0
    %610 = vmatpush2.msra.mxu0 0.0
    %611 = vmatprep.subr.mxu0 0.0
    %612 = vmatpush2.msra.mxu0 0.0
    %613 = vmatprep.subr.mxu0 0.0
    %614 = vmatpush2.msra.mxu0 0.0
    %615 = vmatprep.subr.mxu0 0.0
    %616 = vmatpush2.msra.mxu0 0.0
    %617 = vmatprep.subr.mxu0 0.0
    %618 = vmatpush2.msra.mxu0 0.0
    %619 = vmatprep.subr.mxu0 0.0
    %620 = vmatpush2.msra.mxu0 0.0
    %621 = vmatprep.subr.mxu0 0.0
    %622 = vmatpush2.msra.mxu0 0.0
    %623 = vmatprep.subr.mxu0 0.0
    %624 = vmatpush2.msra.mxu0 0.0
    %625 = vmatprep.subr.mxu0 0.0
    %626 = vmatpush2.msra.mxu0 0.0
    %627 = vmatprep.subr.mxu0 0.0
    %628 = vmatpush2.msra.mxu0 0.0
    %629 = vmatprep.mubr.f32.mxu0 0.0
    %630 = vmatmul.mubr.f32.gmra.mxu0 %v293
    %v631 = vpop.f32.mrf.mxu0
    %v632 = vadd.f32 %v527, %v631
    %v633 = vpop.f32.mrf.mxu0
    %634 = vmatprep.mubr.f32.mxu0 0.0
    %635 = vmatmul.mubr.f32.gmra.mxu0 %v294
    %v636 = vpop.f32.mrf.mxu0
    %v637 = vadd.f32 %v532, %v636
    %v638 = vpop.f32.mrf.mxu0
    %639 = vmatprep.mubr.f32.mxu0 0.0
    %640 = vmatmul.mubr.f32.gmra.mxu0 %v295
    %v641 = vpop.f32.mrf.mxu0
    %v642 = vadd.f32 %v537, %v641
    %v643 = vpop.f32.mrf.mxu0
    %644 = vmatprep.mubr.f32.mxu0 0.0
    %645 = vmatmul.mubr.f32.gmra.mxu0 %v296
    %v646 = vpop.f32.mrf.mxu0
    %v647 = vadd.f32 %v542, %v646
    %v648 = vpop.f32.mrf.mxu0
    %649 = vmatprep.mubr.f32.mxu0 0.0
    %650 = vmatmul.mubr.f32.gmra.mxu0 %v297
    %v651 = vpop.f32.mrf.mxu0
    %v652 = vadd.f32 %v547, %v651
    %v653 = vpop.f32.mrf.mxu0
    %654 = vmatprep.mubr.f32.mxu0 0.0
    %655 = vmatmul.mubr.f32.gmra.mxu0 %v298
    %v656 = vpop.f32.mrf.mxu0
    %v657 = vadd.f32 %v552, %v656
    %v658 = vpop.f32.mrf.mxu0
    %659 = vmatprep.mubr.f32.mxu0 0.0
    %660 = vmatmul.mubr.f32.gmra.mxu0 %v299
    %v661 = vpop.f32.mrf.mxu0
    %v662 = vadd.f32 %v557, %v661
    %v663 = vpop.f32.mrf.mxu0
    %664 = vmatprep.mubr.f32.mxu0 0.0
    %665 = vmatmul.mubr.f32.gmra.mxu0 %v300
    %v666 = vpop.f32.mrf.mxu0
    %v667 = vadd.f32 %v562, %v666
    %v668 = vpop.f32.mrf.mxu0
    %669 = vdwg.mxu0
    %s670 = scalar_lea.vmem [#allocation5], 128
    %v671 = vld [vmem:[%s670] sm:$0xf]
    %v673 = vsel %vm144, %v671, 0
    %675 = vmatprep.subr.mxu0 0.0
    %676 = vmatpush1.msra.mxu0 0.0
    %677 = vmatprep.subr.mxu0 0.0
    %678 = vmatpush1.msra.mxu0 0.0
    %679 = vmatprep.subr.mxu0 0.0
    %680 = vmatpush1.msra.mxu0 0.0
    %681 = vmatprep.subr.mxu0 0.0
    %682 = vmatpush1.msra.mxu0 0.0
    %683 = vmatprep.subr.mxu0 0.0
    %684 = vmatpush1.msra.mxu0 0.0
    %685 = vmatprep.subr.mxu0 0.0
    %686 = vmatpush1.msra.mxu0 0.0
    %687 = vmatprep.subr.mxu0 0.0
    %688 = vmatpush1.msra.mxu0 0.0
    %689 = vmatprep.subr.mxu0 0.0
    %690 = vmatpush1.msra.mxu0 0.0
    %691 = vmatprep.subr.mxu0 0.0
    %692 = vmatpush1.msra.mxu0 0.0
    %693 = vmatprep.subr.mxu0 0.0
    %694 = vmatpush1.msra.mxu0 0.0
    %695 = vmatprep.subr.mxu0 0.0
    %696 = vmatpush1.msra.mxu0 0.0
    %697 = vmatprep.subr.mxu0 0.0
    %698 = vmatpush1.msra.mxu0 0.0
    %699 = vmatprep.subr.mxu0 0.0
    %700 = vmatpush1.msra.mxu0 0.0
    %701 = vmatprep.subr.mxu0 0.0
    %702 = vmatpush1.msra.mxu0 0.0
    %703 = vmatprep.subr.mxu0 0.0
    %704 = vmatpush1.msra.mxu0 0.0
    %705 = vmatprep.subr.mxu0 0.0
    %706 = vmatpush1.msra.mxu0 %v673
    %707 = vmatprep.subr.mxu0 0.0
    %708 = vmatpush2.msra.mxu0 0.0
    %709 = vmatprep.subr.mxu0 0.0
    %710 = vmatpush2.msra.mxu0 0.0
    %711 = vmatprep.subr.mxu0 0.0
    %712 = vmatpush2.msra.mxu0 0.0
    %713 = vmatprep.subr.mxu0 0.0
    %714 = vmatpush2.msra.mxu0 0.0
    %715 = vmatprep.subr.mxu0 0.0
    %716 = vmatpush2.msra.mxu0 0.0
    %717 = vmatprep.subr.mxu0 0.0
    %718 = vmatpush2.msra.mxu0 0.0
    %719 = vmatprep.subr.mxu0 0.0
    %720 = vmatpush2.msra.mxu0 0.0
    %721 = vmatprep.subr.mxu0 0.0
    %722 = vmatpush2.msra.mxu0 0.0
    %723 = vmatprep.subr.mxu0 0.0
    %724 = vmatpush2.msra.mxu0 0.0
    %725 = vmatprep.subr.mxu0 0.0
    %726 = vmatpush2.msra.mxu0 0.0
    %727 = vmatprep.subr.mxu0 0.0
    %728 = vmatpush2.msra.mxu0 0.0
    %729 = vmatprep.subr.mxu0 0.0
    %730 = vmatpush2.msra.mxu0 0.0
    %731 = vmatprep.subr.mxu0 0.0
    %732 = vmatpush2.msra.mxu0 0.0
    %733 = vmatprep.subr.mxu0 0.0
    %734 = vmatpush2.msra.mxu0 0.0
    %735 = vmatprep.subr.mxu0 0.0
    %736 = vmatpush2.msra.mxu0 0.0
    %737 = vmatprep.subr.mxu0 0.0
    %738 = vmatpush2.msra.mxu0 0.0
    %739 = vmatprep.mubr.f32.mxu0 0.0
    %740 = vmatmul.mubr.f32.gmra.mxu0 %v97
    %v741 = vpop.f32.mrf.mxu0
    %v742 = vadd.f32 0.0, %v741
    %v743 = vpop.f32.mrf.mxu0
    %744 = vmatprep.mubr.f32.mxu0 0.0
    %745 = vmatmul.mubr.f32.gmra.mxu0 %v100
    %v746 = vpop.f32.mrf.mxu0
    %v747 = vadd.f32 0.0, %v746
    %v748 = vpop.f32.mrf.mxu0
    %749 = vmatprep.mubr.f32.mxu0 0.0
    %750 = vmatmul.mubr.f32.gmra.mxu0 %v103
    %v751 = vpop.f32.mrf.mxu0
    %v752 = vadd.f32 0.0, %v751
    %v753 = vpop.f32.mrf.mxu0
    %754 = vmatprep.mubr.f32.mxu0 0.0
    %755 = vmatmul.mubr.f32.gmra.mxu0 %v106
    %v756 = vpop.f32.mrf.mxu0
    %v757 = vadd.f32 0.0, %v756
    %v758 = vpop.f32.mrf.mxu0
    %759 = vmatprep.mubr.f32.mxu0 0.0
    %760 = vmatmul.mubr.f32.gmra.mxu0 %v109
    %v761 = vpop.f32.mrf.mxu0
    %v762 = vadd.f32 0.0, %v761
    %v763 = vpop.f32.mrf.mxu0
    %764 = vmatprep.mubr.f32.mxu0 0.0
    %765 = vmatmul.mubr.f32.gmra.mxu0 %v112
    %v766 = vpop.f32.mrf.mxu0
    %v767 = vadd.f32 0.0, %v766
    %v768 = vpop.f32.mrf.mxu0
    %769 = vmatprep.mubr.f32.mxu0 0.0
    %770 = vmatmul.mubr.f32.gmra.mxu0 %v115
    %v771 = vpop.f32.mrf.mxu0
    %v772 = vadd.f32 0.0, %v771
    %v773 = vpop.f32.mrf.mxu0
    %774 = vmatprep.mubr.f32.mxu0 0.0
    %775 = vmatmul.mubr.f32.gmra.mxu0 %v118
    %v776 = vpop.f32.mrf.mxu0
    %v777 = vadd.f32 0.0, %v776
    %v778 = vpop.f32.mrf.mxu0
    %779 = vmatprep.mubr.f32.mxu0 0.0
    %780 = vmatmul.mubr.f32.gmra.mxu0 %v121
    %v781 = vpop.f32.mrf.mxu0
    %v782 = vadd.f32 0.0, %v781
    %v783 = vpop.f32.mrf.mxu0
    %784 = vmatprep.mubr.f32.mxu0 0.0
    %785 = vmatmul.mubr.f32.gmra.mxu0 %v124
    %v786 = vpop.f32.mrf.mxu0
    %v787 = vadd.f32 0.0, %v786
    %v788 = vpop.f32.mrf.mxu0
    %789 = vmatprep.mubr.f32.mxu0 0.0
    %790 = vmatmul.mubr.f32.gmra.mxu0 %v127
    %v791 = vpop.f32.mrf.mxu0
    %v792 = vadd.f32 0.0, %v791
    %v793 = vpop.f32.mrf.mxu0
    %794 = vmatprep.mubr.f32.mxu0 0.0
    %795 = vmatmul.mubr.f32.gmra.mxu0 %v130
    %v796 = vpop.f32.mrf.mxu0
    %v797 = vadd.f32 0.0, %v796
    %v798 = vpop.f32.mrf.mxu0
    %799 = vmatprep.mubr.f32.mxu0 0.0
    %800 = vmatmul.mubr.f32.gmra.mxu0 %v133
    %v801 = vpop.f32.mrf.mxu0
    %v802 = vadd.f32 0.0, %v801
    %v803 = vpop.f32.mrf.mxu0
    %804 = vmatprep.mubr.f32.mxu0 0.0
    %805 = vmatmul.mubr.f32.gmra.mxu0 %v136
    %v806 = vpop.f32.mrf.mxu0
    %v807 = vadd.f32 0.0, %v806
    %v808 = vpop.f32.mrf.mxu0
    %809 = vmatprep.mubr.f32.mxu0 0.0
    %810 = vmatmul.mubr.f32.gmra.mxu0 %v139
    %v811 = vpop.f32.mrf.mxu0
    %v812 = vadd.f32 0.0, %v811
    %v813 = vpop.f32.mrf.mxu0
    %814 = vmatprep.mubr.f32.mxu0 0.0
    %815 = vmatmul.mubr.f32.gmra.mxu0 %v142
    %v816 = vpop.f32.mrf.mxu0
    %v817 = vadd.f32 0.0, %v816
    %v818 = vpop.f32.mrf.mxu0
    %819 = vdwg.mxu0
    %s820 = scalar_lea.vmem [#allocation3], 256
    %v821 = vld [vmem:[%s820] sm:$0xff]
    %v822 = vld [vmem:[%s820 + $0x8] sm:$0xff]
    %v823 = vld [vmem:[%s820 + $0x10] sm:$0xff]
    %v824 = vld [vmem:[%s820 + $0x18] sm:$0xff]
    %v825 = vld [vmem:[%s820 + $0x20] sm:$0xff]
    %v826 = vld [vmem:[%s820 + $0x28] sm:$0xff]
    %v827 = vld [vmem:[%s820 + $0x30] sm:$0xff]
    %v828 = vld [vmem:[%s820 + $0x38] sm:$0xff]
    %829 = vmatprep.subr.mxu0 0.0
    %830 = vmatpush1.msra.mxu0 %v817
    %831 = vmatprep.subr.mxu0 0.0
    %832 = vmatpush1.msra.mxu0 %v812
    %833 = vmatprep.subr.mxu0 0.0
    %834 = vmatpush1.msra.mxu0 %v807
    %835 = vmatprep.subr.mxu0 0.0
    %836 = vmatpush1.msra.mxu0 %v802
    %837 = vmatprep.subr.mxu0 0.0
    %838 = vmatpush1.msra.mxu0 %v797
    %839 = vmatprep.subr.mxu0 0.0
    %840 = vmatpush1.msra.mxu0 %v792
    %841 = vmatprep.subr.mxu0 0.0
    %842 = vmatpush1.msra.mxu0 %v787
    %843 = vmatprep.subr.mxu0 0.0
    %844 = vmatpush1.msra.mxu0 %v782
    %845 = vmatprep.subr.mxu0 0.0
    %846 = vmatpush1.msra.mxu0 %v777
    %847 = vmatprep.subr.mxu0 0.0
    %848 = vmatpush1.msra.mxu0 %v772
    %849 = vmatprep.subr.mxu0 0.0
    %850 = vmatpush1.msra.mxu0 %v767
    %851 = vmatprep.subr.mxu0 0.0
    %852 = vmatpush1.msra.mxu0 %v762
    %853 = vmatprep.subr.mxu0 0.0
    %854 = vmatpush1.msra.mxu0 %v757
    %855 = vmatprep.subr.mxu0 0.0
    %856 = vmatpush1.msra.mxu0 %v752
    %857 = vmatprep.subr.mxu0 0.0
    %858 = vmatpush1.msra.mxu0 %v747
    %859 = vmatprep.subr.mxu0 0.0
    %860 = vmatpush1.msra.mxu0 %v742
    %861 = vmatprep.subr.mxu0 0.0
    %862 = vmatpush2.msra.mxu0 0.0
    %863 = vmatprep.subr.mxu0 0.0
    %864 = vmatpush2.msra.mxu0 0.0
    %865 = vmatprep.subr.mxu0 0.0
    %866 = vmatpush2.msra.mxu0 0.0
    %867 = vmatprep.subr.mxu0 0.0
    %868 = vmatpush2.msra.mxu0 0.0
    %869 = vmatprep.subr.mxu0 0.0
    %870 = vmatpush2.msra.mxu0 0.0
    %871 = vmatprep.subr.mxu0 0.0
    %872 = vmatpush2.msra.mxu0 0.0
    %873 = vmatprep.subr.mxu0 0.0
    %874 = vmatpush2.msra.mxu0 0.0
    %875 = vmatprep.subr.mxu0 0.0
    %876 = vmatpush2.msra.mxu0 0.0
    %877 = vmatprep.subr.mxu0 0.0
    %878 = vmatpush2.msra.mxu0 0.0
    %879 = vmatprep.subr.mxu0 0.0
    %880 = vmatpush2.msra.mxu0 0.0
    %881 = vmatprep.subr.mxu0 0.0
    %882 = vmatpush2.msra.mxu0 0.0
    %883 = vmatprep.subr.mxu0 0.0
    %884 = vmatpush2.msra.mxu0 0.0
    %885 = vmatprep.subr.mxu0 0.0
    %886 = vmatpush2.msra.mxu0 0.0
    %887 = vmatprep.subr.mxu0 0.0
    %888 = vmatpush2.msra.mxu0 0.0
    %889 = vmatprep.subr.mxu0 0.0
    %890 = vmatpush2.msra.mxu0 0.0
    %891 = vmatprep.subr.mxu0 0.0
    %892 = vmatpush2.msra.mxu0 0.0
    %893 = vmatprep.mubr.f32.mxu0 0.0
    %894 = vmatmul.mubr.f32.gmra.mxu0 %v821
    %v895 = vpop.f32.mrf.mxu0
    %v896 = vadd.f32 0.0, %v895
    %v897 = vpop.f32.mrf.mxu0
    %898 = vmatprep.mubr.f32.mxu0 0.0
    %899 = vmatmul.mubr.f32.gmra.mxu0 %v822
    %v900 = vpop.f32.mrf.mxu0
    %v901 = vadd.f32 0.0, %v900
    %v902 = vpop.f32.mrf.mxu0
    %903 = vmatprep.mubr.f32.mxu0 0.0
    %904 = vmatmul.mubr.f32.gmra.mxu0 %v823
    %v905 = vpop.f32.mrf.mxu0
    %v906 = vadd.f32 0.0, %v905
    %v907 = vpop.f32.mrf.mxu0
    %908 = vmatprep.mubr.f32.mxu0 0.0
    %909 = vmatmul.mubr.f32.gmra.mxu0 %v824
    %v910 = vpop.f32.mrf.mxu0
    %v911 = vadd.f32 0.0, %v910
    %v912 = vpop.f32.mrf.mxu0
    %913 = vmatprep.mubr.f32.mxu0 0.0
    %914 = vmatmul.mubr.f32.gmra.mxu0 %v825
    %v915 = vpop.f32.mrf.mxu0
    %v916 = vadd.f32 0.0, %v915
    %v917 = vpop.f32.mrf.mxu0
    %918 = vmatprep.mubr.f32.mxu0 0.0
    %919 = vmatmul.mubr.f32.gmra.mxu0 %v826
    %v920 = vpop.f32.mrf.mxu0
    %v921 = vadd.f32 0.0, %v920
    %v922 = vpop.f32.mrf.mxu0
    %923 = vmatprep.mubr.f32.mxu0 0.0
    %924 = vmatmul.mubr.f32.gmra.mxu0 %v827
    %v925 = vpop.f32.mrf.mxu0
    %v926 = vadd.f32 0.0, %v925
    %v927 = vpop.f32.mrf.mxu0
    %928 = vmatprep.mubr.f32.mxu0 0.0
    %929 = vmatmul.mubr.f32.gmra.mxu0 %v828
    %v930 = vpop.f32.mrf.mxu0
    %v931 = vadd.f32 0.0, %v930
    %v932 = vpop.f32.mrf.mxu0
    %933 = vdwg.mxu0
    %v934 = vadd.f32 %v632, %v896
    %v935 = vadd.f32 %v637, %v901
    %v936 = vadd.f32 %v642, %v906
    %v937 = vadd.f32 %v647, %v911
    %v938 = vadd.f32 %v652, %v916
    %v939 = vadd.f32 %v657, %v921
    %v940 = vadd.f32 %v662, %v926
    %v941 = vadd.f32 %v667, %v931
    %vm942 = vcmask 64512
    %v943 = vsel %vm942, %v934, 0.0
    %v944 = vsel %vm942, %v935, 0.0
    %v945 = vadd.f32 %v943, %v944
    %v946 = vsel %vm942, %v936, 0.0
    %v947 = vadd.f32 %v945, %v946
    %v948 = vsel %vm942, %v937, 0.0
    %v949 = vadd.f32 %v947, %v948
    %v950 = vsel %vm942, %v938, 0.0
    %v951 = vadd.f32 %v949, %v950
    %v952 = vsel %vm942, %v939, 0.0
    %v953 = vadd.f32 %v951, %v952
    %v954 = vsel %vm942, %v940, 0.0
    %v955 = vadd.f32 %v953, %v954
    %v956 = vsel %vm942, %v941, 0.0
    %v957 = vadd.f32 %v955, %v956
    %v958 = vrot.slane %v957, 4
    %v959 = vadd.f32 %v957, %v958
    %v960 = vrot.slane %v959, 2
    %v961 = vadd.f32 %v959, %v960
    %v962 = vrot.slane %v961, 1
    %v963 = vadd.f32 %v961, %v962
    %v964 = vmul.f32 %v934, %v934
    %v965 = vmul.f32 %v935, %v935
    %v966 = vmul.f32 %v936, %v936
    %v967 = vmul.f32 %v937, %v937
    %v968 = vmul.f32 %v938, %v938
    %v969 = vmul.f32 %v939, %v939
    %v970 = vmul.f32 %v940, %v940
    %v971 = vmul.f32 %v941, %v941
    %v972 = vsel %vm942, %v964, 0.0
    %v973 = vsel %vm942, %v965, 0.0
    %v974 = vadd.f32 %v972, %v973
    %v975 = vsel %vm942, %v966, 0.0
    %v976 = vadd.f32 %v974, %v975
    %v977 = vsel %vm942, %v967, 0.0
    %v978 = vadd.f32 %v976, %v977
    %v979 = vsel %vm942, %v968, 0.0
    %v980 = vadd.f32 %v978, %v979
    %v981 = vsel %vm942, %v969, 0.0
    %v982 = vadd.f32 %v980, %v981
    %v983 = vsel %vm942, %v970, 0.0
    %v984 = vadd.f32 %v982, %v983
    %v985 = vsel %vm942, %v971, 0.0
    %v986 = vadd.f32 %v984, %v985
    %v987 = vrot.slane %v986, 4
    %v988 = vadd.f32 %v986, %v987
    %v989 = vrot.slane %v988, 2
    %v990 = vadd.f32 %v988, %v989
    %v991 = vrot.slane %v990, 1
    %v992 = vadd.f32 %v990, %v991
    %v993 = vmul.f32 %v963, 0.015625
    %v994 = vmul.f32 %v992, 0.015625
    %v995 = vmul.f32 %v993, %v993
    %v996 = vsub.f32 %v994, %v995
    %v997 = vmax.f32 %v996, 0.0
    %v998 = vld [vmem:[#allocation7] sm:$0x1]
    %v999 = vsub.f32 %v934, %v993
    %v1000 = vsub.f32 %v935, %v993
    %v1001 = vsub.f32 %v936, %v993
    %v1002 = vsub.f32 %v937, %v993
    %v1003 = vsub.f32 %v938, %v993
    %v1004 = vsub.f32 %v939, %v993
    %v1005 = vsub.f32 %v940, %v993
    %v1006 = vsub.f32 %v941, %v993
    %v1007 = vlaneseq
    %v1008 = vshrl.u32 %v1007, 7
    %v1009 = vsub.s32 0, %v1008
    %v1010 = vrot.slane %v998, %v1009
    %v1011 = vmul.f32 %v1010, %v999
    %v1012 = vmul.f32 %v1010, %v1000
    %v1013 = vmul.f32 %v1010, %v1001
    %v1014 = vmul.f32 %v1010, %v1002
    %v1015 = vmul.f32 %v1010, %v1003
    %v1016 = vmul.f32 %v1010, %v1004
    %v1017 = vmul.f32 %v1010, %v1005
    %v1018 = vmul.f32 %v1010, %v1006
    %v1019 = vadd.f32 %v997, 1e-05
    %v1020 = vrsqrt.pop %v1019
    %v1021 = vmul.f32 %v1011, %v1020
    %v1022 = vmul.f32 %v1012, %v1020
    %v1023 = vmul.f32 %v1013, %v1020
    %v1024 = vmul.f32 %v1014, %v1020
    %v1025 = vmul.f32 %v1015, %v1020
    %v1026 = vmul.f32 %v1016, %v1020
    %v1027 = vmul.f32 %v1017, %v1020
    %v1028 = vmul.f32 %v1018, %v1020
    %v1029 = vld [vmem:[#allocation7 + $0x1] sm:$0x1]
    %v1030 = vlaneseq
    %v1031 = vshrl.u32 %v1030, 7
    %v1032 = vsub.s32 0, %v1031
    %v1033 = vrot.slane %v1029, %v1032
    %v1034 = vadd.f32 %v1021, %v1033
    %v1035 = vadd.f32 %v1022, %v1033
    %v1036 = vadd.f32 %v1023, %v1033
    %v1037 = vadd.f32 %v1024, %v1033
    %v1038 = vadd.f32 %v1025, %v1033
    %v1039 = vadd.f32 %v1026, %v1033
    %v1040 = vadd.f32 %v1027, %v1033
    %v1041 = vadd.f32 %v1028, %v1033
    %v1042 = vmax.f32 %v1034, 0.0
    %v1043 = vmax.f32 %v1035, 0.0
    %v1044 = vmax.f32 %v1036, 0.0
    %v1045 = vmax.f32 %v1037, 0.0
    %v1046 = vmax.f32 %v1038, 0.0
    %v1047 = vmax.f32 %v1039, 0.0
    %v1048 = vmax.f32 %v1040, 0.0
    %v1049 = vmax.f32 %v1041, 0.0
    %s1050 = scalar_lea.vmem [#allocation5], 192
    %v1051 = vld [vmem:[%s1050] sm:$0xff]
    %v1053 = vsel %vm942, %v1042, 0
    %v1056 = vsel %vm942, %v1043, 0
    %v1059 = vsel %vm942, %v1044, 0
    %v1062 = vsel %vm942, %v1045, 0
    %v1065 = vsel %vm942, %v1046, 0
    %v1068 = vsel %vm942, %v1047, 0
    %v1071 = vsel %vm942, %v1048, 0
    %v1074 = vsel %vm942, %v1049, 0
    %1076 = vmatprep.subr.mxu0 0.0
    %1077 = vmatpush1.msra.mxu0 0.0
    %1078 = vmatprep.subr.mxu0 0.0
    %1079 = vmatpush1.msra.mxu0 0.0
    %1080 = vmatprep.subr.mxu0 0.0
    %1081 = vmatpush1.msra.mxu0 0.0
    %1082 = vmatprep.subr.mxu0 0.0
    %1083 = vmatpush1.msra.mxu0 0.0
    %1084 = vmatprep.subr.mxu0 0.0
    %1085 = vmatpush1.msra.mxu0 0.0
    %1086 = vmatprep.subr.mxu0 0.0
    %1087 = vmatpush1.msra.mxu0 0.0
    %1088 = vmatprep.subr.mxu0 0.0
    %1089 = vmatpush1.msra.mxu0 0.0
    %1090 = vmatprep.subr.mxu0 0.0
    %1091 = vmatpush1.msra.mxu0 0.0
    %1092 = vmatprep.subr.mxu0 0.0
    %1093 = vmatpush1.msra.mxu0 0.0
    %1094 = vmatprep.subr.mxu0 0.0
    %1095 = vmatpush1.msra.mxu0 0.0
    %1096 = vmatprep.subr.mxu0 0.0
    %1097 = vmatpush1.msra.mxu0 0.0
    %1098 = vmatprep.subr.mxu0 0.0
    %1099 = vmatpush1.msra.mxu0 0.0
    %1100 = vmatprep.subr.mxu0 0.0
    %1101 = vmatpush1.msra.mxu0 0.0
    %1102 = vmatprep.subr.mxu0 0.0
    %1103 = vmatpush1.msra.mxu0 0.0
    %1104 = vmatprep.subr.mxu0 0.0
    %1105 = vmatpush1.msra.mxu0 0.0
    %1106 = vmatprep.subr.mxu0 0.0
    %1107 = vmatpush1.msra.mxu0 %v1051
    %1108 = vmatprep.subr.mxu0 0.0
    %1109 = vmatpush2.msra.mxu0 0.0
    %1110 = vmatprep.subr.mxu0 0.0
    %1111 = vmatpush2.msra.mxu0 0.0
    %1112 = vmatprep.subr.mxu0 0.0
    %1113 = vmatpush2.msra.mxu0 0.0
    %1114 = vmatprep.subr.mxu0 0.0
    %1115 = vmatpush2.msra.mxu0 0.0
    %1116 = vmatprep.subr.mxu0 0.0
    %1117 = vmatpush2.msra.mxu0 0.0
    %1118 = vmatprep.subr.mxu0 0.0
    %1119 = vmatpush2.msra.mxu0 0.0
    %1120 = vmatprep.subr.mxu0 0.0
    %1121 = vmatpush2.msra.mxu0 0.0
    %1122 = vmatprep.subr.mxu0 0.0
    %1123 = vmatpush2.msra.mxu0 0.0
    %1124 = vmatprep.subr.mxu0 0.0
    %1125 = vmatpush2.msra.mxu0 0.0
    %1126 = vmatprep.subr.mxu0 0.0
    %1127 = vmatpush2.msra.mxu0 0.0
    %1128 = vmatprep.subr.mxu0 0.0
    %1129 = vmatpush2.msra.mxu0 0.0
    %1130 = vmatprep.subr.mxu0 0.0
    %1131 = vmatpush2.msra.mxu0 0.0
    %1132 = vmatprep.subr.mxu0 0.0
    %1133 = vmatpush2.msra.mxu0 0.0
    %1134 = vmatprep.subr.mxu0 0.0
    %1135 = vmatpush2.msra.mxu0 0.0
    %1136 = vmatprep.subr.mxu0 0.0
    %1137 = vmatpush2.msra.mxu0 0.0
    %1138 = vmatprep.subr.mxu0 0.0
    %1139 = vmatpush2.msra.mxu0 0.0
    %1140 = vmatprep.mubr.f32.mxu0 0.0
    %1141 = vmatmul.mubr.f32.gmra.mxu0 %v1053
    %v1142 = vpop.f32.mrf.mxu0
    %v1143 = vadd.f32 0.0, %v1142
    %v1144 = vpop.f32.mrf.mxu0
    %1145 = vmatprep.mubr.f32.mxu0 0.0
    %1146 = vmatmul.mubr.f32.gmra.mxu0 %v1056
    %v1147 = vpop.f32.mrf.mxu0
    %v1148 = vadd.f32 0.0, %v1147
    %v1149 = vpop.f32.mrf.mxu0
    %1150 = vmatprep.mubr.f32.mxu0 0.0
    %1151 = vmatmul.mubr.f32.gmra.mxu0 %v1059
    %v1152 = vpop.f32.mrf.mxu0
    %v1153 = vadd.f32 0.0, %v1152
    %v1154 = vpop.f32.mrf.mxu0
    %1155 = vmatprep.mubr.f32.mxu0 0.0
    %1156 = vmatmul.mubr.f32.gmra.mxu0 %v1062
    %v1157 = vpop.f32.mrf.mxu0
    %v1158 = vadd.f32 0.0, %v1157
    %v1159 = vpop.f32.mrf.mxu0
    %1160 = vmatprep.mubr.f32.mxu0 0.0
    %1161 = vmatmul.mubr.f32.gmra.mxu0 %v1065
    %v1162 = vpop.f32.mrf.mxu0
    %v1163 = vadd.f32 0.0, %v1162
    %v1164 = vpop.f32.mrf.mxu0
    %1165 = vmatprep.mubr.f32.mxu0 0.0
    %1166 = vmatmul.mubr.f32.gmra.mxu0 %v1068
    %v1167 = vpop.f32.mrf.mxu0
    %v1168 = vadd.f32 0.0, %v1167
    %v1169 = vpop.f32.mrf.mxu0
    %1170 = vmatprep.mubr.f32.mxu0 0.0
    %1171 = vmatmul.mubr.f32.gmra.mxu0 %v1071
    %v1172 = vpop.f32.mrf.mxu0
    %v1173 = vadd.f32 0.0, %v1172
    %v1174 = vpop.f32.mrf.mxu0
    %1175 = vmatprep.mubr.f32.mxu0 0.0
    %1176 = vmatmul.mubr.f32.gmra.mxu0 %v1074
    %v1177 = vpop.f32.mrf.mxu0
    %v1178 = vadd.f32 0.0, %v1177
    %v1179 = vpop.f32.mrf.mxu0
    %1180 = vdwg.mxu0
    %s1181 = scalar_lea.vmem [#allocation3], 384
    %v1182 = vld [vmem:[%s1181] sm:$0xff]
    %v1183 = vld [vmem:[%s1181 + $0x8] sm:$0xff]
    %v1184 = vld [vmem:[%s1181 + $0x10] sm:$0xff]
    %v1185 = vld [vmem:[%s1181 + $0x18] sm:$0xff]
    %s1186 = scalar_lea.vmem [#allocation5], 256
    %v1187 = vld [vmem:[%s1186] sm:$0xff]
    %1188 = vmatprep.subr.mxu0 0.0
    %1189 = vmatpush1.msra.mxu0 0.0
    %1190 = vmatprep.subr.mxu0 0.0
    %1191 = vmatpush1.msra.mxu0 0.0
    %1192 = vmatprep.subr.mxu0 0.0
    %1193 = vmatpush1.msra.mxu0 0.0
    %1194 = vmatprep.subr.mxu0 0.0
    %1195 = vmatpush1.msra.mxu0 0.0
    %1196 = vmatprep.subr.mxu0 0.0
    %1197 = vmatpush1.msra.mxu0 0.0
    %1198 = vmatprep.subr.mxu0 0.0
    %1199 = vmatpush1.msra.mxu0 0.0
    %1200 = vmatprep.subr.mxu0 0.0
    %1201 = vmatpush1.msra.mxu0 0.0
    %1202 = vmatprep.subr.mxu0 0.0
    %1203 = vmatpush1.msra.mxu0 0.0
    %1204 = vmatprep.subr.mxu0 0.0
    %1205 = vmatpush1.msra.mxu0 0.0
    %1206 = vmatprep.subr.mxu0 0.0
    %1207 = vmatpush1.msra.mxu0 0.0
    %1208 = vmatprep.subr.mxu0 0.0
    %1209 = vmatpush1.msra.mxu0 0.0
    %1210 = vmatprep.subr.mxu0 0.0
    %1211 = vmatpush1.msra.mxu0 0.0
    %1212 = vmatprep.subr.mxu0 0.0
    %1213 = vmatpush1.msra.mxu0 0.0
    %1214 = vmatprep.subr.mxu0 0.0
    %1215 = vmatpush1.msra.mxu0 0.0
    %1216 = vmatprep.subr.mxu0 0.0
    %1217 = vmatpush1.msra.mxu0 0.0
    %1218 = vmatprep.subr.mxu0 0.0
    %1219 = vmatpush1.msra.mxu0 %v1187
    %1220 = vmatprep.subr.mxu0 0.0
    %1221 = vmatpush2.msra.mxu0 0.0
    %1222 = vmatprep.subr.mxu0 0.0
    %1223 = vmatpush2.msra.mxu0 0.0
    %1224 = vmatprep.subr.mxu0 0.0
    %1225 = vmatpush2.msra.mxu0 0.0
    %1226 = vmatprep.subr.mxu0 0.0
    %1227 = vmatpush2.msra.mxu0 0.0
    %1228 = vmatprep.subr.mxu0 0.0
    %1229 = vmatpush2.msra.mxu0 0.0
    %1230 = vmatprep.subr.mxu0 0.0
    %1231 = vmatpush2.msra.mxu0 0.0
    %1232 = vmatprep.subr.mxu0 0.0
    %1233 = vmatpush2.msra.mxu0 0.0
    %1234 = vmatprep.subr.mxu0 0.0
    %1235 = vmatpush2.msra.mxu0 0.0
    %1236 = vmatprep.subr.mxu0 0.0
    %1237 = vmatpush2.msra.mxu0 0.0
    %1238 = vmatprep.subr.mxu0 0.0
    %1239 = vmatpush2.msra.mxu0 0.0
    %1240 = vmatprep.subr.mxu0 0.0
    %1241 = vmatpush2.msra.mxu0 0.0
    %1242 = vmatprep.subr.mxu0 0.0
    %1243 = vmatpush2.msra.mxu0 0.0
    %1244 = vmatprep.subr.mxu0 0.0
    %1245 = vmatpush2.msra.mxu0 0.0
    %1246 = vmatprep.subr.mxu0 0.0
    %1247 = vmatpush2.msra.mxu0 0.0
    %1248 = vmatprep.subr.mxu0 0.0
    %1249 = vmatpush2.msra.mxu0 0.0
    %1250 = vmatprep.subr.mxu0 0.0
    %1251 = vmatpush2.msra.mxu0 0.0
    %1252 = vmatprep.mubr.f32.mxu0 0.0
    %1253 = vmatmul.mubr.f32.gmra.mxu0 %v1053
    %v1254 = vpop.f32.mrf.mxu0
    %v1255 = vadd.f32 0.0, %v1254
    %v1256 = vpop.f32.mrf.mxu0
    %1257 = vmatprep.mubr.f32.mxu0 0.0
    %1258 = vmatmul.mubr.f32.gmra.mxu0 %v1056
    %v1259 = vpop.f32.mrf.mxu0
    %v1260 = vadd.f32 0.0, %v1259
    %v1261 = vpop.f32.mrf.mxu0
    %1262 = vmatprep.mubr.f32.mxu0 0.0
    %1263 = vmatmul.mubr.f32.gmra.mxu0 %v1059
    %v1264 = vpop.f32.mrf.mxu0
    %v1265 = vadd.f32 0.0, %v1264
    %v1266 = vpop.f32.mrf.mxu0
    %1267 = vmatprep.mubr.f32.mxu0 0.0
    %1268 = vmatmul.mubr.f32.gmra.mxu0 %v1062
    %v1269 = vpop.f32.mrf.mxu0
    %v1270 = vadd.f32 0.0, %v1269
    %v1271 = vpop.f32.mrf.mxu0
    %1272 = vmatprep.mubr.f32.mxu0 0.0
    %1273 = vmatmul.mubr.f32.gmra.mxu0 %v1065
    %v1274 = vpop.f32.mrf.mxu0
    %v1275 = vadd.f32 0.0, %v1274
    %v1276 = vpop.f32.mrf.mxu0
    %1277 = vmatprep.mubr.f32.mxu0 0.0
    %1278 = vmatmul.mubr.f32.gmra.mxu0 %v1068
    %v1279 = vpop.f32.mrf.mxu0
    %v1280 = vadd.f32 0.0, %v1279
    %v1281 = vpop.f32.mrf.mxu0
    %1282 = vmatprep.mubr.f32.mxu0 0.0
    %1283 = vmatmul.mubr.f32.gmra.mxu0 %v1071
    %v1284 = vpop.f32.mrf.mxu0
    %v1285 = vadd.f32 0.0, %v1284
    %v1286 = vpop.f32.mrf.mxu0
    %1287 = vmatprep.mubr.f32.mxu0 0.0
    %1288 = vmatmul.mubr.f32.gmra.mxu0 %v1074
    %v1289 = vpop.f32.mrf.mxu0
    %v1290 = vadd.f32 0.0, %v1289
    %v1291 = vpop.f32.mrf.mxu0
    %1292 = vdwg.mxu0
    %s1293 = scalar_lea.vmem [#allocation3], 512
    %v1294 = vld [vmem:[%s1293] sm:$0xff]
    %v1295 = vld [vmem:[%s1293 + $0x8] sm:$0xff]
    %v1296 = vld [vmem:[%s1293 + $0x10] sm:$0xff]
    %v1297 = vld [vmem:[%s1293 + $0x18] sm:$0xff]
    %vm1298 = vcmask 523264
    %v1300 = vsel %vm1298, %v1294, 0
    %v1303 = vsel %vm1298, %v1295, 0
    %v1306 = vsel %vm1298, %v1296, 0
    %v1309 = vsel %vm1298, %v1297, 0
    %1311 = vmatprep.subr.mxu0 0.0
    %1312 = vmatpush1.msra.mxu0 0.0
    %1313 = vmatprep.subr.mxu0 0.0
    %1314 = vmatpush1.msra.mxu0 0.0
    %1315 = vmatprep.subr.mxu0 0.0
    %1316 = vmatpush1.msra.mxu0 0.0
    %1317 = vmatprep.subr.mxu0 0.0
    %1318 = vmatpush1.msra.mxu0 0.0
    %1319 = vmatprep.subr.mxu0 0.0
    %1320 = vmatpush1.msra.mxu0 0.0
    %1321 = vmatprep.subr.mxu0 0.0
    %1322 = vmatpush1.msra.mxu0 0.0
    %1323 = vmatprep.subr.mxu0 0.0
    %1324 = vmatpush1.msra.mxu0 0.0
    %1325 = vmatprep.subr.mxu0 0.0
    %1326 = vmatpush1.msra.mxu0 0.0
    %1327 = vmatprep.subr.mxu0 0.0
    %1328 = vmatpush1.msra.mxu0 %v1290
    %1329 = vmatprep.subr.mxu0 0.0
    %1330 = vmatpush1.msra.mxu0 %v1285
    %1331 = vmatprep.subr.mxu0 0.0
    %1332 = vmatpush1.msra.mxu0 %v1280
    %1333 = vmatprep.subr.mxu0 0.0
    %1334 = vmatpush1.msra.mxu0 %v1275
    %1335 = vmatprep.subr.mxu0 0.0
    %1336 = vmatpush1.msra.mxu0 %v1270
    %1337 = vmatprep.subr.mxu0 0.0
    %1338 = vmatpush1.msra.mxu0 %v1265
    %1339 = vmatprep.subr.mxu0 0.0
    %1340 = vmatpush1.msra.mxu0 %v1260
    %1341 = vmatprep.subr.mxu0 0.0
    %1342 = vmatpush1.msra.mxu0 %v1255
    %1343 = vmatprep.subr.mxu0 0.0
    %1344 = vmatpush2.msra.mxu0 0.0
    %1345 = vmatprep.subr.mxu0 0.0
    %1346 = vmatpush2.msra.mxu0 0.0
    %1347 = vmatprep.subr.mxu0 0.0
    %1348 = vmatpush2.msra.mxu0 0.0
    %1349 = vmatprep.subr.mxu0 0.0
    %1350 = vmatpush2.msra.mxu0 0.0
    %1351 = vmatprep.subr.mxu0 0.0
    %1352 = vmatpush2.msra.mxu0 0.0
    %1353 = vmatprep.subr.mxu0 0.0
    %1354 = vmatpush2.msra.mxu0 0.0
    %1355 = vmatprep.subr.mxu0 0.0
    %1356 = vmatpush2.msra.mxu0 0.0
    %1357 = vmatprep.subr.mxu0 0.0
    %1358 = vmatpush2.msra.mxu0 0.0
    %1359 = vmatprep.subr.mxu0 0.0
    %1360 = vmatpush2.msra.mxu0 0.0
    %1361 = vmatprep.subr.mxu0 0.0
    %1362 = vmatpush2.msra.mxu0 0.0
    %1363 = vmatprep.subr.mxu0 0.0
    %1364 = vmatpush2.msra.mxu0 0.0
    %1365 = vmatprep.subr.mxu0 0.0
    %1366 = vmatpush2.msra.mxu0 0.0
    %1367 = vmatprep.subr.mxu0 0.0
    %1368 = vmatpush2.msra.mxu0 0.0
    %1369 = vmatprep.subr.mxu0 0.0
    %1370 = vmatpush2.msra.mxu0 0.0
    %1371 = vmatprep.subr.mxu0 0.0
    %1372 = vmatpush2.msra.mxu0 0.0
    %1373 = vmatprep.subr.mxu0 0.0
    %1374 = vmatpush2.msra.mxu0 0.0
    %1375 = vmatprep.mubr.f32.mxu0 0.0
    %1376 = vmatmul.mubr.f32.gmra.mxu0 %v1300
    %v1377 = vpop.f32.mrf.mxu0
    %v1378 = vadd.f32 0.0, %v1377
    %v1379 = vpop.f32.mrf.mxu0
    %1380 = vmatprep.mubr.f32.mxu0 0.0
    %1381 = vmatmul.mubr.f32.gmra.mxu0 %v1303
    %v1382 = vpop.f32.mrf.mxu0
    %v1383 = vadd.f32 0.0, %v1382
    %v1384 = vpop.f32.mrf.mxu0
    %1385 = vmatprep.mubr.f32.mxu0 0.0
    %1386 = vmatmul.mubr.f32.gmra.mxu0 %v1306
    %v1387 = vpop.f32.mrf.mxu0
    %v1388 = vadd.f32 0.0, %v1387
    %v1389 = vpop.f32.mrf.mxu0
    %1390 = vmatprep.mubr.f32.mxu0 0.0
    %1391 = vmatmul.mubr.f32.gmra.mxu0 %v1309
    %v1392 = vpop.f32.mrf.mxu0
    %v1393 = vadd.f32 0.0, %v1392
    %v1394 = vpop.f32.mrf.mxu0
    %1395 = vdwg.mxu0
    %v1397 = vsel %vm1298, %v1182, 0
    %v1400 = vsel %vm1298, %v1183, 0
    %v1403 = vsel %vm1298, %v1184, 0
    %v1406 = vsel %vm1298, %v1185, 0
    %1408 = vmatprep.subr.mxu0 0.0
    %1409 = vmatpush1.msra.mxu0 0.0
    %1410 = vmatprep.subr.mxu0 0.0
    %1411 = vmatpush1.msra.mxu0 0.0
    %1412 = vmatprep.subr.mxu0 0.0
    %1413 = vmatpush1.msra.mxu0 0.0
    %1414 = vmatprep.subr.mxu0 0.0
    %1415 = vmatpush1.msra.mxu0 0.0
    %1416 = vmatprep.subr.mxu0 0.0
    %1417 = vmatpush1.msra.mxu0 0.0
    %1418 = vmatprep.subr.mxu0 0.0
    %1419 = vmatpush1.msra.mxu0 0.0
    %1420 = vmatprep.subr.mxu0 0.0
    %1421 = vmatpush1.msra.mxu0 0.0
    %1422 = vmatprep.subr.mxu0 0.0
    %1423 = vmatpush1.msra.mxu0 0.0
    %1424 = vmatprep.subr.mxu0 0.0
    %1425 = vmatpush1.msra.mxu0 %v1178
    %1426 = vmatprep.subr.mxu0 0.0
    %1427 = vmatpush1.msra.mxu0 %v1173
    %1428 = vmatprep.subr.mxu0 0.0
    %1429 = vmatpush1.msra.mxu0 %v1168
    %1430 = vmatprep.subr.mxu0 0.0
    %1431 = vmatpush1.msra.mxu0 %v1163
    %1432 = vmatprep.subr.mxu0 0.0
    %1433 = vmatpush1.msra.mxu0 %v1158
    %1434 = vmatprep.subr.mxu0 0.0
    %1435 = vmatpush1.msra.mxu0 %v1153
    %1436 = vmatprep.subr.mxu0 0.0
    %1437 = vmatpush1.msra.mxu0 %v1148
    %1438 = vmatprep.subr.mxu0 0.0
    %1439 = vmatpush1.msra.mxu0 %v1143
    %1440 = vmatprep.subr.mxu0 0.0
    %1441 = vmatpush2.msra.mxu0 0.0
    %1442 = vmatprep.subr.mxu0 0.0
    %1443 = vmatpush2.msra.mxu0 0.0
    %1444 = vmatprep.subr.mxu0 0.0
    %1445 = vmatpush2.msra.mxu0 0.0
    %1446 = vmatprep.subr.mxu0 0.0
    %1447 = vmatpush2.msra.mxu0 0.0
    %1448 = vmatprep.subr.mxu0 0.0
    %1449 = vmatpush2.msra.mxu0 0.0
    %1450 = vmatprep.subr.mxu0 0.0
    %1451 = vmatpush2.msra.mxu0 0.0
    %1452 = vmatprep.subr.mxu0 0.0
    %1453 = vmatpush2.msra.mxu0 0.0
    %1454 = vmatprep.subr.mxu0 0.0
    %1455 = vmatpush2.msra.mxu0 0.0
    %1456 = vmatprep.subr.mxu0 0.0
    %1457 = vmatpush2.msra.mxu0 0.0
    %1458 = vmatprep.subr.mxu0 0.0
    %1459 = vmatpush2.msra.mxu0 0.0
    %1460 = vmatprep.subr.mxu0 0.0
    %1461 = vmatpush2.msra.mxu0 0.0
    %1462 = vmatprep.subr.mxu0 0.0
    %1463 = vmatpush2.msra.mxu0 0.0
    %1464 = vmatprep.subr.mxu0 0.0
    %1465 = vmatpush2.msra.mxu0 0.0
    %1466 = vmatprep.subr.mxu0 0.0
    %1467 = vmatpush2.msra.mxu0 0.0
    %1468 = vmatprep.subr.mxu0 0.0
    %1469 = vmatpush2.msra.mxu0 0.0
    %1470 = vmatprep.subr.mxu0 0.0
    %1471 = vmatpush2.msra.mxu0 0.0
    %1472 = vmatprep.mubr.f32.mxu0 0.0
    %1473 = vmatmul.mubr.f32.gmra.mxu0 %v1397
    %v1474 = vpop.f32.mrf.mxu0
    %v1475 = vadd.f32 %v1378, %v1474
    %v1476 = vpop.f32.mrf.mxu0
    %1477 = vmatprep.mubr.f32.mxu0 0.0
    %1478 = vmatmul.mubr.f32.gmra.mxu0 %v1400
    %v1479 = vpop.f32.mrf.mxu0
    %v1480 = vadd.f32 %v1383, %v1479
    %v1481 = vpop.f32.mrf.mxu0
    %1482 = vmatprep.mubr.f32.mxu0 0.0
    %1483 = vmatmul.mubr.f32.gmra.mxu0 %v1403
    %v1484 = vpop.f32.mrf.mxu0
    %v1485 = vadd.f32 %v1388, %v1484
    %v1486 = vpop.f32.mrf.mxu0
    %1487 = vmatprep.mubr.f32.mxu0 0.0
    %1488 = vmatmul.mubr.f32.gmra.mxu0 %v1406
    %v1489 = vpop.f32.mrf.mxu0
    %v1490 = vadd.f32 %v1393, %v1489
    %v1491 = vpop.f32.mrf.mxu0
    %1492 = vdwg.mxu0
    %s1493 = scalar_lea.vmem [#allocation5], 320
    %v1494 = vld [vmem:[%s1493] sm:$0xff]
    %1495 = vmatprep.subr.mxu0 0.0
    %1496 = vmatpush1.msra.mxu0 0.0
    %1497 = vmatprep.subr.mxu0 0.0
    %1498 = vmatpush1.msra.mxu0 0.0
    %1499 = vmatprep.subr.mxu0 0.0
    %1500 = vmatpush1.msra.mxu0 0.0
    %1501 = vmatprep.subr.mxu0 0.0
    %1502 = vmatpush1.msra.mxu0 0.0
    %1503 = vmatprep.subr.mxu0 0.0
    %1504 = vmatpush1.msra.mxu0 0.0
    %1505 = vmatprep.subr.mxu0 0.0
    %1506 = vmatpush1.msra.mxu0 0.0
    %1507 = vmatprep.subr.mxu0 0.0
    %1508 = vmatpush1.msra.mxu0 0.0
    %1509 = vmatprep.subr.mxu0 0.0
    %1510 = vmatpush1.msra.mxu0 0.0
    %1511 = vmatprep.subr.mxu0 0.0
    %1512 = vmatpush1.msra.mxu0 0.0
    %1513 = vmatprep.subr.mxu0 0.0
    %1514 = vmatpush1.msra.mxu0 0.0
    %1515 = vmatprep.subr.mxu0 0.0
    %1516 = vmatpush1.msra.mxu0 0.0
    %1517 = vmatprep.subr.mxu0 0.0
    %1518 = vmatpush1.msra.mxu0 0.0
    %1519 = vmatprep.subr.mxu0 0.0
    %1520 = vmatpush1.msra.mxu0 0.0
    %1521 = vmatprep.subr.mxu0 0.0
    %1522 = vmatpush1.msra.mxu0 0.0
    %1523 = vmatprep.subr.mxu0 0.0
    %1524 = vmatpush1.msra.mxu0 0.0
    %1525 = vmatprep.subr.mxu0 0.0
    %1526 = vmatpush1.msra.mxu0 %v1494
    %1527 = vmatprep.subr.mxu0 0.0
    %1528 = vmatpush2.msra.mxu0 0.0
    %1529 = vmatprep.subr.mxu0 0.0
    %1530 = vmatpush2.msra.mxu0 0.0
    %1531 = vmatprep.subr.mxu0 0.0
    %1532 = vmatpush2.msra.mxu0 0.0
    %1533 = vmatprep.subr.mxu0 0.0
    %1534 = vmatpush2.msra.mxu0 0.0
    %1535 = vmatprep.subr.mxu0 0.0
    %1536 = vmatpush2.msra.mxu0 0.0
    %1537 = vmatprep.subr.mxu0 0.0
    %1538 = vmatpush2.msra.mxu0 0.0
    %1539 = vmatprep.subr.mxu0 0.0
    %1540 = vmatpush2.msra.mxu0 0.0
    %1541 = vmatprep.subr.mxu0 0.0
    %1542 = vmatpush2.msra.mxu0 0.0
    %1543 = vmatprep.subr.mxu0 0.0
    %1544 = vmatpush2.msra.mxu0 0.0
    %1545 = vmatprep.subr.mxu0 0.0
    %1546 = vmatpush2.msra.mxu0 0.0
    %1547 = vmatprep.subr.mxu0 0.0
    %1548 = vmatpush2.msra.mxu0 0.0
    %1549 = vmatprep.subr.mxu0 0.0
    %1550 = vmatpush2.msra.mxu0 0.0
    %1551 = vmatprep.subr.mxu0 0.0
    %1552 = vmatpush2.msra.mxu0 0.0
    %1553 = vmatprep.subr.mxu0 0.0
    %1554 = vmatpush2.msra.mxu0 0.0
    %1555 = vmatprep.subr.mxu0 0.0
    %1556 = vmatpush2.msra.mxu0 0.0
    %1557 = vmatprep.subr.mxu0 0.0
    %1558 = vmatpush2.msra.mxu0 0.0
    %1559 = vmatprep.mubr.f32.mxu0 0.0
    %1560 = vmatmul.mubr.f32.gmra.mxu0 %v1053
    %v1561 = vpop.f32.mrf.mxu0
    %v1562 = vadd.f32 0.0, %v1561
    %v1563 = vpop.f32.mrf.mxu0
    %1564 = vmatprep.mubr.f32.mxu0 0.0
    %1565 = vmatmul.mubr.f32.gmra.mxu0 %v1056
    %v1566 = vpop.f32.mrf.mxu0
    %v1567 = vadd.f32 0.0, %v1566
    %v1568 = vpop.f32.mrf.mxu0
    %1569 = vmatprep.mubr.f32.mxu0 0.0
    %1570 = vmatmul.mubr.f32.gmra.mxu0 %v1059
    %v1571 = vpop.f32.mrf.mxu0
    %v1572 = vadd.f32 0.0, %v1571
    %v1573 = vpop.f32.mrf.mxu0
    %1574 = vmatprep.mubr.f32.mxu0 0.0
    %1575 = vmatmul.mubr.f32.gmra.mxu0 %v1062
    %v1576 = vpop.f32.mrf.mxu0
    %v1577 = vadd.f32 0.0, %v1576
    %v1578 = vpop.f32.mrf.mxu0
    %1579 = vmatprep.mubr.f32.mxu0 0.0
    %1580 = vmatmul.mubr.f32.gmra.mxu0 %v1065
    %v1581 = vpop.f32.mrf.mxu0
    %v1582 = vadd.f32 0.0, %v1581
    %v1583 = vpop.f32.mrf.mxu0
    %1584 = vmatprep.mubr.f32.mxu0 0.0
    %1585 = vmatmul.mubr.f32.gmra.mxu0 %v1068
    %v1586 = vpop.f32.mrf.mxu0
    %v1587 = vadd.f32 0.0, %v1586
    %v1588 = vpop.f32.mrf.mxu0
    %1589 = vmatprep.mubr.f32.mxu0 0.0
    %1590 = vmatmul.mubr.f32.gmra.mxu0 %v1071
    %v1591 = vpop.f32.mrf.mxu0
    %v1592 = vadd.f32 0.0, %v1591
    %v1593 = vpop.f32.mrf.mxu0
    %1594 = vmatprep.mubr.f32.mxu0 0.0
    %1595 = vmatmul.mubr.f32.gmra.mxu0 %v1074
    %v1596 = vpop.f32.mrf.mxu0
    %v1597 = vadd.f32 0.0, %v1596
    %v1598 = vpop.f32.mrf.mxu0
    %1599 = vdwg.mxu0
    %s1600 = scalar_lea.vmem [#allocation3], 640
    %v1601 = vld [vmem:[%s1600] sm:$0xff]
    %v1602 = vld [vmem:[%s1600 + $0x8] sm:$0xff]
    %v1603 = vld [vmem:[%s1600 + $0x10] sm:$0xff]
    %v1604 = vld [vmem:[%s1600 + $0x18] sm:$0xff]
    %v1606 = vsel %vm1298, %v1601, 0
    %v1609 = vsel %vm1298, %v1602, 0
    %v1612 = vsel %vm1298, %v1603, 0
    %v1615 = vsel %vm1298, %v1604, 0
    %1617 = vmatprep.subr.mxu0 0.0
    %1618 = vmatpush1.msra.mxu0 0.0
    %1619 = vmatprep.subr.mxu0 0.0
    %1620 = vmatpush1.msra.mxu0 0.0
    %1621 = vmatprep.subr.mxu0 0.0
    %1622 = vmatpush1.msra.mxu0 0.0
    %1623 = vmatprep.subr.mxu0 0.0
    %1624 = vmatpush1.msra.mxu0 0.0
    %1625 = vmatprep.subr.mxu0 0.0
    %1626 = vmatpush1.msra.mxu0 0.0
    %1627 = vmatprep.subr.mxu0 0.0
    %1628 = vmatpush1.msra.mxu0 0.0
    %1629 = vmatprep.subr.mxu0 0.0
    %1630 = vmatpush1.msra.mxu0 0.0
    %1631 = vmatprep.subr.mxu0 0.0
    %1632 = vmatpush1.msra.mxu0 0.0
    %1633 = vmatprep.subr.mxu0 0.0
    %1634 = vmatpush1.msra.mxu0 %v1597
    %1635 = vmatprep.subr.mxu0 0.0
    %1636 = vmatpush1.msra.mxu0 %v1592
    %1637 = vmatprep.subr.mxu0 0.0
    %1638 = vmatpush1.msra.mxu0 %v1587
    %1639 = vmatprep.subr.mxu0 0.0
    %1640 = vmatpush1.msra.mxu0 %v1582
    %1641 = vmatprep.subr.mxu0 0.0
    %1642 = vmatpush1.msra.mxu0 %v1577
    %1643 = vmatprep.subr.mxu0 0.0
    %1644 = vmatpush1.msra.mxu0 %v1572
    %1645 = vmatprep.subr.mxu0 0.0
    %1646 = vmatpush1.msra.mxu0 %v1567
    %1647 = vmatprep.subr.mxu0 0.0
    %1648 = vmatpush1.msra.mxu0 %v1562
    %1649 = vmatprep.subr.mxu0 0.0
    %1650 = vmatpush2.msra.mxu0 0.0
    %1651 = vmatprep.subr.mxu0 0.0
    %1652 = vmatpush2.msra.mxu0 0.0
    %1653 = vmatprep.subr.mxu0 0.0
    %1654 = vmatpush2.msra.mxu0 0.0
    %1655 = vmatprep.subr.mxu0 0.0
    %1656 = vmatpush2.msra.mxu0 0.0
    %1657 = vmatprep.subr.mxu0 0.0
    %1658 = vmatpush2.msra.mxu0 0.0
    %1659 = vmatprep.subr.mxu0 0.0
    %1660 = vmatpush2.msra.mxu0 0.0
    %1661 = vmatprep.subr.mxu0 0.0
    %1662 = vmatpush2.msra.mxu0 0.0
    %1663 = vmatprep.subr.mxu0 0.0
    %1664 = vmatpush2.msra.mxu0 0.0
    %1665 = vmatprep.subr.mxu0 0.0
    %1666 = vmatpush2.msra.mxu0 0.0
    %1667 = vmatprep.subr.mxu0 0.0
    %1668 = vmatpush2.msra.mxu0 0.0
    %1669 = vmatprep.subr.mxu0 0.0
    %1670 = vmatpush2.msra.mxu0 0.0
    %1671 = vmatprep.subr.mxu0 0.0
    %1672 = vmatpush2.msra.mxu0 0.0
    %1673 = vmatprep.subr.mxu0 0.0
    %1674 = vmatpush2.msra.mxu0 0.0
    %1675 = vmatprep.subr.mxu0 0.0
    %1676 = vmatpush2.msra.mxu0 0.0
    %1677 = vmatprep.subr.mxu0 0.0
    %1678 = vmatpush2.msra.mxu0 0.0
    %1679 = vmatprep.subr.mxu0 0.0
    %1680 = vmatpush2.msra.mxu0 0.0
    %1681 = vmatprep.mubr.f32.mxu0 0.0
    %1682 = vmatmul.mubr.f32.gmra.mxu0 %v1606
    %v1683 = vpop.f32.mrf.mxu0
    %v1684 = vadd.f32 0.0, %v1683
    %v1685 = vpop.f32.mrf.mxu0
    %1686 = vmatprep.mubr.f32.mxu0 0.0
    %1687 = vmatmul.mubr.f32.gmra.mxu0 %v1609
    %v1688 = vpop.f32.mrf.mxu0
    %v1689 = vadd.f32 0.0, %v1688
    %v1690 = vpop.f32.mrf.mxu0
    %1691 = vmatprep.mubr.f32.mxu0 0.0
    %1692 = vmatmul.mubr.f32.gmra.mxu0 %v1612
    %v1693 = vpop.f32.mrf.mxu0
    %v1694 = vadd.f32 0.0, %v1693
    %v1695 = vpop.f32.mrf.mxu0
    %1696 = vmatprep.mubr.f32.mxu0 0.0
    %1697 = vmatmul.mubr.f32.gmra.mxu0 %v1615
    %v1698 = vpop.f32.mrf.mxu0
    %v1699 = vadd.f32 0.0, %v1698
    %v1700 = vpop.f32.mrf.mxu0
    %1701 = vdwg.mxu0
    %v1702 = vadd.f32 %v1475, %v1684
    %v1703 = vadd.f32 %v1480, %v1689
    %v1704 = vadd.f32 %v1485, %v1694
    %v1705 = vadd.f32 %v1490, %v1699
    %vm1706 = vcmask 130048
    %v1707 = vsel %vm1706, %v1702, 0.0
    %v1708 = vsel %vm1706, %v1703, 0.0
    %v1709 = vadd.f32 %v1707, %v1708
    %v1710 = vsel %vm1706, %v1704, 0.0
    %v1711 = vadd.f32 %v1709, %v1710
    %v1712 = vsel %vm1706, %v1705, 0.0
    %v1713 = vadd.f32 %v1711, %v1712
    %v1714 = vrot.slane %v1713, 4
    %v1715 = vadd.f32 %v1713, %v1714
    %v1716 = vrot.slane %v1715, 2
    %v1717 = vadd.f32 %v1715, %v1716
    %v1718 = vrot.slane %v1717, 1
    %v1719 = vadd.f32 %v1717, %v1718
    %v1720 = vmul.f32 %v1702, %v1702
    %v1721 = vmul.f32 %v1703, %v1703
    %v1722 = vmul.f32 %v1704, %v1704
    %v1723 = vmul.f32 %v1705, %v1705
    %v1724 = vsel %vm1706, %v1720, 0.0
    %v1725 = vsel %vm1706, %v1721, 0.0
    %v1726 = vadd.f32 %v1724, %v1725
    %v1727 = vsel %vm1706, %v1722, 0.0
    %v1728 = vadd.f32 %v1726, %v1727
    %v1729 = vsel %vm1706, %v1723, 0.0
    %v1730 = vadd.f32 %v1728, %v1729
    %v1731 = vrot.slane %v1730, 4
    %v1732 = vadd.f32 %v1730, %v1731
    %v1733 = vrot.slane %v1732, 2
    %v1734 = vadd.f32 %v1732, %v1733
    %v1735 = vrot.slane %v1734, 1
    %v1736 = vadd.f32 %v1734, %v1735
    %v1737 = vmul.f32 %v1719, 0.03125
    %v1738 = vmul.f32 %v1736, 0.03125
    %v1739 = vmul.f32 %v1737, %v1737
    %v1740 = vsub.f32 %v1738, %v1739
    %v1741 = vmax.f32 %v1740, 0.0
    %s1742 = scalar_lea.vmem [#allocation7], 2
    %v1743 = vld [vmem:[%s1742] sm:$0x1]
    %v1744 = vsub.f32 %v1702, %v1737
    %v1745 = vsub.f32 %v1703, %v1737
    %v1746 = vsub.f32 %v1704, %v1737
    %v1747 = vsub.f32 %v1705, %v1737
    %v1748 = vlaneseq
    %v1749 = vshrl.u32 %v1748, 7
    %v1750 = vsub.s32 0, %v1749
    %v1751 = vrot.slane %v1743, %v1750
    %v1752 = vmul.f32 %v1751, %v1744
    %v1753 = vmul.f32 %v1751, %v1745
    %v1754 = vmul.f32 %v1751, %v1746
    %v1755 = vmul.f32 %v1751, %v1747
    %v1756 = vadd.f32 %v1741, 1e-05
    %v1757 = vrsqrt.pop %v1756
    %v1758 = vmul.f32 %v1752, %v1757
    %v1759 = vmul.f32 %v1753, %v1757
    %v1760 = vmul.f32 %v1754, %v1757
    %v1761 = vmul.f32 %v1755, %v1757
    %v1762 = vld [vmem:[%s1742 + $0x1] sm:$0x1]
    %v1763 = vlaneseq
    %v1764 = vshrl.u32 %v1763, 7
    %v1765 = vsub.s32 0, %v1764
    %v1766 = vrot.slane %v1762, %v1765
    %v1767 = vadd.f32 %v1758, %v1766
    %v1768 = vadd.f32 %v1759, %v1766
    %v1769 = vadd.f32 %v1760, %v1766
    %v1770 = vadd.f32 %v1761, %v1766
    %v1771 = vmax.f32 %v1767, 0.0
    %v1772 = vmax.f32 %v1768, 0.0
    %v1773 = vmax.f32 %v1769, 0.0
    %v1774 = vmax.f32 %v1770, 0.0
    %s1775 = scalar_lea.vmem [#allocation5], 384
    %v1776 = vld [vmem:[%s1775] sm:$0xff]
    %v1777 = vld [vmem:[%s1775 + $0x8] sm:$0xff]
    %v1779 = vsel %vm1706, %v1771, 0
    %v1782 = vsel %vm1706, %v1772, 0
    %v1785 = vsel %vm1706, %v1773, 0
    %v1788 = vsel %vm1706, %v1774, 0
    %1790 = vmatprep.subr.mxu0 0.0
    %1791 = vmatpush1.msra.mxu0 0.0
    %1792 = vmatprep.subr.mxu0 0.0
    %1793 = vmatpush1.msra.mxu0 0.0
    %1794 = vmatprep.subr.mxu0 0.0
    %1795 = vmatpush1.msra.mxu0 0.0
    %1796 = vmatprep.subr.mxu0 0.0
    %1797 = vmatpush1.msra.mxu0 0.0
    %1798 = vmatprep.subr.mxu0 0.0
    %1799 = vmatpush1.msra.mxu0 0.0
    %1800 = vmatprep.subr.mxu0 0.0
    %1801 = vmatpush1.msra.mxu0 0.0
    %1802 = vmatprep.subr.mxu0 0.0
    %1803 = vmatpush1.msra.mxu0 0.0
    %1804 = vmatprep.subr.mxu0 0.0
    %1805 = vmatpush1.msra.mxu0 0.0
    %1806 = vmatprep.subr.mxu0 0.0
    %1807 = vmatpush1.msra.mxu0 0.0
    %1808 = vmatprep.subr.mxu0 0.0
    %1809 = vmatpush1.msra.mxu0 0.0
    %1810 = vmatprep.subr.mxu0 0.0
    %1811 = vmatpush1.msra.mxu0 0.0
    %1812 = vmatprep.subr.mxu0 0.0
    %1813 = vmatpush1.msra.mxu0 0.0
    %1814 = vmatprep.subr.mxu0 0.0
    %1815 = vmatpush1.msra.mxu0 0.0
    %1816 = vmatprep.subr.mxu0 0.0
    %1817 = vmatpush1.msra.mxu0 0.0
    %1818 = vmatprep.subr.mxu0 0.0
    %1819 = vmatpush1.msra.mxu0 %v1777
    %1820 = vmatprep.subr.mxu0 0.0
    %1821 = vmatpush1.msra.mxu0 %v1776
    %1822 = vmatprep.subr.mxu0 0.0
    %1823 = vmatpush2.msra.mxu0 0.0
    %1824 = vmatprep.subr.mxu0 0.0
    %1825 = vmatpush2.msra.mxu0 0.0
    %1826 = vmatprep.subr.mxu0 0.0
    %1827 = vmatpush2.msra.mxu0 0.0
    %1828 = vmatprep.subr.mxu0 0.0
    %1829 = vmatpush2.msra.mxu0 0.0
    %1830 = vmatprep.subr.mxu0 0.0
    %1831 = vmatpush2.msra.mxu0 0.0
    %1832 = vmatprep.subr.mxu0 0.0
    %1833 = vmatpush2.msra.mxu0 0.0
    %1834 = vmatprep.subr.mxu0 0.0
    %1835 = vmatpush2.msra.mxu0 0.0
    %1836 = vmatprep.subr.mxu0 0.0
    %1837 = vmatpush2.msra.mxu0 0.0
    %1838 = vmatprep.subr.mxu0 0.0
    %1839 = vmatpush2.msra.mxu0 0.0
    %1840 = vmatprep.subr.mxu0 0.0
    %1841 = vmatpush2.msra.mxu0 0.0
    %1842 = vmatprep.subr.mxu0 0.0
    %1843 = vmatpush2.msra.mxu0 0.0
    %1844 = vmatprep.subr.mxu0 0.0
    %1845 = vmatpush2.msra.mxu0 0.0
    %1846 = vmatprep.subr.mxu0 0.0
    %1847 = vmatpush2.msra.mxu0 0.0
    %1848 = vmatprep.subr.mxu0 0.0
    %1849 = vmatpush2.msra.mxu0 0.0
    %1850 = vmatprep.subr.mxu0 0.0
    %1851 = vmatpush2.msra.mxu0 0.0
    %1852 = vmatprep.subr.mxu0 0.0
    %1853 = vmatpush2.msra.mxu0 0.0
    %1854 = vmatprep.mubr.f32.mxu0 0.0
    %1855 = vmatmul.mubr.f32.gmra.mxu0 %v1779
    %v1856 = vpop.f32.mrf.mxu0
    %v1857 = vadd.f32 0.0, %v1856
    %v1858 = vpop.f32.mrf.mxu0
    %1859 = vmatprep.mubr.f32.mxu0 0.0
    %1860 = vmatmul.mubr.f32.gmra.mxu0 %v1782
    %v1861 = vpop.f32.mrf.mxu0
    %v1862 = vadd.f32 0.0, %v1861
    %v1863 = vpop.f32.mrf.mxu0
    %1864 = vmatprep.mubr.f32.mxu0 0.0
    %1865 = vmatmul.mubr.f32.gmra.mxu0 %v1785
    %v1866 = vpop.f32.mrf.mxu0
    %v1867 = vadd.f32 0.0, %v1866
    %v1868 = vpop.f32.mrf.mxu0
    %1869 = vmatprep.mubr.f32.mxu0 0.0
    %1870 = vmatmul.mubr.f32.gmra.mxu0 %v1788
    %v1871 = vpop.f32.mrf.mxu0
    %v1872 = vadd.f32 0.0, %v1871
    %v1873 = vpop.f32.mrf.mxu0
    %1874 = vdwg.mxu0
    %s1875 = scalar_lea.vmem [#allocation3], 768
    %v1876 = vld [vmem:[%s1875] sm:$0xff]
    %v1877 = vld [vmem:[%s1875 + $0x8] sm:$0xff]
    %s1878 = scalar_lea.vmem [#allocation5], 448
    %v1879 = vld [vmem:[%s1878] sm:$0xff]
    %v1880 = vld [vmem:[%s1878 + $0x8] sm:$0xff]
    %1881 = vmatprep.subr.mxu0 0.0
    %1882 = vmatpush1.msra.mxu0 0.0
    %1883 = vmatprep.subr.mxu0 0.0
    %1884 = vmatpush1.msra.mxu0 0.0
    %1885 = vmatprep.subr.mxu0 0.0
    %1886 = vmatpush1.msra.mxu0 0.0
    %1887 = vmatprep.subr.mxu0 0.0
    %1888 = vmatpush1.msra.mxu0 0.0
    %1889 = vmatprep.subr.mxu0 0.0
    %1890 = vmatpush1.msra.mxu0 0.0
    %1891 = vmatprep.subr.mxu0 0.0
    %1892 = vmatpush1.msra.mxu0 0.0
    %1893 = vmatprep.subr.mxu0 0.0
    %1894 = vmatpush1.msra.mxu0 0.0
    %1895 = vmatprep.subr.mxu0 0.0
    %1896 = vmatpush1.msra.mxu0 0.0
    %1897 = vmatprep.subr.mxu0 0.0
    %1898 = vmatpush1.msra.mxu0 0.0
    %1899 = vmatprep.subr.mxu0 0.0
    %1900 = vmatpush1.msra.mxu0 0.0
    %1901 = vmatprep.subr.mxu0 0.0
    %1902 = vmatpush1.msra.mxu0 0.0
    %1903 = vmatprep.subr.mxu0 0.0
    %1904 = vmatpush1.msra.mxu0 0.0
    %1905 = vmatprep.subr.mxu0 0.0
    %1906 = vmatpush1.msra.mxu0 0.0
    %1907 = vmatprep.subr.mxu0 0.0
    %1908 = vmatpush1.msra.mxu0 0.0
    %1909 = vmatprep.subr.mxu0 0.0
    %1910 = vmatpush1.msra.mxu0 %v1880
    %1911 = vmatprep.subr.mxu0 0.0
    %1912 = vmatpush1.msra.mxu0 %v1879
    %1913 = vmatprep.subr.mxu0 0.0
    %1914 = vmatpush2.msra.mxu0 0.0
    %1915 = vmatprep.subr.mxu0 0.0
    %1916 = vmatpush2.msra.mxu0 0.0
    %1917 = vmatprep.subr.mxu0 0.0
    %1918 = vmatpush2.msra.mxu0 0.0
    %1919 = vmatprep.subr.mxu0 0.0
    %1920 = vmatpush2.msra.mxu0 0.0
    %1921 = vmatprep.subr.mxu0 0.0
    %1922 = vmatpush2.msra.mxu0 0.0
    %1923 = vmatprep.subr.mxu0 0.0
    %1924 = vmatpush2.msra.mxu0 0.0
    %1925 = vmatprep.subr.mxu0 0.0
    %1926 = vmatpush2.msra.mxu0 0.0
    %1927 = vmatprep.subr.mxu0 0.0
    %1928 = vmatpush2.msra.mxu0 0.0
    %1929 = vmatprep.subr.mxu0 0.0
    %1930 = vmatpush2.msra.mxu0 0.0
    %1931 = vmatprep.subr.mxu0 0.0
    %1932 = vmatpush2.msra.mxu0 0.0
    %1933 = vmatprep.subr.mxu0 0.0
    %1934 = vmatpush2.msra.mxu0 0.0
    %1935 = vmatprep.subr.mxu0 0.0
    %1936 = vmatpush2.msra.mxu0 0.0
    %1937 = vmatprep.subr.mxu0 0.0
    %1938 = vmatpush2.msra.mxu0 0.0
    %1939 = vmatprep.subr.mxu0 0.0
    %1940 = vmatpush2.msra.mxu0 0.0
    %1941 = vmatprep.subr.mxu0 0.0
    %1942 = vmatpush2.msra.mxu0 0.0
    %1943 = vmatprep.subr.mxu0 0.0
    %1944 = vmatpush2.msra.mxu0 0.0
    %1945 = vmatprep.mubr.f32.mxu0 0.0
    %1946 = vmatmul.mubr.f32.gmra.mxu0 %v1779
    %v1947 = vpop.f32.mrf.mxu0
    %v1948 = vadd.f32 0.0, %v1947
    %v1949 = vpop.f32.mrf.mxu0
    %1950 = vmatprep.mubr.f32.mxu0 0.0
    %1951 = vmatmul.mubr.f32.gmra.mxu0 %v1782
    %v1952 = vpop.f32.mrf.mxu0
    %v1953 = vadd.f32 0.0, %v1952
    %v1954 = vpop.f32.mrf.mxu0
    %1955 = vmatprep.mubr.f32.mxu0 0.0
    %1956 = vmatmul.mubr.f32.gmra.mxu0 %v1785
    %v1957 = vpop.f32.mrf.mxu0
    %v1958 = vadd.f32 0.0, %v1957
    %v1959 = vpop.f32.mrf.mxu0
    %1960 = vmatprep.mubr.f32.mxu0 0.0
    %1961 = vmatmul.mubr.f32.gmra.mxu0 %v1788
    %v1962 = vpop.f32.mrf.mxu0
    %v1963 = vadd.f32 0.0, %v1962
    %v1964 = vpop.f32.mrf.mxu0
    %1965 = vdwg.mxu0
    %s1966 = scalar_lea.vmem [#allocation3], 896
    %v1967 = vld [vmem:[%s1966] sm:$0xff]
    %v1968 = vld [vmem:[%s1966 + $0x8] sm:$0xff]
    %vm1969 = vcmask 261120
    %v1971 = vsel %vm1969, %v1967, 0
    %v1974 = vsel %vm1969, %v1968, 0
    %1976 = vmatprep.subr.mxu0 0.0
    %1977 = vmatpush1.msra.mxu0 0.0
    %1978 = vmatprep.subr.mxu0 0.0
    %1979 = vmatpush1.msra.mxu0 0.0
    %1980 = vmatprep.subr.mxu0 0.0
    %1981 = vmatpush1.msra.mxu0 0.0
    %1982 = vmatprep.subr.mxu0 0.0
    %1983 = vmatpush1.msra.mxu0 0.0
    %1984 = vmatprep.subr.mxu0 0.0
    %1985 = vmatpush1.msra.mxu0 0.0
    %1986 = vmatprep.subr.mxu0 0.0
    %1987 = vmatpush1.msra.mxu0 0.0
    %1988 = vmatprep.subr.mxu0 0.0
    %1989 = vmatpush1.msra.mxu0 0.0
    %1990 = vmatprep.subr.mxu0 0.0
    %1991 = vmatpush1.msra.mxu0 0.0
    %1992 = vmatprep.subr.mxu0 0.0
    %1993 = vmatpush1.msra.mxu0 0.0
    %1994 = vmatprep.subr.mxu0 0.0
    %1995 = vmatpush1.msra.mxu0 0.0
    %1996 = vmatprep.subr.mxu0 0.0
    %1997 = vmatpush1.msra.mxu0 0.0
    %1998 = vmatprep.subr.mxu0 0.0
    %1999 = vmatpush1.msra.mxu0 0.0
    %2000 = vmatprep.subr.mxu0 0.0
    %2001 = vmatpush1.msra.mxu0 %v1963
    %2002 = vmatprep.subr.mxu0 0.0
    %2003 = vmatpush1.msra.mxu0 %v1958
    %2004 = vmatprep.subr.mxu0 0.0
    %2005 = vmatpush1.msra.mxu0 %v1953
    %2006 = vmatprep.subr.mxu0 0.0
    %2007 = vmatpush1.msra.mxu0 %v1948
    %2008 = vmatprep.subr.mxu0 0.0
    %2009 = vmatpush2.msra.mxu0 0.0
    %2010 = vmatprep.subr.mxu0 0.0
    %2011 = vmatpush2.msra.mxu0 0.0
    %2012 = vmatprep.subr.mxu0 0.0
    %2013 = vmatpush2.msra.mxu0 0.0
    %2014 = vmatprep.subr.mxu0 0.0
    %2015 = vmatpush2.msra.mxu0 0.0
    %2016 = vmatprep.subr.mxu0 0.0
    %2017 = vmatpush2.msra.mxu0 0.0
    %2018 = vmatprep.subr.mxu0 0.0
    %2019 = vmatpush2.msra.mxu0 0.0
    %2020 = vmatprep.subr.mxu0 0.0
    %2021 = vmatpush2.msra.mxu0 0.0
    %2022 = vmatprep.subr.mxu0 0.0
    %2023 = vmatpush2.msra.mxu0 0.0
    %2024 = vmatprep.subr.mxu0 0.0
    %2025 = vmatpush2.msra.mxu0 0.0
    %2026 = vmatprep.subr.mxu0 0.0
    %2027 = vmatpush2.msra.mxu0 0.0
    %2028 = vmatprep.subr.mxu0 0.0
    %2029 = vmatpush2.msra.mxu0 0.0
    %2030 = vmatprep.subr.mxu0 0.0
    %2031 = vmatpush2.msra.mxu0 0.0
    %2032 = vmatprep.subr.mxu0 0.0
    %2033 = vmatpush2.msra.mxu0 0.0
    %2034 = vmatprep.subr.mxu0 0.0
    %2035 = vmatpush2.msra.mxu0 0.0
    %2036 = vmatprep.subr.mxu0 0.0
    %2037 = vmatpush2.msra.mxu0 0.0
    %2038 = vmatprep.subr.mxu0 0.0
    %2039 = vmatpush2.msra.mxu0 0.0
    %2040 = vmatprep.mubr.f32.mxu0 0.0
    %2041 = vmatmul.mubr.f32.gmra.mxu0 %v1971
    %v2042 = vpop.f32.mrf.mxu0
    %v2043 = vadd.f32 0.0, %v2042
    %v2044 = vpop.f32.mrf.mxu0
    %2045 = vmatprep.mubr.f32.mxu0 0.0
    %2046 = vmatmul.mubr.f32.gmra.mxu0 %v1974
    %v2047 = vpop.f32.mrf.mxu0
    %v2048 = vadd.f32 0.0, %v2047
    %v2049 = vpop.f32.mrf.mxu0
    %2050 = vdwg.mxu0
    %v2052 = vsel %vm1969, %v1876, 0
    %v2055 = vsel %vm1969, %v1877, 0
    %2057 = vmatprep.subr.mxu0 0.0
    %2058 = vmatpush1.msra.mxu0 0.0
    %2059 = vmatprep.subr.mxu0 0.0
    %2060 = vmatpush1.msra.mxu0 0.0
    %2061 = vmatprep.subr.mxu0 0.0
    %2062 = vmatpush1.msra.mxu0 0.0
    %2063 = vmatprep.subr.mxu0 0.0
    %2064 = vmatpush1.msra.mxu0 0.0
    %2065 = vmatprep.subr.mxu0 0.0
    %2066 = vmatpush1.msra.mxu0 0.0
    %2067 = vmatprep.subr.mxu0 0.0
    %2068 = vmatpush1.msra.mxu0 0.0
    %2069 = vmatprep.subr.mxu0 0.0
    %2070 = vmatpush1.msra.mxu0 0.0
    %2071 = vmatprep.subr.mxu0 0.0
    %2072 = vmatpush1.msra.mxu0 0.0
    %2073 = vmatprep.subr.mxu0 0.0
    %2074 = vmatpush1.msra.mxu0 0.0
    %2075 = vmatprep.subr.mxu0 0.0
    %2076 = vmatpush1.msra.mxu0 0.0
    %2077 = vmatprep.subr.mxu0 0.0
    %2078 = vmatpush1.msra.mxu0 0.0
    %2079 = vmatprep.subr.mxu0 0.0
    %2080 = vmatpush1.msra.mxu0 0.0
    %2081 = vmatprep.subr.mxu0 0.0
    %2082 = vmatpush1.msra.mxu0 %v1872
    %2083 = vmatprep.subr.mxu0 0.0
    %2084 = vmatpush1.msra.mxu0 %v1867
    %2085 = vmatprep.subr.mxu0 0.0
    %2086 = vmatpush1.msra.mxu0 %v1862
    %2087 = vmatprep.subr.mxu0 0.0
    %2088 = vmatpush1.msra.mxu0 %v1857
    %2089 = vmatprep.subr.mxu0 0.0
    %2090 = vmatpush2.msra.mxu0 0.0
    %2091 = vmatprep.subr.mxu0 0.0
    %2092 = vmatpush2.msra.mxu0 0.0
    %2093 = vmatprep.subr.mxu0 0.0
    %2094 = vmatpush2.msra.mxu0 0.0
    %2095 = vmatprep.subr.mxu0 0.0
    %2096 = vmatpush2.msra.mxu0 0.0
    %2097 = vmatprep.subr.mxu0 0.0
    %2098 = vmatpush2.msra.mxu0 0.0
    %2099 = vmatprep.subr.mxu0 0.0
    %2100 = vmatpush2.msra.mxu0 0.0
    %2101 = vmatprep.subr.mxu0 0.0
    %2102 = vmatpush2.msra.mxu0 0.0
    %2103 = vmatprep.subr.mxu0 0.0
    %2104 = vmatpush2.msra.mxu0 0.0
    %2105 = vmatprep.subr.mxu0 0.0
    %2106 = vmatpush2.msra.mxu0 0.0
    %2107 = vmatprep.subr.mxu0 0.0
    %2108 = vmatpush2.msra.mxu0 0.0
    %2109 = vmatprep.subr.mxu0 0.0
    %2110 = vmatpush2.msra.mxu0 0.0
    %2111 = vmatprep.subr.mxu0 0.0
    %2112 = vmatpush2.msra.mxu0 0.0
    %2113 = vmatprep.subr.mxu0 0.0
    %2114 = vmatpush2.msra.mxu0 0.0
    %2115 = vmatprep.subr.mxu0 0.0
    %2116 = vmatpush2.msra.mxu0 0.0
    %2117 = vmatprep.subr.mxu0 0.0
    %2118 = vmatpush2.msra.mxu0 0.0
    %2119 = vmatprep.subr.mxu0 0.0
    %2120 = vmatpush2.msra.mxu0 0.0
    %2121 = vmatprep.mubr.f32.mxu0 0.0
    %2122 = vmatmul.mubr.f32.gmra.mxu0 %v2052
    %v2123 = vpop.f32.mrf.mxu0
    %v2124 = vadd.f32 %v2043, %v2123
    %v2125 = vpop.f32.mrf.mxu0
    %2126 = vmatprep.mubr.f32.mxu0 0.0
    %2127 = vmatmul.mubr.f32.gmra.mxu0 %v2055
    %v2128 = vpop.f32.mrf.mxu0
    %v2129 = vadd.f32 %v2048, %v2128
    %v2130 = vpop.f32.mrf.mxu0
    %2131 = vdwg.mxu0
    %s2132 = scalar_lea.vmem [#allocation5], 512
    %v2133 = vld [vmem:[%s2132] sm:$0xff]
    %v2134 = vld [vmem:[%s2132 + $0x8] sm:$0xff]
    %2135 = vmatprep.subr.mxu0 0.0
    %2136 = vmatpush1.msra.mxu0 0.0
    %2137 = vmatprep.subr.mxu0 0.0
    %2138 = vmatpush1.msra.mxu0 0.0
    %2139 = vmatprep.subr.mxu0 0.0
    %2140 = vmatpush1.msra.mxu0 0.0
    %2141 = vmatprep.subr.mxu0 0.0
    %2142 = vmatpush1.msra.mxu0 0.0
    %2143 = vmatprep.subr.mxu0 0.0
    %2144 = vmatpush1.msra.mxu0 0.0
    %2145 = vmatprep.subr.mxu0 0.0
    %2146 = vmatpush1.msra.mxu0 0.0
    %2147 = vmatprep.subr.mxu0 0.0
    %2148 = vmatpush1.msra.mxu0 0.0
    %2149 = vmatprep.subr.mxu0 0.0
    %2150 = vmatpush1.msra.mxu0 0.0
    %2151 = vmatprep.subr.mxu0 0.0
    %2152 = vmatpush1.msra.mxu0 0.0
    %2153 = vmatprep.subr.mxu0 0.0
    %2154 = vmatpush1.msra.mxu0 0.0
    %2155 = vmatprep.subr.mxu0 0.0
    %2156 = vmatpush1.msra.mxu0 0.0
    %2157 = vmatprep.subr.mxu0 0.0
    %2158 = vmatpush1.msra.mxu0 0.0
    %2159 = vmatprep.subr.mxu0 0.0
    %2160 = vmatpush1.msra.mxu0 0.0
    %2161 = vmatprep.subr.mxu0 0.0
    %2162 = vmatpush1.msra.mxu0 0.0
    %2163 = vmatprep.subr.mxu0 0.0
    %2164 = vmatpush1.msra.mxu0 %v2134
    %2165 = vmatprep.subr.mxu0 0.0
    %2166 = vmatpush1.msra.mxu0 %v2133
    %2167 = vmatprep.subr.mxu0 0.0
    %2168 = vmatpush2.msra.mxu0 0.0
    %2169 = vmatprep.subr.mxu0 0.0
    %2170 = vmatpush2.msra.mxu0 0.0
    %2171 = vmatprep.subr.mxu0 0.0
    %2172 = vmatpush2.msra.mxu0 0.0
    %2173 = vmatprep.subr.mxu0 0.0
    %2174 = vmatpush2.msra.mxu0 0.0
    %2175 = vmatprep.subr.mxu0 0.0
    %2176 = vmatpush2.msra.mxu0 0.0
    %2177 = vmatprep.subr.mxu0 0.0
    %2178 = vmatpush2.msra.mxu0 0.0
    %2179 = vmatprep.subr.mxu0 0.0
    %2180 = vmatpush2.msra.mxu0 0.0
    %2181 = vmatprep.subr.mxu0 0.0
    %2182 = vmatpush2.msra.mxu0 0.0
    %2183 = vmatprep.subr.mxu0 0.0
    %2184 = vmatpush2.msra.mxu0 0.0
    %2185 = vmatprep.subr.mxu0 0.0
    %2186 = vmatpush2.msra.mxu0 0.0
    %2187 = vmatprep.subr.mxu0 0.0
    %2188 = vmatpush2.msra.mxu0 0.0
    %2189 = vmatprep.subr.mxu0 0.0
    %2190 = vmatpush2.msra.mxu0 0.0
    %2191 = vmatprep.subr.mxu0 0.0
    %2192 = vmatpush2.msra.mxu0 0.0
    %2193 = vmatprep.subr.mxu0 0.0
    %2194 = vmatpush2.msra.mxu0 0.0
    %2195 = vmatprep.subr.mxu0 0.0
    %2196 = vmatpush2.msra.mxu0 0.0
    %2197 = vmatprep.subr.mxu0 0.0
    %2198 = vmatpush2.msra.mxu0 0.0
    %2199 = vmatprep.mubr.f32.mxu0 0.0
    %2200 = vmatmul.mubr.f32.gmra.mxu0 %v1779
    %v2201 = vpop.f32.mrf.mxu0
    %v2202 = vadd.f32 0.0, %v2201
    %v2203 = vpop.f32.mrf.mxu0
    %2204 = vmatprep.mubr.f32.mxu0 0.0
    %2205 = vmatmul.mubr.f32.gmra.mxu0 %v1782
    %v2206 = vpop.f32.mrf.mxu0
    %v2207 = vadd.f32 0.0, %v2206
    %v2208 = vpop.f32.mrf.mxu0
    %2209 = vmatprep.mubr.f32.mxu0 0.0
    %2210 = vmatmul.mubr.f32.gmra.mxu0 %v1785
    %v2211 = vpop.f32.mrf.mxu0
    %v2212 = vadd.f32 0.0, %v2211
    %v2213 = vpop.f32.mrf.mxu0
    %2214 = vmatprep.mubr.f32.mxu0 0.0
    %2215 = vmatmul.mubr.f32.gmra.mxu0 %v1788
    %v2216 = vpop.f32.mrf.mxu0
    %v2217 = vadd.f32 0.0, %v2216
    %v2218 = vpop.f32.mrf.mxu0
    %2219 = vdwg.mxu0
    %s2220 = scalar_lea.vmem [#allocation3], 1024
    %v2221 = vld [vmem:[%s2220] sm:$0xff]
    %v2222 = vld [vmem:[%s2220 + $0x8] sm:$0xff]
    %v2224 = vsel %vm1969, %v2221, 0
    %v2227 = vsel %vm1969, %v2222, 0
    %2229 = vmatprep.subr.mxu0 0.0
    %2230 = vmatpush1.msra.mxu0 0.0
    %2231 = vmatprep.subr.mxu0 0.0
    %2232 = vmatpush1.msra.mxu0 0.0
    %2233 = vmatprep.subr.mxu0 0.0
    %2234 = vmatpush1.msra.mxu0 0.0
    %2235 = vmatprep.subr.mxu0 0.0
    %2236 = vmatpush1.msra.mxu0 0.0
    %2237 = vmatprep.subr.mxu0 0.0
    %2238 = vmatpush1.msra.mxu0 0.0
    %2239 = vmatprep.subr.mxu0 0.0
    %2240 = vmatpush1.msra.mxu0 0.0
    %2241 = vmatprep.subr.mxu0 0.0
    %2242 = vmatpush1.msra.mxu0 0.0
    %2243 = vmatprep.subr.mxu0 0.0
    %2244 = vmatpush1.msra.mxu0 0.0
    %2245 = vmatprep.subr.mxu0 0.0
    %2246 = vmatpush1.msra.mxu0 0.0
    %2247 = vmatprep.subr.mxu0 0.0
    %2248 = vmatpush1.msra.mxu0 0.0
    %2249 = vmatprep.subr.mxu0 0.0
    %2250 = vmatpush1.msra.mxu0 0.0
    %2251 = vmatprep.subr.mxu0 0.0
    %2252 = vmatpush1.msra.mxu0 0.0
    %2253 = vmatprep.subr.mxu0 0.0
    %2254 = vmatpush1.msra.mxu0 %v2217
    %2255 = vmatprep.subr.mxu0 0.0
    %2256 = vmatpush1.msra.mxu0 %v2212
    %2257 = vmatprep.subr.mxu0 0.0
    %2258 = vmatpush1.msra.mxu0 %v2207
    %2259 = vmatprep.subr.mxu0 0.0
    %2260 = vmatpush1.msra.mxu0 %v2202
    %2261 = vmatprep.subr.mxu0 0.0
    %2262 = vmatpush2.msra.mxu0 0.0
    %2263 = vmatprep.subr.mxu0 0.0
    %2264 = vmatpush2.msra.mxu0 0.0
    %2265 = vmatprep.subr.mxu0 0.0
    %2266 = vmatpush2.msra.mxu0 0.0
    %2267 = vmatprep.subr.mxu0 0.0
    %2268 = vmatpush2.msra.mxu0 0.0
    %2269 = vmatprep.subr.mxu0 0.0
    %2270 = vmatpush2.msra.mxu0 0.0
    %2271 = vmatprep.subr.mxu0 0.0
    %2272 = vmatpush2.msra.mxu0 0.0
    %2273 = vmatprep.subr.mxu0 0.0
    %2274 = vmatpush2.msra.mxu0 0.0
    %2275 = vmatprep.subr.mxu0 0.0
    %2276 = vmatpush2.msra.mxu0 0.0
    %2277 = vmatprep.subr.mxu0 0.0
    %2278 = vmatpush2.msra.mxu0 0.0
    %2279 = vmatprep.subr.mxu0 0.0
    %2280 = vmatpush2.msra.mxu0 0.0
    %2281 = vmatprep.subr.mxu0 0.0
    %2282 = vmatpush2.msra.mxu0 0.0
    %2283 = vmatprep.subr.mxu0 0.0
    %2284 = vmatpush2.msra.mxu0 0.0
    %2285 = vmatprep.subr.mxu0 0.0
    %2286 = vmatpush2.msra.mxu0 0.0
    %2287 = vmatprep.subr.mxu0 0.0
    %2288 = vmatpush2.msra.mxu0 0.0
    %2289 = vmatprep.subr.mxu0 0.0
    %2290 = vmatpush2.msra.mxu0 0.0
    %2291 = vmatprep.subr.mxu0 0.0
    %2292 = vmatpush2.msra.mxu0 0.0
    %2293 = vmatprep.mubr.f32.mxu0 0.0
    %2294 = vmatmul.mubr.f32.gmra.mxu0 %v2224
    %v2295 = vpop.f32.mrf.mxu0
    %v2296 = vadd.f32 0.0, %v2295
    %v2297 = vpop.f32.mrf.mxu0
    %2298 = vmatprep.mubr.f32.mxu0 0.0
    %2299 = vmatmul.mubr.f32.gmra.mxu0 %v2227
    %v2300 = vpop.f32.mrf.mxu0
    %v2301 = vadd.f32 0.0, %v2300
    %v2302 = vpop.f32.mrf.mxu0
    %2303 = vdwg.mxu0
    %v2304 = vadd.f32 %v2124, %v2296
    %v2305 = vadd.f32 %v2129, %v2301
    %v2306 = vsel %vm1969, %v2304, 0.0
    %v2307 = vsel %vm1969, %v2305, 0.0
    %v2308 = vadd.f32 %v2306, %v2307
    %v2309 = vrot.slane %v2308, 4
    %v2310 = vadd.f32 %v2308, %v2309
    %v2311 = vrot.slane %v2310, 2
    %v2312 = vadd.f32 %v2310, %v2311
    %v2313 = vrot.slane %v2312, 1
    %v2314 = vadd.f32 %v2312, %v2313
    %v2315 = vmul.f32 %v2304, %v2304
    %v2316 = vmul.f32 %v2305, %v2305
    %v2317 = vsel %vm1969, %v2315, 0.0
    %v2318 = vsel %vm1969, %v2316, 0.0
    %v2319 = vadd.f32 %v2317, %v2318
    %v2320 = vrot.slane %v2319, 4
    %v2321 = vadd.f32 %v2319, %v2320
    %v2322 = vrot.slane %v2321, 2
    %v2323 = vadd.f32 %v2321, %v2322
    %v2324 = vrot.slane %v2323, 1
    %v2325 = vadd.f32 %v2323, %v2324
    %v2326 = vmul.f32 %v2314, 0.0625
    %v2327 = vmul.f32 %v2325, 0.0625
    %v2328 = vmul.f32 %v2326, %v2326
    %v2329 = vsub.f32 %v2327, %v2328
    %v2330 = vmax.f32 %v2329, 0.0
    %s2331 = scalar_lea.vmem [#allocation7], 4
    %v2332 = vld [vmem:[%s2331] sm:$0x1]
    %v2333 = vsub.f32 %v2304, %v2326
    %v2334 = vsub.f32 %v2305, %v2326
    %v2335 = vlaneseq
    %v2336 = vshrl.u32 %v2335, 7
    %v2337 = vsub.s32 0, %v2336
    %v2338 = vrot.slane %v2332, %v2337
    %v2339 = vmul.f32 %v2338, %v2333
    %v2340 = vmul.f32 %v2338, %v2334
    %v2341 = vadd.f32 %v2330, 1e-05
    %v2342 = vrsqrt.pop %v2341
    %v2343 = vmul.f32 %v2339, %v2342
    %v2344 = vmul.f32 %v2340, %v2342
    %v2345 = vld [vmem:[%s2331 + $0x1] sm:$0x1]
    %v2346 = vlaneseq
    %v2347 = vshrl.u32 %v2346, 7
    %v2348 = vsub.s32 0, %v2347
    %v2349 = vrot.slane %v2345, %v2348
    %v2350 = vadd.f32 %v2343, %v2349
    %v2351 = vadd.f32 %v2344, %v2349
    %v2352 = vmax.f32 %v2350, 0.0
    %v2353 = vmax.f32 %v2351, 0.0
    %s2354 = scalar_lea.vmem [#allocation5], 576
    %v2355 = vld [vmem:[%s2354] sm:$0xff]
    %v2356 = vld [vmem:[%s2354 + $0x8] sm:$0xff]
    %v2357 = vld [vmem:[%s2354 + $0x10] sm:$0xff]
    %v2358 = vld [vmem:[%s2354 + $0x18] sm:$0xff]
    %v2360 = vsel %vm1969, %v2352, 0
    %v2363 = vsel %vm1969, %v2353, 0
    %2365 = vmatprep.subr.mxu0 0.0
    %2366 = vmatpush1.msra.mxu0 0.0
    %2367 = vmatprep.subr.mxu0 0.0
    %2368 = vmatpush1.msra.mxu0 0.0
    %2369 = vmatprep.subr.mxu0 0.0
    %2370 = vmatpush1.msra.mxu0 0.0
    %2371 = vmatprep.subr.mxu0 0.0
    %2372 = vmatpush1.msra.mxu0 0.0
    %2373 = vmatprep.subr.mxu0 0.0
    %2374 = vmatpush1.msra.mxu0 0.0
    %2375 = vmatprep.subr.mxu0 0.0
    %2376 = vmatpush1.msra.mxu0 0.0
    %2377 = vmatprep.subr.mxu0 0.0
    %2378 = vmatpush1.msra.mxu0 0.0
    %2379 = vmatprep.subr.mxu0 0.0
    %2380 = vmatpush1.msra.mxu0 0.0
    %2381 = vmatprep.subr.mxu0 0.0
    %2382 = vmatpush1.msra.mxu0 0.0
    %2383 = vmatprep.subr.mxu0 0.0
    %2384 = vmatpush1.msra.mxu0 0.0
    %2385 = vmatprep.subr.mxu0 0.0
    %2386 = vmatpush1.msra.mxu0 0.0
    %2387 = vmatprep.subr.mxu0 0.0
    %2388 = vmatpush1.msra.mxu0 0.0
    %2389 = vmatprep.subr.mxu0 0.0
    %2390 = vmatpush1.msra.mxu0 %v2358
    %2391 = vmatprep.subr.mxu0 0.0
    %2392 = vmatpush1.msra.mxu0 %v2357
    %2393 = vmatprep.subr.mxu0 0.0
    %2394 = vmatpush1.msra.mxu0 %v2356
    %2395 = vmatprep.subr.mxu0 0.0
    %2396 = vmatpush1.msra.mxu0 %v2355
    %2397 = vmatprep.subr.mxu0 0.0
    %2398 = vmatpush2.msra.mxu0 0.0
    %2399 = vmatprep.subr.mxu0 0.0
    %2400 = vmatpush2.msra.mxu0 0.0
    %2401 = vmatprep.subr.mxu0 0.0
    %2402 = vmatpush2.msra.mxu0 0.0
    %2403 = vmatprep.subr.mxu0 0.0
    %2404 = vmatpush2.msra.mxu0 0.0
    %2405 = vmatprep.subr.mxu0 0.0
    %2406 = vmatpush2.msra.mxu0 0.0
    %2407 = vmatprep.subr.mxu0 0.0
    %2408 = vmatpush2.msra.mxu0 0.0
    %2409 = vmatprep.subr.mxu0 0.0
    %2410 = vmatpush2.msra.mxu0 0.0
    %2411 = vmatprep.subr.mxu0 0.0
    %2412 = vmatpush2.msra.mxu0 0.0
    %2413 = vmatprep.subr.mxu0 0.0
    %2414 = vmatpush2.msra.mxu0 0.0
    %2415 = vmatprep.subr.mxu0 0.0
    %2416 = vmatpush2.msra.mxu0 0.0
    %2417 = vmatprep.subr.mxu0 0.0
    %2418 = vmatpush2.msra.mxu0 0.0
    %2419 = vmatprep.subr.mxu0 0.0
    %2420 = vmatpush2.msra.mxu0 0.0
    %2421 = vmatprep.subr.mxu0 0.0
    %2422 = vmatpush2.msra.mxu0 0.0
    %2423 = vmatprep.subr.mxu0 0.0
    %2424 = vmatpush2.msra.mxu0 0.0
    %2425 = vmatprep.subr.mxu0 0.0
    %2426 = vmatpush2.msra.mxu0 0.0
    %2427 = vmatprep.subr.mxu0 0.0
    %2428 = vmatpush2.msra.mxu0 0.0
    %2429 = vmatprep.mubr.f32.mxu0 0.0
    %2430 = vmatmul.mubr.f32.gmra.mxu0 %v2360
    %v2431 = vpop.f32.mrf.mxu0
    %v2432 = vadd.f32 0.0, %v2431
    %v2433 = vpop.f32.mrf.mxu0
    %2434 = vmatprep.mubr.f32.mxu0 0.0
    %2435 = vmatmul.mubr.f32.gmra.mxu0 %v2363
    %v2436 = vpop.f32.mrf.mxu0
    %v2437 = vadd.f32 0.0, %v2436
    %v2438 = vpop.f32.mrf.mxu0
    %2439 = vdwg.mxu0
    %s2440 = scalar_lea.vmem [#allocation3], 1152
    %v2441 = vld [vmem:[%s2440] sm:$0xff]
    %s2442 = scalar_lea.vmem [#allocation5], 640
    %v2443 = vld [vmem:[%s2442] sm:$0xff]
    %v2444 = vld [vmem:[%s2442 + $0x8] sm:$0xff]
    %v2445 = vld [vmem:[%s2442 + $0x10] sm:$0xff]
    %v2446 = vld [vmem:[%s2442 + $0x18] sm:$0xff]
    %2447 = vmatprep.subr.mxu0 0.0
    %2448 = vmatpush1.msra.mxu0 0.0
    %2449 = vmatprep.subr.mxu0 0.0
    %2450 = vmatpush1.msra.mxu0 0.0
    %2451 = vmatprep.subr.mxu0 0.0
    %2452 = vmatpush1.msra.mxu0 0.0
    %2453 = vmatprep.subr.mxu0 0.0
    %2454 = vmatpush1.msra.mxu0 0.0
    %2455 = vmatprep.subr.mxu0 0.0
    %2456 = vmatpush1.msra.mxu0 0.0
    %2457 = vmatprep.subr.mxu0 0.0
    %2458 = vmatpush1.msra.mxu0 0.0
    %2459 = vmatprep.subr.mxu0 0.0
    %2460 = vmatpush1.msra.mxu0 0.0
    %2461 = vmatprep.subr.mxu0 0.0
    %2462 = vmatpush1.msra.mxu0 0.0
    %2463 = vmatprep.subr.mxu0 0.0
    %2464 = vmatpush1.msra.mxu0 0.0
    %2465 = vmatprep.subr.mxu0 0.0
    %2466 = vmatpush1.msra.mxu0 0.0
    %2467 = vmatprep.subr.mxu0 0.0
    %2468 = vmatpush1.msra.mxu0 0.0
    %2469 = vmatprep.subr.mxu0 0.0
    %2470 = vmatpush1.msra.mxu0 0.0
    %2471 = vmatprep.subr.mxu0 0.0
    %2472 = vmatpush1.msra.mxu0 %v2446
    %2473 = vmatprep.subr.mxu0 0.0
    %2474 = vmatpush1.msra.mxu0 %v2445
    %2475 = vmatprep.subr.mxu0 0.0
    %2476 = vmatpush1.msra.mxu0 %v2444
    %2477 = vmatprep.subr.mxu0 0.0
    %2478 = vmatpush1.msra.mxu0 %v2443
    %2479 = vmatprep.subr.mxu0 0.0
    %2480 = vmatpush2.msra.mxu0 0.0
    %2481 = vmatprep.subr.mxu0 0.0
    %2482 = vmatpush2.msra.mxu0 0.0
    %2483 = vmatprep.subr.mxu0 0.0
    %2484 = vmatpush2.msra.mxu0 0.0
    %2485 = vmatprep.subr.mxu0 0.0
    %2486 = vmatpush2.msra.mxu0 0.0
    %2487 = vmatprep.subr.mxu0 0.0
    %2488 = vmatpush2.msra.mxu0 0.0
    %2489 = vmatprep.subr.mxu0 0.0
    %2490 = vmatpush2.msra.mxu0 0.0
    %2491 = vmatprep.subr.mxu0 0.0
    %2492 = vmatpush2.msra.mxu0 0.0
    %2493 = vmatprep.subr.mxu0 0.0
    %2494 = vmatpush2.msra.mxu0 0.0
    %2495 = vmatprep.subr.mxu0 0.0
    %2496 = vmatpush2.msra.mxu0 0.0
    %2497 = vmatprep.subr.mxu0 0.0
    %2498 = vmatpush2.msra.mxu0 0.0
    %2499 = vmatprep.subr.mxu0 0.0
    %2500 = vmatpush2.msra.mxu0 0.0
    %2501 = vmatprep.subr.mxu0 0.0
    %2502 = vmatpush2.msra.mxu0 0.0
    %2503 = vmatprep.subr.mxu0 0.0
    %2504 = vmatpush2.msra.mxu0 0.0
    %2505 = vmatprep.subr.mxu0 0.0
    %2506 = vmatpush2.msra.mxu0 0.0
    %2507 = vmatprep.subr.mxu0 0.0
    %2508 = vmatpush2.msra.mxu0 0.0
    %2509 = vmatprep.subr.mxu0 0.0
    %2510 = vmatpush2.msra.mxu0 0.0
    %2511 = vmatprep.mubr.f32.mxu0 0.0
    %2512 = vmatmul.mubr.f32.gmra.mxu0 %v2360
    %v2513 = vpop.f32.mrf.mxu0
    %v2514 = vadd.f32 0.0, %v2513
    %v2515 = vpop.f32.mrf.mxu0
    %2516 = vmatprep.mubr.f32.mxu0 0.0
    %2517 = vmatmul.mubr.f32.gmra.mxu0 %v2363
    %v2518 = vpop.f32.mrf.mxu0
    %v2519 = vadd.f32 0.0, %v2518
    %v2520 = vpop.f32.mrf.mxu0
    %2521 = vdwg.mxu0
    %s2522 = scalar_lea.vmem [#allocation3], 1280
    %v2523 = vld [vmem:[%s2522] sm:$0xff]
    %v2525 = vsel %vm1706, %v2523, 0
    %2527 = vmatprep.subr.mxu0 0.0
    %2528 = vmatpush1.msra.mxu0 0.0
    %2529 = vmatprep.subr.mxu0 0.0
    %2530 = vmatpush1.msra.mxu0 0.0
    %2531 = vmatprep.subr.mxu0 0.0
    %2532 = vmatpush1.msra.mxu0 0.0
    %2533 = vmatprep.subr.mxu0 0.0
    %2534 = vmatpush1.msra.mxu0 0.0
    %2535 = vmatprep.subr.mxu0 0.0
    %2536 = vmatpush1.msra.mxu0 0.0
    %2537 = vmatprep.subr.mxu0 0.0
    %2538 = vmatpush1.msra.mxu0 0.0
    %2539 = vmatprep.subr.mxu0 0.0
    %2540 = vmatpush1.msra.mxu0 0.0
    %2541 = vmatprep.subr.mxu0 0.0
    %2542 = vmatpush1.msra.mxu0 0.0
    %2543 = vmatprep.subr.mxu0 0.0
    %2544 = vmatpush1.msra.mxu0 0.0
    %2545 = vmatprep.subr.mxu0 0.0
    %2546 = vmatpush1.msra.mxu0 0.0
    %2547 = vmatprep.subr.mxu0 0.0
    %2548 = vmatpush1.msra.mxu0 0.0
    %2549 = vmatprep.subr.mxu0 0.0
    %2550 = vmatpush1.msra.mxu0 0.0
    %2551 = vmatprep.subr.mxu0 0.0
    %2552 = vmatpush1.msra.mxu0 0.0
    %2553 = vmatprep.subr.mxu0 0.0
    %2554 = vmatpush1.msra.mxu0 0.0
    %2555 = vmatprep.subr.mxu0 0.0
    %2556 = vmatpush1.msra.mxu0 %v2519
    %2557 = vmatprep.subr.mxu0 0.0
    %2558 = vmatpush1.msra.mxu0 %v2514
    %2559 = vmatprep.subr.mxu0 0.0
    %2560 = vmatpush2.msra.mxu0 0.0
    %2561 = vmatprep.subr.mxu0 0.0
    %2562 = vmatpush2.msra.mxu0 0.0
    %2563 = vmatprep.subr.mxu0 0.0
    %2564 = vmatpush2.msra.mxu0 0.0
    %2565 = vmatprep.subr.mxu0 0.0
    %2566 = vmatpush2.msra.mxu0 0.0
    %2567 = vmatprep.subr.mxu0 0.0
    %2568 = vmatpush2.msra.mxu0 0.0
    %2569 = vmatprep.subr.mxu0 0.0
    %2570 = vmatpush2.msra.mxu0 0.0
    %2571 = vmatprep.subr.mxu0 0.0
    %2572 = vmatpush2.msra.mxu0 0.0
    %2573 = vmatprep.subr.mxu0 0.0
    %2574 = vmatpush2.msra.mxu0 0.0
    %2575 = vmatprep.subr.mxu0 0.0
    %2576 = vmatpush2.msra.mxu0 0.0
    %2577 = vmatprep.subr.mxu0 0.0
    %2578 = vmatpush2.msra.mxu0 0.0
    %2579 = vmatprep.subr.mxu0 0.0
    %2580 = vmatpush2.msra.mxu0 0.0
    %2581 = vmatprep.subr.mxu0 0.0
    %2582 = vmatpush2.msra.mxu0 0.0
    %2583 = vmatprep.subr.mxu0 0.0
    %2584 = vmatpush2.msra.mxu0 0.0
    %2585 = vmatprep.subr.mxu0 0.0
    %2586 = vmatpush2.msra.mxu0 0.0
    %2587 = vmatprep.subr.mxu0 0.0
    %2588 = vmatpush2.msra.mxu0 0.0
    %2589 = vmatprep.subr.mxu0 0.0
    %2590 = vmatpush2.msra.mxu0 0.0
    %2591 = vmatprep.mubr.f32.mxu0 0.0
    %2592 = vmatmul.mubr.f32.gmra.mxu0 %v2525
    %v2593 = vpop.f32.mrf.mxu0
    %v2594 = vadd.f32 0.0, %v2593
    %v2595 = vpop.f32.mrf.mxu0
    %2596 = vdwg.mxu0
    %v2598 = vsel %vm1706, %v2441, 0
    %2600 = vmatprep.subr.mxu0 0.0
    %2601 = vmatpush1.msra.mxu0 0.0
    %2602 = vmatprep.subr.mxu0 0.0
    %2603 = vmatpush1.msra.mxu0 0.0
    %2604 = vmatprep.subr.mxu0 0.0
    %2605 = vmatpush1.msra.mxu0 0.0
    %2606 = vmatprep.subr.mxu0 0.0
    %2607 = vmatpush1.msra.mxu0 0.0
    %2608 = vmatprep.subr.mxu0 0.0
    %2609 = vmatpush1.msra.mxu0 0.0
    %2610 = vmatprep.subr.mxu0 0.0
    %2611 = vmatpush1.msra.mxu0 0.0
    %2612 = vmatprep.subr.mxu0 0.0
    %2613 = vmatpush1.msra.mxu0 0.0
    %2614 = vmatprep.subr.mxu0 0.0
    %2615 = vmatpush1.msra.mxu0 0.0
    %2616 = vmatprep.subr.mxu0 0.0
    %2617 = vmatpush1.msra.mxu0 0.0
    %2618 = vmatprep.subr.mxu0 0.0
    %2619 = vmatpush1.msra.mxu0 0.0
    %2620 = vmatprep.subr.mxu0 0.0
    %2621 = vmatpush1.msra.mxu0 0.0
    %2622 = vmatprep.subr.mxu0 0.0
    %2623 = vmatpush1.msra.mxu0 0.0
    %2624 = vmatprep.subr.mxu0 0.0
    %2625 = vmatpush1.msra.mxu0 0.0
    %2626 = vmatprep.subr.mxu0 0.0
    %2627 = vmatpush1.msra.mxu0 0.0
    %2628 = vmatprep.subr.mxu0 0.0
    %2629 = vmatpush1.msra.mxu0 %v2437
    %2630 = vmatprep.subr.mxu0 0.0
    %2631 = vmatpush1.msra.mxu0 %v2432
    %2632 = vmatprep.subr.mxu0 0.0
    %2633 = vmatpush2.msra.mxu0 0.0
    %2634 = vmatprep.subr.mxu0 0.0
    %2635 = vmatpush2.msra.mxu0 0.0
    %2636 = vmatprep.subr.mxu0 0.0
    %2637 = vmatpush2.msra.mxu0 0.0
    %2638 = vmatprep.subr.mxu0 0.0
    %2639 = vmatpush2.msra.mxu0 0.0
    %2640 = vmatprep.subr.mxu0 0.0
    %2641 = vmatpush2.msra.mxu0 0.0
    %2642 = vmatprep.subr.mxu0 0.0
    %2643 = vmatpush2.msra.mxu0 0.0
    %2644 = vmatprep.subr.mxu0 0.0
    %2645 = vmatpush2.msra.mxu0 0.0
    %2646 = vmatprep.subr.mxu0 0.0
    %2647 = vmatpush2.msra.mxu0 0.0
    %2648 = vmatprep.subr.mxu0 0.0
    %2649 = vmatpush2.msra.mxu0 0.0
    %2650 = vmatprep.subr.mxu0 0.0
    %2651 = vmatpush2.msra.mxu0 0.0
    %2652 = vmatprep.subr.mxu0 0.0
    %2653 = vmatpush2.msra.mxu0 0.0
    %2654 = vmatprep.subr.mxu0 0.0
    %2655 = vmatpush2.msra.mxu0 0.0
    %2656 = vmatprep.subr.mxu0 0.0
    %2657 = vmatpush2.msra.mxu0 0.0
    %2658 = vmatprep.subr.mxu0 0.0
    %2659 = vmatpush2.msra.mxu0 0.0
    %2660 = vmatprep.subr.mxu0 0.0
    %2661 = vmatpush2.msra.mxu0 0.0
    %2662 = vmatprep.subr.mxu0 0.0
    %2663 = vmatpush2.msra.mxu0 0.0
    %2664 = vmatprep.mubr.f32.mxu0 0.0
    %2665 = vmatmul.mubr.f32.gmra.mxu0 %v2598
    %v2666 = vpop.f32.mrf.mxu0
    %v2667 = vadd.f32 %v2594, %v2666
    %v2668 = vpop.f32.mrf.mxu0
    %2669 = vdwg.mxu0
    %s2670 = scalar_lea.vmem [#allocation5], 704
    %v2671 = vld [vmem:[%s2670] sm:$0xff]
    %v2672 = vld [vmem:[%s2670 + $0x8] sm:$0xff]
    %v2673 = vld [vmem:[%s2670 + $0x10] sm:$0xff]
    %v2674 = vld [vmem:[%s2670 + $0x18] sm:$0xff]
    %2675 = vmatprep.subr.mxu0 0.0
    %2676 = vmatpush1.msra.mxu0 0.0
    %2677 = vmatprep.subr.mxu0 0.0
    %2678 = vmatpush1.msra.mxu0 0.0
    %2679 = vmatprep.subr.mxu0 0.0
    %2680 = vmatpush1.msra.mxu0 0.0
    %2681 = vmatprep.subr.mxu0 0.0
    %2682 = vmatpush1.msra.mxu0 0.0
    %2683 = vmatprep.subr.mxu0 0.0
    %2684 = vmatpush1.msra.mxu0 0.0
    %2685 = vmatprep.subr.mxu0 0.0
    %2686 = vmatpush1.msra.mxu0 0.0
    %2687 = vmatprep.subr.mxu0 0.0
    %2688 = vmatpush1.msra.mxu0 0.0
    %2689 = vmatprep.subr.mxu0 0.0
    %2690 = vmatpush1.msra.mxu0 0.0
    %2691 = vmatprep.subr.mxu0 0.0
    %2692 = vmatpush1.msra.mxu0 0.0
    %2693 = vmatprep.subr.mxu0 0.0
    %2694 = vmatpush1.msra.mxu0 0.0
    %2695 = vmatprep.subr.mxu0 0.0
    %2696 = vmatpush1.msra.mxu0 0.0
    %2697 = vmatprep.subr.mxu0 0.0
    %2698 = vmatpush1.msra.mxu0 0.0
    %2699 = vmatprep.subr.mxu0 0.0
    %2700 = vmatpush1.msra.mxu0 %v2674
    %2701 = vmatprep.subr.mxu0 0.0
    %2702 = vmatpush1.msra.mxu0 %v2673
    %2703 = vmatprep.subr.mxu0 0.0
    %2704 = vmatpush1.msra.mxu0 %v2672
    %2705 = vmatprep.subr.mxu0 0.0
    %2706 = vmatpush1.msra.mxu0 %v2671
    %2707 = vmatprep.subr.mxu0 0.0
    %2708 = vmatpush2.msra.mxu0 0.0
    %2709 = vmatprep.subr.mxu0 0.0
    %2710 = vmatpush2.msra.mxu0 0.0
    %2711 = vmatprep.subr.mxu0 0.0
    %2712 = vmatpush2.msra.mxu0 0.0
    %2713 = vmatprep.subr.mxu0 0.0
    %2714 = vmatpush2.msra.mxu0 0.0
    %2715 = vmatprep.subr.mxu0 0.0
    %2716 = vmatpush2.msra.mxu0 0.0
    %2717 = vmatprep.subr.mxu0 0.0
    %2718 = vmatpush2.msra.mxu0 0.0
    %2719 = vmatprep.subr.mxu0 0.0
    %2720 = vmatpush2.msra.mxu0 0.0
    %2721 = vmatprep.subr.mxu0 0.0
    %2722 = vmatpush2.msra.mxu0 0.0
    %2723 = vmatprep.subr.mxu0 0.0
    %2724 = vmatpush2.msra.mxu0 0.0
    %2725 = vmatprep.subr.mxu0 0.0
    %2726 = vmatpush2.msra.mxu0 0.0
    %2727 = vmatprep.subr.mxu0 0.0
    %2728 = vmatpush2.msra.mxu0 0.0
    %2729 = vmatprep.subr.mxu0 0.0
    %2730 = vmatpush2.msra.mxu0 0.0
    %2731 = vmatprep.subr.mxu0 0.0
    %2732 = vmatpush2.msra.mxu0 0.0
    %2733 = vmatprep.subr.mxu0 0.0
    %2734 = vmatpush2.msra.mxu0 0.0
    %2735 = vmatprep.subr.mxu0 0.0
    %2736 = vmatpush2.msra.mxu0 0.0
    %2737 = vmatprep.subr.mxu0 0.0
    %2738 = vmatpush2.msra.mxu0 0.0
    %2739 = vmatprep.mubr.f32.mxu0 0.0
    %2740 = vmatmul.mubr.f32.gmra.mxu0 %v2360
    %v2741 = vpop.f32.mrf.mxu0
    %v2742 = vadd.f32 0.0, %v2741
    %v2743 = vpop.f32.mrf.mxu0
    %2744 = vmatprep.mubr.f32.mxu0 0.0
    %2745 = vmatmul.mubr.f32.gmra.mxu0 %v2363
    %v2746 = vpop.f32.mrf.mxu0
    %v2747 = vadd.f32 0.0, %v2746
    %v2748 = vpop.f32.mrf.mxu0
    %2749 = vdwg.mxu0
    %s2750 = scalar_lea.vmem [#allocation3], 1408
    %v2751 = vld [vmem:[%s2750] sm:$0xff]
    %v2753 = vsel %vm1706, %v2751, 0
    %2755 = vmatprep.subr.mxu0 0.0
    %2756 = vmatpush1.msra.mxu0 0.0
    %2757 = vmatprep.subr.mxu0 0.0
    %2758 = vmatpush1.msra.mxu0 0.0
    %2759 = vmatprep.subr.mxu0 0.0
    %2760 = vmatpush1.msra.mxu0 0.0
    %2761 = vmatprep.subr.mxu0 0.0
    %2762 = vmatpush1.msra.mxu0 0.0
    %2763 = vmatprep.subr.mxu0 0.0
    %2764 = vmatpush1.msra.mxu0 0.0
    %2765 = vmatprep.subr.mxu0 0.0
    %2766 = vmatpush1.msra.mxu0 0.0
    %2767 = vmatprep.subr.mxu0 0.0
    %2768 = vmatpush1.msra.mxu0 0.0
    %2769 = vmatprep.subr.mxu0 0.0
    %2770 = vmatpush1.msra.mxu0 0.0
    %2771 = vmatprep.subr.mxu0 0.0
    %2772 = vmatpush1.msra.mxu0 0.0
    %2773 = vmatprep.subr.mxu0 0.0
    %2774 = vmatpush1.msra.mxu0 0.0
    %2775 = vmatprep.subr.mxu0 0.0
    %2776 = vmatpush1.msra.mxu0 0.0
    %2777 = vmatprep.subr.mxu0 0.0
    %2778 = vmatpush1.msra.mxu0 0.0
    %2779 = vmatprep.subr.mxu0 0.0
    %2780 = vmatpush1.msra.mxu0 0.0
    %2781 = vmatprep.subr.mxu0 0.0
    %2782 = vmatpush1.msra.mxu0 0.0
    %2783 = vmatprep.subr.mxu0 0.0
    %2784 = vmatpush1.msra.mxu0 %v2747
    %2785 = vmatprep.subr.mxu0 0.0
    %2786 = vmatpush1.msra.mxu0 %v2742
    %2787 = vmatprep.subr.mxu0 0.0
    %2788 = vmatpush2.msra.mxu0 0.0
    %2789 = vmatprep.subr.mxu0 0.0
    %2790 = vmatpush2.msra.mxu0 0.0
    %2791 = vmatprep.subr.mxu0 0.0
    %2792 = vmatpush2.msra.mxu0 0.0
    %2793 = vmatprep.subr.mxu0 0.0
    %2794 = vmatpush2.msra.mxu0 0.0
    %2795 = vmatprep.subr.mxu0 0.0
    %2796 = vmatpush2.msra.mxu0 0.0
    %2797 = vmatprep.subr.mxu0 0.0
    %2798 = vmatpush2.msra.mxu0 0.0
    %2799 = vmatprep.subr.mxu0 0.0
    %2800 = vmatpush2.msra.mxu0 0.0
    %2801 = vmatprep.subr.mxu0 0.0
    %2802 = vmatpush2.msra.mxu0 0.0
    %2803 = vmatprep.subr.mxu0 0.0
    %2804 = vmatpush2.msra.mxu0 0.0
    %2805 = vmatprep.subr.mxu0 0.0
    %2806 = vmatpush2.msra.mxu0 0.0
    %2807 = vmatprep.subr.mxu0 0.0
    %2808 = vmatpush2.msra.mxu0 0.0
    %2809 = vmatprep.subr.mxu0 0.0
    %2810 = vmatpush2.msra.mxu0 0.0
    %2811 = vmatprep.subr.mxu0 0.0
    %2812 = vmatpush2.msra.mxu0 0.0
    %2813 = vmatprep.subr.mxu0 0.0
    %2814 = vmatpush2.msra.mxu0 0.0
    %2815 = vmatprep.subr.mxu0 0.0
    %2816 = vmatpush2.msra.mxu0 0.0
    %2817 = vmatprep.subr.mxu0 0.0
    %2818 = vmatpush2.msra.mxu0 0.0
    %2819 = vmatprep.mubr.f32.mxu0 0.0
    %2820 = vmatmul.mubr.f32.gmra.mxu0 %v2753
    %v2821 = vpop.f32.mrf.mxu0
    %v2822 = vadd.f32 0.0, %v2821
    %v2823 = vpop.f32.mrf.mxu0
    %2824 = vdwg.mxu0
    %v2825 = vadd.f32 %v2667, %v2822
    %v2826 = vsel %vm1298, %v2825, 0.0
    %v2827 = vrot.slane %v2826, 4
    %v2828 = vadd.f32 %v2826, %v2827
    %v2829 = vrot.slane %v2828, 2
    %v2830 = vadd.f32 %v2828, %v2829
    %v2831 = vrot.slane %v2830, 1
    %v2832 = vadd.f32 %v2830, %v2831
    %v2833 = vmul.f32 %v2825, %v2825
    %v2834 = vsel %vm1298, %v2833, 0.0
    %v2835 = vrot.slane %v2834, 4
    %v2836 = vadd.f32 %v2834, %v2835
    %v2837 = vrot.slane %v2836, 2
    %v2838 = vadd.f32 %v2836, %v2837
    %v2839 = vrot.slane %v2838, 1
    %v2840 = vadd.f32 %v2838, %v2839
    %v2841 = vmul.f32 %v2832, 0.125
    %v2842 = vmul.f32 %v2840, 0.125
    %v2843 = vmul.f32 %v2841, %v2841
    %v2844 = vsub.f32 %v2842, %v2843
    %v2845 = vmax.f32 %v2844, 0.0
    %s2846 = scalar_lea.vmem [#allocation7], 6
    %v2847 = vld [vmem:[%s2846] sm:$0x1]
    %v2848 = vsub.f32 %v2825, %v2841
    %v2849 = vlaneseq
    %v2850 = vshrl.u32 %v2849, 7
    %v2851 = vsub.s32 0, %v2850
    %v2852 = vrot.slane %v2847, %v2851
    %v2853 = vmul.f32 %v2852, %v2848
    %v2854 = vadd.f32 %v2845, 1e-05
    %v2855 = vrsqrt.pop %v2854
    %v2856 = vmul.f32 %v2853, %v2855
    %v2857 = vld [vmem:[%s2846 + $0x1] sm:$0x1]
    %v2858 = vlaneseq
    %v2859 = vshrl.u32 %v2858, 7
    %v2860 = vsub.s32 0, %v2859
    %v2861 = vrot.slane %v2857, %v2860
    %v2862 = vadd.f32 %v2856, %v2861
    %v2863 = vmax.f32 %v2862, 0.0
    %s2864 = scalar_lea.vmem [#allocation5], 768
    %v2865 = vld [vmem:[%s2864] sm:$0xff]
    %v2866 = vld [vmem:[%s2864 + $0x8] sm:$0xff]
    %v2867 = vld [vmem:[%s2864 + $0x10] sm:$0xff]
    %v2868 = vld [vmem:[%s2864 + $0x18] sm:$0xff]
    %v2869 = vld [vmem:[%s2864 + $0x20] sm:$0xff]
    %v2870 = vld [vmem:[%s2864 + $0x28] sm:$0xff]
    %v2871 = vld [vmem:[%s2864 + $0x30] sm:$0xff]
    %v2872 = vld [vmem:[%s2864 + $0x38] sm:$0xff]
    %v2874 = vsel %vm1298, %v2863, 0
    %2876 = vmatprep.subr.mxu0 0.0
    %2877 = vmatpush1.msra.mxu0 0.0
    %2878 = vmatprep.subr.mxu0 0.0
    %2879 = vmatpush1.msra.mxu0 0.0
    %2880 = vmatprep.subr.mxu0 0.0
    %2881 = vmatpush1.msra.mxu0 0.0
    %2882 = vmatprep.subr.mxu0 0.0
    %2883 = vmatpush1.msra.mxu0 0.0
    %2884 = vmatprep.subr.mxu0 0.0
    %2885 = vmatpush1.msra.mxu0 0.0
    %2886 = vmatprep.subr.mxu0 0.0
    %2887 = vmatpush1.msra.mxu0 0.0
    %2888 = vmatprep.subr.mxu0 0.0
    %2889 = vmatpush1.msra.mxu0 0.0
    %2890 = vmatprep.subr.mxu0 0.0
    %2891 = vmatpush1.msra.mxu0 0.0
    %2892 = vmatprep.subr.mxu0 0.0
    %2893 = vmatpush1.msra.mxu0 %v2872
    %2894 = vmatprep.subr.mxu0 0.0
    %2895 = vmatpush1.msra.mxu0 %v2871
    %2896 = vmatprep.subr.mxu0 0.0
    %2897 = vmatpush1.msra.mxu0 %v2870
    %2898 = vmatprep.subr.mxu0 0.0
    %2899 = vmatpush1.msra.mxu0 %v2869
    %2900 = vmatprep.subr.mxu0 0.0
    %2901 = vmatpush1.msra.mxu0 %v2868
    %2902 = vmatprep.subr.mxu0 0.0
    %2903 = vmatpush1.msra.mxu0 %v2867
    %2904 = vmatprep.subr.mxu0 0.0
    %2905 = vmatpush1.msra.mxu0 %v2866
    %2906 = vmatprep.subr.mxu0 0.0
    %2907 = vmatpush1.msra.mxu0 %v2865
    %2908 = vmatprep.subr.mxu0 0.0
    %2909 = vmatpush2.msra.mxu0 0.0
    %2910 = vmatprep.subr.mxu0 0.0
    %2911 = vmatpush2.msra.mxu0 0.0
    %2912 = vmatprep.subr.mxu0 0.0
    %2913 = vmatpush2.msra.mxu0 0.0
    %2914 = vmatprep.subr.mxu0 0.0
    %2915 = vmatpush2.msra.mxu0 0.0
    %2916 = vmatprep.subr.mxu0 0.0
    %2917 = vmatpush2.msra.mxu0 0.0
    %2918 = vmatprep.subr.mxu0 0.0
    %2919 = vmatpush2.msra.mxu0 0.0
    %2920 = vmatprep.subr.mxu0 0.0
    %2921 = vmatpush2.msra.mxu0 0.0
    %2922 = vmatprep.subr.mxu0 0.0
    %2923 = vmatpush2.msra.mxu0 0.0
    %2924 = vmatprep.subr.mxu0 0.0
    %2925 = vmatpush2.msra.mxu0 0.0
    %2926 = vmatprep.subr.mxu0 0.0
    %2927 = vmatpush2.msra.mxu0 0.0
    %2928 = vmatprep.subr.mxu0 0.0
    %2929 = vmatpush2.msra.mxu0 0.0
    %2930 = vmatprep.subr.mxu0 0.0
    %2931 = vmatpush2.msra.mxu0 0.0
    %2932 = vmatprep.subr.mxu0 0.0
    %2933 = vmatpush2.msra.mxu0 0.0
    %2934 = vmatprep.subr.mxu0 0.0
    %2935 = vmatpush2.msra.mxu0 0.0
    %2936 = vmatprep.subr.mxu0 0.0
    %2937 = vmatpush2.msra.mxu0 0.0
    %2938 = vmatprep.subr.mxu0 0.0
    %2939 = vmatpush2.msra.mxu0 0.0
    %2940 = vmatprep.mubr.f32.mxu0 0.0
    %2941 = vmatmul.mubr.f32.gmra.mxu0 %v2874
    %v2942 = vpop.f32.mrf.mxu0
    %v2943 = vadd.f32 0.0, %v2942
    %v2944 = vpop.f32.mrf.mxu0
    %2945 = vdwg.mxu0
    %s2946 = scalar_lea.vmem [#allocation3], 1536
    %v2947 = vld [vmem:[%s2946] sm:$0xff]
    %v2948 = vld [vmem:[%s2946 + $0x8] sm:$0xff]
    %s2949 = scalar_lea.vmem [#allocation5], 832
    %v2950 = vld [vmem:[%s2949] sm:$0xff]
    %v2951 = vld [vmem:[%s2949 + $0x8] sm:$0xff]
    %v2952 = vld [vmem:[%s2949 + $0x10] sm:$0xff]
    %v2953 = vld [vmem:[%s2949 + $0x18] sm:$0xff]
    %v2954 = vld [vmem:[%s2949 + $0x20] sm:$0xff]
    %v2955 = vld [vmem:[%s2949 + $0x28] sm:$0xff]
    %v2956 = vld [vmem:[%s2949 + $0x30] sm:$0xff]
    %v2957 = vld [vmem:[%s2949 + $0x38] sm:$0xff]
    %2958 = vmatprep.subr.mxu0 0.0
    %2959 = vmatpush1.msra.mxu0 0.0
    %2960 = vmatprep.subr.mxu0 0.0
    %2961 = vmatpush1.msra.mxu0 0.0
    %2962 = vmatprep.subr.mxu0 0.0
    %2963 = vmatpush1.msra.mxu0 0.0
    %2964 = vmatprep.subr.mxu0 0.0
    %2965 = vmatpush1.msra.mxu0 0.0
    %2966 = vmatprep.subr.mxu0 0.0
    %2967 = vmatpush1.msra.mxu0 0.0
    %2968 = vmatprep.subr.mxu0 0.0
    %2969 = vmatpush1.msra.mxu0 0.0
    %2970 = vmatprep.subr.mxu0 0.0
    %2971 = vmatpush1.msra.mxu0 0.0
    %2972 = vmatprep.subr.mxu0 0.0
    %2973 = vmatpush1.msra.mxu0 0.0
    %2974 = vmatprep.subr.mxu0 0.0
    %2975 = vmatpush1.msra.mxu0 %v2957
    %2976 = vmatprep.subr.mxu0 0.0
    %2977 = vmatpush1.msra.mxu0 %v2956
    %2978 = vmatprep.subr.mxu0 0.0
    %2979 = vmatpush1.msra.mxu0 %v2955
    %2980 = vmatprep.subr.mxu0 0.0
    %2981 = vmatpush1.msra.mxu0 %v2954
    %2982 = vmatprep.subr.mxu0 0.0
    %2983 = vmatpush1.msra.mxu0 %v2953
    %2984 = vmatprep.subr.mxu0 0.0
    %2985 = vmatpush1.msra.mxu0 %v2952
    %2986 = vmatprep.subr.mxu0 0.0
    %2987 = vmatpush1.msra.mxu0 %v2951
    %2988 = vmatprep.subr.mxu0 0.0
    %2989 = vmatpush1.msra.mxu0 %v2950
    %2990 = vmatprep.subr.mxu0 0.0
    %2991 = vmatpush2.msra.mxu0 0.0
    %2992 = vmatprep.subr.mxu0 0.0
    %2993 = vmatpush2.msra.mxu0 0.0
    %2994 = vmatprep.subr.mxu0 0.0
    %2995 = vmatpush2.msra.mxu0 0.0
    %2996 = vmatprep.subr.mxu0 0.0
    %2997 = vmatpush2.msra.mxu0 0.0
    %2998 = vmatprep.subr.mxu0 0.0
    %2999 = vmatpush2.msra.mxu0 0.0
    %3000 = vmatprep.subr.mxu0 0.0
    %3001 = vmatpush2.msra.mxu0 0.0
    %3002 = vmatprep.subr.mxu0 0.0
    %3003 = vmatpush2.msra.mxu0 0.0
    %3004 = vmatprep.subr.mxu0 0.0
    %3005 = vmatpush2.msra.mxu0 0.0
    %3006 = vmatprep.subr.mxu0 0.0
    %3007 = vmatpush2.msra.mxu0 0.0
    %3008 = vmatprep.subr.mxu0 0.0
    %3009 = vmatpush2.msra.mxu0 0.0
    %3010 = vmatprep.subr.mxu0 0.0
    %3011 = vmatpush2.msra.mxu0 0.0
    %3012 = vmatprep.subr.mxu0 0.0
    %3013 = vmatpush2.msra.mxu0 0.0
    %3014 = vmatprep.subr.mxu0 0.0
    %3015 = vmatpush2.msra.mxu0 0.0
    %3016 = vmatprep.subr.mxu0 0.0
    %3017 = vmatpush2.msra.mxu0 0.0
    %3018 = vmatprep.subr.mxu0 0.0
    %3019 = vmatpush2.msra.mxu0 0.0
    %3020 = vmatprep.subr.mxu0 0.0
    %3021 = vmatpush2.msra.mxu0 0.0
    %3022 = vmatprep.mubr.f32.mxu0 0.0
    %3023 = vmatmul.mubr.f32.gmra.mxu0 %v2874
    %v3024 = vpop.f32.mrf.mxu0
    %v3025 = vadd.f32 0.0, %v3024
    %v3026 = vpop.f32.mrf.mxu0
    %3027 = vdwg.mxu0
    %s3028 = scalar_lea.vmem [#allocation3], 1664
    %v3029 = vld [vmem:[%s3028] sm:$0xff]
    %v3030 = vld [vmem:[%s3028 + $0x8] sm:$0xff]
    %v3032 = vsel %vm942, %v3029, 0
    %v3035 = vsel %vm942, %v3030, 0
    %3037 = vmatprep.subr.mxu0 0.0
    %3038 = vmatpush1.msra.mxu0 0.0
    %3039 = vmatprep.subr.mxu0 0.0
    %3040 = vmatpush1.msra.mxu0 0.0
    %3041 = vmatprep.subr.mxu0 0.0
    %3042 = vmatpush1.msra.mxu0 0.0
    %3043 = vmatprep.subr.mxu0 0.0
    %3044 = vmatpush1.msra.mxu0 0.0
    %3045 = vmatprep.subr.mxu0 0.0
    %3046 = vmatpush1.msra.mxu0 0.0
    %3047 = vmatprep.subr.mxu0 0.0
    %3048 = vmatpush1.msra.mxu0 0.0
    %3049 = vmatprep.subr.mxu0 0.0
    %3050 = vmatpush1.msra.mxu0 0.0
    %3051 = vmatprep.subr.mxu0 0.0
    %3052 = vmatpush1.msra.mxu0 0.0
    %3053 = vmatprep.subr.mxu0 0.0
    %3054 = vmatpush1.msra.mxu0 0.0
    %3055 = vmatprep.subr.mxu0 0.0
    %3056 = vmatpush1.msra.mxu0 0.0
    %3057 = vmatprep.subr.mxu0 0.0
    %3058 = vmatpush1.msra.mxu0 0.0
    %3059 = vmatprep.subr.mxu0 0.0
    %3060 = vmatpush1.msra.mxu0 0.0
    %3061 = vmatprep.subr.mxu0 0.0
    %3062 = vmatpush1.msra.mxu0 0.0
    %3063 = vmatprep.subr.mxu0 0.0
    %3064 = vmatpush1.msra.mxu0 0.0
    %3065 = vmatprep.subr.mxu0 0.0
    %3066 = vmatpush1.msra.mxu0 0.0
    %3067 = vmatprep.subr.mxu0 0.0
    %3068 = vmatpush1.msra.mxu0 %v3025
    %3069 = vmatprep.subr.mxu0 0.0
    %3070 = vmatpush2.msra.mxu0 0.0
    %3071 = vmatprep.subr.mxu0 0.0
    %3072 = vmatpush2.msra.mxu0 0.0
    %3073 = vmatprep.subr.mxu0 0.0
    %3074 = vmatpush2.msra.mxu0 0.0
    %3075 = vmatprep.subr.mxu0 0.0
    %3076 = vmatpush2.msra.mxu0 0.0
    %3077 = vmatprep.subr.mxu0 0.0
    %3078 = vmatpush2.msra.mxu0 0.0
    %3079 = vmatprep.subr.mxu0 0.0
    %3080 = vmatpush2.msra.mxu0 0.0
    %3081 = vmatprep.subr.mxu0 0.0
    %3082 = vmatpush2.msra.mxu0 0.0
    %3083 = vmatprep.subr.mxu0 0.0
    %3084 = vmatpush2.msra.mxu0 0.0
    %3085 = vmatprep.subr.mxu0 0.0
    %3086 = vmatpush2.msra.mxu0 0.0
    %3087 = vmatprep.subr.mxu0 0.0
    %3088 = vmatpush2.msra.mxu0 0.0
    %3089 = vmatprep.subr.mxu0 0.0
    %3090 = vmatpush2.msra.mxu0 0.0
    %3091 = vmatprep.subr.mxu0 0.0
    %3092 = vmatpush2.msra.mxu0 0.0
    %3093 = vmatprep.subr.mxu0 0.0
    %3094 = vmatpush2.msra.mxu0 0.0
    %3095 = vmatprep.subr.mxu0 0.0
    %3096 = vmatpush2.msra.mxu0 0.0
    %3097 = vmatprep.subr.mxu0 0.0
    %3098 = vmatpush2.msra.mxu0 0.0
    %3099 = vmatprep.subr.mxu0 0.0
    %3100 = vmatpush2.msra.mxu0 0.0
    %3101 = vmatprep.mubr.f32.mxu0 0.0
    %3102 = vmatmul.mubr.f32.gmra.mxu0 %v3032
    %v3103 = vpop.f32.mrf.mxu0
    %v3104 = vadd.f32 0.0, %v3103
    %v3105 = vpop.f32.mrf.mxu0
    %3106 = vmatprep.mubr.f32.mxu0 0.0
    %3107 = vmatmul.mubr.f32.gmra.mxu0 %v3035
    %v3108 = vpop.f32.mrf.mxu0
    %v3109 = vadd.f32 0.0, %v3108
    %v3110 = vpop.f32.mrf.mxu0
    %3111 = vdwg.mxu0
    %v3113 = vsel %vm942, %v2947, 0
    %v3116 = vsel %vm942, %v2948, 0
    %3118 = vmatprep.subr.mxu0 0.0
    %3119 = vmatpush1.msra.mxu0 0.0
    %3120 = vmatprep.subr.mxu0 0.0
    %3121 = vmatpush1.msra.mxu0 0.0
    %3122 = vmatprep.subr.mxu0 0.0
    %3123 = vmatpush1.msra.mxu0 0.0
    %3124 = vmatprep.subr.mxu0 0.0
    %3125 = vmatpush1.msra.mxu0 0.0
    %3126 = vmatprep.subr.mxu0 0.0
    %3127 = vmatpush1.msra.mxu0 0.0
    %3128 = vmatprep.subr.mxu0 0.0
    %3129 = vmatpush1.msra.mxu0 0.0
    %3130 = vmatprep.subr.mxu0 0.0
    %3131 = vmatpush1.msra.mxu0 0.0
    %3132 = vmatprep.subr.mxu0 0.0
    %3133 = vmatpush1.msra.mxu0 0.0
    %3134 = vmatprep.subr.mxu0 0.0
    %3135 = vmatpush1.msra.mxu0 0.0
    %3136 = vmatprep.subr.mxu0 0.0
    %3137 = vmatpush1.msra.mxu0 0.0
    %3138 = vmatprep.subr.mxu0 0.0
    %3139 = vmatpush1.msra.mxu0 0.0
    %3140 = vmatprep.subr.mxu0 0.0
    %3141 = vmatpush1.msra.mxu0 0.0
    %3142 = vmatprep.subr.mxu0 0.0
    %3143 = vmatpush1.msra.mxu0 0.0
    %3144 = vmatprep.subr.mxu0 0.0
    %3145 = vmatpush1.msra.mxu0 0.0
    %3146 = vmatprep.subr.mxu0 0.0
    %3147 = vmatpush1.msra.mxu0 0.0
    %3148 = vmatprep.subr.mxu0 0.0
    %3149 = vmatpush1.msra.mxu0 %v2943
    %3150 = vmatprep.subr.mxu0 0.0
    %3151 = vmatpush2.msra.mxu0 0.0
    %3152 = vmatprep.subr.mxu0 0.0
    %3153 = vmatpush2.msra.mxu0 0.0
    %3154 = vmatprep.subr.mxu0 0.0
    %3155 = vmatpush2.msra.mxu0 0.0
    %3156 = vmatprep.subr.mxu0 0.0
    %3157 = vmatpush2.msra.mxu0 0.0
    %3158 = vmatprep.subr.mxu0 0.0
    %3159 = vmatpush2.msra.mxu0 0.0
    %3160 = vmatprep.subr.mxu0 0.0
    %3161 = vmatpush2.msra.mxu0 0.0
    %3162 = vmatprep.subr.mxu0 0.0
    %3163 = vmatpush2.msra.mxu0 0.0
    %3164 = vmatprep.subr.mxu0 0.0
    %3165 = vmatpush2.msra.mxu0 0.0
    %3166 = vmatprep.subr.mxu0 0.0
    %3167 = vmatpush2.msra.mxu0 0.0
    %3168 = vmatprep.subr.mxu0 0.0
    %3169 = vmatpush2.msra.mxu0 0.0
    %3170 = vmatprep.subr.mxu0 0.0
    %3171 = vmatpush2.msra.mxu0 0.0
    %3172 = vmatprep.subr.mxu0 0.0
    %3173 = vmatpush2.msra.mxu0 0.0
    %3174 = vmatprep.subr.mxu0 0.0
    %3175 = vmatpush2.msra.mxu0 0.0
    %3176 = vmatprep.subr.mxu0 0.0
    %3177 = vmatpush2.msra.mxu0 0.0
    %3178 = vmatprep.subr.mxu0 0.0
    %3179 = vmatpush2.msra.mxu0 0.0
    %3180 = vmatprep.subr.mxu0 0.0
    %3181 = vmatpush2.msra.mxu0 0.0
    %3182 = vmatprep.mubr.f32.mxu0 0.0
    %3183 = vmatmul.mubr.f32.gmra.mxu0 %v3113
    %v3184 = vpop.f32.mrf.mxu0
    %v3185 = vadd.f32 %v3104, %v3184
    %v3186 = vpop.f32.mrf.mxu0
    %3187 = vmatprep.mubr.f32.mxu0 0.0
    %3188 = vmatmul.mubr.f32.gmra.mxu0 %v3116
    %v3189 = vpop.f32.mrf.mxu0
    %v3190 = vadd.f32 %v3109, %v3189
    %v3191 = vpop.f32.mrf.mxu0
    %3192 = vdwg.mxu0
    %s3193 = scalar_lea.vmem [#allocation5], 896
    %v3194 = vld [vmem:[%s3193] sm:$0xff]
    %v3195 = vld [vmem:[%s3193 + $0x8] sm:$0xff]
    %v3196 = vld [vmem:[%s3193 + $0x10] sm:$0xff]
    %v3197 = vld [vmem:[%s3193 + $0x18] sm:$0xff]
    %v3198 = vld [vmem:[%s3193 + $0x20] sm:$0xff]
    %v3199 = vld [vmem:[%s3193 + $0x28] sm:$0xff]
    %v3200 = vld [vmem:[%s3193 + $0x30] sm:$0xff]
    %v3201 = vld [vmem:[%s3193 + $0x38] sm:$0xff]
    %3202 = vmatprep.subr.mxu0 0.0
    %3203 = vmatpush1.msra.mxu0 0.0
    %3204 = vmatprep.subr.mxu0 0.0
    %3205 = vmatpush1.msra.mxu0 0.0
    %3206 = vmatprep.subr.mxu0 0.0
    %3207 = vmatpush1.msra.mxu0 0.0
    %3208 = vmatprep.subr.mxu0 0.0
    %3209 = vmatpush1.msra.mxu0 0.0
    %3210 = vmatprep.subr.mxu0 0.0
    %3211 = vmatpush1.msra.mxu0 0.0
    %3212 = vmatprep.subr.mxu0 0.0
    %3213 = vmatpush1.msra.mxu0 0.0
    %3214 = vmatprep.subr.mxu0 0.0
    %3215 = vmatpush1.msra.mxu0 0.0
    %3216 = vmatprep.subr.mxu0 0.0
    %3217 = vmatpush1.msra.mxu0 0.0
    %3218 = vmatprep.subr.mxu0 0.0
    %3219 = vmatpush1.msra.mxu0 %v3201
    %3220 = vmatprep.subr.mxu0 0.0
    %3221 = vmatpush1.msra.mxu0 %v3200
    %3222 = vmatprep.subr.mxu0 0.0
    %3223 = vmatpush1.msra.mxu0 %v3199
    %3224 = vmatprep.subr.mxu0 0.0
    %3225 = vmatpush1.msra.mxu0 %v3198
    %3226 = vmatprep.subr.mxu0 0.0
    %3227 = vmatpush1.msra.mxu0 %v3197
    %3228 = vmatprep.subr.mxu0 0.0
    %3229 = vmatpush1.msra.mxu0 %v3196
    %3230 = vmatprep.subr.mxu0 0.0
    %3231 = vmatpush1.msra.mxu0 %v3195
    %3232 = vmatprep.subr.mxu0 0.0
    %3233 = vmatpush1.msra.mxu0 %v3194
    %3234 = vmatprep.subr.mxu0 0.0
    %3235 = vmatpush2.msra.mxu0 0.0
    %3236 = vmatprep.subr.mxu0 0.0
    %3237 = vmatpush2.msra.mxu0 0.0
    %3238 = vmatprep.subr.mxu0 0.0
    %3239 = vmatpush2.msra.mxu0 0.0
    %3240 = vmatprep.subr.mxu0 0.0
    %3241 = vmatpush2.msra.mxu0 0.0
    %3242 = vmatprep.subr.mxu0 0.0
    %3243 = vmatpush2.msra.mxu0 0.0
    %3244 = vmatprep.subr.mxu0 0.0
    %3245 = vmatpush2.msra.mxu0 0.0
    %3246 = vmatprep.subr.mxu0 0.0
    %3247 = vmatpush2.msra.mxu0 0.0
    %3248 = vmatprep.subr.mxu0 0.0
    %3249 = vmatpush2.msra.mxu0 0.0
    %3250 = vmatprep.subr.mxu0 0.0
    %3251 = vmatpush2.msra.mxu0 0.0
    %3252 = vmatprep.subr.mxu0 0.0
    %3253 = vmatpush2.msra.mxu0 0.0
    %3254 = vmatprep.subr.mxu0 0.0
    %3255 = vmatpush2.msra.mxu0 0.0
    %3256 = vmatprep.subr.mxu0 0.0
    %3257 = vmatpush2.msra.mxu0 0.0
    %3258 = vmatprep.subr.mxu0 0.0
    %3259 = vmatpush2.msra.mxu0 0.0
    %3260 = vmatprep.subr.mxu0 0.0
    %3261 = vmatpush2.msra.mxu0 0.0
    %3262 = vmatprep.subr.mxu0 0.0
    %3263 = vmatpush2.msra.mxu0 0.0
    %3264 = vmatprep.subr.mxu0 0.0
    %3265 = vmatpush2.msra.mxu0 0.0
    %3266 = vmatprep.mubr.f32.mxu0 0.0
    %3267 = vmatmul.mubr.f32.gmra.mxu0 %v2874
    %v3268 = vpop.f32.mrf.mxu0
    %v3269 = vadd.f32 0.0, %v3268
    %v3270 = vpop.f32.mrf.mxu0
    %3271 = vdwg.mxu0
    %s3272 = scalar_lea.vmem [#allocation3], 1792
    %v3273 = vld [vmem:[%s3272] sm:$0xff]
    %v3274 = vld [vmem:[%s3272 + $0x8] sm:$0xff]
    %v3276 = vsel %vm942, %v3273, 0
    %v3279 = vsel %vm942, %v3274, 0
    %3281 = vmatprep.subr.mxu0 0.0
    %3282 = vmatpush1.msra.mxu0 0.0
    %3283 = vmatprep.subr.mxu0 0.0
    %3284 = vmatpush1.msra.mxu0 0.0
    %3285 = vmatprep.subr.mxu0 0.0
    %3286 = vmatpush1.msra.mxu0 0.0
    %3287 = vmatprep.subr.mxu0 0.0
    %3288 = vmatpush1.msra.mxu0 0.0
    %3289 = vmatprep.subr.mxu0 0.0
    %3290 = vmatpush1.msra.mxu0 0.0
    %3291 = vmatprep.subr.mxu0 0.0
    %3292 = vmatpush1.msra.mxu0 0.0
    %3293 = vmatprep.subr.mxu0 0.0
    %3294 = vmatpush1.msra.mxu0 0.0
    %3295 = vmatprep.subr.mxu0 0.0
    %3296 = vmatpush1.msra.mxu0 0.0
    %3297 = vmatprep.subr.mxu0 0.0
    %3298 = vmatpush1.msra.mxu0 0.0
    %3299 = vmatprep.subr.mxu0 0.0
    %3300 = vmatpush1.msra.mxu0 0.0
    %3301 = vmatprep.subr.mxu0 0.0
    %3302 = vmatpush1.msra.mxu0 0.0
    %3303 = vmatprep.subr.mxu0 0.0
    %3304 = vmatpush1.msra.mxu0 0.0
    %3305 = vmatprep.subr.mxu0 0.0
    %3306 = vmatpush1.msra.mxu0 0.0
    %3307 = vmatprep.subr.mxu0 0.0
    %3308 = vmatpush1.msra.mxu0 0.0
    %3309 = vmatprep.subr.mxu0 0.0
    %3310 = vmatpush1.msra.mxu0 0.0
    %3311 = vmatprep.subr.mxu0 0.0
    %3312 = vmatpush1.msra.mxu0 %v3269
    %3313 = vmatprep.subr.mxu0 0.0
    %3314 = vmatpush2.msra.mxu0 0.0
    %3315 = vmatprep.subr.mxu0 0.0
    %3316 = vmatpush2.msra.mxu0 0.0
    %3317 = vmatprep.subr.mxu0 0.0
    %3318 = vmatpush2.msra.mxu0 0.0
    %3319 = vmatprep.subr.mxu0 0.0
    %3320 = vmatpush2.msra.mxu0 0.0
    %3321 = vmatprep.subr.mxu0 0.0
    %3322 = vmatpush2.msra.mxu0 0.0
    %3323 = vmatprep.subr.mxu0 0.0
    %3324 = vmatpush2.msra.mxu0 0.0
    %3325 = vmatprep.subr.mxu0 0.0
    %3326 = vmatpush2.msra.mxu0 0.0
    %3327 = vmatprep.subr.mxu0 0.0
    %3328 = vmatpush2.msra.mxu0 0.0
    %3329 = vmatprep.subr.mxu0 0.0
    %3330 = vmatpush2.msra.mxu0 0.0
    %3331 = vmatprep.subr.mxu0 0.0
    %3332 = vmatpush2.msra.mxu0 0.0
    %3333 = vmatprep.subr.mxu0 0.0
    %3334 = vmatpush2.msra.mxu0 0.0
    %3335 = vmatprep.subr.mxu0 0.0
    %3336 = vmatpush2.msra.mxu0 0.0
    %3337 = vmatprep.subr.mxu0 0.0
    %3338 = vmatpush2.msra.mxu0 0.0
    %3339 = vmatprep.subr.mxu0 0.0
    %3340 = vmatpush2.msra.mxu0 0.0
    %3341 = vmatprep.subr.mxu0 0.0
    %3342 = vmatpush2.msra.mxu0 0.0
    %3343 = vmatprep.subr.mxu0 0.0
    %3344 = vmatpush2.msra.mxu0 0.0
    %3345 = vmatprep.mubr.f32.mxu0 0.0
    %3346 = vmatmul.mubr.f32.gmra.mxu0 %v3276
    %v3347 = vpop.f32.mrf.mxu0
    %v3348 = vadd.f32 0.0, %v3347
    %v3349 = vpop.f32.mrf.mxu0
    %3350 = vmatprep.mubr.f32.mxu0 0.0
    %3351 = vmatmul.mubr.f32.gmra.mxu0 %v3279
    %v3352 = vpop.f32.mrf.mxu0
    %v3353 = vadd.f32 0.0, %v3352
    %v3354 = vpop.f32.mrf.mxu0
    %3355 = vdwg.mxu0
    %v3356 = vadd.f32 %v3185, %v3348
    %v3357 = vadd.f32 %v3190, %v3353
    %v3358 = vsel %vm1969, %v3356, 0.0
    %v3359 = vsel %vm1969, %v3357, 0.0
    %v3360 = vadd.f32 %v3358, %v3359
    %v3361 = vrot.slane %v3360, 4
    %v3362 = vadd.f32 %v3360, %v3361
    %v3363 = vrot.slane %v3362, 2
    %v3364 = vadd.f32 %v3362, %v3363
    %v3365 = vrot.slane %v3364, 1
    %v3366 = vadd.f32 %v3364, %v3365
    %v3367 = vmul.f32 %v3356, %v3356
    %v3368 = vmul.f32 %v3357, %v3357
    %v3369 = vsel %vm1969, %v3367, 0.0
    %v3370 = vsel %vm1969, %v3368, 0.0
    %v3371 = vadd.f32 %v3369, %v3370
    %v3372 = vrot.slane %v3371, 4
    %v3373 = vadd.f32 %v3371, %v3372
    %v3374 = vrot.slane %v3373, 2
    %v3375 = vadd.f32 %v3373, %v3374
    %v3376 = vrot.slane %v3375, 1
    %v3377 = vadd.f32 %v3375, %v3376
    %v3378 = vmul.f32 %v3366, 0.0625
    %v3379 = vmul.f32 %v3377, 0.0625
    %v3380 = vmul.f32 %v3378, %v3378
    %v3381 = vsub.f32 %v3379, %v3380
    %v3382 = vmax.f32 %v3381, 0.0
    %s3383 = scalar_lea.vmem [#allocation7], 8
    %v3384 = vld [vmem:[%s3383] sm:$0x1]
    %v3385 = vsub.f32 %v3356, %v3378
    %v3386 = vsub.f32 %v3357, %v3378
    %v3387 = vlaneseq
    %v3388 = vshrl.u32 %v3387, 7
    %v3389 = vsub.s32 0, %v3388
    %v3390 = vrot.slane %v3384, %v3389
    %v3391 = vmul.f32 %v3390, %v3385
    %v3392 = vmul.f32 %v3390, %v3386
    %v3393 = vadd.f32 %v3382, 1e-05
    %v3394 = vrsqrt.pop %v3393
    %v3395 = vmul.f32 %v3391, %v3394
    %v3396 = vmul.f32 %v3392, %v3394
    %v3397 = vld [vmem:[%s3383 + $0x1] sm:$0x1]
    %v3398 = vlaneseq
    %v3399 = vshrl.u32 %v3398, 7
    %v3400 = vsub.s32 0, %v3399
    %v3401 = vrot.slane %v3397, %v3400
    %v3402 = vadd.f32 %v3395, %v3401
    %v3403 = vadd.f32 %v3396, %v3401
    %v3404 = vmax.f32 %v3402, 0.0
    %v3405 = vmax.f32 %v3403, 0.0
    %s3406 = scalar_lea.vmem [#allocation5], 960
    %v3407 = vld [vmem:[%s3406] sm:$0xff]
    %v3408 = vld [vmem:[%s3406 + $0x8] sm:$0xff]
    %v3409 = vld [vmem:[%s3406 + $0x10] sm:$0xff]
    %v3410 = vld [vmem:[%s3406 + $0x18] sm:$0xff]
    %v3411 = vld [vmem:[%s3406 + $0x20] sm:$0xff]
    %v3412 = vld [vmem:[%s3406 + $0x28] sm:$0xff]
    %v3413 = vld [vmem:[%s3406 + $0x30] sm:$0xff]
    %v3414 = vld [vmem:[%s3406 + $0x38] sm:$0xff]
    %3415 = vmatprep.subr.mxu0 0.0
    %3416 = vmatpush1.msra.mxu0 0.0
    %3417 = vmatprep.subr.mxu0 0.0
    %3418 = vmatpush1.msra.mxu0 0.0
    %3419 = vmatprep.subr.mxu0 0.0
    %3420 = vmatpush1.msra.mxu0 0.0
    %3421 = vmatprep.subr.mxu0 0.0
    %3422 = vmatpush1.msra.mxu0 0.0
    %3423 = vmatprep.subr.mxu0 0.0
    %3424 = vmatpush1.msra.mxu0 0.0
    %3425 = vmatprep.subr.mxu0 0.0
    %3426 = vmatpush1.msra.mxu0 0.0
    %3427 = vmatprep.subr.mxu0 0.0
    %3428 = vmatpush1.msra.mxu0 0.0
    %3429 = vmatprep.subr.mxu0 0.0
    %3430 = vmatpush1.msra.mxu0 0.0
    %3431 = vmatprep.subr.mxu0 0.0
    %3432 = vmatpush1.msra.mxu0 0.0
    %3433 = vmatprep.subr.mxu0 0.0
    %3434 = vmatpush1.msra.mxu0 0.0
    %3435 = vmatprep.subr.mxu0 0.0
    %3436 = vmatpush1.msra.mxu0 0.0
    %3437 = vmatprep.subr.mxu0 0.0
    %3438 = vmatpush1.msra.mxu0 0.0
    %3439 = vmatprep.subr.mxu0 0.0
    %3440 = vmatpush1.msra.mxu0 %v3414
    %3441 = vmatprep.subr.mxu0 0.0
    %3442 = vmatpush1.msra.mxu0 %v3413
    %3443 = vmatprep.subr.mxu0 0.0
    %3444 = vmatpush1.msra.mxu0 %v3412
    %3445 = vmatprep.subr.mxu0 0.0
    %3446 = vmatpush1.msra.mxu0 %v3411
    %3447 = vmatprep.subr.mxu0 0.0
    %3448 = vmatpush2.msra.mxu0 0.0
    %3449 = vmatprep.subr.mxu0 0.0
    %3450 = vmatpush2.msra.mxu0 0.0
    %3451 = vmatprep.subr.mxu0 0.0
    %3452 = vmatpush2.msra.mxu0 0.0
    %3453 = vmatprep.subr.mxu0 0.0
    %3454 = vmatpush2.msra.mxu0 0.0
    %3455 = vmatprep.subr.mxu0 0.0
    %3456 = vmatpush2.msra.mxu0 0.0
    %3457 = vmatprep.subr.mxu0 0.0
    %3458 = vmatpush2.msra.mxu0 0.0
    %3459 = vmatprep.subr.mxu0 0.0
    %3460 = vmatpush2.msra.mxu0 0.0
    %3461 = vmatprep.subr.mxu0 0.0
    %3462 = vmatpush2.msra.mxu0 0.0
    %3463 = vmatprep.subr.mxu0 0.0
    %3464 = vmatpush2.msra.mxu0 0.0
    %3465 = vmatprep.subr.mxu0 0.0
    %3466 = vmatpush2.msra.mxu0 0.0
    %3467 = vmatprep.subr.mxu0 0.0
    %3468 = vmatpush2.msra.mxu0 0.0
    %3469 = vmatprep.subr.mxu0 0.0
    %3470 = vmatpush2.msra.mxu0 0.0
    %3471 = vmatprep.subr.mxu0 0.0
    %3472 = vmatpush2.msra.mxu0 0.0
    %3473 = vmatprep.subr.mxu0 0.0
    %3474 = vmatpush2.msra.mxu0 0.0
    %3475 = vmatprep.subr.mxu0 0.0
    %3476 = vmatpush2.msra.mxu0 0.0
    %3477 = vmatprep.subr.mxu0 0.0
    %3478 = vmatpush2.msra.mxu0 0.0
    %3479 = vmatprep.mubr.f32.mxu0 0.0
    %3480 = vmatmul.mubr.f32.gmra.mxu0 %v2360
    %v3481 = vpop.f32.mrf.mxu0
    %v3482 = vadd.f32 0.0, %v3481
    %v3483 = vpop.f32.mrf.mxu0
    %3484 = vmatprep.mubr.f32.mxu0 0.0
    %3485 = vmatmul.mubr.f32.gmra.mxu0 %v2363
    %v3486 = vpop.f32.mrf.mxu0
    %v3487 = vadd.f32 0.0, %v3486
    %v3488 = vpop.f32.mrf.mxu0
    %3489 = vdwg.mxu0
    %v3491 = vsel %vm1969, %v3404, 0
    %v3494 = vsel %vm1969, %v3405, 0
    %3496 = vmatprep.subr.mxu0 0.0
    %3497 = vmatpush1.msra.mxu0 0.0
    %3498 = vmatprep.subr.mxu0 0.0
    %3499 = vmatpush1.msra.mxu0 0.0
    %3500 = vmatprep.subr.mxu0 0.0
    %3501 = vmatpush1.msra.mxu0 0.0
    %3502 = vmatprep.subr.mxu0 0.0
    %3503 = vmatpush1.msra.mxu0 0.0
    %3504 = vmatprep.subr.mxu0 0.0
    %3505 = vmatpush1.msra.mxu0 0.0
    %3506 = vmatprep.subr.mxu0 0.0
    %3507 = vmatpush1.msra.mxu0 0.0
    %3508 = vmatprep.subr.mxu0 0.0
    %3509 = vmatpush1.msra.mxu0 0.0
    %3510 = vmatprep.subr.mxu0 0.0
    %3511 = vmatpush1.msra.mxu0 0.0
    %3512 = vmatprep.subr.mxu0 0.0
    %3513 = vmatpush1.msra.mxu0 0.0
    %3514 = vmatprep.subr.mxu0 0.0
    %3515 = vmatpush1.msra.mxu0 0.0
    %3516 = vmatprep.subr.mxu0 0.0
    %3517 = vmatpush1.msra.mxu0 0.0
    %3518 = vmatprep.subr.mxu0 0.0
    %3519 = vmatpush1.msra.mxu0 0.0
    %3520 = vmatprep.subr.mxu0 0.0
    %3521 = vmatpush1.msra.mxu0 %v3410
    %3522 = vmatprep.subr.mxu0 0.0
    %3523 = vmatpush1.msra.mxu0 %v3409
    %3524 = vmatprep.subr.mxu0 0.0
    %3525 = vmatpush1.msra.mxu0 %v3408
    %3526 = vmatprep.subr.mxu0 0.0
    %3527 = vmatpush1.msra.mxu0 %v3407
    %3528 = vmatprep.subr.mxu0 0.0
    %3529 = vmatpush2.msra.mxu0 0.0
    %3530 = vmatprep.subr.mxu0 0.0
    %3531 = vmatpush2.msra.mxu0 0.0
    %3532 = vmatprep.subr.mxu0 0.0
    %3533 = vmatpush2.msra.mxu0 0.0
    %3534 = vmatprep.subr.mxu0 0.0
    %3535 = vmatpush2.msra.mxu0 0.0
    %3536 = vmatprep.subr.mxu0 0.0
    %3537 = vmatpush2.msra.mxu0 0.0
    %3538 = vmatprep.subr.mxu0 0.0
    %3539 = vmatpush2.msra.mxu0 0.0
    %3540 = vmatprep.subr.mxu0 0.0
    %3541 = vmatpush2.msra.mxu0 0.0
    %3542 = vmatprep.subr.mxu0 0.0
    %3543 = vmatpush2.msra.mxu0 0.0
    %3544 = vmatprep.subr.mxu0 0.0
    %3545 = vmatpush2.msra.mxu0 0.0
    %3546 = vmatprep.subr.mxu0 0.0
    %3547 = vmatpush2.msra.mxu0 0.0
    %3548 = vmatprep.subr.mxu0 0.0
    %3549 = vmatpush2.msra.mxu0 0.0
    %3550 = vmatprep.subr.mxu0 0.0
    %3551 = vmatpush2.msra.mxu0 0.0
    %3552 = vmatprep.subr.mxu0 0.0
    %3553 = vmatpush2.msra.mxu0 0.0
    %3554 = vmatprep.subr.mxu0 0.0
    %3555 = vmatpush2.msra.mxu0 0.0
    %3556 = vmatprep.subr.mxu0 0.0
    %3557 = vmatpush2.msra.mxu0 0.0
    %3558 = vmatprep.subr.mxu0 0.0
    %3559 = vmatpush2.msra.mxu0 0.0
    %3560 = vmatprep.mubr.f32.mxu0 0.0
    %3561 = vmatmul.mubr.f32.gmra.mxu0 %v3491
    %v3562 = vpop.f32.mrf.mxu0
    %v3563 = vadd.f32 %v3482, %v3562
    %v3564 = vpop.f32.mrf.mxu0
    %3565 = vmatprep.mubr.f32.mxu0 0.0
    %3566 = vmatmul.mubr.f32.gmra.mxu0 %v3494
    %v3567 = vpop.f32.mrf.mxu0
    %v3568 = vadd.f32 %v3487, %v3567
    %v3569 = vpop.f32.mrf.mxu0
    %3570 = vdwg.mxu0
    %s3571 = scalar_lea.vmem [#allocation3], 1920
    %v3572 = vld [vmem:[%s3571] sm:$0xff]
    %v3573 = vld [vmem:[%s3571 + $0x8] sm:$0xff]
    %v3574 = vld [vmem:[%s3571 + $0x10] sm:$0xff]
    %v3575 = vld [vmem:[%s3571 + $0x18] sm:$0xff]
    %s3576 = scalar_lea.vmem [#allocation5], 1024
    %v3577 = vld [vmem:[%s3576] sm:$0xff]
    %v3578 = vld [vmem:[%s3576 + $0x8] sm:$0xff]
    %v3579 = vld [vmem:[%s3576 + $0x10] sm:$0xff]
    %v3580 = vld [vmem:[%s3576 + $0x18] sm:$0xff]
    %v3581 = vld [vmem:[%s3576 + $0x20] sm:$0xff]
    %v3582 = vld [vmem:[%s3576 + $0x28] sm:$0xff]
    %v3583 = vld [vmem:[%s3576 + $0x30] sm:$0xff]
    %v3584 = vld [vmem:[%s3576 + $0x38] sm:$0xff]
    %3585 = vmatprep.subr.mxu0 0.0
    %3586 = vmatpush1.msra.mxu0 0.0
    %3587 = vmatprep.subr.mxu0 0.0
    %3588 = vmatpush1.msra.mxu0 0.0
    %3589 = vmatprep.subr.mxu0 0.0
    %3590 = vmatpush1.msra.mxu0 0.0
    %3591 = vmatprep.subr.mxu0 0.0
    %3592 = vmatpush1.msra.mxu0 0.0
    %3593 = vmatprep.subr.mxu0 0.0
    %3594 = vmatpush1.msra.mxu0 0.0
    %3595 = vmatprep.subr.mxu0 0.0
    %3596 = vmatpush1.msra.mxu0 0.0
    %3597 = vmatprep.subr.mxu0 0.0
    %3598 = vmatpush1.msra.mxu0 0.0
    %3599 = vmatprep.subr.mxu0 0.0
    %3600 = vmatpush1.msra.mxu0 0.0
    %3601 = vmatprep.subr.mxu0 0.0
    %3602 = vmatpush1.msra.mxu0 0.0
    %3603 = vmatprep.subr.mxu0 0.0
    %3604 = vmatpush1.msra.mxu0 0.0
    %3605 = vmatprep.subr.mxu0 0.0
    %3606 = vmatpush1.msra.mxu0 0.0
    %3607 = vmatprep.subr.mxu0 0.0
    %3608 = vmatpush1.msra.mxu0 0.0
    %3609 = vmatprep.subr.mxu0 0.0
    %3610 = vmatpush1.msra.mxu0 %v3584
    %3611 = vmatprep.subr.mxu0 0.0
    %3612 = vmatpush1.msra.mxu0 %v3583
    %3613 = vmatprep.subr.mxu0 0.0
    %3614 = vmatpush1.msra.mxu0 %v3582
    %3615 = vmatprep.subr.mxu0 0.0
    %3616 = vmatpush1.msra.mxu0 %v3581
    %3617 = vmatprep.subr.mxu0 0.0
    %3618 = vmatpush2.msra.mxu0 0.0
    %3619 = vmatprep.subr.mxu0 0.0
    %3620 = vmatpush2.msra.mxu0 0.0
    %3621 = vmatprep.subr.mxu0 0.0
    %3622 = vmatpush2.msra.mxu0 0.0
    %3623 = vmatprep.subr.mxu0 0.0
    %3624 = vmatpush2.msra.mxu0 0.0
    %3625 = vmatprep.subr.mxu0 0.0
    %3626 = vmatpush2.msra.mxu0 0.0
    %3627 = vmatprep.subr.mxu0 0.0
    %3628 = vmatpush2.msra.mxu0 0.0
    %3629 = vmatprep.subr.mxu0 0.0
    %3630 = vmatpush2.msra.mxu0 0.0
    %3631 = vmatprep.subr.mxu0 0.0
    %3632 = vmatpush2.msra.mxu0 0.0
    %3633 = vmatprep.subr.mxu0 0.0
    %3634 = vmatpush2.msra.mxu0 0.0
    %3635 = vmatprep.subr.mxu0 0.0
    %3636 = vmatpush2.msra.mxu0 0.0
    %3637 = vmatprep.subr.mxu0 0.0
    %3638 = vmatpush2.msra.mxu0 0.0
    %3639 = vmatprep.subr.mxu0 0.0
    %3640 = vmatpush2.msra.mxu0 0.0
    %3641 = vmatprep.subr.mxu0 0.0
    %3642 = vmatpush2.msra.mxu0 0.0
    %3643 = vmatprep.subr.mxu0 0.0
    %3644 = vmatpush2.msra.mxu0 0.0
    %3645 = vmatprep.subr.mxu0 0.0
    %3646 = vmatpush2.msra.mxu0 0.0
    %3647 = vmatprep.subr.mxu0 0.0
    %3648 = vmatpush2.msra.mxu0 0.0
    %3649 = vmatprep.mubr.f32.mxu0 0.0
    %3650 = vmatmul.mubr.f32.gmra.mxu0 %v2360
    %v3651 = vpop.f32.mrf.mxu0
    %v3652 = vadd.f32 0.0, %v3651
    %v3653 = vpop.f32.mrf.mxu0
    %3654 = vmatprep.mubr.f32.mxu0 0.0
    %3655 = vmatmul.mubr.f32.gmra.mxu0 %v2363
    %v3656 = vpop.f32.mrf.mxu0
    %v3657 = vadd.f32 0.0, %v3656
    %v3658 = vpop.f32.mrf.mxu0
    %3659 = vdwg.mxu0
    %3660 = vmatprep.subr.mxu0 0.0
    %3661 = vmatpush1.msra.mxu0 0.0
    %3662 = vmatprep.subr.mxu0 0.0
    %3663 = vmatpush1.msra.mxu0 0.0
    %3664 = vmatprep.subr.mxu0 0.0
    %3665 = vmatpush1.msra.mxu0 0.0
    %3666 = vmatprep.subr.mxu0 0.0
    %3667 = vmatpush1.msra.mxu0 0.0
    %3668 = vmatprep.subr.mxu0 0.0
    %3669 = vmatpush1.msra.mxu0 0.0
    %3670 = vmatprep.subr.mxu0 0.0
    %3671 = vmatpush1.msra.mxu0 0.0
    %3672 = vmatprep.subr.mxu0 0.0
    %3673 = vmatpush1.msra.mxu0 0.0
    %3674 = vmatprep.subr.mxu0 0.0
    %3675 = vmatpush1.msra.mxu0 0.0
    %3676 = vmatprep.subr.mxu0 0.0
    %3677 = vmatpush1.msra.mxu0 0.0
    %3678 = vmatprep.subr.mxu0 0.0
    %3679 = vmatpush1.msra.mxu0 0.0
    %3680 = vmatprep.subr.mxu0 0.0
    %3681 = vmatpush1.msra.mxu0 0.0
    %3682 = vmatprep.subr.mxu0 0.0
    %3683 = vmatpush1.msra.mxu0 0.0
    %3684 = vmatprep.subr.mxu0 0.0
    %3685 = vmatpush1.msra.mxu0 %v3580
    %3686 = vmatprep.subr.mxu0 0.0
    %3687 = vmatpush1.msra.mxu0 %v3579
    %3688 = vmatprep.subr.mxu0 0.0
    %3689 = vmatpush1.msra.mxu0 %v3578
    %3690 = vmatprep.subr.mxu0 0.0
    %3691 = vmatpush1.msra.mxu0 %v3577
    %3692 = vmatprep.subr.mxu0 0.0
    %3693 = vmatpush2.msra.mxu0 0.0
    %3694 = vmatprep.subr.mxu0 0.0
    %3695 = vmatpush2.msra.mxu0 0.0
    %3696 = vmatprep.subr.mxu0 0.0
    %3697 = vmatpush2.msra.mxu0 0.0
    %3698 = vmatprep.subr.mxu0 0.0
    %3699 = vmatpush2.msra.mxu0 0.0
    %3700 = vmatprep.subr.mxu0 0.0
    %3701 = vmatpush2.msra.mxu0 0.0
    %3702 = vmatprep.subr.mxu0 0.0
    %3703 = vmatpush2.msra.mxu0 0.0
    %3704 = vmatprep.subr.mxu0 0.0
    %3705 = vmatpush2.msra.mxu0 0.0
    %3706 = vmatprep.subr.mxu0 0.0
    %3707 = vmatpush2.msra.mxu0 0.0
    %3708 = vmatprep.subr.mxu0 0.0
    %3709 = vmatpush2.msra.mxu0 0.0
    %3710 = vmatprep.subr.mxu0 0.0
    %3711 = vmatpush2.msra.mxu0 0.0
    %3712 = vmatprep.subr.mxu0 0.0
    %3713 = vmatpush2.msra.mxu0 0.0
    %3714 = vmatprep.subr.mxu0 0.0
    %3715 = vmatpush2.msra.mxu0 0.0
    %3716 = vmatprep.subr.mxu0 0.0
    %3717 = vmatpush2.msra.mxu0 0.0
    %3718 = vmatprep.subr.mxu0 0.0
    %3719 = vmatpush2.msra.mxu0 0.0
    %3720 = vmatprep.subr.mxu0 0.0
    %3721 = vmatpush2.msra.mxu0 0.0
    %3722 = vmatprep.subr.mxu0 0.0
    %3723 = vmatpush2.msra.mxu0 0.0
    %3724 = vmatprep.mubr.f32.mxu0 0.0
    %3725 = vmatmul.mubr.f32.gmra.mxu0 %v3491
    %v3726 = vpop.f32.mrf.mxu0
    %v3727 = vadd.f32 %v3652, %v3726
    %v3728 = vpop.f32.mrf.mxu0
    %3729 = vmatprep.mubr.f32.mxu0 0.0
    %3730 = vmatmul.mubr.f32.gmra.mxu0 %v3494
    %v3731 = vpop.f32.mrf.mxu0
    %v3732 = vadd.f32 %v3657, %v3731
    %v3733 = vpop.f32.mrf.mxu0
    %3734 = vdwg.mxu0
    %s3735 = scalar_lea.vmem [#allocation3], 2048
    %v3736 = vld [vmem:[%s3735] sm:$0xff]
    %v3737 = vld [vmem:[%s3735 + $0x8] sm:$0xff]
    %v3738 = vld [vmem:[%s3735 + $0x10] sm:$0xff]
    %v3739 = vld [vmem:[%s3735 + $0x18] sm:$0xff]
    %v3741 = vsel %vm1706, %v3736, 0
    %v3744 = vsel %vm1706, %v3737, 0
    %v3747 = vsel %vm1706, %v3738, 0
    %v3750 = vsel %vm1706, %v3739, 0
    %3752 = vmatprep.subr.mxu0 0.0
    %3753 = vmatpush1.msra.mxu0 0.0
    %3754 = vmatprep.subr.mxu0 0.0
    %3755 = vmatpush1.msra.mxu0 0.0
    %3756 = vmatprep.subr.mxu0 0.0
    %3757 = vmatpush1.msra.mxu0 0.0
    %3758 = vmatprep.subr.mxu0 0.0
    %3759 = vmatpush1.msra.mxu0 0.0
    %3760 = vmatprep.subr.mxu0 0.0
    %3761 = vmatpush1.msra.mxu0 0.0
    %3762 = vmatprep.subr.mxu0 0.0
    %3763 = vmatpush1.msra.mxu0 0.0
    %3764 = vmatprep.subr.mxu0 0.0
    %3765 = vmatpush1.msra.mxu0 0.0
    %3766 = vmatprep.subr.mxu0 0.0
    %3767 = vmatpush1.msra.mxu0 0.0
    %3768 = vmatprep.subr.mxu0 0.0
    %3769 = vmatpush1.msra.mxu0 0.0
    %3770 = vmatprep.subr.mxu0 0.0
    %3771 = vmatpush1.msra.mxu0 0.0
    %3772 = vmatprep.subr.mxu0 0.0
    %3773 = vmatpush1.msra.mxu0 0.0
    %3774 = vmatprep.subr.mxu0 0.0
    %3775 = vmatpush1.msra.mxu0 0.0
    %3776 = vmatprep.subr.mxu0 0.0
    %3777 = vmatpush1.msra.mxu0 0.0
    %3778 = vmatprep.subr.mxu0 0.0
    %3779 = vmatpush1.msra.mxu0 0.0
    %3780 = vmatprep.subr.mxu0 0.0
    %3781 = vmatpush1.msra.mxu0 %v3732
    %3782 = vmatprep.subr.mxu0 0.0
    %3783 = vmatpush1.msra.mxu0 %v3727
    %3784 = vmatprep.subr.mxu0 0.0
    %3785 = vmatpush2.msra.mxu0 0.0
    %3786 = vmatprep.subr.mxu0 0.0
    %3787 = vmatpush2.msra.mxu0 0.0
    %3788 = vmatprep.subr.mxu0 0.0
    %3789 = vmatpush2.msra.mxu0 0.0
    %3790 = vmatprep.subr.mxu0 0.0
    %3791 = vmatpush2.msra.mxu0 0.0
    %3792 = vmatprep.subr.mxu0 0.0
    %3793 = vmatpush2.msra.mxu0 0.0
    %3794 = vmatprep.subr.mxu0 0.0
    %3795 = vmatpush2.msra.mxu0 0.0
    %3796 = vmatprep.subr.mxu0 0.0
    %3797 = vmatpush2.msra.mxu0 0.0
    %3798 = vmatprep.subr.mxu0 0.0
    %3799 = vmatpush2.msra.mxu0 0.0
    %3800 = vmatprep.subr.mxu0 0.0
    %3801 = vmatpush2.msra.mxu0 0.0
    %3802 = vmatprep.subr.mxu0 0.0
    %3803 = vmatpush2.msra.mxu0 0.0
    %3804 = vmatprep.subr.mxu0 0.0
    %3805 = vmatpush2.msra.mxu0 0.0
    %3806 = vmatprep.subr.mxu0 0.0
    %3807 = vmatpush2.msra.mxu0 0.0
    %3808 = vmatprep.subr.mxu0 0.0
    %3809 = vmatpush2.msra.mxu0 0.0
    %3810 = vmatprep.subr.mxu0 0.0
    %3811 = vmatpush2.msra.mxu0 0.0
    %3812 = vmatprep.subr.mxu0 0.0
    %3813 = vmatpush2.msra.mxu0 0.0
    %3814 = vmatprep.subr.mxu0 0.0
    %3815 = vmatpush2.msra.mxu0 0.0
    %3816 = vmatprep.mubr.f32.mxu0 0.0
    %3817 = vmatmul.mubr.f32.gmra.mxu0 %v3741
    %v3818 = vpop.f32.mrf.mxu0
    %v3819 = vadd.f32 0.0, %v3818
    %v3820 = vpop.f32.mrf.mxu0
    %3821 = vmatprep.mubr.f32.mxu0 0.0
    %3822 = vmatmul.mubr.f32.gmra.mxu0 %v3744
    %v3823 = vpop.f32.mrf.mxu0
    %v3824 = vadd.f32 0.0, %v3823
    %v3825 = vpop.f32.mrf.mxu0
    %3826 = vmatprep.mubr.f32.mxu0 0.0
    %3827 = vmatmul.mubr.f32.gmra.mxu0 %v3747
    %v3828 = vpop.f32.mrf.mxu0
    %v3829 = vadd.f32 0.0, %v3828
    %v3830 = vpop.f32.mrf.mxu0
    %3831 = vmatprep.mubr.f32.mxu0 0.0
    %3832 = vmatmul.mubr.f32.gmra.mxu0 %v3750
    %v3833 = vpop.f32.mrf.mxu0
    %v3834 = vadd.f32 0.0, %v3833
    %v3835 = vpop.f32.mrf.mxu0
    %3836 = vdwg.mxu0
    %v3838 = vsel %vm1706, %v3572, 0
    %v3841 = vsel %vm1706, %v3573, 0
    %v3844 = vsel %vm1706, %v3574, 0
    %v3847 = vsel %vm1706, %v3575, 0
    %3849 = vmatprep.subr.mxu0 0.0
    %3850 = vmatpush1.msra.mxu0 0.0
    %3851 = vmatprep.subr.mxu0 0.0
    %3852 = vmatpush1.msra.mxu0 0.0
    %3853 = vmatprep.subr.mxu0 0.0
    %3854 = vmatpush1.msra.mxu0 0.0
    %3855 = vmatprep.subr.mxu0 0.0
    %3856 = vmatpush1.msra.mxu0 0.0
    %3857 = vmatprep.subr.mxu0 0.0
    %3858 = vmatpush1.msra.mxu0 0.0
    %3859 = vmatprep.subr.mxu0 0.0
    %3860 = vmatpush1.msra.mxu0 0.0
    %3861 = vmatprep.subr.mxu0 0.0
    %3862 = vmatpush1.msra.mxu0 0.0
    %3863 = vmatprep.subr.mxu0 0.0
    %3864 = vmatpush1.msra.mxu0 0.0
    %3865 = vmatprep.subr.mxu0 0.0
    %3866 = vmatpush1.msra.mxu0 0.0
    %3867 = vmatprep.subr.mxu0 0.0
    %3868 = vmatpush1.msra.mxu0 0.0
    %3869 = vmatprep.subr.mxu0 0.0
    %3870 = vmatpush1.msra.mxu0 0.0
    %3871 = vmatprep.subr.mxu0 0.0
    %3872 = vmatpush1.msra.mxu0 0.0
    %3873 = vmatprep.subr.mxu0 0.0
    %3874 = vmatpush1.msra.mxu0 0.0
    %3875 = vmatprep.subr.mxu0 0.0
    %3876 = vmatpush1.msra.mxu0 0.0
    %3877 = vmatprep.subr.mxu0 0.0
    %3878 = vmatpush1.msra.mxu0 %v3568
    %3879 = vmatprep.subr.mxu0 0.0
    %3880 = vmatpush1.msra.mxu0 %v3563
    %3881 = vmatprep.subr.mxu0 0.0
    %3882 = vmatpush2.msra.mxu0 0.0
    %3883 = vmatprep.subr.mxu0 0.0
    %3884 = vmatpush2.msra.mxu0 0.0
    %3885 = vmatprep.subr.mxu0 0.0
    %3886 = vmatpush2.msra.mxu0 0.0
    %3887 = vmatprep.subr.mxu0 0.0
    %3888 = vmatpush2.msra.mxu0 0.0
    %3889 = vmatprep.subr.mxu0 0.0
    %3890 = vmatpush2.msra.mxu0 0.0
    %3891 = vmatprep.subr.mxu0 0.0
    %3892 = vmatpush2.msra.mxu0 0.0
    %3893 = vmatprep.subr.mxu0 0.0
    %3894 = vmatpush2.msra.mxu0 0.0
    %3895 = vmatprep.subr.mxu0 0.0
    %3896 = vmatpush2.msra.mxu0 0.0
    %3897 = vmatprep.subr.mxu0 0.0
    %3898 = vmatpush2.msra.mxu0 0.0
    %3899 = vmatprep.subr.mxu0 0.0
    %3900 = vmatpush2.msra.mxu0 0.0
    %3901 = vmatprep.subr.mxu0 0.0
    %3902 = vmatpush2.msra.mxu0 0.0
    %3903 = vmatprep.subr.mxu0 0.0
    %3904 = vmatpush2.msra.mxu0 0.0
    %3905 = vmatprep.subr.mxu0 0.0
    %3906 = vmatpush2.msra.mxu0 0.0
    %3907 = vmatprep.subr.mxu0 0.0
    %3908 = vmatpush2.msra.mxu0 0.0
    %3909 = vmatprep.subr.mxu0 0.0
    %3910 = vmatpush2.msra.mxu0 0.0
    %3911 = vmatprep.subr.mxu0 0.0
    %3912 = vmatpush2.msra.mxu0 0.0
    %3913 = vmatprep.mubr.f32.mxu0 0.0
    %3914 = vmatmul.mubr.f32.gmra.mxu0 %v3838
    %v3915 = vpop.f32.mrf.mxu0
    %v3916 = vadd.f32 %v3819, %v3915
    %v3917 = vpop.f32.mrf.mxu0
    %3918 = vmatprep.mubr.f32.mxu0 0.0
    %3919 = vmatmul.mubr.f32.gmra.mxu0 %v3841
    %v3920 = vpop.f32.mrf.mxu0
    %v3921 = vadd.f32 %v3824, %v3920
    %v3922 = vpop.f32.mrf.mxu0
    %3923 = vmatprep.mubr.f32.mxu0 0.0
    %3924 = vmatmul.mubr.f32.gmra.mxu0 %v3844
    %v3925 = vpop.f32.mrf.mxu0
    %v3926 = vadd.f32 %v3829, %v3925
    %v3927 = vpop.f32.mrf.mxu0
    %3928 = vmatprep.mubr.f32.mxu0 0.0
    %3929 = vmatmul.mubr.f32.gmra.mxu0 %v3847
    %v3930 = vpop.f32.mrf.mxu0
    %v3931 = vadd.f32 %v3834, %v3930
    %v3932 = vpop.f32.mrf.mxu0
    %3933 = vdwg.mxu0
    %s3934 = scalar_lea.vmem [#allocation5], 1088
    %v3935 = vld [vmem:[%s3934] sm:$0xff]
    %v3936 = vld [vmem:[%s3934 + $0x8] sm:$0xff]
    %v3937 = vld [vmem:[%s3934 + $0x10] sm:$0xff]
    %v3938 = vld [vmem:[%s3934 + $0x18] sm:$0xff]
    %v3939 = vld [vmem:[%s3934 + $0x20] sm:$0xff]
    %v3940 = vld [vmem:[%s3934 + $0x28] sm:$0xff]
    %v3941 = vld [vmem:[%s3934 + $0x30] sm:$0xff]
    %v3942 = vld [vmem:[%s3934 + $0x38] sm:$0xff]
    %3943 = vmatprep.subr.mxu0 0.0
    %3944 = vmatpush1.msra.mxu0 0.0
    %3945 = vmatprep.subr.mxu0 0.0
    %3946 = vmatpush1.msra.mxu0 0.0
    %3947 = vmatprep.subr.mxu0 0.0
    %3948 = vmatpush1.msra.mxu0 0.0
    %3949 = vmatprep.subr.mxu0 0.0
    %3950 = vmatpush1.msra.mxu0 0.0
    %3951 = vmatprep.subr.mxu0 0.0
    %3952 = vmatpush1.msra.mxu0 0.0
    %3953 = vmatprep.subr.mxu0 0.0
    %3954 = vmatpush1.msra.mxu0 0.0
    %3955 = vmatprep.subr.mxu0 0.0
    %3956 = vmatpush1.msra.mxu0 0.0
    %3957 = vmatprep.subr.mxu0 0.0
    %3958 = vmatpush1.msra.mxu0 0.0
    %3959 = vmatprep.subr.mxu0 0.0
    %3960 = vmatpush1.msra.mxu0 0.0
    %3961 = vmatprep.subr.mxu0 0.0
    %3962 = vmatpush1.msra.mxu0 0.0
    %3963 = vmatprep.subr.mxu0 0.0
    %3964 = vmatpush1.msra.mxu0 0.0
    %3965 = vmatprep.subr.mxu0 0.0
    %3966 = vmatpush1.msra.mxu0 0.0
    %3967 = vmatprep.subr.mxu0 0.0
    %3968 = vmatpush1.msra.mxu0 %v3942
    %3969 = vmatprep.subr.mxu0 0.0
    %3970 = vmatpush1.msra.mxu0 %v3941
    %3971 = vmatprep.subr.mxu0 0.0
    %3972 = vmatpush1.msra.mxu0 %v3940
    %3973 = vmatprep.subr.mxu0 0.0
    %3974 = vmatpush1.msra.mxu0 %v3939
    %3975 = vmatprep.subr.mxu0 0.0
    %3976 = vmatpush2.msra.mxu0 0.0
    %3977 = vmatprep.subr.mxu0 0.0
    %3978 = vmatpush2.msra.mxu0 0.0
    %3979 = vmatprep.subr.mxu0 0.0
    %3980 = vmatpush2.msra.mxu0 0.0
    %3981 = vmatprep.subr.mxu0 0.0
    %3982 = vmatpush2.msra.mxu0 0.0
    %3983 = vmatprep.subr.mxu0 0.0
    %3984 = vmatpush2.msra.mxu0 0.0
    %3985 = vmatprep.subr.mxu0 0.0
    %3986 = vmatpush2.msra.mxu0 0.0
    %3987 = vmatprep.subr.mxu0 0.0
    %3988 = vmatpush2.msra.mxu0 0.0
    %3989 = vmatprep.subr.mxu0 0.0
    %3990 = vmatpush2.msra.mxu0 0.0
    %3991 = vmatprep.subr.mxu0 0.0
    %3992 = vmatpush2.msra.mxu0 0.0
    %3993 = vmatprep.subr.mxu0 0.0
    %3994 = vmatpush2.msra.mxu0 0.0
    %3995 = vmatprep.subr.mxu0 0.0
    %3996 = vmatpush2.msra.mxu0 0.0
    %3997 = vmatprep.subr.mxu0 0.0
    %3998 = vmatpush2.msra.mxu0 0.0
    %3999 = vmatprep.subr.mxu0 0.0
    %4000 = vmatpush2.msra.mxu0 0.0
    %4001 = vmatprep.subr.mxu0 0.0
    %4002 = vmatpush2.msra.mxu0 0.0
    %4003 = vmatprep.subr.mxu0 0.0
    %4004 = vmatpush2.msra.mxu0 0.0
    %4005 = vmatprep.subr.mxu0 0.0
    %4006 = vmatpush2.msra.mxu0 0.0
    %4007 = vmatprep.mubr.f32.mxu0 0.0
    %4008 = vmatmul.mubr.f32.gmra.mxu0 %v2360
    %v4009 = vpop.f32.mrf.mxu0
    %v4010 = vadd.f32 0.0, %v4009
    %v4011 = vpop.f32.mrf.mxu0
    %4012 = vmatprep.mubr.f32.mxu0 0.0
    %4013 = vmatmul.mubr.f32.gmra.mxu0 %v2363
    %v4014 = vpop.f32.mrf.mxu0
    %v4015 = vadd.f32 0.0, %v4014
    %v4016 = vpop.f32.mrf.mxu0
    %4017 = vdwg.mxu0
    %4018 = vmatprep.subr.mxu0 0.0
    %4019 = vmatpush1.msra.mxu0 0.0
    %4020 = vmatprep.subr.mxu0 0.0
    %4021 = vmatpush1.msra.mxu0 0.0
    %4022 = vmatprep.subr.mxu0 0.0
    %4023 = vmatpush1.msra.mxu0 0.0
    %4024 = vmatprep.subr.mxu0 0.0
    %4025 = vmatpush1.msra.mxu0 0.0
    %4026 = vmatprep.subr.mxu0 0.0
    %4027 = vmatpush1.msra.mxu0 0.0
    %4028 = vmatprep.subr.mxu0 0.0
    %4029 = vmatpush1.msra.mxu0 0.0
    %4030 = vmatprep.subr.mxu0 0.0
    %4031 = vmatpush1.msra.mxu0 0.0
    %4032 = vmatprep.subr.mxu0 0.0
    %4033 = vmatpush1.msra.mxu0 0.0
    %4034 = vmatprep.subr.mxu0 0.0
    %4035 = vmatpush1.msra.mxu0 0.0
    %4036 = vmatprep.subr.mxu0 0.0
    %4037 = vmatpush1.msra.mxu0 0.0
    %4038 = vmatprep.subr.mxu0 0.0
    %4039 = vmatpush1.msra.mxu0 0.0
    %4040 = vmatprep.subr.mxu0 0.0
    %4041 = vmatpush1.msra.mxu0 0.0
    %4042 = vmatprep.subr.mxu0 0.0
    %4043 = vmatpush1.msra.mxu0 %v3938
    %4044 = vmatprep.subr.mxu0 0.0
    %4045 = vmatpush1.msra.mxu0 %v3937
    %4046 = vmatprep.subr.mxu0 0.0
    %4047 = vmatpush1.msra.mxu0 %v3936
    %4048 = vmatprep.subr.mxu0 0.0
    %4049 = vmatpush1.msra.mxu0 %v3935
    %4050 = vmatprep.subr.mxu0 0.0
    %4051 = vmatpush2.msra.mxu0 0.0
    %4052 = vmatprep.subr.mxu0 0.0
    %4053 = vmatpush2.msra.mxu0 0.0
    %4054 = vmatprep.subr.mxu0 0.0
    %4055 = vmatpush2.msra.mxu0 0.0
    %4056 = vmatprep.subr.mxu0 0.0
    %4057 = vmatpush2.msra.mxu0 0.0
    %4058 = vmatprep.subr.mxu0 0.0
    %4059 = vmatpush2.msra.mxu0 0.0
    %4060 = vmatprep.subr.mxu0 0.0
    %4061 = vmatpush2.msra.mxu0 0.0
    %4062 = vmatprep.subr.mxu0 0.0
    %4063 = vmatpush2.msra.mxu0 0.0
    %4064 = vmatprep.subr.mxu0 0.0
    %4065 = vmatpush2.msra.mxu0 0.0
    %4066 = vmatprep.subr.mxu0 0.0
    %4067 = vmatpush2.msra.mxu0 0.0
    %4068 = vmatprep.subr.mxu0 0.0
    %4069 = vmatpush2.msra.mxu0 0.0
    %4070 = vmatprep.subr.mxu0 0.0
    %4071 = vmatpush2.msra.mxu0 0.0
    %4072 = vmatprep.subr.mxu0 0.0
    %4073 = vmatpush2.msra.mxu0 0.0
    %4074 = vmatprep.subr.mxu0 0.0
    %4075 = vmatpush2.msra.mxu0 0.0
    %4076 = vmatprep.subr.mxu0 0.0
    %4077 = vmatpush2.msra.mxu0 0.0
    %4078 = vmatprep.subr.mxu0 0.0
    %4079 = vmatpush2.msra.mxu0 0.0
    %4080 = vmatprep.subr.mxu0 0.0
    %4081 = vmatpush2.msra.mxu0 0.0
    %4082 = vmatprep.mubr.f32.mxu0 0.0
    %4083 = vmatmul.mubr.f32.gmra.mxu0 %v3491
    %v4084 = vpop.f32.mrf.mxu0
    %v4085 = vadd.f32 %v4010, %v4084
    %v4086 = vpop.f32.mrf.mxu0
    %4087 = vmatprep.mubr.f32.mxu0 0.0
    %4088 = vmatmul.mubr.f32.gmra.mxu0 %v3494
    %v4089 = vpop.f32.mrf.mxu0
    %v4090 = vadd.f32 %v4015, %v4089
    %v4091 = vpop.f32.mrf.mxu0
    %4092 = vdwg.mxu0
    %s4093 = scalar_lea.vmem [#allocation3], 2176
    %v4094 = vld [vmem:[%s4093] sm:$0xff]
    %v4095 = vld [vmem:[%s4093 + $0x8] sm:$0xff]
    %v4096 = vld [vmem:[%s4093 + $0x10] sm:$0xff]
    %v4097 = vld [vmem:[%s4093 + $0x18] sm:$0xff]
    %v4099 = vsel %vm1706, %v4094, 0
    %v4102 = vsel %vm1706, %v4095, 0
    %v4105 = vsel %vm1706, %v4096, 0
    %v4108 = vsel %vm1706, %v4097, 0
    %4110 = vmatprep.subr.mxu0 0.0
    %4111 = vmatpush1.msra.mxu0 0.0
    %4112 = vmatprep.subr.mxu0 0.0
    %4113 = vmatpush1.msra.mxu0 0.0
    %4114 = vmatprep.subr.mxu0 0.0
    %4115 = vmatpush1.msra.mxu0 0.0
    %4116 = vmatprep.subr.mxu0 0.0
    %4117 = vmatpush1.msra.mxu0 0.0
    %4118 = vmatprep.subr.mxu0 0.0
    %4119 = vmatpush1.msra.mxu0 0.0
    %4120 = vmatprep.subr.mxu0 0.0
    %4121 = vmatpush1.msra.mxu0 0.0
    %4122 = vmatprep.subr.mxu0 0.0
    %4123 = vmatpush1.msra.mxu0 0.0
    %4124 = vmatprep.subr.mxu0 0.0
    %4125 = vmatpush1.msra.mxu0 0.0
    %4126 = vmatprep.subr.mxu0 0.0
    %4127 = vmatpush1.msra.mxu0 0.0
    %4128 = vmatprep.subr.mxu0 0.0
    %4129 = vmatpush1.msra.mxu0 0.0
    %4130 = vmatprep.subr.mxu0 0.0
    %4131 = vmatpush1.msra.mxu0 0.0
    %4132 = vmatprep.subr.mxu0 0.0
    %4133 = vmatpush1.msra.mxu0 0.0
    %4134 = vmatprep.subr.mxu0 0.0
    %4135 = vmatpush1.msra.mxu0 0.0
    %4136 = vmatprep.subr.mxu0 0.0
    %4137 = vmatpush1.msra.mxu0 0.0
    %4138 = vmatprep.subr.mxu0 0.0
    %4139 = vmatpush1.msra.mxu0 %v4090
    %4140 = vmatprep.subr.mxu0 0.0
    %4141 = vmatpush1.msra.mxu0 %v4085
    %4142 = vmatprep.subr.mxu0 0.0
    %4143 = vmatpush2.msra.mxu0 0.0
    %4144 = vmatprep.subr.mxu0 0.0
    %4145 = vmatpush2.msra.mxu0 0.0
    %4146 = vmatprep.subr.mxu0 0.0
    %4147 = vmatpush2.msra.mxu0 0.0
    %4148 = vmatprep.subr.mxu0 0.0
    %4149 = vmatpush2.msra.mxu0 0.0
    %4150 = vmatprep.subr.mxu0 0.0
    %4151 = vmatpush2.msra.mxu0 0.0
    %4152 = vmatprep.subr.mxu0 0.0
    %4153 = vmatpush2.msra.mxu0 0.0
    %4154 = vmatprep.subr.mxu0 0.0
    %4155 = vmatpush2.msra.mxu0 0.0
    %4156 = vmatprep.subr.mxu0 0.0
    %4157 = vmatpush2.msra.mxu0 0.0
    %4158 = vmatprep.subr.mxu0 0.0
    %4159 = vmatpush2.msra.mxu0 0.0
    %4160 = vmatprep.subr.mxu0 0.0
    %4161 = vmatpush2.msra.mxu0 0.0
    %4162 = vmatprep.subr.mxu0 0.0
    %4163 = vmatpush2.msra.mxu0 0.0
    %4164 = vmatprep.subr.mxu0 0.0
    %4165 = vmatpush2.msra.mxu0 0.0
    %4166 = vmatprep.subr.mxu0 0.0
    %4167 = vmatpush2.msra.mxu0 0.0
    %4168 = vmatprep.subr.mxu0 0.0
    %4169 = vmatpush2.msra.mxu0 0.0
    %4170 = vmatprep.subr.mxu0 0.0
    %4171 = vmatpush2.msra.mxu0 0.0
    %4172 = vmatprep.subr.mxu0 0.0
    %4173 = vmatpush2.msra.mxu0 0.0
    %4174 = vmatprep.mubr.f32.mxu0 0.0
    %4175 = vmatmul.mubr.f32.gmra.mxu0 %v4099
    %v4176 = vpop.f32.mrf.mxu0
    %v4177 = vadd.f32 0.0, %v4176
    %v4178 = vpop.f32.mrf.mxu0
    %4179 = vmatprep.mubr.f32.mxu0 0.0
    %4180 = vmatmul.mubr.f32.gmra.mxu0 %v4102
    %v4181 = vpop.f32.mrf.mxu0
    %v4182 = vadd.f32 0.0, %v4181
    %v4183 = vpop.f32.mrf.mxu0
    %4184 = vmatprep.mubr.f32.mxu0 0.0
    %4185 = vmatmul.mubr.f32.gmra.mxu0 %v4105
    %v4186 = vpop.f32.mrf.mxu0
    %v4187 = vadd.f32 0.0, %v4186
    %v4188 = vpop.f32.mrf.mxu0
    %4189 = vmatprep.mubr.f32.mxu0 0.0
    %4190 = vmatmul.mubr.f32.gmra.mxu0 %v4108
    %v4191 = vpop.f32.mrf.mxu0
    %v4192 = vadd.f32 0.0, %v4191
    %v4193 = vpop.f32.mrf.mxu0
    %4194 = vdwg.mxu0
    %v4195 = vadd.f32 %v3916, %v4177
    %v4196 = vadd.f32 %v3921, %v4182
    %v4197 = vadd.f32 %v3926, %v4187
    %v4198 = vadd.f32 %v3931, %v4192
    %v4199 = vsel %vm1706, %v4195, 0.0
    %v4200 = vsel %vm1706, %v4196, 0.0
    %v4201 = vadd.f32 %v4199, %v4200
    %v4202 = vsel %vm1706, %v4197, 0.0
    %v4203 = vadd.f32 %v4201, %v4202
    %v4204 = vsel %vm1706, %v4198, 0.0
    %v4205 = vadd.f32 %v4203, %v4204
    %v4206 = vrot.slane %v4205, 4
    %v4207 = vadd.f32 %v4205, %v4206
    %v4208 = vrot.slane %v4207, 2
    %v4209 = vadd.f32 %v4207, %v4208
    %v4210 = vrot.slane %v4209, 1
    %v4211 = vadd.f32 %v4209, %v4210
    %v4212 = vmul.f32 %v4195, %v4195
    %v4213 = vmul.f32 %v4196, %v4196
    %v4214 = vmul.f32 %v4197, %v4197
    %v4215 = vmul.f32 %v4198, %v4198
    %v4216 = vsel %vm1706, %v4212, 0.0
    %v4217 = vsel %vm1706, %v4213, 0.0
    %v4218 = vadd.f32 %v4216, %v4217
    %v4219 = vsel %vm1706, %v4214, 0.0
    %v4220 = vadd.f32 %v4218, %v4219
    %v4221 = vsel %vm1706, %v4215, 0.0
    %v4222 = vadd.f32 %v4220, %v4221
    %v4223 = vrot.slane %v4222, 4
    %v4224 = vadd.f32 %v4222, %v4223
    %v4225 = vrot.slane %v4224, 2
    %v4226 = vadd.f32 %v4224, %v4225
    %v4227 = vrot.slane %v4226, 1
    %v4228 = vadd.f32 %v4226, %v4227
    %v4229 = vmul.f32 %v4211, 0.03125
    %v4230 = vmul.f32 %v4228, 0.03125
    %v4231 = vmul.f32 %v4229, %v4229
    %v4232 = vsub.f32 %v4230, %v4231
    %v4233 = vmax.f32 %v4232, 0.0
    %s4234 = scalar_lea.vmem [#allocation7], 10
    %v4235 = vld [vmem:[%s4234] sm:$0x1]
    %v4236 = vsub.f32 %v4195, %v4229
    %v4237 = vsub.f32 %v4196, %v4229
    %v4238 = vsub.f32 %v4197, %v4229
    %v4239 = vsub.f32 %v4198, %v4229
    %v4240 = vlaneseq
    %v4241 = vshrl.u32 %v4240, 7
    %v4242 = vsub.s32 0, %v4241
    %v4243 = vrot.slane %v4235, %v4242
    %v4244 = vmul.f32 %v4243, %v4236
    %v4245 = vmul.f32 %v4243, %v4237
    %v4246 = vmul.f32 %v4243, %v4238
    %v4247 = vmul.f32 %v4243, %v4239
    %v4248 = vadd.f32 %v4233, 1e-05
    %v4249 = vrsqrt.pop %v4248
    %v4250 = vmul.f32 %v4244, %v4249
    %v4251 = vmul.f32 %v4245, %v4249
    %v4252 = vmul.f32 %v4246, %v4249
    %v4253 = vmul.f32 %v4247, %v4249
    %v4254 = vld [vmem:[%s4234 + $0x1] sm:$0x1]
    %v4255 = vlaneseq
    %v4256 = vshrl.u32 %v4255, 7
    %v4257 = vsub.s32 0, %v4256
    %v4258 = vrot.slane %v4254, %v4257
    %v4259 = vadd.f32 %v4250, %v4258
    %v4260 = vadd.f32 %v4251, %v4258
    %v4261 = vadd.f32 %v4252, %v4258
    %v4262 = vadd.f32 %v4253, %v4258
    %v4263 = vmax.f32 %v4259, 0.0
    %v4264 = vmax.f32 %v4260, 0.0
    %v4265 = vmax.f32 %v4261, 0.0
    %v4266 = vmax.f32 %v4262, 0.0
    %s4267 = scalar_lea.vmem [#allocation5], 1152
    %v4268 = vld [vmem:[%s4267] sm:$0xff]
    %v4269 = vld [vmem:[%s4267 + $0x8] sm:$0xff]
    %v4270 = vld [vmem:[%s4267 + $0x10] sm:$0xff]
    %v4271 = vld [vmem:[%s4267 + $0x18] sm:$0xff]
    %4272 = vmatprep.subr.mxu0 0.0
    %4273 = vmatpush1.msra.mxu0 0.0
    %4274 = vmatprep.subr.mxu0 0.0
    %4275 = vmatpush1.msra.mxu0 0.0
    %4276 = vmatprep.subr.mxu0 0.0
    %4277 = vmatpush1.msra.mxu0 0.0
    %4278 = vmatprep.subr.mxu0 0.0
    %4279 = vmatpush1.msra.mxu0 0.0
    %4280 = vmatprep.subr.mxu0 0.0
    %4281 = vmatpush1.msra.mxu0 0.0
    %4282 = vmatprep.subr.mxu0 0.0
    %4283 = vmatpush1.msra.mxu0 0.0
    %4284 = vmatprep.subr.mxu0 0.0
    %4285 = vmatpush1.msra.mxu0 0.0
    %4286 = vmatprep.subr.mxu0 0.0
    %4287 = vmatpush1.msra.mxu0 0.0
    %4288 = vmatprep.subr.mxu0 0.0
    %4289 = vmatpush1.msra.mxu0 0.0
    %4290 = vmatprep.subr.mxu0 0.0
    %4291 = vmatpush1.msra.mxu0 0.0
    %4292 = vmatprep.subr.mxu0 0.0
    %4293 = vmatpush1.msra.mxu0 0.0
    %4294 = vmatprep.subr.mxu0 0.0
    %4295 = vmatpush1.msra.mxu0 0.0
    %4296 = vmatprep.subr.mxu0 0.0
    %4297 = vmatpush1.msra.mxu0 0.0
    %4298 = vmatprep.subr.mxu0 0.0
    %4299 = vmatpush1.msra.mxu0 0.0
    %4300 = vmatprep.subr.mxu0 0.0
    %4301 = vmatpush1.msra.mxu0 %v4271
    %4302 = vmatprep.subr.mxu0 0.0
    %4303 = vmatpush1.msra.mxu0 %v4270
    %4304 = vmatprep.subr.mxu0 0.0
    %4305 = vmatpush2.msra.mxu0 0.0
    %4306 = vmatprep.subr.mxu0 0.0
    %4307 = vmatpush2.msra.mxu0 0.0
    %4308 = vmatprep.subr.mxu0 0.0
    %4309 = vmatpush2.msra.mxu0 0.0
    %4310 = vmatprep.subr.mxu0 0.0
    %4311 = vmatpush2.msra.mxu0 0.0
    %4312 = vmatprep.subr.mxu0 0.0
    %4313 = vmatpush2.msra.mxu0 0.0
    %4314 = vmatprep.subr.mxu0 0.0
    %4315 = vmatpush2.msra.mxu0 0.0
    %4316 = vmatprep.subr.mxu0 0.0
    %4317 = vmatpush2.msra.mxu0 0.0
    %4318 = vmatprep.subr.mxu0 0.0
    %4319 = vmatpush2.msra.mxu0 0.0
    %4320 = vmatprep.subr.mxu0 0.0
    %4321 = vmatpush2.msra.mxu0 0.0
    %4322 = vmatprep.subr.mxu0 0.0
    %4323 = vmatpush2.msra.mxu0 0.0
    %4324 = vmatprep.subr.mxu0 0.0
    %4325 = vmatpush2.msra.mxu0 0.0
    %4326 = vmatprep.subr.mxu0 0.0
    %4327 = vmatpush2.msra.mxu0 0.0
    %4328 = vmatprep.subr.mxu0 0.0
    %4329 = vmatpush2.msra.mxu0 0.0
    %4330 = vmatprep.subr.mxu0 0.0
    %4331 = vmatpush2.msra.mxu0 0.0
    %4332 = vmatprep.subr.mxu0 0.0
    %4333 = vmatpush2.msra.mxu0 0.0
    %4334 = vmatprep.subr.mxu0 0.0
    %4335 = vmatpush2.msra.mxu0 0.0
    %4336 = vmatprep.mubr.f32.mxu0 0.0
    %4337 = vmatmul.mubr.f32.gmra.mxu0 %v1779
    %v4338 = vpop.f32.mrf.mxu0
    %v4339 = vadd.f32 0.0, %v4338
    %v4340 = vpop.f32.mrf.mxu0
    %4341 = vmatprep.mubr.f32.mxu0 0.0
    %4342 = vmatmul.mubr.f32.gmra.mxu0 %v1782
    %v4343 = vpop.f32.mrf.mxu0
    %v4344 = vadd.f32 0.0, %v4343
    %v4345 = vpop.f32.mrf.mxu0
    %4346 = vmatprep.mubr.f32.mxu0 0.0
    %4347 = vmatmul.mubr.f32.gmra.mxu0 %v1785
    %v4348 = vpop.f32.mrf.mxu0
    %v4349 = vadd.f32 0.0, %v4348
    %v4350 = vpop.f32.mrf.mxu0
    %4351 = vmatprep.mubr.f32.mxu0 0.0
    %4352 = vmatmul.mubr.f32.gmra.mxu0 %v1788
    %v4353 = vpop.f32.mrf.mxu0
    %v4354 = vadd.f32 0.0, %v4353
    %v4355 = vpop.f32.mrf.mxu0
    %4356 = vdwg.mxu0
    %v4358 = vsel %vm1706, %v4263, 0
    %v4361 = vsel %vm1706, %v4264, 0
    %v4364 = vsel %vm1706, %v4265, 0
    %v4367 = vsel %vm1706, %v4266, 0
    %4369 = vmatprep.subr.mxu0 0.0
    %4370 = vmatpush1.msra.mxu0 0.0
    %4371 = vmatprep.subr.mxu0 0.0
    %4372 = vmatpush1.msra.mxu0 0.0
    %4373 = vmatprep.subr.mxu0 0.0
    %4374 = vmatpush1.msra.mxu0 0.0
    %4375 = vmatprep.subr.mxu0 0.0
    %4376 = vmatpush1.msra.mxu0 0.0
    %4377 = vmatprep.subr.mxu0 0.0
    %4378 = vmatpush1.msra.mxu0 0.0
    %4379 = vmatprep.subr.mxu0 0.0
    %4380 = vmatpush1.msra.mxu0 0.0
    %4381 = vmatprep.subr.mxu0 0.0
    %4382 = vmatpush1.msra.mxu0 0.0
    %4383 = vmatprep.subr.mxu0 0.0
    %4384 = vmatpush1.msra.mxu0 0.0
    %4385 = vmatprep.subr.mxu0 0.0
    %4386 = vmatpush1.msra.mxu0 0.0
    %4387 = vmatprep.subr.mxu0 0.0
    %4388 = vmatpush1.msra.mxu0 0.0
    %4389 = vmatprep.subr.mxu0 0.0
    %4390 = vmatpush1.msra.mxu0 0.0
    %4391 = vmatprep.subr.mxu0 0.0
    %4392 = vmatpush1.msra.mxu0 0.0
    %4393 = vmatprep.subr.mxu0 0.0
    %4394 = vmatpush1.msra.mxu0 0.0
    %4395 = vmatprep.subr.mxu0 0.0
    %4396 = vmatpush1.msra.mxu0 0.0
    %4397 = vmatprep.subr.mxu0 0.0
    %4398 = vmatpush1.msra.mxu0 %v4269
    %4399 = vmatprep.subr.mxu0 0.0
    %4400 = vmatpush1.msra.mxu0 %v4268
    %4401 = vmatprep.subr.mxu0 0.0
    %4402 = vmatpush2.msra.mxu0 0.0
    %4403 = vmatprep.subr.mxu0 0.0
    %4404 = vmatpush2.msra.mxu0 0.0
    %4405 = vmatprep.subr.mxu0 0.0
    %4406 = vmatpush2.msra.mxu0 0.0
    %4407 = vmatprep.subr.mxu0 0.0
    %4408 = vmatpush2.msra.mxu0 0.0
    %4409 = vmatprep.subr.mxu0 0.0
    %4410 = vmatpush2.msra.mxu0 0.0
    %4411 = vmatprep.subr.mxu0 0.0
    %4412 = vmatpush2.msra.mxu0 0.0
    %4413 = vmatprep.subr.mxu0 0.0
    %4414 = vmatpush2.msra.mxu0 0.0
    %4415 = vmatprep.subr.mxu0 0.0
    %4416 = vmatpush2.msra.mxu0 0.0
    %4417 = vmatprep.subr.mxu0 0.0
    %4418 = vmatpush2.msra.mxu0 0.0
    %4419 = vmatprep.subr.mxu0 0.0
    %4420 = vmatpush2.msra.mxu0 0.0
    %4421 = vmatprep.subr.mxu0 0.0
    %4422 = vmatpush2.msra.mxu0 0.0
    %4423 = vmatprep.subr.mxu0 0.0
    %4424 = vmatpush2.msra.mxu0 0.0
    %4425 = vmatprep.subr.mxu0 0.0
    %4426 = vmatpush2.msra.mxu0 0.0
    %4427 = vmatprep.subr.mxu0 0.0
    %4428 = vmatpush2.msra.mxu0 0.0
    %4429 = vmatprep.subr.mxu0 0.0
    %4430 = vmatpush2.msra.mxu0 0.0
    %4431 = vmatprep.subr.mxu0 0.0
    %4432 = vmatpush2.msra.mxu0 0.0
    %4433 = vmatprep.mubr.f32.mxu0 0.0
    %4434 = vmatmul.mubr.f32.gmra.mxu0 %v4358
    %v4435 = vpop.f32.mrf.mxu0
    %v4436 = vadd.f32 %v4339, %v4435
    %v4437 = vpop.f32.mrf.mxu0
    %4438 = vmatprep.mubr.f32.mxu0 0.0
    %4439 = vmatmul.mubr.f32.gmra.mxu0 %v4361
    %v4440 = vpop.f32.mrf.mxu0
    %v4441 = vadd.f32 %v4344, %v4440
    %v4442 = vpop.f32.mrf.mxu0
    %4443 = vmatprep.mubr.f32.mxu0 0.0
    %4444 = vmatmul.mubr.f32.gmra.mxu0 %v4364
    %v4445 = vpop.f32.mrf.mxu0
    %v4446 = vadd.f32 %v4349, %v4445
    %v4447 = vpop.f32.mrf.mxu0
    %4448 = vmatprep.mubr.f32.mxu0 0.0
    %4449 = vmatmul.mubr.f32.gmra.mxu0 %v4367
    %v4450 = vpop.f32.mrf.mxu0
    %v4451 = vadd.f32 %v4354, %v4450
    %v4452 = vpop.f32.mrf.mxu0
    %4453 = vdwg.mxu0
    %s4454 = scalar_lea.vmem [#allocation3], 2304
    %v4455 = vld [vmem:[%s4454] sm:$0xff]
    %v4456 = vld [vmem:[%s4454 + $0x8] sm:$0xff]
    %v4457 = vld [vmem:[%s4454 + $0x10] sm:$0xff]
    %v4458 = vld [vmem:[%s4454 + $0x18] sm:$0xff]
    %v4459 = vld [vmem:[%s4454 + $0x20] sm:$0xff]
    %v4460 = vld [vmem:[%s4454 + $0x28] sm:$0xff]
    %v4461 = vld [vmem:[%s4454 + $0x30] sm:$0xff]
    %v4462 = vld [vmem:[%s4454 + $0x38] sm:$0xff]
    %s4463 = scalar_lea.vmem [#allocation5], 1216
    %v4464 = vld [vmem:[%s4463] sm:$0xff]
    %v4465 = vld [vmem:[%s4463 + $0x8] sm:$0xff]
    %v4466 = vld [vmem:[%s4463 + $0x10] sm:$0xff]
    %v4467 = vld [vmem:[%s4463 + $0x18] sm:$0xff]
    %4468 = vmatprep.subr.mxu0 0.0
    %4469 = vmatpush1.msra.mxu0 0.0
    %4470 = vmatprep.subr.mxu0 0.0
    %4471 = vmatpush1.msra.mxu0 0.0
    %4472 = vmatprep.subr.mxu0 0.0
    %4473 = vmatpush1.msra.mxu0 0.0
    %4474 = vmatprep.subr.mxu0 0.0
    %4475 = vmatpush1.msra.mxu0 0.0
    %4476 = vmatprep.subr.mxu0 0.0
    %4477 = vmatpush1.msra.mxu0 0.0
    %4478 = vmatprep.subr.mxu0 0.0
    %4479 = vmatpush1.msra.mxu0 0.0
    %4480 = vmatprep.subr.mxu0 0.0
    %4481 = vmatpush1.msra.mxu0 0.0
    %4482 = vmatprep.subr.mxu0 0.0
    %4483 = vmatpush1.msra.mxu0 0.0
    %4484 = vmatprep.subr.mxu0 0.0
    %4485 = vmatpush1.msra.mxu0 0.0
    %4486 = vmatprep.subr.mxu0 0.0
    %4487 = vmatpush1.msra.mxu0 0.0
    %4488 = vmatprep.subr.mxu0 0.0
    %4489 = vmatpush1.msra.mxu0 0.0
    %4490 = vmatprep.subr.mxu0 0.0
    %4491 = vmatpush1.msra.mxu0 0.0
    %4492 = vmatprep.subr.mxu0 0.0
    %4493 = vmatpush1.msra.mxu0 0.0
    %4494 = vmatprep.subr.mxu0 0.0
    %4495 = vmatpush1.msra.mxu0 0.0
    %4496 = vmatprep.subr.mxu0 0.0
    %4497 = vmatpush1.msra.mxu0 %v4467
    %4498 = vmatprep.subr.mxu0 0.0
    %4499 = vmatpush1.msra.mxu0 %v4466
    %4500 = vmatprep.subr.mxu0 0.0
    %4501 = vmatpush2.msra.mxu0 0.0
    %4502 = vmatprep.subr.mxu0 0.0
    %4503 = vmatpush2.msra.mxu0 0.0
    %4504 = vmatprep.subr.mxu0 0.0
    %4505 = vmatpush2.msra.mxu0 0.0
    %4506 = vmatprep.subr.mxu0 0.0
    %4507 = vmatpush2.msra.mxu0 0.0
    %4508 = vmatprep.subr.mxu0 0.0
    %4509 = vmatpush2.msra.mxu0 0.0
    %4510 = vmatprep.subr.mxu0 0.0
    %4511 = vmatpush2.msra.mxu0 0.0
    %4512 = vmatprep.subr.mxu0 0.0
    %4513 = vmatpush2.msra.mxu0 0.0
    %4514 = vmatprep.subr.mxu0 0.0
    %4515 = vmatpush2.msra.mxu0 0.0
    %4516 = vmatprep.subr.mxu0 0.0
    %4517 = vmatpush2.msra.mxu0 0.0
    %4518 = vmatprep.subr.mxu0 0.0
    %4519 = vmatpush2.msra.mxu0 0.0
    %4520 = vmatprep.subr.mxu0 0.0
    %4521 = vmatpush2.msra.mxu0 0.0
    %4522 = vmatprep.subr.mxu0 0.0
    %4523 = vmatpush2.msra.mxu0 0.0
    %4524 = vmatprep.subr.mxu0 0.0
    %4525 = vmatpush2.msra.mxu0 0.0
    %4526 = vmatprep.subr.mxu0 0.0
    %4527 = vmatpush2.msra.mxu0 0.0
    %4528 = vmatprep.subr.mxu0 0.0
    %4529 = vmatpush2.msra.mxu0 0.0
    %4530 = vmatprep.subr.mxu0 0.0
    %4531 = vmatpush2.msra.mxu0 0.0
    %4532 = vmatprep.mubr.f32.mxu0 0.0
    %4533 = vmatmul.mubr.f32.gmra.mxu0 %v1779
    %v4534 = vpop.f32.mrf.mxu0
    %v4535 = vadd.f32 0.0, %v4534
    %v4536 = vpop.f32.mrf.mxu0
    %4537 = vmatprep.mubr.f32.mxu0 0.0
    %4538 = vmatmul.mubr.f32.gmra.mxu0 %v1782
    %v4539 = vpop.f32.mrf.mxu0
    %v4540 = vadd.f32 0.0, %v4539
    %v4541 = vpop.f32.mrf.mxu0
    %4542 = vmatprep.mubr.f32.mxu0 0.0
    %4543 = vmatmul.mubr.f32.gmra.mxu0 %v1785
    %v4544 = vpop.f32.mrf.mxu0
    %v4545 = vadd.f32 0.0, %v4544
    %v4546 = vpop.f32.mrf.mxu0
    %4547 = vmatprep.mubr.f32.mxu0 0.0
    %4548 = vmatmul.mubr.f32.gmra.mxu0 %v1788
    %v4549 = vpop.f32.mrf.mxu0
    %v4550 = vadd.f32 0.0, %v4549
    %v4551 = vpop.f32.mrf.mxu0
    %4552 = vdwg.mxu0
    %4553 = vmatprep.subr.mxu0 0.0
    %4554 = vmatpush1.msra.mxu0 0.0
    %4555 = vmatprep.subr.mxu0 0.0
    %4556 = vmatpush1.msra.mxu0 0.0
    %4557 = vmatprep.subr.mxu0 0.0
    %4558 = vmatpush1.msra.mxu0 0.0
    %4559 = vmatprep.subr.mxu0 0.0
    %4560 = vmatpush1.msra.mxu0 0.0
    %4561 = vmatprep.subr.mxu0 0.0
    %4562 = vmatpush1.msra.mxu0 0.0
    %4563 = vmatprep.subr.mxu0 0.0
    %4564 = vmatpush1.msra.mxu0 0.0
    %4565 = vmatprep.subr.mxu0 0.0
    %4566 = vmatpush1.msra.mxu0 0.0
    %4567 = vmatprep.subr.mxu0 0.0
    %4568 = vmatpush1.msra.mxu0 0.0
    %4569 = vmatprep.subr.mxu0 0.0
    %4570 = vmatpush1.msra.mxu0 0.0
    %4571 = vmatprep.subr.mxu0 0.0
    %4572 = vmatpush1.msra.mxu0 0.0
    %4573 = vmatprep.subr.mxu0 0.0
    %4574 = vmatpush1.msra.mxu0 0.0
    %4575 = vmatprep.subr.mxu0 0.0
    %4576 = vmatpush1.msra.mxu0 0.0
    %4577 = vmatprep.subr.mxu0 0.0
    %4578 = vmatpush1.msra.mxu0 0.0
    %4579 = vmatprep.subr.mxu0 0.0
    %4580 = vmatpush1.msra.mxu0 0.0
    %4581 = vmatprep.subr.mxu0 0.0
    %4582 = vmatpush1.msra.mxu0 %v4465
    %4583 = vmatprep.subr.mxu0 0.0
    %4584 = vmatpush1.msra.mxu0 %v4464
    %4585 = vmatprep.subr.mxu0 0.0
    %4586 = vmatpush2.msra.mxu0 0.0
    %4587 = vmatprep.subr.mxu0 0.0
    %4588 = vmatpush2.msra.mxu0 0.0
    %4589 = vmatprep.subr.mxu0 0.0
    %4590 = vmatpush2.msra.mxu0 0.0
    %4591 = vmatprep.subr.mxu0 0.0
    %4592 = vmatpush2.msra.mxu0 0.0
    %4593 = vmatprep.subr.mxu0 0.0
    %4594 = vmatpush2.msra.mxu0 0.0
    %4595 = vmatprep.subr.mxu0 0.0
    %4596 = vmatpush2.msra.mxu0 0.0
    %4597 = vmatprep.subr.mxu0 0.0
    %4598 = vmatpush2.msra.mxu0 0.0
    %4599 = vmatprep.subr.mxu0 0.0
    %4600 = vmatpush2.msra.mxu0 0.0
    %4601 = vmatprep.subr.mxu0 0.0
    %4602 = vmatpush2.msra.mxu0 0.0
    %4603 = vmatprep.subr.mxu0 0.0
    %4604 = vmatpush2.msra.mxu0 0.0
    %4605 = vmatprep.subr.mxu0 0.0
    %4606 = vmatpush2.msra.mxu0 0.0
    %4607 = vmatprep.subr.mxu0 0.0
    %4608 = vmatpush2.msra.mxu0 0.0
    %4609 = vmatprep.subr.mxu0 0.0
    %4610 = vmatpush2.msra.mxu0 0.0
    %4611 = vmatprep.subr.mxu0 0.0
    %4612 = vmatpush2.msra.mxu0 0.0
    %4613 = vmatprep.subr.mxu0 0.0
    %4614 = vmatpush2.msra.mxu0 0.0
    %4615 = vmatprep.subr.mxu0 0.0
    %4616 = vmatpush2.msra.mxu0 0.0
    %4617 = vmatprep.mubr.f32.mxu0 0.0
    %4618 = vmatmul.mubr.f32.gmra.mxu0 %v4358
    %v4619 = vpop.f32.mrf.mxu0
    %v4620 = vadd.f32 %v4535, %v4619
    %v4621 = vpop.f32.mrf.mxu0
    %4622 = vmatprep.mubr.f32.mxu0 0.0
    %4623 = vmatmul.mubr.f32.gmra.mxu0 %v4361
    %v4624 = vpop.f32.mrf.mxu0
    %v4625 = vadd.f32 %v4540, %v4624
    %v4626 = vpop.f32.mrf.mxu0
    %4627 = vmatprep.mubr.f32.mxu0 0.0
    %4628 = vmatmul.mubr.f32.gmra.mxu0 %v4364
    %v4629 = vpop.f32.mrf.mxu0
    %v4630 = vadd.f32 %v4545, %v4629
    %v4631 = vpop.f32.mrf.mxu0
    %4632 = vmatprep.mubr.f32.mxu0 0.0
    %4633 = vmatmul.mubr.f32.gmra.mxu0 %v4367
    %v4634 = vpop.f32.mrf.mxu0
    %v4635 = vadd.f32 %v4550, %v4634
    %v4636 = vpop.f32.mrf.mxu0
    %4637 = vdwg.mxu0
    %s4638 = scalar_lea.vmem [#allocation3], 2432
    %v4639 = vld [vmem:[%s4638] sm:$0xff]
    %v4640 = vld [vmem:[%s4638 + $0x8] sm:$0xff]
    %v4641 = vld [vmem:[%s4638 + $0x10] sm:$0xff]
    %v4642 = vld [vmem:[%s4638 + $0x18] sm:$0xff]
    %v4643 = vld [vmem:[%s4638 + $0x20] sm:$0xff]
    %v4644 = vld [vmem:[%s4638 + $0x28] sm:$0xff]
    %v4645 = vld [vmem:[%s4638 + $0x30] sm:$0xff]
    %v4646 = vld [vmem:[%s4638 + $0x38] sm:$0xff]
    %v4648 = vsel %vm1969, %v4639, 0
    %v4651 = vsel %vm1969, %v4640, 0
    %v4654 = vsel %vm1969, %v4641, 0
    %v4657 = vsel %vm1969, %v4642, 0
    %v4660 = vsel %vm1969, %v4643, 0
    %v4663 = vsel %vm1969, %v4644, 0
    %v4666 = vsel %vm1969, %v4645, 0
    %v4669 = vsel %vm1969, %v4646, 0
    %4671 = vmatprep.subr.mxu0 0.0
    %4672 = vmatpush1.msra.mxu0 0.0
    %4673 = vmatprep.subr.mxu0 0.0
    %4674 = vmatpush1.msra.mxu0 0.0
    %4675 = vmatprep.subr.mxu0 0.0
    %4676 = vmatpush1.msra.mxu0 0.0
    %4677 = vmatprep.subr.mxu0 0.0
    %4678 = vmatpush1.msra.mxu0 0.0
    %4679 = vmatprep.subr.mxu0 0.0
    %4680 = vmatpush1.msra.mxu0 0.0
    %4681 = vmatprep.subr.mxu0 0.0
    %4682 = vmatpush1.msra.mxu0 0.0
    %4683 = vmatprep.subr.mxu0 0.0
    %4684 = vmatpush1.msra.mxu0 0.0
    %4685 = vmatprep.subr.mxu0 0.0
    %4686 = vmatpush1.msra.mxu0 0.0
    %4687 = vmatprep.subr.mxu0 0.0
    %4688 = vmatpush1.msra.mxu0 0.0
    %4689 = vmatprep.subr.mxu0 0.0
    %4690 = vmatpush1.msra.mxu0 0.0
    %4691 = vmatprep.subr.mxu0 0.0
    %4692 = vmatpush1.msra.mxu0 0.0
    %4693 = vmatprep.subr.mxu0 0.0
    %4694 = vmatpush1.msra.mxu0 0.0
    %4695 = vmatprep.subr.mxu0 0.0
    %4696 = vmatpush1.msra.mxu0 %v4635
    %4697 = vmatprep.subr.mxu0 0.0
    %4698 = vmatpush1.msra.mxu0 %v4630
    %4699 = vmatprep.subr.mxu0 0.0
    %4700 = vmatpush1.msra.mxu0 %v4625
    %4701 = vmatprep.subr.mxu0 0.0
    %4702 = vmatpush1.msra.mxu0 %v4620
    %4703 = vmatprep.subr.mxu0 0.0
    %4704 = vmatpush2.msra.mxu0 0.0
    %4705 = vmatprep.subr.mxu0 0.0
    %4706 = vmatpush2.msra.mxu0 0.0
    %4707 = vmatprep.subr.mxu0 0.0
    %4708 = vmatpush2.msra.mxu0 0.0
    %4709 = vmatprep.subr.mxu0 0.0
    %4710 = vmatpush2.msra.mxu0 0.0
    %4711 = vmatprep.subr.mxu0 0.0
    %4712 = vmatpush2.msra.mxu0 0.0
    %4713 = vmatprep.subr.mxu0 0.0
    %4714 = vmatpush2.msra.mxu0 0.0
    %4715 = vmatprep.subr.mxu0 0.0
    %4716 = vmatpush2.msra.mxu0 0.0
    %4717 = vmatprep.subr.mxu0 0.0
    %4718 = vmatpush2.msra.mxu0 0.0
    %4719 = vmatprep.subr.mxu0 0.0
    %4720 = vmatpush2.msra.mxu0 0.0
    %4721 = vmatprep.subr.mxu0 0.0
    %4722 = vmatpush2.msra.mxu0 0.0
    %4723 = vmatprep.subr.mxu0 0.0
    %4724 = vmatpush2.msra.mxu0 0.0
    %4725 = vmatprep.subr.mxu0 0.0
    %4726 = vmatpush2.msra.mxu0 0.0
    %4727 = vmatprep.subr.mxu0 0.0
    %4728 = vmatpush2.msra.mxu0 0.0
    %4729 = vmatprep.subr.mxu0 0.0
    %4730 = vmatpush2.msra.mxu0 0.0
    %4731 = vmatprep.subr.mxu0 0.0
    %4732 = vmatpush2.msra.mxu0 0.0
    %4733 = vmatprep.subr.mxu0 0.0
    %4734 = vmatpush2.msra.mxu0 0.0
    %4735 = vmatprep.mubr.f32.mxu0 0.0
    %4736 = vmatmul.mubr.f32.gmra.mxu0 %v4648
    %v4737 = vpop.f32.mrf.mxu0
    %v4738 = vadd.f32 0.0, %v4737
    %v4739 = vpop.f32.mrf.mxu0
    %4740 = vmatprep.mubr.f32.mxu0 0.0
    %4741 = vmatmul.mubr.f32.gmra.mxu0 %v4651
    %v4742 = vpop.f32.mrf.mxu0
    %v4743 = vadd.f32 0.0, %v4742
    %v4744 = vpop.f32.mrf.mxu0
    %4745 = vmatprep.mubr.f32.mxu0 0.0
    %4746 = vmatmul.mubr.f32.gmra.mxu0 %v4654
    %v4747 = vpop.f32.mrf.mxu0
    %v4748 = vadd.f32 0.0, %v4747
    %v4749 = vpop.f32.mrf.mxu0
    %4750 = vmatprep.mubr.f32.mxu0 0.0
    %4751 = vmatmul.mubr.f32.gmra.mxu0 %v4657
    %v4752 = vpop.f32.mrf.mxu0
    %v4753 = vadd.f32 0.0, %v4752
    %v4754 = vpop.f32.mrf.mxu0
    %4755 = vmatprep.mubr.f32.mxu0 0.0
    %4756 = vmatmul.mubr.f32.gmra.mxu0 %v4660
    %v4757 = vpop.f32.mrf.mxu0
    %v4758 = vadd.f32 0.0, %v4757
    %v4759 = vpop.f32.mrf.mxu0
    %4760 = vmatprep.mubr.f32.mxu0 0.0
    %4761 = vmatmul.mubr.f32.gmra.mxu0 %v4663
    %v4762 = vpop.f32.mrf.mxu0
    %v4763 = vadd.f32 0.0, %v4762
    %v4764 = vpop.f32.mrf.mxu0
    %4765 = vmatprep.mubr.f32.mxu0 0.0
    %4766 = vmatmul.mubr.f32.gmra.mxu0 %v4666
    %v4767 = vpop.f32.mrf.mxu0
    %v4768 = vadd.f32 0.0, %v4767
    %v4769 = vpop.f32.mrf.mxu0
    %4770 = vmatprep.mubr.f32.mxu0 0.0
    %4771 = vmatmul.mubr.f32.gmra.mxu0 %v4669
    %v4772 = vpop.f32.mrf.mxu0
    %v4773 = vadd.f32 0.0, %v4772
    %v4774 = vpop.f32.mrf.mxu0
    %4775 = vdwg.mxu0
    %v4777 = vsel %vm1969, %v4455, 0
    %v4780 = vsel %vm1969, %v4456, 0
    %v4783 = vsel %vm1969, %v4457, 0
    %v4786 = vsel %vm1969, %v4458, 0
    %v4789 = vsel %vm1969, %v4459, 0
    %v4792 = vsel %vm1969, %v4460, 0
    %v4795 = vsel %vm1969, %v4461, 0
    %v4798 = vsel %vm1969, %v4462, 0
    %4800 = vmatprep.subr.mxu0 0.0
    %4801 = vmatpush1.msra.mxu0 0.0
    %4802 = vmatprep.subr.mxu0 0.0
    %4803 = vmatpush1.msra.mxu0 0.0
    %4804 = vmatprep.subr.mxu0 0.0
    %4805 = vmatpush1.msra.mxu0 0.0
    %4806 = vmatprep.subr.mxu0 0.0
    %4807 = vmatpush1.msra.mxu0 0.0
    %4808 = vmatprep.subr.mxu0 0.0
    %4809 = vmatpush1.msra.mxu0 0.0
    %4810 = vmatprep.subr.mxu0 0.0
    %4811 = vmatpush1.msra.mxu0 0.0
    %4812 = vmatprep.subr.mxu0 0.0
    %4813 = vmatpush1.msra.mxu0 0.0
    %4814 = vmatprep.subr.mxu0 0.0
    %4815 = vmatpush1.msra.mxu0 0.0
    %4816 = vmatprep.subr.mxu0 0.0
    %4817 = vmatpush1.msra.mxu0 0.0
    %4818 = vmatprep.subr.mxu0 0.0
    %4819 = vmatpush1.msra.mxu0 0.0
    %4820 = vmatprep.subr.mxu0 0.0
    %4821 = vmatpush1.msra.mxu0 0.0
    %4822 = vmatprep.subr.mxu0 0.0
    %4823 = vmatpush1.msra.mxu0 0.0
    %4824 = vmatprep.subr.mxu0 0.0
    %4825 = vmatpush1.msra.mxu0 %v4451
    %4826 = vmatprep.subr.mxu0 0.0
    %4827 = vmatpush1.msra.mxu0 %v4446
    %4828 = vmatprep.subr.mxu0 0.0
    %4829 = vmatpush1.msra.mxu0 %v4441
    %4830 = vmatprep.subr.mxu0 0.0
    %4831 = vmatpush1.msra.mxu0 %v4436
    %4832 = vmatprep.subr.mxu0 0.0
    %4833 = vmatpush2.msra.mxu0 0.0
    %4834 = vmatprep.subr.mxu0 0.0
    %4835 = vmatpush2.msra.mxu0 0.0
    %4836 = vmatprep.subr.mxu0 0.0
    %4837 = vmatpush2.msra.mxu0 0.0
    %4838 = vmatprep.subr.mxu0 0.0
    %4839 = vmatpush2.msra.mxu0 0.0
    %4840 = vmatprep.subr.mxu0 0.0
    %4841 = vmatpush2.msra.mxu0 0.0
    %4842 = vmatprep.subr.mxu0 0.0
    %4843 = vmatpush2.msra.mxu0 0.0
    %4844 = vmatprep.subr.mxu0 0.0
    %4845 = vmatpush2.msra.mxu0 0.0
    %4846 = vmatprep.subr.mxu0 0.0
    %4847 = vmatpush2.msra.mxu0 0.0
    %4848 = vmatprep.subr.mxu0 0.0
    %4849 = vmatpush2.msra.mxu0 0.0
    %4850 = vmatprep.subr.mxu0 0.0
    %4851 = vmatpush2.msra.mxu0 0.0
    %4852 = vmatprep.subr.mxu0 0.0
    %4853 = vmatpush2.msra.mxu0 0.0
    %4854 = vmatprep.subr.mxu0 0.0
    %4855 = vmatpush2.msra.mxu0 0.0
    %4856 = vmatprep.subr.mxu0 0.0
    %4857 = vmatpush2.msra.mxu0 0.0
    %4858 = vmatprep.subr.mxu0 0.0
    %4859 = vmatpush2.msra.mxu0 0.0
    %4860 = vmatprep.subr.mxu0 0.0
    %4861 = vmatpush2.msra.mxu0 0.0
    %4862 = vmatprep.subr.mxu0 0.0
    %4863 = vmatpush2.msra.mxu0 0.0
    %4864 = vmatprep.mubr.f32.mxu0 0.0
    %4865 = vmatmul.mubr.f32.gmra.mxu0 %v4777
    %v4866 = vpop.f32.mrf.mxu0
    %v4867 = vadd.f32 %v4738, %v4866
    %v4868 = vpop.f32.mrf.mxu0
    %4869 = vmatprep.mubr.f32.mxu0 0.0
    %4870 = vmatmul.mubr.f32.gmra.mxu0 %v4780
    %v4871 = vpop.f32.mrf.mxu0
    %v4872 = vadd.f32 %v4743, %v4871
    %v4873 = vpop.f32.mrf.mxu0
    %4874 = vmatprep.mubr.f32.mxu0 0.0
    %4875 = vmatmul.mubr.f32.gmra.mxu0 %v4783
    %v4876 = vpop.f32.mrf.mxu0
    %v4877 = vadd.f32 %v4748, %v4876
    %v4878 = vpop.f32.mrf.mxu0
    %4879 = vmatprep.mubr.f32.mxu0 0.0
    %4880 = vmatmul.mubr.f32.gmra.mxu0 %v4786
    %v4881 = vpop.f32.mrf.mxu0
    %v4882 = vadd.f32 %v4753, %v4881
    %v4883 = vpop.f32.mrf.mxu0
    %4884 = vmatprep.mubr.f32.mxu0 0.0
    %4885 = vmatmul.mubr.f32.gmra.mxu0 %v4789
    %v4886 = vpop.f32.mrf.mxu0
    %v4887 = vadd.f32 %v4758, %v4886
    %v4888 = vpop.f32.mrf.mxu0
    %4889 = vmatprep.mubr.f32.mxu0 0.0
    %4890 = vmatmul.mubr.f32.gmra.mxu0 %v4792
    %v4891 = vpop.f32.mrf.mxu0
    %v4892 = vadd.f32 %v4763, %v4891
    %v4893 = vpop.f32.mrf.mxu0
    %4894 = vmatprep.mubr.f32.mxu0 0.0
    %4895 = vmatmul.mubr.f32.gmra.mxu0 %v4795
    %v4896 = vpop.f32.mrf.mxu0
    %v4897 = vadd.f32 %v4768, %v4896
    %v4898 = vpop.f32.mrf.mxu0
    %4899 = vmatprep.mubr.f32.mxu0 0.0
    %4900 = vmatmul.mubr.f32.gmra.mxu0 %v4798
    %v4901 = vpop.f32.mrf.mxu0
    %v4902 = vadd.f32 %v4773, %v4901
    %v4903 = vpop.f32.mrf.mxu0
    %4904 = vdwg.mxu0
    %s4905 = scalar_lea.vmem [#allocation5], 1280
    %v4906 = vld [vmem:[%s4905] sm:$0xff]
    %v4907 = vld [vmem:[%s4905 + $0x8] sm:$0xff]
    %v4908 = vld [vmem:[%s4905 + $0x10] sm:$0xff]
    %v4909 = vld [vmem:[%s4905 + $0x18] sm:$0xff]
    %4910 = vmatprep.subr.mxu0 0.0
    %4911 = vmatpush1.msra.mxu0 0.0
    %4912 = vmatprep.subr.mxu0 0.0
    %4913 = vmatpush1.msra.mxu0 0.0
    %4914 = vmatprep.subr.mxu0 0.0
    %4915 = vmatpush1.msra.mxu0 0.0
    %4916 = vmatprep.subr.mxu0 0.0
    %4917 = vmatpush1.msra.mxu0 0.0
    %4918 = vmatprep.subr.mxu0 0.0
    %4919 = vmatpush1.msra.mxu0 0.0
    %4920 = vmatprep.subr.mxu0 0.0
    %4921 = vmatpush1.msra.mxu0 0.0
    %4922 = vmatprep.subr.mxu0 0.0
    %4923 = vmatpush1.msra.mxu0 0.0
    %4924 = vmatprep.subr.mxu0 0.0
    %4925 = vmatpush1.msra.mxu0 0.0
    %4926 = vmatprep.subr.mxu0 0.0
    %4927 = vmatpush1.msra.mxu0 0.0
    %4928 = vmatprep.subr.mxu0 0.0
    %4929 = vmatpush1.msra.mxu0 0.0
    %4930 = vmatprep.subr.mxu0 0.0
    %4931 = vmatpush1.msra.mxu0 0.0
    %4932 = vmatprep.subr.mxu0 0.0
    %4933 = vmatpush1.msra.mxu0 0.0
    %4934 = vmatprep.subr.mxu0 0.0
    %4935 = vmatpush1.msra.mxu0 0.0
    %4936 = vmatprep.subr.mxu0 0.0
    %4937 = vmatpush1.msra.mxu0 0.0
    %4938 = vmatprep.subr.mxu0 0.0
    %4939 = vmatpush1.msra.mxu0 %v4909
    %4940 = vmatprep.subr.mxu0 0.0
    %4941 = vmatpush1.msra.mxu0 %v4908
    %4942 = vmatprep.subr.mxu0 0.0
    %4943 = vmatpush2.msra.mxu0 0.0
    %4944 = vmatprep.subr.mxu0 0.0
    %4945 = vmatpush2.msra.mxu0 0.0
    %4946 = vmatprep.subr.mxu0 0.0
    %4947 = vmatpush2.msra.mxu0 0.0
    %4948 = vmatprep.subr.mxu0 0.0
    %4949 = vmatpush2.msra.mxu0 0.0
    %4950 = vmatprep.subr.mxu0 0.0
    %4951 = vmatpush2.msra.mxu0 0.0
    %4952 = vmatprep.subr.mxu0 0.0
    %4953 = vmatpush2.msra.mxu0 0.0
    %4954 = vmatprep.subr.mxu0 0.0
    %4955 = vmatpush2.msra.mxu0 0.0
    %4956 = vmatprep.subr.mxu0 0.0
    %4957 = vmatpush2.msra.mxu0 0.0
    %4958 = vmatprep.subr.mxu0 0.0
    %4959 = vmatpush2.msra.mxu0 0.0
    %4960 = vmatprep.subr.mxu0 0.0
    %4961 = vmatpush2.msra.mxu0 0.0
    %4962 = vmatprep.subr.mxu0 0.0
    %4963 = vmatpush2.msra.mxu0 0.0
    %4964 = vmatprep.subr.mxu0 0.0
    %4965 = vmatpush2.msra.mxu0 0.0
    %4966 = vmatprep.subr.mxu0 0.0
    %4967 = vmatpush2.msra.mxu0 0.0
    %4968 = vmatprep.subr.mxu0 0.0
    %4969 = vmatpush2.msra.mxu0 0.0
    %4970 = vmatprep.subr.mxu0 0.0
    %4971 = vmatpush2.msra.mxu0 0.0
    %4972 = vmatprep.subr.mxu0 0.0
    %4973 = vmatpush2.msra.mxu0 0.0
    %4974 = vmatprep.mubr.f32.mxu0 0.0
    %4975 = vmatmul.mubr.f32.gmra.mxu0 %v1779
    %v4976 = vpop.f32.mrf.mxu0
    %v4977 = vadd.f32 0.0, %v4976
    %v4978 = vpop.f32.mrf.mxu0
    %4979 = vmatprep.mubr.f32.mxu0 0.0
    %4980 = vmatmul.mubr.f32.gmra.mxu0 %v1782
    %v4981 = vpop.f32.mrf.mxu0
    %v4982 = vadd.f32 0.0, %v4981
    %v4983 = vpop.f32.mrf.mxu0
    %4984 = vmatprep.mubr.f32.mxu0 0.0
    %4985 = vmatmul.mubr.f32.gmra.mxu0 %v1785
    %v4986 = vpop.f32.mrf.mxu0
    %v4987 = vadd.f32 0.0, %v4986
    %v4988 = vpop.f32.mrf.mxu0
    %4989 = vmatprep.mubr.f32.mxu0 0.0
    %4990 = vmatmul.mubr.f32.gmra.mxu0 %v1788
    %v4991 = vpop.f32.mrf.mxu0
    %v4992 = vadd.f32 0.0, %v4991
    %v4993 = vpop.f32.mrf.mxu0
    %4994 = vdwg.mxu0
    %4995 = vmatprep.subr.mxu0 0.0
    %4996 = vmatpush1.msra.mxu0 0.0
    %4997 = vmatprep.subr.mxu0 0.0
    %4998 = vmatpush1.msra.mxu0 0.0
    %4999 = vmatprep.subr.mxu0 0.0
    %5000 = vmatpush1.msra.mxu0 0.0
    %5001 = vmatprep.subr.mxu0 0.0
    %5002 = vmatpush1.msra.mxu0 0.0
    %5003 = vmatprep.subr.mxu0 0.0
    %5004 = vmatpush1.msra.mxu0 0.0
    %5005 = vmatprep.subr.mxu0 0.0
    %5006 = vmatpush1.msra.mxu0 0.0
    %5007 = vmatprep.subr.mxu0 0.0
    %5008 = vmatpush1.msra.mxu0 0.0
    %5009 = vmatprep.subr.mxu0 0.0
    %5010 = vmatpush1.msra.mxu0 0.0
    %5011 = vmatprep.subr.mxu0 0.0
    %5012 = vmatpush1.msra.mxu0 0.0
    %5013 = vmatprep.subr.mxu0 0.0
    %5014 = vmatpush1.msra.mxu0 0.0
    %5015 = vmatprep.subr.mxu0 0.0
    %5016 = vmatpush1.msra.mxu0 0.0
    %5017 = vmatprep.subr.mxu0 0.0
    %5018 = vmatpush1.msra.mxu0 0.0
    %5019 = vmatprep.subr.mxu0 0.0
    %5020 = vmatpush1.msra.mxu0 0.0
    %5021 = vmatprep.subr.mxu0 0.0
    %5022 = vmatpush1.msra.mxu0 0.0
    %5023 = vmatprep.subr.mxu0 0.0
    %5024 = vmatpush1.msra.mxu0 %v4907
    %5025 = vmatprep.subr.mxu0 0.0
    %5026 = vmatpush1.msra.mxu0 %v4906
    %5027 = vmatprep.subr.mxu0 0.0
    %5028 = vmatpush2.msra.mxu0 0.0
    %5029 = vmatprep.subr.mxu0 0.0
    %5030 = vmatpush2.msra.mxu0 0.0
    %5031 = vmatprep.subr.mxu0 0.0
    %5032 = vmatpush2.msra.mxu0 0.0
    %5033 = vmatprep.subr.mxu0 0.0
    %5034 = vmatpush2.msra.mxu0 0.0
    %5035 = vmatprep.subr.mxu0 0.0
    %5036 = vmatpush2.msra.mxu0 0.0
    %5037 = vmatprep.subr.mxu0 0.0
    %5038 = vmatpush2.msra.mxu0 0.0
    %5039 = vmatprep.subr.mxu0 0.0
    %5040 = vmatpush2.msra.mxu0 0.0
    %5041 = vmatprep.subr.mxu0 0.0
    %5042 = vmatpush2.msra.mxu0 0.0
    %5043 = vmatprep.subr.mxu0 0.0
    %5044 = vmatpush2.msra.mxu0 0.0
    %5045 = vmatprep.subr.mxu0 0.0
    %5046 = vmatpush2.msra.mxu0 0.0
    %5047 = vmatprep.subr.mxu0 0.0
    %5048 = vmatpush2.msra.mxu0 0.0
    %5049 = vmatprep.subr.mxu0 0.0
    %5050 = vmatpush2.msra.mxu0 0.0
    %5051 = vmatprep.subr.mxu0 0.0
    %5052 = vmatpush2.msra.mxu0 0.0
    %5053 = vmatprep.subr.mxu0 0.0
    %5054 = vmatpush2.msra.mxu0 0.0
    %5055 = vmatprep.subr.mxu0 0.0
    %5056 = vmatpush2.msra.mxu0 0.0
    %5057 = vmatprep.subr.mxu0 0.0
    %5058 = vmatpush2.msra.mxu0 0.0
    %5059 = vmatprep.mubr.f32.mxu0 0.0
    %5060 = vmatmul.mubr.f32.gmra.mxu0 %v4358
    %v5061 = vpop.f32.mrf.mxu0
    %v5062 = vadd.f32 %v4977, %v5061
    %v5063 = vpop.f32.mrf.mxu0
    %5064 = vmatprep.mubr.f32.mxu0 0.0
    %5065 = vmatmul.mubr.f32.gmra.mxu0 %v4361
    %v5066 = vpop.f32.mrf.mxu0
    %v5067 = vadd.f32 %v4982, %v5066
    %v5068 = vpop.f32.mrf.mxu0
    %5069 = vmatprep.mubr.f32.mxu0 0.0
    %5070 = vmatmul.mubr.f32.gmra.mxu0 %v4364
    %v5071 = vpop.f32.mrf.mxu0
    %v5072 = vadd.f32 %v4987, %v5071
    %v5073 = vpop.f32.mrf.mxu0
    %5074 = vmatprep.mubr.f32.mxu0 0.0
    %5075 = vmatmul.mubr.f32.gmra.mxu0 %v4367
    %v5076 = vpop.f32.mrf.mxu0
    %v5077 = vadd.f32 %v4992, %v5076
    %v5078 = vpop.f32.mrf.mxu0
    %5079 = vdwg.mxu0
    %s5080 = scalar_lea.vmem [#allocation3], 2560
    %v5081 = vld [vmem:[%s5080] sm:$0xff]
    %v5082 = vld [vmem:[%s5080 + $0x8] sm:$0xff]
    %v5083 = vld [vmem:[%s5080 + $0x10] sm:$0xff]
    %v5084 = vld [vmem:[%s5080 + $0x18] sm:$0xff]
    %v5085 = vld [vmem:[%s5080 + $0x20] sm:$0xff]
    %v5086 = vld [vmem:[%s5080 + $0x28] sm:$0xff]
    %v5087 = vld [vmem:[%s5080 + $0x30] sm:$0xff]
    %v5088 = vld [vmem:[%s5080 + $0x38] sm:$0xff]
    %v5090 = vsel %vm1969, %v5081, 0
    %v5093 = vsel %vm1969, %v5082, 0
    %v5096 = vsel %vm1969, %v5083, 0
    %v5099 = vsel %vm1969, %v5084, 0
    %v5102 = vsel %vm1969, %v5085, 0
    %v5105 = vsel %vm1969, %v5086, 0
    %v5108 = vsel %vm1969, %v5087, 0
    %v5111 = vsel %vm1969, %v5088, 0
    %5113 = vmatprep.subr.mxu0 0.0
    %5114 = vmatpush1.msra.mxu0 0.0
    %5115 = vmatprep.subr.mxu0 0.0
    %5116 = vmatpush1.msra.mxu0 0.0
    %5117 = vmatprep.subr.mxu0 0.0
    %5118 = vmatpush1.msra.mxu0 0.0
    %5119 = vmatprep.subr.mxu0 0.0
    %5120 = vmatpush1.msra.mxu0 0.0
    %5121 = vmatprep.subr.mxu0 0.0
    %5122 = vmatpush1.msra.mxu0 0.0
    %5123 = vmatprep.subr.mxu0 0.0
    %5124 = vmatpush1.msra.mxu0 0.0
    %5125 = vmatprep.subr.mxu0 0.0
    %5126 = vmatpush1.msra.mxu0 0.0
    %5127 = vmatprep.subr.mxu0 0.0
    %5128 = vmatpush1.msra.mxu0 0.0
    %5129 = vmatprep.subr.mxu0 0.0
    %5130 = vmatpush1.msra.mxu0 0.0
    %5131 = vmatprep.subr.mxu0 0.0
    %5132 = vmatpush1.msra.mxu0 0.0
    %5133 = vmatprep.subr.mxu0 0.0
    %5134 = vmatpush1.msra.mxu0 0.0
    %5135 = vmatprep.subr.mxu0 0.0
    %5136 = vmatpush1.msra.mxu0 0.0
    %5137 = vmatprep.subr.mxu0 0.0
    %5138 = vmatpush1.msra.mxu0 %v5077
    %5139 = vmatprep.subr.mxu0 0.0
    %5140 = vmatpush1.msra.mxu0 %v5072
    %5141 = vmatprep.subr.mxu0 0.0
    %5142 = vmatpush1.msra.mxu0 %v5067
    %5143 = vmatprep.subr.mxu0 0.0
    %5144 = vmatpush1.msra.mxu0 %v5062
    %5145 = vmatprep.subr.mxu0 0.0
    %5146 = vmatpush2.msra.mxu0 0.0
    %5147 = vmatprep.subr.mxu0 0.0
    %5148 = vmatpush2.msra.mxu0 0.0
    %5149 = vmatprep.subr.mxu0 0.0
    %5150 = vmatpush2.msra.mxu0 0.0
    %5151 = vmatprep.subr.mxu0 0.0
    %5152 = vmatpush2.msra.mxu0 0.0
    %5153 = vmatprep.subr.mxu0 0.0
    %5154 = vmatpush2.msra.mxu0 0.0
    %5155 = vmatprep.subr.mxu0 0.0
    %5156 = vmatpush2.msra.mxu0 0.0
    %5157 = vmatprep.subr.mxu0 0.0
    %5158 = vmatpush2.msra.mxu0 0.0
    %5159 = vmatprep.subr.mxu0 0.0
    %5160 = vmatpush2.msra.mxu0 0.0
    %5161 = vmatprep.subr.mxu0 0.0
    %5162 = vmatpush2.msra.mxu0 0.0
    %5163 = vmatprep.subr.mxu0 0.0
    %5164 = vmatpush2.msra.mxu0 0.0
    %5165 = vmatprep.subr.mxu0 0.0
    %5166 = vmatpush2.msra.mxu0 0.0
    %5167 = vmatprep.subr.mxu0 0.0
    %5168 = vmatpush2.msra.mxu0 0.0
    %5169 = vmatprep.subr.mxu0 0.0
    %5170 = vmatpush2.msra.mxu0 0.0
    %5171 = vmatprep.subr.mxu0 0.0
    %5172 = vmatpush2.msra.mxu0 0.0
    %5173 = vmatprep.subr.mxu0 0.0
    %5174 = vmatpush2.msra.mxu0 0.0
    %5175 = vmatprep.subr.mxu0 0.0
    %5176 = vmatpush2.msra.mxu0 0.0
    %5177 = vmatprep.mubr.f32.mxu0 0.0
    %5178 = vmatmul.mubr.f32.gmra.mxu0 %v5090
    %v5179 = vpop.f32.mrf.mxu0
    %v5180 = vadd.f32 0.0, %v5179
    %v5181 = vpop.f32.mrf.mxu0
    %5182 = vmatprep.mubr.f32.mxu0 0.0
    %5183 = vmatmul.mubr.f32.gmra.mxu0 %v5093
    %v5184 = vpop.f32.mrf.mxu0
    %v5185 = vadd.f32 0.0, %v5184
    %v5186 = vpop.f32.mrf.mxu0
    %5187 = vmatprep.mubr.f32.mxu0 0.0
    %5188 = vmatmul.mubr.f32.gmra.mxu0 %v5096
    %v5189 = vpop.f32.mrf.mxu0
    %v5190 = vadd.f32 0.0, %v5189
    %v5191 = vpop.f32.mrf.mxu0
    %5192 = vmatprep.mubr.f32.mxu0 0.0
    %5193 = vmatmul.mubr.f32.gmra.mxu0 %v5099
    %v5194 = vpop.f32.mrf.mxu0
    %v5195 = vadd.f32 0.0, %v5194
    %v5196 = vpop.f32.mrf.mxu0
    %5197 = vmatprep.mubr.f32.mxu0 0.0
    %5198 = vmatmul.mubr.f32.gmra.mxu0 %v5102
    %v5199 = vpop.f32.mrf.mxu0
    %v5200 = vadd.f32 0.0, %v5199
    %v5201 = vpop.f32.mrf.mxu0
    %5202 = vmatprep.mubr.f32.mxu0 0.0
    %5203 = vmatmul.mubr.f32.gmra.mxu0 %v5105
    %v5204 = vpop.f32.mrf.mxu0
    %v5205 = vadd.f32 0.0, %v5204
    %v5206 = vpop.f32.mrf.mxu0
    %5207 = vmatprep.mubr.f32.mxu0 0.0
    %5208 = vmatmul.mubr.f32.gmra.mxu0 %v5108
    %v5209 = vpop.f32.mrf.mxu0
    %v5210 = vadd.f32 0.0, %v5209
    %v5211 = vpop.f32.mrf.mxu0
    %5212 = vmatprep.mubr.f32.mxu0 0.0
    %5213 = vmatmul.mubr.f32.gmra.mxu0 %v5111
    %v5214 = vpop.f32.mrf.mxu0
    %v5215 = vadd.f32 0.0, %v5214
    %v5216 = vpop.f32.mrf.mxu0
    %5217 = vdwg.mxu0
    %v5218 = vadd.f32 %v4867, %v5180
    %v5219 = vadd.f32 %v4872, %v5185
    %v5220 = vadd.f32 %v4877, %v5190
    %v5221 = vadd.f32 %v4882, %v5195
    %v5222 = vadd.f32 %v4887, %v5200
    %v5223 = vadd.f32 %v4892, %v5205
    %v5224 = vadd.f32 %v4897, %v5210
    %v5225 = vadd.f32 %v4902, %v5215
    %v5226 = vsel %vm942, %v5218, 0.0
    %v5227 = vsel %vm942, %v5219, 0.0
    %v5228 = vadd.f32 %v5226, %v5227
    %v5229 = vsel %vm942, %v5220, 0.0
    %v5230 = vadd.f32 %v5228, %v5229
    %v5231 = vsel %vm942, %v5221, 0.0
    %v5232 = vadd.f32 %v5230, %v5231
    %v5233 = vsel %vm942, %v5222, 0.0
    %v5234 = vadd.f32 %v5232, %v5233
    %v5235 = vsel %vm942, %v5223, 0.0
    %v5236 = vadd.f32 %v5234, %v5235
    %v5237 = vsel %vm942, %v5224, 0.0
    %v5238 = vadd.f32 %v5236, %v5237
    %v5239 = vsel %vm942, %v5225, 0.0
    %v5240 = vadd.f32 %v5238, %v5239
    %v5241 = vrot.slane %v5240, 4
    %v5242 = vadd.f32 %v5240, %v5241
    %v5243 = vrot.slane %v5242, 2
    %v5244 = vadd.f32 %v5242, %v5243
    %v5245 = vrot.slane %v5244, 1
    %v5246 = vadd.f32 %v5244, %v5245
    %v5247 = vmul.f32 %v5218, %v5218
    %v5248 = vmul.f32 %v5219, %v5219
    %v5249 = vmul.f32 %v5220, %v5220
    %v5250 = vmul.f32 %v5221, %v5221
    %v5251 = vmul.f32 %v5222, %v5222
    %v5252 = vmul.f32 %v5223, %v5223
    %v5253 = vmul.f32 %v5224, %v5224
    %v5254 = vmul.f32 %v5225, %v5225
    %v5255 = vsel %vm942, %v5247, 0.0
    %v5256 = vsel %vm942, %v5248, 0.0
    %v5257 = vadd.f32 %v5255, %v5256
    %v5258 = vsel %vm942, %v5249, 0.0
    %v5259 = vadd.f32 %v5257, %v5258
    %v5260 = vsel %vm942, %v5250, 0.0
    %v5261 = vadd.f32 %v5259, %v5260
    %v5262 = vsel %vm942, %v5251, 0.0
    %v5263 = vadd.f32 %v5261, %v5262
    %v5264 = vsel %vm942, %v5252, 0.0
    %v5265 = vadd.f32 %v5263, %v5264
    %v5266 = vsel %vm942, %v5253, 0.0
    %v5267 = vadd.f32 %v5265, %v5266
    %v5268 = vsel %vm942, %v5254, 0.0
    %v5269 = vadd.f32 %v5267, %v5268
    %v5270 = vrot.slane %v5269, 4
    %v5271 = vadd.f32 %v5269, %v5270
    %v5272 = vrot.slane %v5271, 2
    %v5273 = vadd.f32 %v5271, %v5272
    %v5274 = vrot.slane %v5273, 1
    %v5275 = vadd.f32 %v5273, %v5274
    %v5276 = vmul.f32 %v5246, 0.015625
    %v5277 = vmul.f32 %v5275, 0.015625
    %v5278 = vmul.f32 %v5276, %v5276
    %v5279 = vsub.f32 %v5277, %v5278
    %v5280 = vmax.f32 %v5279, 0.0
    %s5281 = scalar_lea.vmem [#allocation7], 12
    %v5282 = vld [vmem:[%s5281] sm:$0x1]
    %v5283 = vsub.f32 %v5218, %v5276
    %v5284 = vsub.f32 %v5219, %v5276
    %v5285 = vsub.f32 %v5220, %v5276
    %v5286 = vsub.f32 %v5221, %v5276
    %v5287 = vsub.f32 %v5222, %v5276
    %v5288 = vsub.f32 %v5223, %v5276
    %v5289 = vsub.f32 %v5224, %v5276
    %v5290 = vsub.f32 %v5225, %v5276
    %v5291 = vlaneseq
    %v5292 = vshrl.u32 %v5291, 7
    %v5293 = vsub.s32 0, %v5292
    %v5294 = vrot.slane %v5282, %v5293
    %v5295 = vmul.f32 %v5294, %v5283
    %v5296 = vmul.f32 %v5294, %v5284
    %v5297 = vmul.f32 %v5294, %v5285
    %v5298 = vmul.f32 %v5294, %v5286
    %v5299 = vmul.f32 %v5294, %v5287
    %v5300 = vmul.f32 %v5294, %v5288
    %v5301 = vmul.f32 %v5294, %v5289
    %v5302 = vmul.f32 %v5294, %v5290
    %v5303 = vadd.f32 %v5280, 1e-05
    %v5304 = vrsqrt.pop %v5303
    %v5305 = vmul.f32 %v5295, %v5304
    %v5306 = vmul.f32 %v5296, %v5304
    %v5307 = vmul.f32 %v5297, %v5304
    %v5308 = vmul.f32 %v5298, %v5304
    %v5309 = vmul.f32 %v5299, %v5304
    %v5310 = vmul.f32 %v5300, %v5304
    %v5311 = vmul.f32 %v5301, %v5304
    %v5312 = vmul.f32 %v5302, %v5304
    %v5313 = vld [vmem:[%s5281 + $0x1] sm:$0x1]
    %v5314 = vlaneseq
    %v5315 = vshrl.u32 %v5314, 7
    %v5316 = vsub.s32 0, %v5315
    %v5317 = vrot.slane %v5313, %v5316
    %v5318 = vadd.f32 %v5305, %v5317
    %v5319 = vadd.f32 %v5306, %v5317
    %v5320 = vadd.f32 %v5307, %v5317
    %v5321 = vadd.f32 %v5308, %v5317
    %v5322 = vadd.f32 %v5309, %v5317
    %v5323 = vadd.f32 %v5310, %v5317
    %v5324 = vadd.f32 %v5311, %v5317
    %v5325 = vadd.f32 %v5312, %v5317
    %v5326 = vmax.f32 %v5318, 0.0
    %v5327 = vmax.f32 %v5319, 0.0
    %v5328 = vmax.f32 %v5320, 0.0
    %v5329 = vmax.f32 %v5321, 0.0
    %v5330 = vmax.f32 %v5322, 0.0
    %v5331 = vmax.f32 %v5323, 0.0
    %v5332 = vmax.f32 %v5324, 0.0
    %v5333 = vmax.f32 %v5325, 0.0
    %s5334 = scalar_lea.vmem [#allocation5], 1344
    %v5335 = vld [vmem:[%s5334] sm:$0xff]
    %v5336 = vld [vmem:[%s5334 + $0x8] sm:$0xff]
    %5337 = vmatprep.subr.mxu0 0.0
    %5338 = vmatpush1.msra.mxu0 0.0
    %5339 = vmatprep.subr.mxu0 0.0
    %5340 = vmatpush1.msra.mxu0 0.0
    %5341 = vmatprep.subr.mxu0 0.0
    %5342 = vmatpush1.msra.mxu0 0.0
    %5343 = vmatprep.subr.mxu0 0.0
    %5344 = vmatpush1.msra.mxu0 0.0
    %5345 = vmatprep.subr.mxu0 0.0
    %5346 = vmatpush1.msra.mxu0 0.0
    %5347 = vmatprep.subr.mxu0 0.0
    %5348 = vmatpush1.msra.mxu0 0.0
    %5349 = vmatprep.subr.mxu0 0.0
    %5350 = vmatpush1.msra.mxu0 0.0
    %5351 = vmatprep.subr.mxu0 0.0
    %5352 = vmatpush1.msra.mxu0 0.0
    %5353 = vmatprep.subr.mxu0 0.0
    %5354 = vmatpush1.msra.mxu0 0.0
    %5355 = vmatprep.subr.mxu0 0.0
    %5356 = vmatpush1.msra.mxu0 0.0
    %5357 = vmatprep.subr.mxu0 0.0
    %5358 = vmatpush1.msra.mxu0 0.0
    %5359 = vmatprep.subr.mxu0 0.0
    %5360 = vmatpush1.msra.mxu0 0.0
    %5361 = vmatprep.subr.mxu0 0.0
    %5362 = vmatpush1.msra.mxu0 0.0
    %5363 = vmatprep.subr.mxu0 0.0
    %5364 = vmatpush1.msra.mxu0 0.0
    %5365 = vmatprep.subr.mxu0 0.0
    %5366 = vmatpush1.msra.mxu0 0.0
    %5367 = vmatprep.subr.mxu0 0.0
    %5368 = vmatpush1.msra.mxu0 %v5336
    %5369 = vmatprep.subr.mxu0 0.0
    %5370 = vmatpush2.msra.mxu0 0.0
    %5371 = vmatprep.subr.mxu0 0.0
    %5372 = vmatpush2.msra.mxu0 0.0
    %5373 = vmatprep.subr.mxu0 0.0
    %5374 = vmatpush2.msra.mxu0 0.0
    %5375 = vmatprep.subr.mxu0 0.0
    %5376 = vmatpush2.msra.mxu0 0.0
    %5377 = vmatprep.subr.mxu0 0.0
    %5378 = vmatpush2.msra.mxu0 0.0
    %5379 = vmatprep.subr.mxu0 0.0
    %5380 = vmatpush2.msra.mxu0 0.0
    %5381 = vmatprep.subr.mxu0 0.0
    %5382 = vmatpush2.msra.mxu0 0.0
    %5383 = vmatprep.subr.mxu0 0.0
    %5384 = vmatpush2.msra.mxu0 0.0
    %5385 = vmatprep.subr.mxu0 0.0
    %5386 = vmatpush2.msra.mxu0 0.0
    %5387 = vmatprep.subr.mxu0 0.0
    %5388 = vmatpush2.msra.mxu0 0.0
    %5389 = vmatprep.subr.mxu0 0.0
    %5390 = vmatpush2.msra.mxu0 0.0
    %5391 = vmatprep.subr.mxu0 0.0
    %5392 = vmatpush2.msra.mxu0 0.0
    %5393 = vmatprep.subr.mxu0 0.0
    %5394 = vmatpush2.msra.mxu0 0.0
    %5395 = vmatprep.subr.mxu0 0.0
    %5396 = vmatpush2.msra.mxu0 0.0
    %5397 = vmatprep.subr.mxu0 0.0
    %5398 = vmatpush2.msra.mxu0 0.0
    %5399 = vmatprep.subr.mxu0 0.0
    %5400 = vmatpush2.msra.mxu0 0.0
    %5401 = vmatprep.mubr.f32.mxu0 0.0
    %5402 = vmatmul.mubr.f32.gmra.mxu0 %v1053
    %v5403 = vpop.f32.mrf.mxu0
    %v5404 = vadd.f32 0.0, %v5403
    %v5405 = vpop.f32.mrf.mxu0
    %5406 = vmatprep.mubr.f32.mxu0 0.0
    %5407 = vmatmul.mubr.f32.gmra.mxu0 %v1056
    %v5408 = vpop.f32.mrf.mxu0
    %v5409 = vadd.f32 0.0, %v5408
    %v5410 = vpop.f32.mrf.mxu0
    %5411 = vmatprep.mubr.f32.mxu0 0.0
    %5412 = vmatmul.mubr.f32.gmra.mxu0 %v1059
    %v5413 = vpop.f32.mrf.mxu0
    %v5414 = vadd.f32 0.0, %v5413
    %v5415 = vpop.f32.mrf.mxu0
    %5416 = vmatprep.mubr.f32.mxu0 0.0
    %5417 = vmatmul.mubr.f32.gmra.mxu0 %v1062
    %v5418 = vpop.f32.mrf.mxu0
    %v5419 = vadd.f32 0.0, %v5418
    %v5420 = vpop.f32.mrf.mxu0
    %5421 = vmatprep.mubr.f32.mxu0 0.0
    %5422 = vmatmul.mubr.f32.gmra.mxu0 %v1065
    %v5423 = vpop.f32.mrf.mxu0
    %v5424 = vadd.f32 0.0, %v5423
    %v5425 = vpop.f32.mrf.mxu0
    %5426 = vmatprep.mubr.f32.mxu0 0.0
    %5427 = vmatmul.mubr.f32.gmra.mxu0 %v1068
    %v5428 = vpop.f32.mrf.mxu0
    %v5429 = vadd.f32 0.0, %v5428
    %v5430 = vpop.f32.mrf.mxu0
    %5431 = vmatprep.mubr.f32.mxu0 0.0
    %5432 = vmatmul.mubr.f32.gmra.mxu0 %v1071
    %v5433 = vpop.f32.mrf.mxu0
    %v5434 = vadd.f32 0.0, %v5433
    %v5435 = vpop.f32.mrf.mxu0
    %5436 = vmatprep.mubr.f32.mxu0 0.0
    %5437 = vmatmul.mubr.f32.gmra.mxu0 %v1074
    %v5438 = vpop.f32.mrf.mxu0
    %v5439 = vadd.f32 0.0, %v5438
    %v5440 = vpop.f32.mrf.mxu0
    %5441 = vdwg.mxu0
    %v5443 = vsel %vm942, %v5326, 0
    %v5446 = vsel %vm942, %v5327, 0
    %v5449 = vsel %vm942, %v5328, 0
    %v5452 = vsel %vm942, %v5329, 0
    %v5455 = vsel %vm942, %v5330, 0
    %v5458 = vsel %vm942, %v5331, 0
    %v5461 = vsel %vm942, %v5332, 0
    %v5464 = vsel %vm942, %v5333, 0
    %5466 = vmatprep.subr.mxu0 0.0
    %5467 = vmatpush1.msra.mxu0 0.0
    %5468 = vmatprep.subr.mxu0 0.0
    %5469 = vmatpush1.msra.mxu0 0.0
    %5470 = vmatprep.subr.mxu0 0.0
    %5471 = vmatpush1.msra.mxu0 0.0
    %5472 = vmatprep.subr.mxu0 0.0
    %5473 = vmatpush1.msra.mxu0 0.0
    %5474 = vmatprep.subr.mxu0 0.0
    %5475 = vmatpush1.msra.mxu0 0.0
    %5476 = vmatprep.subr.mxu0 0.0
    %5477 = vmatpush1.msra.mxu0 0.0
    %5478 = vmatprep.subr.mxu0 0.0
    %5479 = vmatpush1.msra.mxu0 0.0
    %5480 = vmatprep.subr.mxu0 0.0
    %5481 = vmatpush1.msra.mxu0 0.0
    %5482 = vmatprep.subr.mxu0 0.0
    %5483 = vmatpush1.msra.mxu0 0.0
    %5484 = vmatprep.subr.mxu0 0.0
    %5485 = vmatpush1.msra.mxu0 0.0
    %5486 = vmatprep.subr.mxu0 0.0
    %5487 = vmatpush1.msra.mxu0 0.0
    %5488 = vmatprep.subr.mxu0 0.0
    %5489 = vmatpush1.msra.mxu0 0.0
    %5490 = vmatprep.subr.mxu0 0.0
    %5491 = vmatpush1.msra.mxu0 0.0
    %5492 = vmatprep.subr.mxu0 0.0
    %5493 = vmatpush1.msra.mxu0 0.0
    %5494 = vmatprep.subr.mxu0 0.0
    %5495 = vmatpush1.msra.mxu0 0.0
    %5496 = vmatprep.subr.mxu0 0.0
    %5497 = vmatpush1.msra.mxu0 %v5335
    %5498 = vmatprep.subr.mxu0 0.0
    %5499 = vmatpush2.msra.mxu0 0.0
    %5500 = vmatprep.subr.mxu0 0.0
    %5501 = vmatpush2.msra.mxu0 0.0
    %5502 = vmatprep.subr.mxu0 0.0
    %5503 = vmatpush2.msra.mxu0 0.0
    %5504 = vmatprep.subr.mxu0 0.0
    %5505 = vmatpush2.msra.mxu0 0.0
    %5506 = vmatprep.subr.mxu0 0.0
    %5507 = vmatpush2.msra.mxu0 0.0
    %5508 = vmatprep.subr.mxu0 0.0
    %5509 = vmatpush2.msra.mxu0 0.0
    %5510 = vmatprep.subr.mxu0 0.0
    %5511 = vmatpush2.msra.mxu0 0.0
    %5512 = vmatprep.subr.mxu0 0.0
    %5513 = vmatpush2.msra.mxu0 0.0
    %5514 = vmatprep.subr.mxu0 0.0
    %5515 = vmatpush2.msra.mxu0 0.0
    %5516 = vmatprep.subr.mxu0 0.0
    %5517 = vmatpush2.msra.mxu0 0.0
    %5518 = vmatprep.subr.mxu0 0.0
    %5519 = vmatpush2.msra.mxu0 0.0
    %5520 = vmatprep.subr.mxu0 0.0
    %5521 = vmatpush2.msra.mxu0 0.0
    %5522 = vmatprep.subr.mxu0 0.0
    %5523 = vmatpush2.msra.mxu0 0.0
    %5524 = vmatprep.subr.mxu0 0.0
    %5525 = vmatpush2.msra.mxu0 0.0
    %5526 = vmatprep.subr.mxu0 0.0
    %5527 = vmatpush2.msra.mxu0 0.0
    %5528 = vmatprep.subr.mxu0 0.0
    %5529 = vmatpush2.msra.mxu0 0.0
    %5530 = vmatprep.mubr.f32.mxu0 0.0
    %5531 = vmatmul.mubr.f32.gmra.mxu0 %v5443
    %v5532 = vpop.f32.mrf.mxu0
    %v5533 = vadd.f32 %v5404, %v5532
    %v5534 = vpop.f32.mrf.mxu0
    %5535 = vmatprep.mubr.f32.mxu0 0.0
    %5536 = vmatmul.mubr.f32.gmra.mxu0 %v5446
    %v5537 = vpop.f32.mrf.mxu0
    %v5538 = vadd.f32 %v5409, %v5537
    %v5539 = vpop.f32.mrf.mxu0
    %5540 = vmatprep.mubr.f32.mxu0 0.0
    %5541 = vmatmul.mubr.f32.gmra.mxu0 %v5449
    %v5542 = vpop.f32.mrf.mxu0
    %v5543 = vadd.f32 %v5414, %v5542
    %v5544 = vpop.f32.mrf.mxu0
    %5545 = vmatprep.mubr.f32.mxu0 0.0
    %5546 = vmatmul.mubr.f32.gmra.mxu0 %v5452
    %v5547 = vpop.f32.mrf.mxu0
    %v5548 = vadd.f32 %v5419, %v5547
    %v5549 = vpop.f32.mrf.mxu0
    %5550 = vmatprep.mubr.f32.mxu0 0.0
    %5551 = vmatmul.mubr.f32.gmra.mxu0 %v5455
    %v5552 = vpop.f32.mrf.mxu0
    %v5553 = vadd.f32 %v5424, %v5552
    %v5554 = vpop.f32.mrf.mxu0
    %5555 = vmatprep.mubr.f32.mxu0 0.0
    %5556 = vmatmul.mubr.f32.gmra.mxu0 %v5458
    %v5557 = vpop.f32.mrf.mxu0
    %v5558 = vadd.f32 %v5429, %v5557
    %v5559 = vpop.f32.mrf.mxu0
    %5560 = vmatprep.mubr.f32.mxu0 0.0
    %5561 = vmatmul.mubr.f32.gmra.mxu0 %v5461
    %v5562 = vpop.f32.mrf.mxu0
    %v5563 = vadd.f32 %v5434, %v5562
    %v5564 = vpop.f32.mrf.mxu0
    %5565 = vmatprep.mubr.f32.mxu0 0.0
    %5566 = vmatmul.mubr.f32.gmra.mxu0 %v5464
    %v5567 = vpop.f32.mrf.mxu0
    %v5568 = vadd.f32 %v5439, %v5567
    %v5569 = vpop.f32.mrf.mxu0
    %5570 = vdwg.mxu0
    %s5571 = scalar_lea.vmem [#allocation3], 2688
    %v5572 = vld [vmem:[%s5571] sm:$0xff]
    %v5573 = vld [vmem:[%s5571 + $0x8] sm:$0xff]
    %v5574 = vld [vmem:[%s5571 + $0x10] sm:$0xff]
    %v5575 = vld [vmem:[%s5571 + $0x18] sm:$0xff]
    %v5576 = vld [vmem:[%s5571 + $0x20] sm:$0xff]
    %v5577 = vld [vmem:[%s5571 + $0x28] sm:$0xff]
    %v5578 = vld [vmem:[%s5571 + $0x30] sm:$0xff]
    %v5579 = vld [vmem:[%s5571 + $0x38] sm:$0xff]
    %v5580 = vld [vmem:[%s5571 + $0x40] sm:$0xff]
    %v5581 = vld [vmem:[%s5571 + $0x48] sm:$0xff]
    %v5582 = vld [vmem:[%s5571 + $0x50] sm:$0xff]
    %v5583 = vld [vmem:[%s5571 + $0x58] sm:$0xff]
    %v5584 = vld [vmem:[%s5571 + $0x60] sm:$0xff]
    %v5585 = vld [vmem:[%s5571 + $0x68] sm:$0xff]
    %v5586 = vld [vmem:[%s5571 + $0x70] sm:$0xff]
    %v5587 = vld [vmem:[%s5571 + $0x78] sm:$0xff]
    %s5588 = scalar_lea.vmem [#allocation5], 1408
    %v5589 = vld [vmem:[%s5588] sm:$0xff]
    %v5590 = vld [vmem:[%s5588 + $0x8] sm:$0xff]
    %5591 = vmatprep.subr.mxu0 0.0
    %5592 = vmatpush1.msra.mxu0 0.0
    %5593 = vmatprep.subr.mxu0 0.0
    %5594 = vmatpush1.msra.mxu0 0.0
    %5595 = vmatprep.subr.mxu0 0.0
    %5596 = vmatpush1.msra.mxu0 0.0
    %5597 = vmatprep.subr.mxu0 0.0
    %5598 = vmatpush1.msra.mxu0 0.0
    %5599 = vmatprep.subr.mxu0 0.0
    %5600 = vmatpush1.msra.mxu0 0.0
    %5601 = vmatprep.subr.mxu0 0.0
    %5602 = vmatpush1.msra.mxu0 0.0
    %5603 = vmatprep.subr.mxu0 0.0
    %5604 = vmatpush1.msra.mxu0 0.0
    %5605 = vmatprep.subr.mxu0 0.0
    %5606 = vmatpush1.msra.mxu0 0.0
    %5607 = vmatprep.subr.mxu0 0.0
    %5608 = vmatpush1.msra.mxu0 0.0
    %5609 = vmatprep.subr.mxu0 0.0
    %5610 = vmatpush1.msra.mxu0 0.0
    %5611 = vmatprep.subr.mxu0 0.0
    %5612 = vmatpush1.msra.mxu0 0.0
    %5613 = vmatprep.subr.mxu0 0.0
    %5614 = vmatpush1.msra.mxu0 0.0
    %5615 = vmatprep.subr.mxu0 0.0
    %5616 = vmatpush1.msra.mxu0 0.0
    %5617 = vmatprep.subr.mxu0 0.0
    %5618 = vmatpush1.msra.mxu0 0.0
    %5619 = vmatprep.subr.mxu0 0.0
    %5620 = vmatpush1.msra.mxu0 0.0
    %5621 = vmatprep.subr.mxu0 0.0
    %5622 = vmatpush1.msra.mxu0 %v5590
    %5623 = vmatprep.subr.mxu0 0.0
    %5624 = vmatpush2.msra.mxu0 0.0
    %5625 = vmatprep.subr.mxu0 0.0
    %5626 = vmatpush2.msra.mxu0 0.0
    %5627 = vmatprep.subr.mxu0 0.0
    %5628 = vmatpush2.msra.mxu0 0.0
    %5629 = vmatprep.subr.mxu0 0.0
    %5630 = vmatpush2.msra.mxu0 0.0
    %5631 = vmatprep.subr.mxu0 0.0
    %5632 = vmatpush2.msra.mxu0 0.0
    %5633 = vmatprep.subr.mxu0 0.0
    %5634 = vmatpush2.msra.mxu0 0.0
    %5635 = vmatprep.subr.mxu0 0.0
    %5636 = vmatpush2.msra.mxu0 0.0
    %5637 = vmatprep.subr.mxu0 0.0
    %5638 = vmatpush2.msra.mxu0 0.0
    %5639 = vmatprep.subr.mxu0 0.0
    %5640 = vmatpush2.msra.mxu0 0.0
    %5641 = vmatprep.subr.mxu0 0.0
    %5642 = vmatpush2.msra.mxu0 0.0
    %5643 = vmatprep.subr.mxu0 0.0
    %5644 = vmatpush2.msra.mxu0 0.0
    %5645 = vmatprep.subr.mxu0 0.0
    %5646 = vmatpush2.msra.mxu0 0.0
    %5647 = vmatprep.subr.mxu0 0.0
    %5648 = vmatpush2.msra.mxu0 0.0
    %5649 = vmatprep.subr.mxu0 0.0
    %5650 = vmatpush2.msra.mxu0 0.0
    %5651 = vmatprep.subr.mxu0 0.0
    %5652 = vmatpush2.msra.mxu0 0.0
    %5653 = vmatprep.subr.mxu0 0.0
    %5654 = vmatpush2.msra.mxu0 0.0
    %5655 = vmatprep.mubr.f32.mxu0 0.0
    %5656 = vmatmul.mubr.f32.gmra.mxu0 %v1053
    %v5657 = vpop.f32.mrf.mxu0
    %v5658 = vadd.f32 0.0, %v5657
    %v5659 = vpop.f32.mrf.mxu0
    %5660 = vmatprep.mubr.f32.mxu0 0.0
    %5661 = vmatmul.mubr.f32.gmra.mxu0 %v1056
    %v5662 = vpop.f32.mrf.mxu0
    %v5663 = vadd.f32 0.0, %v5662
    %v5664 = vpop.f32.mrf.mxu0
    %5665 = vmatprep.mubr.f32.mxu0 0.0
    %5666 = vmatmul.mubr.f32.gmra.mxu0 %v1059
    %v5667 = vpop.f32.mrf.mxu0
    %v5668 = vadd.f32 0.0, %v5667
    %v5669 = vpop.f32.mrf.mxu0
    %5670 = vmatprep.mubr.f32.mxu0 0.0
    %5671 = vmatmul.mubr.f32.gmra.mxu0 %v1062
    %v5672 = vpop.f32.mrf.mxu0
    %v5673 = vadd.f32 0.0, %v5672
    %v5674 = vpop.f32.mrf.mxu0
    %5675 = vmatprep.mubr.f32.mxu0 0.0
    %5676 = vmatmul.mubr.f32.gmra.mxu0 %v1065
    %v5677 = vpop.f32.mrf.mxu0
    %v5678 = vadd.f32 0.0, %v5677
    %v5679 = vpop.f32.mrf.mxu0
    %5680 = vmatprep.mubr.f32.mxu0 0.0
    %5681 = vmatmul.mubr.f32.gmra.mxu0 %v1068
    %v5682 = vpop.f32.mrf.mxu0
    %v5683 = vadd.f32 0.0, %v5682
    %v5684 = vpop.f32.mrf.mxu0
    %5685 = vmatprep.mubr.f32.mxu0 0.0
    %5686 = vmatmul.mubr.f32.gmra.mxu0 %v1071
    %v5687 = vpop.f32.mrf.mxu0
    %v5688 = vadd.f32 0.0, %v5687
    %v5689 = vpop.f32.mrf.mxu0
    %5690 = vmatprep.mubr.f32.mxu0 0.0
    %5691 = vmatmul.mubr.f32.gmra.mxu0 %v1074
    %v5692 = vpop.f32.mrf.mxu0
    %v5693 = vadd.f32 0.0, %v5692
    %v5694 = vpop.f32.mrf.mxu0
    %5695 = vdwg.mxu0
    %5696 = vmatprep.subr.mxu0 0.0
    %5697 = vmatpush1.msra.mxu0 0.0
    %5698 = vmatprep.subr.mxu0 0.0
    %5699 = vmatpush1.msra.mxu0 0.0
    %5700 = vmatprep.subr.mxu0 0.0
    %5701 = vmatpush1.msra.mxu0 0.0
    %5702 = vmatprep.subr.mxu0 0.0
    %5703 = vmatpush1.msra.mxu0 0.0
    %5704 = vmatprep.subr.mxu0 0.0
    %5705 = vmatpush1.msra.mxu0 0.0
    %5706 = vmatprep.subr.mxu0 0.0
    %5707 = vmatpush1.msra.mxu0 0.0
    %5708 = vmatprep.subr.mxu0 0.0
    %5709 = vmatpush1.msra.mxu0 0.0
    %5710 = vmatprep.subr.mxu0 0.0
    %5711 = vmatpush1.msra.mxu0 0.0
    %5712 = vmatprep.subr.mxu0 0.0
    %5713 = vmatpush1.msra.mxu0 0.0
    %5714 = vmatprep.subr.mxu0 0.0
    %5715 = vmatpush1.msra.mxu0 0.0
    %5716 = vmatprep.subr.mxu0 0.0
    %5717 = vmatpush1.msra.mxu0 0.0
    %5718 = vmatprep.subr.mxu0 0.0
    %5719 = vmatpush1.msra.mxu0 0.0
    %5720 = vmatprep.subr.mxu0 0.0
    %5721 = vmatpush1.msra.mxu0 0.0
    %5722 = vmatprep.subr.mxu0 0.0
    %5723 = vmatpush1.msra.mxu0 0.0
    %5724 = vmatprep.subr.mxu0 0.0
    %5725 = vmatpush1.msra.mxu0 0.0
    %5726 = vmatprep.subr.mxu0 0.0
    %5727 = vmatpush1.msra.mxu0 %v5589
    %5728 = vmatprep.subr.mxu0 0.0
    %5729 = vmatpush2.msra.mxu0 0.0
    %5730 = vmatprep.subr.mxu0 0.0
    %5731 = vmatpush2.msra.mxu0 0.0
    %5732 = vmatprep.subr.mxu0 0.0
    %5733 = vmatpush2.msra.mxu0 0.0
    %5734 = vmatprep.subr.mxu0 0.0
    %5735 = vmatpush2.msra.mxu0 0.0
    %5736 = vmatprep.subr.mxu0 0.0
    %5737 = vmatpush2.msra.mxu0 0.0
    %5738 = vmatprep.subr.mxu0 0.0
    %5739 = vmatpush2.msra.mxu0 0.0
    %5740 = vmatprep.subr.mxu0 0.0
    %5741 = vmatpush2.msra.mxu0 0.0
    %5742 = vmatprep.subr.mxu0 0.0
    %5743 = vmatpush2.msra.mxu0 0.0
    %5744 = vmatprep.subr.mxu0 0.0
    %5745 = vmatpush2.msra.mxu0 0.0
    %5746 = vmatprep.subr.mxu0 0.0
    %5747 = vmatpush2.msra.mxu0 0.0
    %5748 = vmatprep.subr.mxu0 0.0
    %5749 = vmatpush2.msra.mxu0 0.0
    %5750 = vmatprep.subr.mxu0 0.0
    %5751 = vmatpush2.msra.mxu0 0.0
    %5752 = vmatprep.subr.mxu0 0.0
    %5753 = vmatpush2.msra.mxu0 0.0
    %5754 = vmatprep.subr.mxu0 0.0
    %5755 = vmatpush2.msra.mxu0 0.0
    %5756 = vmatprep.subr.mxu0 0.0
    %5757 = vmatpush2.msra.mxu0 0.0
    %5758 = vmatprep.subr.mxu0 0.0
    %5759 = vmatpush2.msra.mxu0 0.0
    %5760 = vmatprep.mubr.f32.mxu0 0.0
    %5761 = vmatmul.mubr.f32.gmra.mxu0 %v5443
    %v5762 = vpop.f32.mrf.mxu0
    %v5763 = vadd.f32 %v5658, %v5762
    %v5764 = vpop.f32.mrf.mxu0
    %5765 = vmatprep.mubr.f32.mxu0 0.0
    %5766 = vmatmul.mubr.f32.gmra.mxu0 %v5446
    %v5767 = vpop.f32.mrf.mxu0
    %v5768 = vadd.f32 %v5663, %v5767
    %v5769 = vpop.f32.mrf.mxu0
    %5770 = vmatprep.mubr.f32.mxu0 0.0
    %5771 = vmatmul.mubr.f32.gmra.mxu0 %v5449
    %v5772 = vpop.f32.mrf.mxu0
    %v5773 = vadd.f32 %v5668, %v5772
    %v5774 = vpop.f32.mrf.mxu0
    %5775 = vmatprep.mubr.f32.mxu0 0.0
    %5776 = vmatmul.mubr.f32.gmra.mxu0 %v5452
    %v5777 = vpop.f32.mrf.mxu0
    %v5778 = vadd.f32 %v5673, %v5777
    %v5779 = vpop.f32.mrf.mxu0
    %5780 = vmatprep.mubr.f32.mxu0 0.0
    %5781 = vmatmul.mubr.f32.gmra.mxu0 %v5455
    %v5782 = vpop.f32.mrf.mxu0
    %v5783 = vadd.f32 %v5678, %v5782
    %v5784 = vpop.f32.mrf.mxu0
    %5785 = vmatprep.mubr.f32.mxu0 0.0
    %5786 = vmatmul.mubr.f32.gmra.mxu0 %v5458
    %v5787 = vpop.f32.mrf.mxu0
    %v5788 = vadd.f32 %v5683, %v5787
    %v5789 = vpop.f32.mrf.mxu0
    %5790 = vmatprep.mubr.f32.mxu0 0.0
    %5791 = vmatmul.mubr.f32.gmra.mxu0 %v5461
    %v5792 = vpop.f32.mrf.mxu0
    %v5793 = vadd.f32 %v5688, %v5792
    %v5794 = vpop.f32.mrf.mxu0
    %5795 = vmatprep.mubr.f32.mxu0 0.0
    %5796 = vmatmul.mubr.f32.gmra.mxu0 %v5464
    %v5797 = vpop.f32.mrf.mxu0
    %v5798 = vadd.f32 %v5693, %v5797
    %v5799 = vpop.f32.mrf.mxu0
    %5800 = vdwg.mxu0
    %s5801 = scalar_lea.vmem [#allocation3], 2816
    %v5802 = vld [vmem:[%s5801] sm:$0xff]
    %v5803 = vld [vmem:[%s5801 + $0x8] sm:$0xff]
    %v5804 = vld [vmem:[%s5801 + $0x10] sm:$0xff]
    %v5805 = vld [vmem:[%s5801 + $0x18] sm:$0xff]
    %v5806 = vld [vmem:[%s5801 + $0x20] sm:$0xff]
    %v5807 = vld [vmem:[%s5801 + $0x28] sm:$0xff]
    %v5808 = vld [vmem:[%s5801 + $0x30] sm:$0xff]
    %v5809 = vld [vmem:[%s5801 + $0x38] sm:$0xff]
    %v5810 = vld [vmem:[%s5801 + $0x40] sm:$0xff]
    %v5811 = vld [vmem:[%s5801 + $0x48] sm:$0xff]
    %v5812 = vld [vmem:[%s5801 + $0x50] sm:$0xff]
    %v5813 = vld [vmem:[%s5801 + $0x58] sm:$0xff]
    %v5814 = vld [vmem:[%s5801 + $0x60] sm:$0xff]
    %v5815 = vld [vmem:[%s5801 + $0x68] sm:$0xff]
    %v5816 = vld [vmem:[%s5801 + $0x70] sm:$0xff]
    %v5817 = vld [vmem:[%s5801 + $0x78] sm:$0xff]
    %v5819 = vsel %vm1298, %v5802, 0
    %v5822 = vsel %vm1298, %v5803, 0
    %v5825 = vsel %vm1298, %v5804, 0
    %v5828 = vsel %vm1298, %v5805, 0
    %v5831 = vsel %vm1298, %v5806, 0
    %v5834 = vsel %vm1298, %v5807, 0
    %v5837 = vsel %vm1298, %v5808, 0
    %v5840 = vsel %vm1298, %v5809, 0
    %v5843 = vsel %vm1298, %v5810, 0
    %v5846 = vsel %vm1298, %v5811, 0
    %v5849 = vsel %vm1298, %v5812, 0
    %v5852 = vsel %vm1298, %v5813, 0
    %v5855 = vsel %vm1298, %v5814, 0
    %v5858 = vsel %vm1298, %v5815, 0
    %v5861 = vsel %vm1298, %v5816, 0
    %v5864 = vsel %vm1298, %v5817, 0
    %5866 = vmatprep.subr.mxu0 0.0
    %5867 = vmatpush1.msra.mxu0 0.0
    %5868 = vmatprep.subr.mxu0 0.0
    %5869 = vmatpush1.msra.mxu0 0.0
    %5870 = vmatprep.subr.mxu0 0.0
    %5871 = vmatpush1.msra.mxu0 0.0
    %5872 = vmatprep.subr.mxu0 0.0
    %5873 = vmatpush1.msra.mxu0 0.0
    %5874 = vmatprep.subr.mxu0 0.0
    %5875 = vmatpush1.msra.mxu0 0.0
    %5876 = vmatprep.subr.mxu0 0.0
    %5877 = vmatpush1.msra.mxu0 0.0
    %5878 = vmatprep.subr.mxu0 0.0
    %5879 = vmatpush1.msra.mxu0 0.0
    %5880 = vmatprep.subr.mxu0 0.0
    %5881 = vmatpush1.msra.mxu0 0.0
    %5882 = vmatprep.subr.mxu0 0.0
    %5883 = vmatpush1.msra.mxu0 %v5798
    %5884 = vmatprep.subr.mxu0 0.0
    %5885 = vmatpush1.msra.mxu0 %v5793
    %5886 = vmatprep.subr.mxu0 0.0
    %5887 = vmatpush1.msra.mxu0 %v5788
    %5888 = vmatprep.subr.mxu0 0.0
    %5889 = vmatpush1.msra.mxu0 %v5783
    %5890 = vmatprep.subr.mxu0 0.0
    %5891 = vmatpush1.msra.mxu0 %v5778
    %5892 = vmatprep.subr.mxu0 0.0
    %5893 = vmatpush1.msra.mxu0 %v5773
    %5894 = vmatprep.subr.mxu0 0.0
    %5895 = vmatpush1.msra.mxu0 %v5768
    %5896 = vmatprep.subr.mxu0 0.0
    %5897 = vmatpush1.msra.mxu0 %v5763
    %5898 = vmatprep.subr.mxu0 0.0
    %5899 = vmatpush2.msra.mxu0 0.0
    %5900 = vmatprep.subr.mxu0 0.0
    %5901 = vmatpush2.msra.mxu0 0.0
    %5902 = vmatprep.subr.mxu0 0.0
    %5903 = vmatpush2.msra.mxu0 0.0
    %5904 = vmatprep.subr.mxu0 0.0
    %5905 = vmatpush2.msra.mxu0 0.0
    %5906 = vmatprep.subr.mxu0 0.0
    %5907 = vmatpush2.msra.mxu0 0.0
    %5908 = vmatprep.subr.mxu0 0.0
    %5909 = vmatpush2.msra.mxu0 0.0
    %5910 = vmatprep.subr.mxu0 0.0
    %5911 = vmatpush2.msra.mxu0 0.0
    %5912 = vmatprep.subr.mxu0 0.0
    %5913 = vmatpush2.msra.mxu0 0.0
    %5914 = vmatprep.subr.mxu0 0.0
    %5915 = vmatpush2.msra.mxu0 0.0
    %5916 = vmatprep.subr.mxu0 0.0
    %5917 = vmatpush2.msra.mxu0 0.0
    %5918 = vmatprep.subr.mxu0 0.0
    %5919 = vmatpush2.msra.mxu0 0.0
    %5920 = vmatprep.subr.mxu0 0.0
    %5921 = vmatpush2.msra.mxu0 0.0
    %5922 = vmatprep.subr.mxu0 0.0
    %5923 = vmatpush2.msra.mxu0 0.0
    %5924 = vmatprep.subr.mxu0 0.0
    %5925 = vmatpush2.msra.mxu0 0.0
    %5926 = vmatprep.subr.mxu0 0.0
    %5927 = vmatpush2.msra.mxu0 0.0
    %5928 = vmatprep.subr.mxu0 0.0
    %5929 = vmatpush2.msra.mxu0 0.0
    %5930 = vmatprep.mubr.f32.mxu0 0.0
    %5931 = vmatmul.mubr.f32.gmra.mxu0 %v5819
    %v5932 = vpop.f32.mrf.mxu0
    %v5933 = vadd.f32 0.0, %v5932
    %v5934 = vpop.f32.mrf.mxu0
    %5935 = vmatprep.mubr.f32.mxu0 0.0
    %5936 = vmatmul.mubr.f32.gmra.mxu0 %v5822
    %v5937 = vpop.f32.mrf.mxu0
    %v5938 = vadd.f32 0.0, %v5937
    %v5939 = vpop.f32.mrf.mxu0
    %5940 = vmatprep.mubr.f32.mxu0 0.0
    %5941 = vmatmul.mubr.f32.gmra.mxu0 %v5825
    %v5942 = vpop.f32.mrf.mxu0
    %v5943 = vadd.f32 0.0, %v5942
    %v5944 = vpop.f32.mrf.mxu0
    %5945 = vmatprep.mubr.f32.mxu0 0.0
    %5946 = vmatmul.mubr.f32.gmra.mxu0 %v5828
    %v5947 = vpop.f32.mrf.mxu0
    %v5948 = vadd.f32 0.0, %v5947
    %v5949 = vpop.f32.mrf.mxu0
    %5950 = vmatprep.mubr.f32.mxu0 0.0
    %5951 = vmatmul.mubr.f32.gmra.mxu0 %v5831
    %v5952 = vpop.f32.mrf.mxu0
    %v5953 = vadd.f32 0.0, %v5952
    %v5954 = vpop.f32.mrf.mxu0
    %5955 = vmatprep.mubr.f32.mxu0 0.0
    %5956 = vmatmul.mubr.f32.gmra.mxu0 %v5834
    %v5957 = vpop.f32.mrf.mxu0
    %v5958 = vadd.f32 0.0, %v5957
    %v5959 = vpop.f32.mrf.mxu0
    %5960 = vmatprep.mubr.f32.mxu0 0.0
    %5961 = vmatmul.mubr.f32.gmra.mxu0 %v5837
    %v5962 = vpop.f32.mrf.mxu0
    %v5963 = vadd.f32 0.0, %v5962
    %v5964 = vpop.f32.mrf.mxu0
    %5965 = vmatprep.mubr.f32.mxu0 0.0
    %5966 = vmatmul.mubr.f32.gmra.mxu0 %v5840
    %v5967 = vpop.f32.mrf.mxu0
    %v5968 = vadd.f32 0.0, %v5967
    %v5969 = vpop.f32.mrf.mxu0
    %5970 = vmatprep.mubr.f32.mxu0 0.0
    %5971 = vmatmul.mubr.f32.gmra.mxu0 %v5843
    %v5972 = vpop.f32.mrf.mxu0
    %v5973 = vadd.f32 0.0, %v5972
    %v5974 = vpop.f32.mrf.mxu0
    %5975 = vmatprep.mubr.f32.mxu0 0.0
    %5976 = vmatmul.mubr.f32.gmra.mxu0 %v5846
    %v5977 = vpop.f32.mrf.mxu0
    %v5978 = vadd.f32 0.0, %v5977
    %v5979 = vpop.f32.mrf.mxu0
    %5980 = vmatprep.mubr.f32.mxu0 0.0
    %5981 = vmatmul.mubr.f32.gmra.mxu0 %v5849
    %v5982 = vpop.f32.mrf.mxu0
    %v5983 = vadd.f32 0.0, %v5982
    %v5984 = vpop.f32.mrf.mxu0
    %5985 = vmatprep.mubr.f32.mxu0 0.0
    %5986 = vmatmul.mubr.f32.gmra.mxu0 %v5852
    %v5987 = vpop.f32.mrf.mxu0
    %v5988 = vadd.f32 0.0, %v5987
    %v5989 = vpop.f32.mrf.mxu0
    %5990 = vmatprep.mubr.f32.mxu0 0.0
    %5991 = vmatmul.mubr.f32.gmra.mxu0 %v5855
    %v5992 = vpop.f32.mrf.mxu0
    %v5993 = vadd.f32 0.0, %v5992
    %v5994 = vpop.f32.mrf.mxu0
    %5995 = vmatprep.mubr.f32.mxu0 0.0
    %5996 = vmatmul.mubr.f32.gmra.mxu0 %v5858
    %v5997 = vpop.f32.mrf.mxu0
    %v5998 = vadd.f32 0.0, %v5997
    %v5999 = vpop.f32.mrf.mxu0
    %6000 = vmatprep.mubr.f32.mxu0 0.0
    %6001 = vmatmul.mubr.f32.gmra.mxu0 %v5861
    %v6002 = vpop.f32.mrf.mxu0
    %v6003 = vadd.f32 0.0, %v6002
    %v6004 = vpop.f32.mrf.mxu0
    %6005 = vmatprep.mubr.f32.mxu0 0.0
    %6006 = vmatmul.mubr.f32.gmra.mxu0 %v5864
    %v6007 = vpop.f32.mrf.mxu0
    %v6008 = vadd.f32 0.0, %v6007
    %v6009 = vpop.f32.mrf.mxu0
    %6010 = vdwg.mxu0
    %v6012 = vsel %vm1298, %v5572, 0
    %v6015 = vsel %vm1298, %v5573, 0
    %v6018 = vsel %vm1298, %v5574, 0
    %v6021 = vsel %vm1298, %v5575, 0
    %v6024 = vsel %vm1298, %v5576, 0
    %v6027 = vsel %vm1298, %v5577, 0
    %v6030 = vsel %vm1298, %v5578, 0
    %v6033 = vsel %vm1298, %v5579, 0
    %v6036 = vsel %vm1298, %v5580, 0
    %v6039 = vsel %vm1298, %v5581, 0
    %v6042 = vsel %vm1298, %v5582, 0
    %v6045 = vsel %vm1298, %v5583, 0
    %v6048 = vsel %vm1298, %v5584, 0
    %v6051 = vsel %vm1298, %v5585, 0
    %v6054 = vsel %vm1298, %v5586, 0
    %v6057 = vsel %vm1298, %v5587, 0
    %6059 = vmatprep.subr.mxu0 0.0
    %6060 = vmatpush1.msra.mxu0 0.0
    %6061 = vmatprep.subr.mxu0 0.0
    %6062 = vmatpush1.msra.mxu0 0.0
    %6063 = vmatprep.subr.mxu0 0.0
    %6064 = vmatpush1.msra.mxu0 0.0
    %6065 = vmatprep.subr.mxu0 0.0
    %6066 = vmatpush1.msra.mxu0 0.0
    %6067 = vmatprep.subr.mxu0 0.0
    %6068 = vmatpush1.msra.mxu0 0.0
    %6069 = vmatprep.subr.mxu0 0.0
    %6070 = vmatpush1.msra.mxu0 0.0
    %6071 = vmatprep.subr.mxu0 0.0
    %6072 = vmatpush1.msra.mxu0 0.0
    %6073 = vmatprep.subr.mxu0 0.0
    %6074 = vmatpush1.msra.mxu0 0.0
    %6075 = vmatprep.subr.mxu0 0.0
    %6076 = vmatpush1.msra.mxu0 %v5568
    %6077 = vmatprep.subr.mxu0 0.0
    %6078 = vmatpush1.msra.mxu0 %v5563
    %6079 = vmatprep.subr.mxu0 0.0
    %6080 = vmatpush1.msra.mxu0 %v5558
    %6081 = vmatprep.subr.mxu0 0.0
    %6082 = vmatpush1.msra.mxu0 %v5553
    %6083 = vmatprep.subr.mxu0 0.0
    %6084 = vmatpush1.msra.mxu0 %v5548
    %6085 = vmatprep.subr.mxu0 0.0
    %6086 = vmatpush1.msra.mxu0 %v5543
    %6087 = vmatprep.subr.mxu0 0.0
    %6088 = vmatpush1.msra.mxu0 %v5538
    %6089 = vmatprep.subr.mxu0 0.0
    %6090 = vmatpush1.msra.mxu0 %v5533
    %6091 = vmatprep.subr.mxu0 0.0
    %6092 = vmatpush2.msra.mxu0 0.0
    %6093 = vmatprep.subr.mxu0 0.0
    %6094 = vmatpush2.msra.mxu0 0.0
    %6095 = vmatprep.subr.mxu0 0.0
    %6096 = vmatpush2.msra.mxu0 0.0
    %6097 = vmatprep.subr.mxu0 0.0
    %6098 = vmatpush2.msra.mxu0 0.0
    %6099 = vmatprep.subr.mxu0 0.0
    %6100 = vmatpush2.msra.mxu0 0.0
    %6101 = vmatprep.subr.mxu0 0.0
    %6102 = vmatpush2.msra.mxu0 0.0
    %6103 = vmatprep.subr.mxu0 0.0
    %6104 = vmatpush2.msra.mxu0 0.0
    %6105 = vmatprep.subr.mxu0 0.0
    %6106 = vmatpush2.msra.mxu0 0.0
    %6107 = vmatprep.subr.mxu0 0.0
    %6108 = vmatpush2.msra.mxu0 0.0
    %6109 = vmatprep.subr.mxu0 0.0
    %6110 = vmatpush2.msra.mxu0 0.0
    %6111 = vmatprep.subr.mxu0 0.0
    %6112 = vmatpush2.msra.mxu0 0.0
    %6113 = vmatprep.subr.mxu0 0.0
    %6114 = vmatpush2.msra.mxu0 0.0
    %6115 = vmatprep.subr.mxu0 0.0
    %6116 = vmatpush2.msra.mxu0 0.0
    %6117 = vmatprep.subr.mxu0 0.0
    %6118 = vmatpush2.msra.mxu0 0.0
    %6119 = vmatprep.subr.mxu0 0.0
    %6120 = vmatpush2.msra.mxu0 0.0
    %6121 = vmatprep.subr.mxu0 0.0
    %6122 = vmatpush2.msra.mxu0 0.0
    %6123 = vmatprep.mubr.f32.mxu0 0.0
    %6124 = vmatmul.mubr.f32.gmra.mxu0 %v6012
    %v6125 = vpop.f32.mrf.mxu0
    %v6126 = vadd.f32 %v5933, %v6125
    %v6127 = vpop.f32.mrf.mxu0
    %6128 = vmatprep.mubr.f32.mxu0 0.0
    %6129 = vmatmul.mubr.f32.gmra.mxu0 %v6015
    %v6130 = vpop.f32.mrf.mxu0
    %v6131 = vadd.f32 %v5938, %v6130
    %v6132 = vpop.f32.mrf.mxu0
    %6133 = vmatprep.mubr.f32.mxu0 0.0
    %6134 = vmatmul.mubr.f32.gmra.mxu0 %v6018
    %v6135 = vpop.f32.mrf.mxu0
    %v6136 = vadd.f32 %v5943, %v6135
    %v6137 = vpop.f32.mrf.mxu0
    %6138 = vmatprep.mubr.f32.mxu0 0.0
    %6139 = vmatmul.mubr.f32.gmra.mxu0 %v6021
    %v6140 = vpop.f32.mrf.mxu0
    %v6141 = vadd.f32 %v5948, %v6140
    %v6142 = vpop.f32.mrf.mxu0
    %6143 = vmatprep.mubr.f32.mxu0 0.0
    %6144 = vmatmul.mubr.f32.gmra.mxu0 %v6024
    %v6145 = vpop.f32.mrf.mxu0
    %v6146 = vadd.f32 %v5953, %v6145
    %v6147 = vpop.f32.mrf.mxu0
    %6148 = vmatprep.mubr.f32.mxu0 0.0
    %6149 = vmatmul.mubr.f32.gmra.mxu0 %v6027
    %v6150 = vpop.f32.mrf.mxu0
    %v6151 = vadd.f32 %v5958, %v6150
    %v6152 = vpop.f32.mrf.mxu0
    %6153 = vmatprep.mubr.f32.mxu0 0.0
    %6154 = vmatmul.mubr.f32.gmra.mxu0 %v6030
    %v6155 = vpop.f32.mrf.mxu0
    %v6156 = vadd.f32 %v5963, %v6155
    %v6157 = vpop.f32.mrf.mxu0
    %6158 = vmatprep.mubr.f32.mxu0 0.0
    %6159 = vmatmul.mubr.f32.gmra.mxu0 %v6033
    %v6160 = vpop.f32.mrf.mxu0
    %v6161 = vadd.f32 %v5968, %v6160
    %v6162 = vpop.f32.mrf.mxu0
    %6163 = vmatprep.mubr.f32.mxu0 0.0
    %6164 = vmatmul.mubr.f32.gmra.mxu0 %v6036
    %v6165 = vpop.f32.mrf.mxu0
    %v6166 = vadd.f32 %v5973, %v6165
    %v6167 = vpop.f32.mrf.mxu0
    %6168 = vmatprep.mubr.f32.mxu0 0.0
    %6169 = vmatmul.mubr.f32.gmra.mxu0 %v6039
    %v6170 = vpop.f32.mrf.mxu0
    %v6171 = vadd.f32 %v5978, %v6170
    %v6172 = vpop.f32.mrf.mxu0
    %6173 = vmatprep.mubr.f32.mxu0 0.0
    %6174 = vmatmul.mubr.f32.gmra.mxu0 %v6042
    %v6175 = vpop.f32.mrf.mxu0
    %v6176 = vadd.f32 %v5983, %v6175
    %v6177 = vpop.f32.mrf.mxu0
    %6178 = vmatprep.mubr.f32.mxu0 0.0
    %6179 = vmatmul.mubr.f32.gmra.mxu0 %v6045
    %v6180 = vpop.f32.mrf.mxu0
    %v6181 = vadd.f32 %v5988, %v6180
    %v6182 = vpop.f32.mrf.mxu0
    %6183 = vmatprep.mubr.f32.mxu0 0.0
    %6184 = vmatmul.mubr.f32.gmra.mxu0 %v6048
    %v6185 = vpop.f32.mrf.mxu0
    %v6186 = vadd.f32 %v5993, %v6185
    %v6187 = vpop.f32.mrf.mxu0
    %6188 = vmatprep.mubr.f32.mxu0 0.0
    %6189 = vmatmul.mubr.f32.gmra.mxu0 %v6051
    %v6190 = vpop.f32.mrf.mxu0
    %v6191 = vadd.f32 %v5998, %v6190
    %v6192 = vpop.f32.mrf.mxu0
    %6193 = vmatprep.mubr.f32.mxu0 0.0
    %6194 = vmatmul.mubr.f32.gmra.mxu0 %v6054
    %v6195 = vpop.f32.mrf.mxu0
    %v6196 = vadd.f32 %v6003, %v6195
    %v6197 = vpop.f32.mrf.mxu0
    %6198 = vmatprep.mubr.f32.mxu0 0.0
    %6199 = vmatmul.mubr.f32.gmra.mxu0 %v6057
    %v6200 = vpop.f32.mrf.mxu0
    %v6201 = vadd.f32 %v6008, %v6200
    %v6202 = vpop.f32.mrf.mxu0
    %6203 = vdwg.mxu0
    %s6204 = scalar_lea.vmem [#allocation5], 1472
    %v6205 = vld [vmem:[%s6204] sm:$0xff]
    %v6206 = vld [vmem:[%s6204 + $0x8] sm:$0xff]
    %6207 = vmatprep.subr.mxu0 0.0
    %6208 = vmatpush1.msra.mxu0 0.0
    %6209 = vmatprep.subr.mxu0 0.0
    %6210 = vmatpush1.msra.mxu0 0.0
    %6211 = vmatprep.subr.mxu0 0.0
    %6212 = vmatpush1.msra.mxu0 0.0
    %6213 = vmatprep.subr.mxu0 0.0
    %6214 = vmatpush1.msra.mxu0 0.0
    %6215 = vmatprep.subr.mxu0 0.0
    %6216 = vmatpush1.msra.mxu0 0.0
    %6217 = vmatprep.subr.mxu0 0.0
    %6218 = vmatpush1.msra.mxu0 0.0
    %6219 = vmatprep.subr.mxu0 0.0
    %6220 = vmatpush1.msra.mxu0 0.0
    %6221 = vmatprep.subr.mxu0 0.0
    %6222 = vmatpush1.msra.mxu0 0.0
    %6223 = vmatprep.subr.mxu0 0.0
    %6224 = vmatpush1.msra.mxu0 0.0
    %6225 = vmatprep.subr.mxu0 0.0
    %6226 = vmatpush1.msra.mxu0 0.0
    %6227 = vmatprep.subr.mxu0 0.0
    %6228 = vmatpush1.msra.mxu0 0.0
    %6229 = vmatprep.subr.mxu0 0.0
    %6230 = vmatpush1.msra.mxu0 0.0
    %6231 = vmatprep.subr.mxu0 0.0
    %6232 = vmatpush1.msra.mxu0 0.0
    %6233 = vmatprep.subr.mxu0 0.0
    %6234 = vmatpush1.msra.mxu0 0.0
    %6235 = vmatprep.subr.mxu0 0.0
    %6236 = vmatpush1.msra.mxu0 0.0
    %6237 = vmatprep.subr.mxu0 0.0
    %6238 = vmatpush1.msra.mxu0 %v6206
    %6239 = vmatprep.subr.mxu0 0.0
    %6240 = vmatpush2.msra.mxu0 0.0
    %6241 = vmatprep.subr.mxu0 0.0
    %6242 = vmatpush2.msra.mxu0 0.0
    %6243 = vmatprep.subr.mxu0 0.0
    %6244 = vmatpush2.msra.mxu0 0.0
    %6245 = vmatprep.subr.mxu0 0.0
    %6246 = vmatpush2.msra.mxu0 0.0
    %6247 = vmatprep.subr.mxu0 0.0
    %6248 = vmatpush2.msra.mxu0 0.0
    %6249 = vmatprep.subr.mxu0 0.0
    %6250 = vmatpush2.msra.mxu0 0.0
    %6251 = vmatprep.subr.mxu0 0.0
    %6252 = vmatpush2.msra.mxu0 0.0
    %6253 = vmatprep.subr.mxu0 0.0
    %6254 = vmatpush2.msra.mxu0 0.0
    %6255 = vmatprep.subr.mxu0 0.0
    %6256 = vmatpush2.msra.mxu0 0.0
    %6257 = vmatprep.subr.mxu0 0.0
    %6258 = vmatpush2.msra.mxu0 0.0
    %6259 = vmatprep.subr.mxu0 0.0
    %6260 = vmatpush2.msra.mxu0 0.0
    %6261 = vmatprep.subr.mxu0 0.0
    %6262 = vmatpush2.msra.mxu0 0.0
    %6263 = vmatprep.subr.mxu0 0.0
    %6264 = vmatpush2.msra.mxu0 0.0
    %6265 = vmatprep.subr.mxu0 0.0
    %6266 = vmatpush2.msra.mxu0 0.0
    %6267 = vmatprep.subr.mxu0 0.0
    %6268 = vmatpush2.msra.mxu0 0.0
    %6269 = vmatprep.subr.mxu0 0.0
    %6270 = vmatpush2.msra.mxu0 0.0
    %6271 = vmatprep.mubr.f32.mxu0 0.0
    %6272 = vmatmul.mubr.f32.gmra.mxu0 %v1053
    %v6273 = vpop.f32.mrf.mxu0
    %v6274 = vadd.f32 0.0, %v6273
    %v6275 = vpop.f32.mrf.mxu0
    %6276 = vmatprep.mubr.f32.mxu0 0.0
    %6277 = vmatmul.mubr.f32.gmra.mxu0 %v1056
    %v6278 = vpop.f32.mrf.mxu0
    %v6279 = vadd.f32 0.0, %v6278
    %v6280 = vpop.f32.mrf.mxu0
    %6281 = vmatprep.mubr.f32.mxu0 0.0
    %6282 = vmatmul.mubr.f32.gmra.mxu0 %v1059
    %v6283 = vpop.f32.mrf.mxu0
    %v6284 = vadd.f32 0.0, %v6283
    %v6285 = vpop.f32.mrf.mxu0
    %6286 = vmatprep.mubr.f32.mxu0 0.0
    %6287 = vmatmul.mubr.f32.gmra.mxu0 %v1062
    %v6288 = vpop.f32.mrf.mxu0
    %v6289 = vadd.f32 0.0, %v6288
    %v6290 = vpop.f32.mrf.mxu0
    %6291 = vmatprep.mubr.f32.mxu0 0.0
    %6292 = vmatmul.mubr.f32.gmra.mxu0 %v1065
    %v6293 = vpop.f32.mrf.mxu0
    %v6294 = vadd.f32 0.0, %v6293
    %v6295 = vpop.f32.mrf.mxu0
    %6296 = vmatprep.mubr.f32.mxu0 0.0
    %6297 = vmatmul.mubr.f32.gmra.mxu0 %v1068
    %v6298 = vpop.f32.mrf.mxu0
    %v6299 = vadd.f32 0.0, %v6298
    %v6300 = vpop.f32.mrf.mxu0
    %6301 = vmatprep.mubr.f32.mxu0 0.0
    %6302 = vmatmul.mubr.f32.gmra.mxu0 %v1071
    %v6303 = vpop.f32.mrf.mxu0
    %v6304 = vadd.f32 0.0, %v6303
    %v6305 = vpop.f32.mrf.mxu0
    %6306 = vmatprep.mubr.f32.mxu0 0.0
    %6307 = vmatmul.mubr.f32.gmra.mxu0 %v1074
    %v6308 = vpop.f32.mrf.mxu0
    %v6309 = vadd.f32 0.0, %v6308
    %v6310 = vpop.f32.mrf.mxu0
    %6311 = vdwg.mxu0
    %6312 = vmatprep.subr.mxu0 0.0
    %6313 = vmatpush1.msra.mxu0 0.0
    %6314 = vmatprep.subr.mxu0 0.0
    %6315 = vmatpush1.msra.mxu0 0.0
    %6316 = vmatprep.subr.mxu0 0.0
    %6317 = vmatpush1.msra.mxu0 0.0
    %6318 = vmatprep.subr.mxu0 0.0
    %6319 = vmatpush1.msra.mxu0 0.0
    %6320 = vmatprep.subr.mxu0 0.0
    %6321 = vmatpush1.msra.mxu0 0.0
    %6322 = vmatprep.subr.mxu0 0.0
    %6323 = vmatpush1.msra.mxu0 0.0
    %6324 = vmatprep.subr.mxu0 0.0
    %6325 = vmatpush1.msra.mxu0 0.0
    %6326 = vmatprep.subr.mxu0 0.0
    %6327 = vmatpush1.msra.mxu0 0.0
    %6328 = vmatprep.subr.mxu0 0.0
    %6329 = vmatpush1.msra.mxu0 0.0
    %6330 = vmatprep.subr.mxu0 0.0
    %6331 = vmatpush1.msra.mxu0 0.0
    %6332 = vmatprep.subr.mxu0 0.0
    %6333 = vmatpush1.msra.mxu0 0.0
    %6334 = vmatprep.subr.mxu0 0.0
    %6335 = vmatpush1.msra.mxu0 0.0
    %6336 = vmatprep.subr.mxu0 0.0
    %6337 = vmatpush1.msra.mxu0 0.0
    %6338 = vmatprep.subr.mxu0 0.0
    %6339 = vmatpush1.msra.mxu0 0.0
    %6340 = vmatprep.subr.mxu0 0.0
    %6341 = vmatpush1.msra.mxu0 0.0
    %6342 = vmatprep.subr.mxu0 0.0
    %6343 = vmatpush1.msra.mxu0 %v6205
    %6344 = vmatprep.subr.mxu0 0.0
    %6345 = vmatpush2.msra.mxu0 0.0
    %6346 = vmatprep.subr.mxu0 0.0
    %6347 = vmatpush2.msra.mxu0 0.0
    %6348 = vmatprep.subr.mxu0 0.0
    %6349 = vmatpush2.msra.mxu0 0.0
    %6350 = vmatprep.subr.mxu0 0.0
    %6351 = vmatpush2.msra.mxu0 0.0
    %6352 = vmatprep.subr.mxu0 0.0
    %6353 = vmatpush2.msra.mxu0 0.0
    %6354 = vmatprep.subr.mxu0 0.0
    %6355 = vmatpush2.msra.mxu0 0.0
    %6356 = vmatprep.subr.mxu0 0.0
    %6357 = vmatpush2.msra.mxu0 0.0
    %6358 = vmatprep.subr.mxu0 0.0
    %6359 = vmatpush2.msra.mxu0 0.0
    %6360 = vmatprep.subr.mxu0 0.0
    %6361 = vmatpush2.msra.mxu0 0.0
    %6362 = vmatprep.subr.mxu0 0.0
    %6363 = vmatpush2.msra.mxu0 0.0
    %6364 = vmatprep.subr.mxu0 0.0
    %6365 = vmatpush2.msra.mxu0 0.0
    %6366 = vmatprep.subr.mxu0 0.0
    %6367 = vmatpush2.msra.mxu0 0.0
    %6368 = vmatprep.subr.mxu0 0.0
    %6369 = vmatpush2.msra.mxu0 0.0
    %6370 = vmatprep.subr.mxu0 0.0
    %6371 = vmatpush2.msra.mxu0 0.0
    %6372 = vmatprep.subr.mxu0 0.0
    %6373 = vmatpush2.msra.mxu0 0.0
    %6374 = vmatprep.subr.mxu0 0.0
    %6375 = vmatpush2.msra.mxu0 0.0
    %6376 = vmatprep.mubr.f32.mxu0 0.0
    %6377 = vmatmul.mubr.f32.gmra.mxu0 %v5443
    %v6378 = vpop.f32.mrf.mxu0
    %v6379 = vadd.f32 %v6274, %v6378
    %v6380 = vpop.f32.mrf.mxu0
    %6381 = vmatprep.mubr.f32.mxu0 0.0
    %6382 = vmatmul.mubr.f32.gmra.mxu0 %v5446
    %v6383 = vpop.f32.mrf.mxu0
    %v6384 = vadd.f32 %v6279, %v6383
    %v6385 = vpop.f32.mrf.mxu0
    %6386 = vmatprep.mubr.f32.mxu0 0.0
    %6387 = vmatmul.mubr.f32.gmra.mxu0 %v5449
    %v6388 = vpop.f32.mrf.mxu0
    %v6389 = vadd.f32 %v6284, %v6388
    %v6390 = vpop.f32.mrf.mxu0
    %6391 = vmatprep.mubr.f32.mxu0 0.0
    %6392 = vmatmul.mubr.f32.gmra.mxu0 %v5452
    %v6393 = vpop.f32.mrf.mxu0
    %v6394 = vadd.f32 %v6289, %v6393
    %v6395 = vpop.f32.mrf.mxu0
    %6396 = vmatprep.mubr.f32.mxu0 0.0
    %6397 = vmatmul.mubr.f32.gmra.mxu0 %v5455
    %v6398 = vpop.f32.mrf.mxu0
    %v6399 = vadd.f32 %v6294, %v6398
    %v6400 = vpop.f32.mrf.mxu0
    %6401 = vmatprep.mubr.f32.mxu0 0.0
    %6402 = vmatmul.mubr.f32.gmra.mxu0 %v5458
    %v6403 = vpop.f32.mrf.mxu0
    %v6404 = vadd.f32 %v6299, %v6403
    %v6405 = vpop.f32.mrf.mxu0
    %6406 = vmatprep.mubr.f32.mxu0 0.0
    %6407 = vmatmul.mubr.f32.gmra.mxu0 %v5461
    %v6408 = vpop.f32.mrf.mxu0
    %v6409 = vadd.f32 %v6304, %v6408
    %v6410 = vpop.f32.mrf.mxu0
    %6411 = vmatprep.mubr.f32.mxu0 0.0
    %6412 = vmatmul.mubr.f32.gmra.mxu0 %v5464
    %v6413 = vpop.f32.mrf.mxu0
    %v6414 = vadd.f32 %v6309, %v6413
    %v6415 = vpop.f32.mrf.mxu0
    %6416 = vdwg.mxu0
    %s6417 = scalar_lea.vmem [#allocation3], 2944
    %v6418 = vld [vmem:[%s6417] sm:$0xff]
    %v6419 = vld [vmem:[%s6417 + $0x8] sm:$0xff]
    %v6420 = vld [vmem:[%s6417 + $0x10] sm:$0xff]
    %v6421 = vld [vmem:[%s6417 + $0x18] sm:$0xff]
    %v6422 = vld [vmem:[%s6417 + $0x20] sm:$0xff]
    %v6423 = vld [vmem:[%s6417 + $0x28] sm:$0xff]
    %v6424 = vld [vmem:[%s6417 + $0x30] sm:$0xff]
    %v6425 = vld [vmem:[%s6417 + $0x38] sm:$0xff]
    %v6426 = vld [vmem:[%s6417 + $0x40] sm:$0xff]
    %v6427 = vld [vmem:[%s6417 + $0x48] sm:$0xff]
    %v6428 = vld [vmem:[%s6417 + $0x50] sm:$0xff]
    %v6429 = vld [vmem:[%s6417 + $0x58] sm:$0xff]
    %v6430 = vld [vmem:[%s6417 + $0x60] sm:$0xff]
    %v6431 = vld [vmem:[%s6417 + $0x68] sm:$0xff]
    %v6432 = vld [vmem:[%s6417 + $0x70] sm:$0xff]
    %v6433 = vld [vmem:[%s6417 + $0x78] sm:$0xff]
    %v6435 = vsel %vm1298, %v6418, 0
    %v6438 = vsel %vm1298, %v6419, 0
    %v6441 = vsel %vm1298, %v6420, 0
    %v6444 = vsel %vm1298, %v6421, 0
    %v6447 = vsel %vm1298, %v6422, 0
    %v6450 = vsel %vm1298, %v6423, 0
    %v6453 = vsel %vm1298, %v6424, 0
    %v6456 = vsel %vm1298, %v6425, 0
    %v6459 = vsel %vm1298, %v6426, 0
    %v6462 = vsel %vm1298, %v6427, 0
    %v6465 = vsel %vm1298, %v6428, 0
    %v6468 = vsel %vm1298, %v6429, 0
    %v6471 = vsel %vm1298, %v6430, 0
    %v6474 = vsel %vm1298, %v6431, 0
    %v6477 = vsel %vm1298, %v6432, 0
    %v6480 = vsel %vm1298, %v6433, 0
    %6482 = vmatprep.subr.mxu0 0.0
    %6483 = vmatpush1.msra.mxu0 0.0
    %6484 = vmatprep.subr.mxu0 0.0
    %6485 = vmatpush1.msra.mxu0 0.0
    %6486 = vmatprep.subr.mxu0 0.0
    %6487 = vmatpush1.msra.mxu0 0.0
    %6488 = vmatprep.subr.mxu0 0.0
    %6489 = vmatpush1.msra.mxu0 0.0
    %6490 = vmatprep.subr.mxu0 0.0
    %6491 = vmatpush1.msra.mxu0 0.0
    %6492 = vmatprep.subr.mxu0 0.0
    %6493 = vmatpush1.msra.mxu0 0.0
    %6494 = vmatprep.subr.mxu0 0.0
    %6495 = vmatpush1.msra.mxu0 0.0
    %6496 = vmatprep.subr.mxu0 0.0
    %6497 = vmatpush1.msra.mxu0 0.0
    %6498 = vmatprep.subr.mxu0 0.0
    %6499 = vmatpush1.msra.mxu0 %v6414
    %6500 = vmatprep.subr.mxu0 0.0
    %6501 = vmatpush1.msra.mxu0 %v6409
    %6502 = vmatprep.subr.mxu0 0.0
    %6503 = vmatpush1.msra.mxu0 %v6404
    %6504 = vmatprep.subr.mxu0 0.0
    %6505 = vmatpush1.msra.mxu0 %v6399
    %6506 = vmatprep.subr.mxu0 0.0
    %6507 = vmatpush1.msra.mxu0 %v6394
    %6508 = vmatprep.subr.mxu0 0.0
    %6509 = vmatpush1.msra.mxu0 %v6389
    %6510 = vmatprep.subr.mxu0 0.0
    %6511 = vmatpush1.msra.mxu0 %v6384
    %6512 = vmatprep.subr.mxu0 0.0
    %6513 = vmatpush1.msra.mxu0 %v6379
    %6514 = vmatprep.subr.mxu0 0.0
    %6515 = vmatpush2.msra.mxu0 0.0
    %6516 = vmatprep.subr.mxu0 0.0
    %6517 = vmatpush2.msra.mxu0 0.0
    %6518 = vmatprep.subr.mxu0 0.0
    %6519 = vmatpush2.msra.mxu0 0.0
    %6520 = vmatprep.subr.mxu0 0.0
    %6521 = vmatpush2.msra.mxu0 0.0
    %6522 = vmatprep.subr.mxu0 0.0
    %6523 = vmatpush2.msra.mxu0 0.0
    %6524 = vmatprep.subr.mxu0 0.0
    %6525 = vmatpush2.msra.mxu0 0.0
    %6526 = vmatprep.subr.mxu0 0.0
    %6527 = vmatpush2.msra.mxu0 0.0
    %6528 = vmatprep.subr.mxu0 0.0
    %6529 = vmatpush2.msra.mxu0 0.0
    %6530 = vmatprep.subr.mxu0 0.0
    %6531 = vmatpush2.msra.mxu0 0.0
    %6532 = vmatprep.subr.mxu0 0.0
    %6533 = vmatpush2.msra.mxu0 0.0
    %6534 = vmatprep.subr.mxu0 0.0
    %6535 = vmatpush2.msra.mxu0 0.0
    %6536 = vmatprep.subr.mxu0 0.0
    %6537 = vmatpush2.msra.mxu0 0.0
    %6538 = vmatprep.subr.mxu0 0.0
    %6539 = vmatpush2.msra.mxu0 0.0
    %6540 = vmatprep.subr.mxu0 0.0
    %6541 = vmatpush2.msra.mxu0 0.0
    %6542 = vmatprep.subr.mxu0 0.0
    %6543 = vmatpush2.msra.mxu0 0.0
    %6544 = vmatprep.subr.mxu0 0.0
    %6545 = vmatpush2.msra.mxu0 0.0
    %6546 = vmatprep.mubr.f32.mxu0 0.0
    %6547 = vmatmul.mubr.f32.gmra.mxu0 %v6435
    %v6548 = vpop.f32.mrf.mxu0
    %v6549 = vadd.f32 0.0, %v6548
    %v6550 = vpop.f32.mrf.mxu0
    %6551 = vmatprep.mubr.f32.mxu0 0.0
    %6552 = vmatmul.mubr.f32.gmra.mxu0 %v6438
    %v6553 = vpop.f32.mrf.mxu0
    %v6554 = vadd.f32 0.0, %v6553
    %v6555 = vpop.f32.mrf.mxu0
    %6556 = vmatprep.mubr.f32.mxu0 0.0
    %6557 = vmatmul.mubr.f32.gmra.mxu0 %v6441
    %v6558 = vpop.f32.mrf.mxu0
    %v6559 = vadd.f32 0.0, %v6558
    %v6560 = vpop.f32.mrf.mxu0
    %6561 = vmatprep.mubr.f32.mxu0 0.0
    %6562 = vmatmul.mubr.f32.gmra.mxu0 %v6444
    %v6563 = vpop.f32.mrf.mxu0
    %v6564 = vadd.f32 0.0, %v6563
    %v6565 = vpop.f32.mrf.mxu0
    %6566 = vmatprep.mubr.f32.mxu0 0.0
    %6567 = vmatmul.mubr.f32.gmra.mxu0 %v6447
    %v6568 = vpop.f32.mrf.mxu0
    %v6569 = vadd.f32 0.0, %v6568
    %v6570 = vpop.f32.mrf.mxu0
    %6571 = vmatprep.mubr.f32.mxu0 0.0
    %6572 = vmatmul.mubr.f32.gmra.mxu0 %v6450
    %v6573 = vpop.f32.mrf.mxu0
    %v6574 = vadd.f32 0.0, %v6573
    %v6575 = vpop.f32.mrf.mxu0
    %6576 = vmatprep.mubr.f32.mxu0 0.0
    %6577 = vmatmul.mubr.f32.gmra.mxu0 %v6453
    %v6578 = vpop.f32.mrf.mxu0
    %v6579 = vadd.f32 0.0, %v6578
    %v6580 = vpop.f32.mrf.mxu0
    %6581 = vmatprep.mubr.f32.mxu0 0.0
    %6582 = vmatmul.mubr.f32.gmra.mxu0 %v6456
    %v6583 = vpop.f32.mrf.mxu0
    %v6584 = vadd.f32 0.0, %v6583
    %v6585 = vpop.f32.mrf.mxu0
    %6586 = vmatprep.mubr.f32.mxu0 0.0
    %6587 = vmatmul.mubr.f32.gmra.mxu0 %v6459
    %v6588 = vpop.f32.mrf.mxu0
    %v6589 = vadd.f32 0.0, %v6588
    %v6590 = vpop.f32.mrf.mxu0
    %6591 = vmatprep.mubr.f32.mxu0 0.0
    %6592 = vmatmul.mubr.f32.gmra.mxu0 %v6462
    %v6593 = vpop.f32.mrf.mxu0
    %v6594 = vadd.f32 0.0, %v6593
    %v6595 = vpop.f32.mrf.mxu0
    %6596 = vmatprep.mubr.f32.mxu0 0.0
    %6597 = vmatmul.mubr.f32.gmra.mxu0 %v6465
    %v6598 = vpop.f32.mrf.mxu0
    %v6599 = vadd.f32 0.0, %v6598
    %v6600 = vpop.f32.mrf.mxu0
    %6601 = vmatprep.mubr.f32.mxu0 0.0
    %6602 = vmatmul.mubr.f32.gmra.mxu0 %v6468
    %v6603 = vpop.f32.mrf.mxu0
    %v6604 = vadd.f32 0.0, %v6603
    %v6605 = vpop.f32.mrf.mxu0
    %6606 = vmatprep.mubr.f32.mxu0 0.0
    %6607 = vmatmul.mubr.f32.gmra.mxu0 %v6471
    %v6608 = vpop.f32.mrf.mxu0
    %v6609 = vadd.f32 0.0, %v6608
    %v6610 = vpop.f32.mrf.mxu0
    %6611 = vmatprep.mubr.f32.mxu0 0.0
    %6612 = vmatmul.mubr.f32.gmra.mxu0 %v6474
    %v6613 = vpop.f32.mrf.mxu0
    %v6614 = vadd.f32 0.0, %v6613
    %v6615 = vpop.f32.mrf.mxu0
    %6616 = vmatprep.mubr.f32.mxu0 0.0
    %6617 = vmatmul.mubr.f32.gmra.mxu0 %v6477
    %v6618 = vpop.f32.mrf.mxu0
    %v6619 = vadd.f32 0.0, %v6618
    %v6620 = vpop.f32.mrf.mxu0
    %6621 = vmatprep.mubr.f32.mxu0 0.0
    %6622 = vmatmul.mubr.f32.gmra.mxu0 %v6480
    %v6623 = vpop.f32.mrf.mxu0
    %v6624 = vadd.f32 0.0, %v6623
    %v6625 = vpop.f32.mrf.mxu0
    %6626 = vdwg.mxu0
    %v6627 = vadd.f32 %v6126, %v6549
    %v6628 = vadd.f32 %v6131, %v6554
    %v6629 = vadd.f32 %v6136, %v6559
    %v6630 = vadd.f32 %v6141, %v6564
    %v6631 = vadd.f32 %v6146, %v6569
    %v6632 = vadd.f32 %v6151, %v6574
    %v6633 = vadd.f32 %v6156, %v6579
    %v6634 = vadd.f32 %v6161, %v6584
    %v6635 = vadd.f32 %v6166, %v6589
    %v6636 = vadd.f32 %v6171, %v6594
    %v6637 = vadd.f32 %v6176, %v6599
    %v6638 = vadd.f32 %v6181, %v6604
    %v6639 = vadd.f32 %v6186, %v6609
    %v6640 = vadd.f32 %v6191, %v6614
    %v6641 = vadd.f32 %v6196, %v6619
    %v6642 = vadd.f32 %v6201, %v6624
    %v6643 = vsel %vm95, %v6627, 0.0
    %v6644 = vsel %vm95, %v6628, 0.0
    %v6645 = vadd.f32 %v6643, %v6644
    %v6646 = vsel %vm95, %v6629, 0.0
    %v6647 = vadd.f32 %v6645, %v6646
    %v6648 = vsel %vm95, %v6630, 0.0
    %v6649 = vadd.f32 %v6647, %v6648
    %v6650 = vsel %vm95, %v6631, 0.0
    %v6651 = vadd.f32 %v6649, %v6650
    %v6652 = vsel %vm95, %v6632, 0.0
    %v6653 = vadd.f32 %v6651, %v6652
    %v6654 = vsel %vm95, %v6633, 0.0
    %v6655 = vadd.f32 %v6653, %v6654
    %v6656 = vsel %vm95, %v6634, 0.0
    %v6657 = vadd.f32 %v6655, %v6656
    %v6658 = vsel %vm95, %v6635, 0.0
    %v6659 = vadd.f32 %v6657, %v6658
    %v6660 = vsel %vm95, %v6636, 0.0
    %v6661 = vadd.f32 %v6659, %v6660
    %v6662 = vsel %vm95, %v6637, 0.0
    %v6663 = vadd.f32 %v6661, %v6662
    %v6664 = vsel %vm95, %v6638, 0.0
    %v6665 = vadd.f32 %v6663, %v6664
    %v6666 = vsel %vm95, %v6639, 0.0
    %v6667 = vadd.f32 %v6665, %v6666
    %v6668 = vsel %vm95, %v6640, 0.0
    %v6669 = vadd.f32 %v6667, %v6668
    %v6670 = vsel %vm95, %v6641, 0.0
    %v6671 = vadd.f32 %v6669, %v6670
    %v6672 = vsel %vm95, %v6642, 0.0
    %v6673 = vadd.f32 %v6671, %v6672
    %v6674 = vrot.slane %v6673, 4
    %v6675 = vadd.f32 %v6673, %v6674
    %v6676 = vrot.slane %v6675, 2
    %v6677 = vadd.f32 %v6675, %v6676
    %v6678 = vrot.slane %v6677, 1
    %v6679 = vadd.f32 %v6677, %v6678
    %v6680 = vmul.f32 %v6627, %v6627
    %v6681 = vmul.f32 %v6628, %v6628
    %v6682 = vmul.f32 %v6629, %v6629
    %v6683 = vmul.f32 %v6630, %v6630
    %v6684 = vmul.f32 %v6631, %v6631
    %v6685 = vmul.f32 %v6632, %v6632
    %v6686 = vmul.f32 %v6633, %v6633
    %v6687 = vmul.f32 %v6634, %v6634
    %v6688 = vmul.f32 %v6635, %v6635
    %v6689 = vmul.f32 %v6636, %v6636
    %v6690 = vmul.f32 %v6637, %v6637
    %v6691 = vmul.f32 %v6638, %v6638
    %v6692 = vmul.f32 %v6639, %v6639
    %v6693 = vmul.f32 %v6640, %v6640
    %v6694 = vmul.f32 %v6641, %v6641
    %v6695 = vmul.f32 %v6642, %v6642
    %v6696 = vsel %vm95, %v6680, 0.0
    %v6697 = vsel %vm95, %v6681, 0.0
    %v6698 = vadd.f32 %v6696, %v6697
    %v6699 = vsel %vm95, %v6682, 0.0
    %v6700 = vadd.f32 %v6698, %v6699
    %v6701 = vsel %vm95, %v6683, 0.0
    %v6702 = vadd.f32 %v6700, %v6701
    %v6703 = vsel %vm95, %v6684, 0.0
    %v6704 = vadd.f32 %v6702, %v6703
    %v6705 = vsel %vm95, %v6685, 0.0
    %v6706 = vadd.f32 %v6704, %v6705
    %v6707 = vsel %vm95, %v6686, 0.0
    %v6708 = vadd.f32 %v6706, %v6707
    %v6709 = vsel %vm95, %v6687, 0.0
    %v6710 = vadd.f32 %v6708, %v6709
    %v6711 = vsel %vm95, %v6688, 0.0
    %v6712 = vadd.f32 %v6710, %v6711
    %v6713 = vsel %vm95, %v6689, 0.0
    %v6714 = vadd.f32 %v6712, %v6713
    %v6715 = vsel %vm95, %v6690, 0.0
    %v6716 = vadd.f32 %v6714, %v6715
    %v6717 = vsel %vm95, %v6691, 0.0
    %v6718 = vadd.f32 %v6716, %v6717
    %v6719 = vsel %vm95, %v6692, 0.0
    %v6720 = vadd.f32 %v6718, %v6719
    %v6721 = vsel %vm95, %v6693, 0.0
    %v6722 = vadd.f32 %v6720, %v6721
    %v6723 = vsel %vm95, %v6694, 0.0
    %v6724 = vadd.f32 %v6722, %v6723
    %v6725 = vsel %vm95, %v6695, 0.0
    %v6726 = vadd.f32 %v6724, %v6725
    %v6727 = vrot.slane %v6726, 4
    %v6728 = vadd.f32 %v6726, %v6727
    %v6729 = vrot.slane %v6728, 2
    %v6730 = vadd.f32 %v6728, %v6729
    %v6731 = vrot.slane %v6730, 1
    %v6732 = vadd.f32 %v6730, %v6731
    %v6733 = vmul.f32 %v6679, 0.0078125
    %v6734 = vmul.f32 %v6732, 0.0078125
    %v6735 = vmul.f32 %v6733, %v6733
    %v6736 = vsub.f32 %v6734, %v6735
    %v6737 = vmax.f32 %v6736, 0.0
    %s6738 = scalar_lea.vmem [#allocation7], 14
    %v6739 = vld [vmem:[%s6738] sm:$0x1]
    %v6740 = vsub.f32 %v6627, %v6733
    %v6741 = vsub.f32 %v6628, %v6733
    %v6742 = vsub.f32 %v6629, %v6733
    %v6743 = vsub.f32 %v6630, %v6733
    %v6744 = vsub.f32 %v6631, %v6733
    %v6745 = vsub.f32 %v6632, %v6733
    %v6746 = vsub.f32 %v6633, %v6733
    %v6747 = vsub.f32 %v6634, %v6733
    %v6748 = vsub.f32 %v6635, %v6733
    %v6749 = vsub.f32 %v6636, %v6733
    %v6750 = vsub.f32 %v6637, %v6733
    %v6751 = vsub.f32 %v6638, %v6733
    %v6752 = vsub.f32 %v6639, %v6733
    %v6753 = vsub.f32 %v6640, %v6733
    %v6754 = vsub.f32 %v6641, %v6733
    %v6755 = vsub.f32 %v6642, %v6733
    %v6756 = vlaneseq
    %v6757 = vshrl.u32 %v6756, 7
    %v6758 = vsub.s32 0, %v6757
    %v6759 = vrot.slane %v6739, %v6758
    %v6760 = vmul.f32 %v6759, %v6740
    %v6761 = vmul.f32 %v6759, %v6741
    %v6762 = vmul.f32 %v6759, %v6742
    %v6763 = vmul.f32 %v6759, %v6743
    %v6764 = vmul.f32 %v6759, %v6744
    %v6765 = vmul.f32 %v6759, %v6745
    %v6766 = vmul.f32 %v6759, %v6746
    %v6767 = vmul.f32 %v6759, %v6747
    %v6768 = vmul.f32 %v6759, %v6748
    %v6769 = vmul.f32 %v6759, %v6749
    %v6770 = vmul.f32 %v6759, %v6750
    %v6771 = vmul.f32 %v6759, %v6751
    %v6772 = vmul.f32 %v6759, %v6752
    %v6773 = vmul.f32 %v6759, %v6753
    %v6774 = vmul.f32 %v6759, %v6754
    %v6775 = vmul.f32 %v6759, %v6755
    %v6776 = vadd.f32 %v6737, 1e-05
    %v6777 = vrsqrt.pop %v6776
    %v6778 = vmul.f32 %v6760, %v6777
    %v6779 = vmul.f32 %v6761, %v6777
    %v6780 = vmul.f32 %v6762, %v6777
    %v6781 = vmul.f32 %v6763, %v6777
    %v6782 = vmul.f32 %v6764, %v6777
    %v6783 = vmul.f32 %v6765, %v6777
    %v6784 = vmul.f32 %v6766, %v6777
    %v6785 = vmul.f32 %v6767, %v6777
    %v6786 = vmul.f32 %v6768, %v6777
    %v6787 = vmul.f32 %v6769, %v6777
    %v6788 = vmul.f32 %v6770, %v6777
    %v6789 = vmul.f32 %v6771, %v6777
    %v6790 = vmul.f32 %v6772, %v6777
    %v6791 = vmul.f32 %v6773, %v6777
    %v6792 = vmul.f32 %v6774, %v6777
    %v6793 = vmul.f32 %v6775, %v6777
    %v6794 = vld [vmem:[%s6738 + $0x1] sm:$0x1]
    %v6795 = vlaneseq
    %v6796 = vshrl.u32 %v6795, 7
    %v6797 = vsub.s32 0, %v6796
    %v6798 = vrot.slane %v6794, %v6797
    %v6799 = vadd.f32 %v6778, %v6798
    %v6800 = vadd.f32 %v6779, %v6798
    %v6801 = vadd.f32 %v6780, %v6798
    %v6802 = vadd.f32 %v6781, %v6798
    %v6803 = vadd.f32 %v6782, %v6798
    %v6804 = vadd.f32 %v6783, %v6798
    %v6805 = vadd.f32 %v6784, %v6798
    %v6806 = vadd.f32 %v6785, %v6798
    %v6807 = vadd.f32 %v6786, %v6798
    %v6808 = vadd.f32 %v6787, %v6798
    %v6809 = vadd.f32 %v6788, %v6798
    %v6810 = vadd.f32 %v6789, %v6798
    %v6811 = vadd.f32 %v6790, %v6798
    %v6812 = vadd.f32 %v6791, %v6798
    %v6813 = vadd.f32 %v6792, %v6798
    %v6814 = vadd.f32 %v6793, %v6798
    %v6815 = vmax.f32 %v6799, 0.0
    %v6816 = vmax.f32 %v6800, 0.0
    %v6817 = vmax.f32 %v6801, 0.0
    %v6818 = vmax.f32 %v6802, 0.0
    %v6819 = vmax.f32 %v6803, 0.0
    %v6820 = vmax.f32 %v6804, 0.0
    %v6821 = vmax.f32 %v6805, 0.0
    %v6822 = vmax.f32 %v6806, 0.0
    %v6823 = vmax.f32 %v6807, 0.0
    %v6824 = vmax.f32 %v6808, 0.0
    %v6825 = vmax.f32 %v6809, 0.0
    %v6826 = vmax.f32 %v6810, 0.0
    %v6827 = vmax.f32 %v6811, 0.0
    %v6828 = vmax.f32 %v6812, 0.0
    %v6829 = vmax.f32 %v6813, 0.0
    %v6830 = vmax.f32 %v6814, 0.0
    %v6831 = vld [vmem:[#allocation8] sm:$0xf]
    %v6832 = vld [vmem:[#allocation2] sm:$0x1]
    %v6834 = vlaneseq
    %v6835 = vshrl.u32 %v6834, 7
    %v6836 = vsub.s32 0, %v6835
    %v6837 = vrot.slane %v6832, %v6836
    %v6840 = vsel %vm95, %v6815, 0
    %v6843 = vsel %vm95, %v6816, 0
    %v6846 = vsel %vm95, %v6817, 0
    %v6849 = vsel %vm95, %v6818, 0
    %v6852 = vsel %vm95, %v6819, 0
    %v6855 = vsel %vm95, %v6820, 0
    %v6858 = vsel %vm95, %v6821, 0
    %v6861 = vsel %vm95, %v6822, 0
    %v6864 = vsel %vm95, %v6823, 0
    %v6867 = vsel %vm95, %v6824, 0
    %v6870 = vsel %vm95, %v6825, 0
    %v6873 = vsel %vm95, %v6826, 0
    %v6876 = vsel %vm95, %v6827, 0
    %v6879 = vsel %vm95, %v6828, 0
    %v6882 = vsel %vm95, %v6829, 0
    %v6885 = vsel %vm95, %v6830, 0
    %v6888 = vsel %vm144, %v6831, 0
    %6890 = vmatprep.subr.mxu0 0.0
    %6891 = vmatpush1.msra.mxu0 0.0
    %6892 = vmatprep.subr.mxu0 0.0
    %6893 = vmatpush1.msra.mxu0 0.0
    %6894 = vmatprep.subr.mxu0 0.0
    %6895 = vmatpush1.msra.mxu0 0.0
    %6896 = vmatprep.subr.mxu0 0.0
    %6897 = vmatpush1.msra.mxu0 0.0
    %6898 = vmatprep.subr.mxu0 0.0
    %6899 = vmatpush1.msra.mxu0 0.0
    %6900 = vmatprep.subr.mxu0 0.0
    %6901 = vmatpush1.msra.mxu0 0.0
    %6902 = vmatprep.subr.mxu0 0.0
    %6903 = vmatpush1.msra.mxu0 0.0
    %6904 = vmatprep.subr.mxu0 0.0
    %6905 = vmatpush1.msra.mxu0 0.0
    %6906 = vmatprep.subr.mxu0 0.0
    %6907 = vmatpush1.msra.mxu0 0.0
    %6908 = vmatprep.subr.mxu0 0.0
    %6909 = vmatpush1.msra.mxu0 0.0
    %6910 = vmatprep.subr.mxu0 0.0
    %6911 = vmatpush1.msra.mxu0 0.0
    %6912 = vmatprep.subr.mxu0 0.0
    %6913 = vmatpush1.msra.mxu0 0.0
    %6914 = vmatprep.subr.mxu0 0.0
    %6915 = vmatpush1.msra.mxu0 0.0
    %6916 = vmatprep.subr.mxu0 0.0
    %6917 = vmatpush1.msra.mxu0 0.0
    %6918 = vmatprep.subr.mxu0 0.0
    %6919 = vmatpush1.msra.mxu0 0.0
    %6920 = vmatprep.subr.mxu0 0.0
    %6921 = vmatpush1.msra.mxu0 %v6888
    %6922 = vmatprep.subr.mxu0 0.0
    %6923 = vmatpush2.msra.mxu0 0.0
    %6924 = vmatprep.subr.mxu0 0.0
    %6925 = vmatpush2.msra.mxu0 0.0
    %6926 = vmatprep.subr.mxu0 0.0
    %6927 = vmatpush2.msra.mxu0 0.0
    %6928 = vmatprep.subr.mxu0 0.0
    %6929 = vmatpush2.msra.mxu0 0.0
    %6930 = vmatprep.subr.mxu0 0.0
    %6931 = vmatpush2.msra.mxu0 0.0
    %6932 = vmatprep.subr.mxu0 0.0
    %6933 = vmatpush2.msra.mxu0 0.0
    %6934 = vmatprep.subr.mxu0 0.0
    %6935 = vmatpush2.msra.mxu0 0.0
    %6936 = vmatprep.subr.mxu0 0.0
    %6937 = vmatpush2.msra.mxu0 0.0
    %6938 = vmatprep.subr.mxu0 0.0
    %6939 = vmatpush2.msra.mxu0 0.0
    %6940 = vmatprep.subr.mxu0 0.0
    %6941 = vmatpush2.msra.mxu0 0.0
    %6942 = vmatprep.subr.mxu0 0.0
    %6943 = vmatpush2.msra.mxu0 0.0
    %6944 = vmatprep.subr.mxu0 0.0
    %6945 = vmatpush2.msra.mxu0 0.0
    %6946 = vmatprep.subr.mxu0 0.0
    %6947 = vmatpush2.msra.mxu0 0.0
    %6948 = vmatprep.subr.mxu0 0.0
    %6949 = vmatpush2.msra.mxu0 0.0
    %6950 = vmatprep.subr.mxu0 0.0
    %6951 = vmatpush2.msra.mxu0 0.0
    %6952 = vmatprep.subr.mxu0 0.0
    %6953 = vmatpush2.msra.mxu0 0.0
    %6954 = vmatprep.mubr.f32.mxu0 0.0
    %6955 = vmatmul.mubr.f32.gmra.mxu0 %v6840
    %v6956 = vpop.f32.mrf.mxu0
    %v6957 = vadd.f32 %v6837, %v6956
    %v6958 = vpop.f32.mrf.mxu0
    %6959 = vmatprep.mubr.f32.mxu0 0.0
    %6960 = vmatmul.mubr.f32.gmra.mxu0 %v6843
    %v6961 = vpop.f32.mrf.mxu0
    %v6962 = vadd.f32 %v6837, %v6961
    %v6963 = vpop.f32.mrf.mxu0
    %6964 = vmatprep.mubr.f32.mxu0 0.0
    %6965 = vmatmul.mubr.f32.gmra.mxu0 %v6846
    %v6966 = vpop.f32.mrf.mxu0
    %v6967 = vadd.f32 %v6837, %v6966
    %v6968 = vpop.f32.mrf.mxu0
    %6969 = vmatprep.mubr.f32.mxu0 0.0
    %6970 = vmatmul.mubr.f32.gmra.mxu0 %v6849
    %v6971 = vpop.f32.mrf.mxu0
    %v6972 = vadd.f32 %v6837, %v6971
    %v6973 = vpop.f32.mrf.mxu0
    %6974 = vmatprep.mubr.f32.mxu0 0.0
    %6975 = vmatmul.mubr.f32.gmra.mxu0 %v6852
    %v6976 = vpop.f32.mrf.mxu0
    %v6977 = vadd.f32 %v6837, %v6976
    %v6978 = vpop.f32.mrf.mxu0
    %6979 = vmatprep.mubr.f32.mxu0 0.0
    %6980 = vmatmul.mubr.f32.gmra.mxu0 %v6855
    %v6981 = vpop.f32.mrf.mxu0
    %v6982 = vadd.f32 %v6837, %v6981
    %v6983 = vpop.f32.mrf.mxu0
    %6984 = vmatprep.mubr.f32.mxu0 0.0
    %6985 = vmatmul.mubr.f32.gmra.mxu0 %v6858
    %v6986 = vpop.f32.mrf.mxu0
    %v6987 = vadd.f32 %v6837, %v6986
    %v6988 = vpop.f32.mrf.mxu0
    %6989 = vmatprep.mubr.f32.mxu0 0.0
    %6990 = vmatmul.mubr.f32.gmra.mxu0 %v6861
    %v6991 = vpop.f32.mrf.mxu0
    %v6992 = vadd.f32 %v6837, %v6991
    %v6993 = vpop.f32.mrf.mxu0
    %6994 = vmatprep.mubr.f32.mxu0 0.0
    %6995 = vmatmul.mubr.f32.gmra.mxu0 %v6864
    %v6996 = vpop.f32.mrf.mxu0
    %v6997 = vadd.f32 %v6837, %v6996
    %v6998 = vpop.f32.mrf.mxu0
    %6999 = vmatprep.mubr.f32.mxu0 0.0
    %7000 = vmatmul.mubr.f32.gmra.mxu0 %v6867
    %v7001 = vpop.f32.mrf.mxu0
    %v7002 = vadd.f32 %v6837, %v7001
    %v7003 = vpop.f32.mrf.mxu0
    %7004 = vmatprep.mubr.f32.mxu0 0.0
    %7005 = vmatmul.mubr.f32.gmra.mxu0 %v6870
    %v7006 = vpop.f32.mrf.mxu0
    %v7007 = vadd.f32 %v6837, %v7006
    %v7008 = vpop.f32.mrf.mxu0
    %7009 = vmatprep.mubr.f32.mxu0 0.0
    %7010 = vmatmul.mubr.f32.gmra.mxu0 %v6873
    %v7011 = vpop.f32.mrf.mxu0
    %v7012 = vadd.f32 %v6837, %v7011
    %v7013 = vpop.f32.mrf.mxu0
    %7014 = vmatprep.mubr.f32.mxu0 0.0
    %7015 = vmatmul.mubr.f32.gmra.mxu0 %v6876
    %v7016 = vpop.f32.mrf.mxu0
    %v7017 = vadd.f32 %v6837, %v7016
    %v7018 = vpop.f32.mrf.mxu0
    %7019 = vmatprep.mubr.f32.mxu0 0.0
    %7020 = vmatmul.mubr.f32.gmra.mxu0 %v6879
    %v7021 = vpop.f32.mrf.mxu0
    %v7022 = vadd.f32 %v6837, %v7021
    %v7023 = vpop.f32.mrf.mxu0
    %7024 = vmatprep.mubr.f32.mxu0 0.0
    %7025 = vmatmul.mubr.f32.gmra.mxu0 %v6882
    %v7026 = vpop.f32.mrf.mxu0
    %v7027 = vadd.f32 %v6837, %v7026
    %v7028 = vpop.f32.mrf.mxu0
    %7029 = vmatprep.mubr.f32.mxu0 0.0
    %7030 = vmatmul.mubr.f32.gmra.mxu0 %v6885
    %v7031 = vpop.f32.mrf.mxu0
    %v7032 = vadd.f32 %v6837, %v7031
    %v7033 = vpop.f32.mrf.mxu0
    %7034 = vdwg.mxu0
    %vm7035 = vcmask 7168
    %7036 = vst.msk [vmem:[%s6] sm:$0xff] %vm7035, %v6957
    %7037 = vst.msk [vmem:[%s6 + $0x8] sm:$0xff] %vm7035, %v6962
    %7038 = vst.msk [vmem:[%s6 + $0x10] sm:$0xff] %vm7035, %v6967
    %7039 = vst.msk [vmem:[%s6 + $0x18] sm:$0xff] %vm7035, %v6972
    %7040 = vst.msk [vmem:[%s6 + $0x20] sm:$0xff] %vm7035, %v6977
    %7041 = vst.msk [vmem:[%s6 + $0x28] sm:$0xff] %vm7035, %v6982
    %7042 = vst.msk [vmem:[%s6 + $0x30] sm:$0xff] %vm7035, %v6987
    %7043 = vst.msk [vmem:[%s6 + $0x38] sm:$0xff] %vm7035, %v6992
    %7044 = vst.msk [vmem:[%s6 + $0x40] sm:$0xff] %vm7035, %v6997
    %7045 = vst.msk [vmem:[%s6 + $0x48] sm:$0xff] %vm7035, %v7002
    %7046 = vst.msk [vmem:[%s6 + $0x50] sm:$0xff] %vm7035, %v7007
    %7047 = vst.msk [vmem:[%s6 + $0x58] sm:$0xff] %vm7035, %v7012
    %7048 = vst.msk [vmem:[%s6 + $0x60] sm:$0xff] %vm7035, %v7017
    %7049 = vst.msk [vmem:[%s6 + $0x68] sm:$0xff] %vm7035, %v7022
    %7050 = vst.msk [vmem:[%s6 + $0x70] sm:$0xff] %vm7035, %v7027
    %7051 = vst.msk [vmem:[%s6 + $0x78] sm:$0xff] %vm7035, %v7032
    // Predicated region
    $region42: #{_lambda_.1} parent=1 // pred_check
      _
    $region43: #{_lambda_.1} parent=1 // pred_check_branch
      %7053 = sbr.rel (0) target = $region45
    $region44: #{_lambda_.1} parent=1 // pred_region
      _
    $region45: #{_lambda_.1} parent=1 // pred_fallthru
      _
    // Predicated region
    $region46: #{_lambda_.1} parent=1 // pred_check
      _
    $region47: #{_lambda_.1} parent=1 // pred_check_branch
      %7055 = sbr.rel (0) target = $region49
    $region48: #{_lambda_.1} parent=1 // pred_region
      _
    $region49: #{_lambda_.1} parent=1 // pred_fallthru
      _
    %7056 = vsyncpa [#allocation4], 1
    %7057 = vsyncpa [#allocation6], 1
    %7058 = vsyncpa [#allocation9], 1

</llo_original>
